<compile_context>
chip_gen: v7x
topology: tpu7x:2x2x1
jax: 0.10.0
libtpu: 0.0.40
codegen_flags: <defaults>
</compile_context>

<pallas_src>
import functools

import jax
import jax.numpy as jnp
from jax.experimental import pallas as pl
from jax.experimental.pallas import tpu as pltpu

_EPS = 1e-5


# ----------------------------------------------------------------------------
# Helpers
# ----------------------------------------------------------------------------
def _choose_m_tile(M, cap=512):
    """Largest row tile <= cap that divides M (rows are multiples of 8 here)."""
    if M <= cap:
        return M
    for tm in (512, 256, 128, 64, 32, 16, 8):
        if M % tm == 0:
            return tm
    return M


# ----------------------------------------------------------------------------
# Fused kernels
# ----------------------------------------------------------------------------
def _stem_kernel(xp_ref, w_ref, o_ref, acc_ref, *, H, W, eps):
    """3x3 conv (pad=1, stride=1, no bias) + BatchNorm, one image per grid step.

    xp_ref : (1, H+2, W+2, Cin)  halo-padded input tile
    w_ref  : (3, 3, Cin, Cout)   bf16 weights (VMEM resident)
    o_ref  : (N, H*W, Cout)      resident output block (constant index_map)
    acc_ref: (N, H*W, Cout) f32  VMEM scratch holding pre-BN activations
    """
    n = pl.program_id(0)
    x = xp_ref[0]                                            # (H+2, W+2, Cin)
    cout = o_ref.shape[-1]
    acc = jnp.zeros((H * W, cout), jnp.float32)
    for kh in range(3):                                      # 9 shifted taps
        for kw in range(3):
            patch = x[kh:kh + H, kw:kw + W, :].reshape(H * W, -1)
            acc = acc + jnp.dot(patch.astype(jnp.bfloat16), w_ref[kh, kw],
                                preferred_element_type=jnp.float32)
    acc_ref[n] = acc

    @pl.when(n == pl.num_programs(0) - 1)
    def _():
        # BatchNorm2d (training stats, identity affine at init), f32 math.
        z = acc_ref[...]
        mean = jnp.mean(z, axis=(0, 1), keepdims=True)
        var = jnp.mean(jnp.square(z - mean), axis=(0, 1), keepdims=True)
        o_ref[...] = ((z - mean) * jax.lax.rsqrt(var + eps)).astype(o_ref.dtype)


def _stdconv_bn_kernel(x_ref, w_ref, o_ref, acc_ref, *, tm, eps):
    """ops.StdConv: ReLU -> 1x1 conv -> BN(affine=False), fused & M-tiled.

    x_ref  : (tm, Cin)       input row tile (pipelined)
    w_ref  : (Cin, Cout)     bf16 weights (VMEM resident)
    o_ref  : (M, Cout)       resident output block
    acc_ref: (M, Cout) f32   scratch holding the pre-BN matmul result
    """
    i = pl.program_id(0)
    a = jnp.maximum(x_ref[...], 0).astype(jnp.bfloat16)
    y = jnp.dot(a, w_ref[...], preferred_element_type=jnp.float32)
    off = pl.multiple_of(i * tm, 8)
    acc_ref[pl.ds(off, tm), :] = y

    @pl.when(i == pl.num_programs(0) - 1)
    def _():
        z = acc_ref[...]
        mean = jnp.mean(z, axis=0, keepdims=True)
        var = jnp.mean(jnp.square(z - mean), axis=0, keepdims=True)
        o_ref[...] = ((z - mean) * jax.lax.rsqrt(var + eps)).astype(o_ref.dtype)


def _fr_bn_kernel(x_ref, w_ref, o_ref, *, eps):
    """ops.FactorizedReduce, one edge per grid step.

    Both stride-2 branches are folded into a single matmul: the input is
    [x[::2,::2], x[1::2,1::2]] concatenated on K and the weight is the
    block-diagonal [[w1,0],[0,w2]], so the output columns are already
    torch.cat([conv1(x), conv2(x[...,1:,1:])], dim=1).
    """
    a = jnp.maximum(x_ref[0], 0).astype(jnp.bfloat16)        # (M2, 2*Cin)
    y = jnp.dot(a, w_ref[0], preferred_element_type=jnp.float32)  # (M2, 2*ch)
    mean = jnp.mean(y, axis=0, keepdims=True)
    var = jnp.mean(jnp.square(y - mean), axis=0, keepdims=True)
    o_ref[0] = ((y - mean) * jax.lax.rsqrt(var + eps)).astype(o_ref.dtype)


def _head_kernel(x_ref, w_ref, b_ref, o_ref):
    """AdaptiveAvgPool2d(1) + flatten + Linear, fused."""
    pooled = jnp.mean(x_ref[...].astype(jnp.float32), axis=1)     # (N, C)
    o_ref[...] = jnp.dot(pooled, w_ref[...],
                         preferred_element_type=jnp.float32) + b_ref[...]


# ----------------------------------------------------------------------------
# Op wrappers (layout plumbing only; all FLOPs go through the kernels above)
# ----------------------------------------------------------------------------
def stem_forward(x_nhwc, w):
    """Conv2d(3x3, s=1, p=1, bias=False) -> BatchNorm2d."""
    N, H, W, Cin = x_nhwc.shape
    Cout = w.shape[-1]
    xp = jnp.pad(x_nhwc, ((0, 0), (1, 1), (1, 1), (0, 0)))
    out = pl.pallas_call(
        functools.partial(_stem_kernel, H=H, W=W, eps=_EPS),
        out_shape=jax.ShapeDtypeStruct((N, H * W, Cout), jnp.bfloat16),
        grid=(N,),
        in_specs=[pl.BlockSpec((1, H + 2, W + 2, Cin), lambda n: (n, 0, 0, 0)),
                  pl.BlockSpec((3, 3, Cin, Cout), lambda n: (0, 0, 0, 0))],
        out_specs=pl.BlockSpec((N, H * W, Cout), lambda n: (0, 0, 0)),
        scratch_shapes=[pltpu.VMEM((N, H * W, Cout), jnp.float32)],
        compiler_params=pltpu.CompilerParams(
            dimension_semantics=("arbitrary",)),
        cost_estimate=pl.CostEstimate(
            flops=2 * N * H * W * 9 * Cin * Cout, transcendentals=0,
            bytes_accessed=4 * N * (H + 2) * (W + 2) * Cin
            + 2 * 9 * Cin * Cout + 2 * N * H * W * Cout),
    )(xp, w)
    return out.reshape(N, H, W, Cout)


def fused_stdconv_bn(x_nhwc, w_io):
    """ops.StdConv: ReLU -> Conv2d(1x1, bias=False) -> BN(affine=False)."""
    N, H, W, Cin = x_nhwc.shape
    Cout = w_io.shape[1]
    M = N * H * W
    x_mat = x_nhwc.reshape(M, Cin)                      # pure reshape (NHWC)
    tm = _choose_m_tile(M)
    out = pl.pallas_call(
        functools.partial(_stdconv_bn_kernel, tm=tm, eps=_EPS),
        out_shape=jax.ShapeDtypeStruct((M, Cout), jnp.bfloat16),
        grid=(M // tm,),
        in_specs=[pl.BlockSpec((tm, Cin), lambda i: (i, 0)),
                  pl.BlockSpec((Cin, Cout), lambda i: (0, 0))],
        out_specs=pl.BlockSpec((M, Cout), lambda i: (0, 0)),
        scratch_shapes=[pltpu.VMEM((M, Cout), jnp.float32)],
        compiler_params=pltpu.CompilerParams(
            dimension_semantics=("arbitrary",)),
        cost_estimate=pl.CostEstimate(
            flops=2 * M * Cin * Cout, transcendentals=0,
            bytes_accessed=2 * M * Cin + 2 * Cin * Cout + 2 * M * Cout),
    )(x_mat, w_io)
    return out.reshape(N, H, W, Cout)


def fused_factorized_reduce_bn(xs, w1s, w2s):
    """Batched ops.FactorizedReduce over E independent edges (grid axis E)."""
    E = len(xs)
    N, H, W, Cin = xs[0].shape
    H2, W2 = H // 2, W // 2
    M2 = N * H2 * W2
    c_half = w1s[0].shape[1]
    Cout = 2 * c_half

    def edge_input(x):
        x1 = x[:, ::2, ::2, :].reshape(M2, Cin)          # conv1 branch rows
        x2 = x[:, 1::2, 1::2, :].reshape(M2, Cin)        # conv2 (x[:,:,1:,1:])
        return jnp.concatenate([x1, x2], axis=-1)        # (M2, 2*Cin)

    def edge_weight(w1, w2):                             # block-diag weight
        z = jnp.zeros((Cin, c_half), w1.dtype)
        top = jnp.concatenate([w1, z], axis=1)
        bot = jnp.concatenate([z, w2], axis=1)
        return jnp.concatenate([top, bot], axis=0)       # (2*Cin, 2*c_half)

    x_b = jnp.stack([edge_input(x) for x in xs], axis=0)
    w_b = jnp.stack([edge_weight(a, b) for a, b in zip(w1s, w2s)], axis=0)

    out = pl.pallas_call(
        functools.partial(_fr_bn_kernel, eps=_EPS),
        out_shape=jax.ShapeDtypeStruct((E, M2, Cout), jnp.bfloat16),
        grid=(E,),
        in_specs=[pl.BlockSpec((1, M2, 2 * Cin), lambda e: (e, 0, 0)),
                  pl.BlockSpec((1, 2 * Cin, Cout), lambda e: (e, 0, 0))],
        out_specs=pl.BlockSpec((1, M2, Cout), lambda e: (e, 0, 0)),
        compiler_params=pltpu.CompilerParams(
            dimension_semantics=("parallel",)),
        cost_estimate=pl.CostEstimate(
            flops=2 * E * M2 * 2 * Cin * Cout, transcendentals=0,
            bytes_accessed=2 * E * (M2 * 2 * Cin + 2 * Cin * Cout + M2 * Cout)),
    )(x_b, w_b)
    return [out[e].reshape(N, H2, W2, Cout) for e in range(E)]


def gap_linear(x_nhwc, w, b):
    N, H, W, C = x_nhwc.shape
    n_classes = w.shape[1]
    x = x_nhwc.reshape(N, H * W, C)
    return pl.pallas_call(
        _head_kernel,
        out_shape=jax.ShapeDtypeStruct((N, n_classes), jnp.float32),
        grid=(1,),
        in_specs=[pl.BlockSpec((N, H * W, C), lambda i: (0, 0, 0)),
                  pl.BlockSpec((C, n_classes), lambda i: (0, 0)),
                  pl.BlockSpec((1, n_classes), lambda i: (0, 0))],
        out_specs=pl.BlockSpec((N, n_classes), lambda i: (0, 0)),
    )(x, w, b.reshape(1, n_classes))


# ----------------------------------------------------------------------------
# Network forward (fixed deterministic sub-architecture, see TODO above)
# ----------------------------------------------------------------------------
def _preproc(p, x):
    if p['type'] == 'fr':
        return fused_factorized_reduce_bn([x], [p['w1']], [p['w2']])[0]
    return fused_stdconv_bn(x, p['w'])


def cell_forward(cell, s0, s1):
    t0 = _preproc(cell['preproc0'], s0)
    t1 = _preproc(cell['preproc1'], s1)
    n_nodes = cell['n_nodes']
    if cell['reduction']:
        # Every chosen edge is a FactorizedReduce on preproc output 0 or 1;
        # batch all of them (2 per node) into one pallas_call.
        xs, w1s, w2s = [], [], []
        for node_edges in cell['nodes']:
            for e, edge in enumerate(node_edges):
                xs.append(t0 if e == 0 else t1)
                w1s.append(edge['w1'])
                w2s.append(edge['w2'])
        ys = fused_factorized_reduce_bn(xs, w1s, w2s)
        new_tensors = [ys[2 * k] + ys[2 * k + 1] for k in range(n_nodes)]
    else:
        # Identity edges; InputChoice(n_chosen=2) -> sum of the two preprocs.
        s = t0 + t1
        new_tensors = [s for _ in range(n_nodes)]
    return jnp.concatenate(new_tensors, axis=-1)          # channel concat (NHWC)


def cnn_forward(params, x_nchw):
    x = jnp.transpose(x_nchw, (0, 2, 3, 1))               # single NCHW->NHWC
    s0 = s1 = stem_forward(x, params['stem_w'])
    for cell in params['cells']:
        s0, s1 = s1, cell_forward(cell, s0, s1)
    return gap_linear(s1, params['linear_w'], params['linear_b'])


# ----------------------------------------------------------------------------
# Deterministic parameter construction (mirrors CNN.__init__)
# ----------------------------------------------------------------------------
def build_cnn_params(key, in_channels, channels, n_classes, n_layers,
                     n_nodes, stem_multiplier):
    keys = iter(jax.random.split(key, 512))

    def w(shape):                                         # bf16 MXU weights
        return (0.1 * jax.random.normal(next(keys), shape, jnp.float32)
                ).astype(jnp.bfloat16)

    params = {}
    c_cur = stem_multiplier * channels
    params['stem_w'] = w((3, 3, in_channels, c_cur))      # (kh, kw, Cin, Cout)

    channels_pp, channels_p, c_cur = c_cur, c_cur, channels
    cells = []
    reduction_p, reduction = False, False
    for i in range(n_layers):
        reduction_p, reduction = reduction, False
        if i in [n_layers // 3, 2 * n_layers // 3]:
            c_cur *= 2
            reduction = True
        cell = {'reduction': reduction, 'n_nodes': n_nodes}
        if reduction_p:
            cell['preproc0'] = {'type': 'fr',
                                'w1': w((channels_pp, c_cur // 2)),
                                'w2': w((channels_pp, c_cur // 2))}
        else:
            cell['preproc0'] = {'type': 'std', 'w': w((channels_pp, c_cur))}
        cell['preproc1'] = {'type': 'std', 'w': w((channels_p, c_cur))}

        nodes = []
        for _depth in range(2, n_nodes + 2):
            num_downsample = 2 if reduction else 0
            edges = []
            for e in range(2):                            # only 2 chosen inputs
                stride = 2 if e < num_downsample else 1
                if stride == 2:
                    edges.append({'type': 'fr',
                                  'w1': w((c_cur, c_cur // 2)),
                                  'w2': w((c_cur, c_cur // 2))})
                else:
                    edges.append({'type': 'id'})
            nodes.append(edges)
        cell['nodes'] = nodes
        cells.append(cell)

        c_cur_out = c_cur * n_nodes
        channels_pp, channels_p = channels_p, c_cur_out

    params['cells'] = cells
    params['linear_w'] = 0.1 * jax.random.normal(
        next(keys), (channels_p, n_classes), jnp.float32)
    params['linear_b'] = jnp.zeros((n_classes,), jnp.float32)
    return params


# ----------------------------------------------------------------------------
if __name__ == "__main__":
    key = jax.random.PRNGKey(0)
    kx, kp = jax.random.split(key)

    # Small config consistent with the module.
    batch, in_channels, spatial = 2, 4, 16
    channels, n_classes, n_layers, n_nodes, stem_mult = 4, 10, 3, 2, 3

    x = jax.random.normal(kx, (batch, in_channels, spatial, spatial),
                          jnp.float32)
    params = build_cnn_params(kp, in_channels, channels, n_classes,
                              n_layers, n_nodes, stem_mult)

    fwd = jax.jit(lambda inp: cnn_forward(params, inp))
    logits = fwd(x)                                       # (2, 10)
    jax.block_until_ready(logits)
    assert logits.shape == (batch, n_classes)
    print("KERNEL_OK")
</pallas_src>

<mosaic_0001>
module attributes {stable_mosaic.version = 11 : i64} {
  func.func @_stdconv_bn_kernel(%arg0: i32, %arg1: memref<512x12xbf16, #tpu.memory_space<vmem>>, %arg2: memref<12x4xbf16, #tpu.memory_space<vmem>>, %arg3: memref<512x4xbf16, #tpu.memory_space<vmem>>, %arg4: memref<512x4xf32, #tpu.memory_space<vmem>>) attributes {dimension_semantics = [#tpu.dimension_semantics<arbitrary>], iteration_bounds = array<i64: 1>, scalar_prefetch = 0 : i64, scratch_operands = 1 : i64, tpu.core_type = #tpu.core_type<tc>, window_params = [{transform_indices = @transform_0, window_bounds = array<i64: 512, 12>}, {pipeline_mode = #tpu.pipeline_mode<synchronous>, transform_indices = @transform_1, window_bounds = array<i64: 12, 4>}, {pipeline_mode = #tpu.pipeline_mode<synchronous>, transform_indices = @transform_2, window_bounds = array<i64: 512, 4>}]} {
    %c0 = arith.constant 0 : index
    %c0_0 = arith.constant 0 : index
    %0 = vector.load %arg1[%c0, %c0_0] : memref<512x12xbf16, #tpu.memory_space<vmem>>, vector<512x12xbf16>
    %cst = arith.constant 0.000000e+00 : bf16
    %1 = vector.broadcast %cst : bf16 to vector<512x12xbf16>
    %2 = arith.maximumf %0, %1 : vector<512x12xbf16>
    %c0_1 = arith.constant 0 : index
    %c0_2 = arith.constant 0 : index
    %3 = vector.load %arg2[%c0_1, %c0_2] : memref<12x4xbf16, #tpu.memory_space<vmem>>, vector<12x4xbf16>
    %cst_3 = arith.constant dense<0.000000e+00> : vector<512x4xf32>
    %4 = tpu.matmul %2, %3, %cst_3 {dimension_numbers = #tpu.dot_dimension_numbers<[1], [0], [0], [1], [0, 0, 1, 1], [], []>} : vector<512x12xbf16>, vector<12x4xbf16>, vector<512x4xf32> -> vector<512x4xf32>
    %c512_i32 = arith.constant 512 : i32
    %5 = arith.muli %arg0, %c512_i32 : i32
    %6 = tpu.assume_multiple %5, 8 : i32
    %7 = arith.index_cast %6 : i32 to index
    %c0_4 = arith.constant 0 : index
    %8 = vector.load %arg4[%7, %c0_4] : memref<512x4xf32, #tpu.memory_space<vmem>>, vector<512x4xf32>
    tpu.vector_store %arg4[%7, %c0_4], %4 {strides = array<i32>} : memref<512x4xf32, #tpu.memory_space<vmem>>, vector<512x4xf32>,
    %c0_i32 = arith.constant 0 : i32
    %9 = arith.cmpi eq, %arg0, %c0_i32 : i32
    %10 = arith.extui %9 : i1 to i32
    %c0_i32_5 = arith.constant 0 : i32
    %11 = arith.cmpi ne, %10, %c0_i32_5 : i32
    scf.if %11 {
      %c0_6 = arith.constant 0 : index
      %c0_7 = arith.constant 0 : index
      %12 = vector.load %arg4[%c0_6, %c0_7] : memref<512x4xf32, #tpu.memory_space<vmem>>, vector<512x4xf32>
      %cst_8 = arith.constant dense<0.000000e+00> : vector<4xf32>
      %13 = vector.multi_reduction <add>, %12, %cst_8 [0] : vector<512x4xf32> to vector<4xf32>
      %14 = vector.shape_cast %13 : vector<4xf32> to vector<1x4xf32>
      %cst_9 = arith.constant 5.120000e+02 : f32
      %15 = vector.broadcast %cst_9 : f32 to vector<1x4xf32>
      %16 = arith.divf %14, %15 : vector<1x4xf32>
      %17 = vector.broadcast %16 : vector<1x4xf32> to vector<512x4xf32>
      %18 = arith.subf %12, %17 : vector<512x4xf32>
      %19 = arith.mulf %18, %18 : vector<512x4xf32>
      %cst_10 = arith.constant dense<0.000000e+00> : vector<4xf32>
      %20 = vector.multi_reduction <add>, %19, %cst_10 [0] : vector<512x4xf32> to vector<4xf32>
      %21 = vector.shape_cast %20 : vector<4xf32> to vector<1x4xf32>
      %cst_11 = arith.constant 5.120000e+02 : f32
      %22 = vector.broadcast %cst_11 : f32 to vector<1x4xf32>
      %23 = arith.divf %21, %22 : vector<1x4xf32>
      %24 = vector.broadcast %16 : vector<1x4xf32> to vector<512x4xf32>
      %25 = arith.subf %12, %24 : vector<512x4xf32>
      %cst_12 = arith.constant 9.99999974E-6 : f32
      %26 = vector.broadcast %cst_12 : f32 to vector<1x4xf32>
      %27 = arith.addf %23, %26 : vector<1x4xf32>
      %28 = math.rsqrt %27 : vector<1x4xf32>
      %29 = vector.broadcast %28 : vector<1x4xf32> to vector<512x4xf32>
      %30 = arith.mulf %25, %29 : vector<512x4xf32>
      %31 = arith.truncf %30 : vector<512x4xf32> to vector<512x4xbf16>
      %c0_13 = arith.constant 0 : index
      %c0_14 = arith.constant 0 : index
      %32 = vector.load %arg3[%c0_13, %c0_14] : memref<512x4xbf16, #tpu.memory_space<vmem>>, vector<512x4xbf16>
      tpu.vector_store %arg3[%c0_13, %c0_14], %31 {strides = array<i32>} : memref<512x4xbf16, #tpu.memory_space<vmem>>, vector<512x4xbf16>,
    } else {
    }
    return
  }
  func.func @transform_0(%arg0: i32) -> (i32, i32) {
    %c0_i32 = arith.constant 0 : i32
    %c0_i32_0 = arith.constant 0 : i32
    return %arg0, %c0_i32 : i32, i32
  }
  func.func @transform_1(%arg0: i32) -> (i32, i32) {
    %c0_i32 = arith.constant 0 : i32
    %c0_i32_0 = arith.constant 0 : i32
    %c0_i32_1 = arith.constant 0 : i32
    return %c0_i32, %c0_i32_0 : i32, i32
  }
  func.func @transform_2(%arg0: i32) -> (i32, i32) {
    %c0_i32 = arith.constant 0 : i32
    %c0_i32_0 = arith.constant 0 : i32
    %c0_i32_1 = arith.constant 0 : i32
    return %c0_i32, %c0_i32_0 : i32, i32
  }
}

module attributes {stable_mosaic.version = 11 : i64} {
  func.func @_stem_kernel(%arg0: i32, %arg1: memref<1x18x18x4xf32, #tpu.memory_space<vmem>>, %arg2: memref<3x3x4x12xbf16, #tpu.memory_space<vmem>>, %arg3: memref<2x256x12xbf16, #tpu.memory_space<vmem>>, %arg4: memref<2x256x12xf32, #tpu.memory_space<vmem>>) attributes {dimension_semantics = [#tpu.dimension_semantics<arbitrary>], iteration_bounds = array<i64: 2>, scalar_prefetch = 0 : i64, scratch_operands = 1 : i64, tpu.core_type = #tpu.core_type<tc>, window_params = [{transform_indices = @transform_0, window_bounds = array<i64: 1, 18, 18, 4>}, {pipeline_mode = #tpu.pipeline_mode<synchronous>, transform_indices = @transform_1, window_bounds = array<i64: 3, 3, 4, 12>}, {pipeline_mode = #tpu.pipeline_mode<synchronous>, transform_indices = @transform_2, window_bounds = array<i64: 2, 256, 12>}]} {
    %c0 = arith.constant 0 : index
    %c0_0 = arith.constant 0 : index
    %c0_1 = arith.constant 0 : index
    %c0_2 = arith.constant 0 : index
    %0 = vector.load %arg1[%c0, %c0_0, %c0_1, %c0_2] : memref<1x18x18x4xf32, #tpu.memory_space<vmem>>, vector<1x18x18x4xf32>
    %1 = vector.shape_cast %0 : vector<1x18x18x4xf32> to vector<18x18x4xf32>
    %cst = arith.constant 0.000000e+00 : f32
    %2 = vector.broadcast %cst : f32 to vector<256x12xf32>
    %3 = vector.extract_strided_slice %1 {offsets = [0, 0, 0], sizes = [16, 16, 4], strides = [1, 1, 1]} : vector<18x18x4xf32> to vector<16x16x4xf32>
    %4 = vector.shape_cast %3 : vector<16x16x4xf32> to vector<256x4xf32>
    %5 = arith.truncf %4 : vector<256x4xf32> to vector<256x4xbf16>
    %c0_3 = arith.constant 0 : index
    %c0_4 = arith.constant 0 : index
    %c0_5 = arith.constant 0 : index
    %c0_6 = arith.constant 0 : index
    %6 = vector.load %arg2[%c0_3, %c0_4, %c0_5, %c0_6] : memref<3x3x4x12xbf16, #tpu.memory_space<vmem>>, vector<1x1x4x12xbf16>
    %7 = vector.shape_cast %6 : vector<1x1x4x12xbf16> to vector<4x12xbf16>
    %cst_7 = arith.constant dense<0.000000e+00> : vector<256x12xf32>
    %8 = tpu.matmul %5, %7, %cst_7 {dimension_numbers = #tpu.dot_dimension_numbers<[1], [0], [0], [1], [0, 0, 1, 1], [], []>} : vector<256x4xbf16>, vector<4x12xbf16>, vector<256x12xf32> -> vector<256x12xf32>
    %9 = arith.addf %2, %8 : vector<256x12xf32>
    %10 = vector.extract_strided_slice %1 {offsets = [0, 1, 0], sizes = [16, 16, 4], strides = [1, 1, 1]} : vector<18x18x4xf32> to vector<16x16x4xf32>
    %11 = vector.shape_cast %10 : vector<16x16x4xf32> to vector<256x4xf32>
    %12 = arith.truncf %11 : vector<256x4xf32> to vector<256x4xbf16>
    %c0_8 = arith.constant 0 : index
    %c1 = arith.constant 1 : index
    %c0_9 = arith.constant 0 : index
    %c0_10 = arith.constant 0 : index
    %13 = vector.load %arg2[%c0_8, %c1, %c0_9, %c0_10] : memref<3x3x4x12xbf16, #tpu.memory_space<vmem>>, vector<1x1x4x12xbf16>
    %14 = vector.shape_cast %13 : vector<1x1x4x12xbf16> to vector<4x12xbf16>
    %cst_11 = arith.constant dense<0.000000e+00> : vector<256x12xf32>
    %15 = tpu.matmul %12, %14, %cst_11 {dimension_numbers = #tpu.dot_dimension_numbers<[1], [0], [0], [1], [0, 0, 1, 1], [], []>} : vector<256x4xbf16>, vector<4x12xbf16>, vector<256x12xf32> -> vector<256x12xf32>
    %16 = arith.addf %9, %15 : vector<256x12xf32>
    %17 = vector.extract_strided_slice %1 {offsets = [0, 2, 0], sizes = [16, 16, 4], strides = [1, 1, 1]} : vector<18x18x4xf32> to vector<16x16x4xf32>
    %18 = vector.shape_cast %17 : vector<16x16x4xf32> to vector<256x4xf32>
    %19 = arith.truncf %18 : vector<256x4xf32> to vector<256x4xbf16>
    %c0_12 = arith.constant 0 : index
    %c2 = arith.constant 2 : index
    %c0_13 = arith.constant 0 : index
    %c0_14 = arith.constant 0 : index
    %20 = vector.load %arg2[%c0_12, %c2, %c0_13, %c0_14] : memref<3x3x4x12xbf16, #tpu.memory_space<vmem>>, vector<1x1x4x12xbf16>
    %21 = vector.shape_cast %20 : vector<1x1x4x12xbf16> to vector<4x12xbf16>
    %cst_15 = arith.constant dense<0.000000e+00> : vector<256x12xf32>
    %22 = tpu.matmul %19, %21, %cst_15 {dimension_numbers = #tpu.dot_dimension_numbers<[1], [0], [0], [1], [0, 0, 1, 1], [], []>} : vector<256x4xbf16>, vector<4x12xbf16>, vector<256x12xf32> -> vector<256x12xf32>
    %23 = arith.addf %16, %22 : vector<256x12xf32>
    %24 = vector.extract_strided_slice %1 {offsets = [1, 0, 0], sizes = [16, 16, 4], strides = [1, 1, 1]} : vector<18x18x4xf32> to vector<16x16x4xf32>
    %25 = vector.shape_cast %24 : vector<16x16x4xf32> to vector<256x4xf32>
    %26 = arith.truncf %25 : vector<256x4xf32> to vector<256x4xbf16>
    %c1_16 = arith.constant 1 : index
    %c0_17 = arith.constant 0 : index
    %c0_18 = arith.constant 0 : index
    %c0_19 = arith.constant 0 : index
    %27 = vector.load %arg2[%c1_16, %c0_17, %c0_18, %c0_19] : memref<3x3x4x12xbf16, #tpu.memory_space<vmem>>, vector<1x1x4x12xbf16>
    %28 = vector.shape_cast %27 : vector<1x1x4x12xbf16> to vector<4x12xbf16>
    %cst_20 = arith.constant dense<0.000000e+00> : vector<256x12xf32>
    %29 = tpu.matmul %26, %28, %cst_20 {dimension_numbers = #tpu.dot_dimension_numbers<[1], [0], [0], [1], [0, 0, 1, 1], [], []>} : vector<256x4xbf16>, vector<4x12xbf16>, vector<256x12xf32> -> vector<256x12xf32>
    %30 = arith.addf %23, %29 : vector<256x12xf32>
    %31 = vector.extract_strided_slice %1 {offsets = [1, 1, 0], sizes = [16, 16, 4], strides = [1, 1, 1]} : vector<18x18x4xf32> to vector<16x16x4xf32>
    %32 = vector.shape_cast %31 : vector<16x16x4xf32> to vector<256x4xf32>
    %33 = arith.truncf %32 : vector<256x4xf32> to vector<256x4xbf16>
    %c1_21 = arith.constant 1 : index
    %c1_22 = arith.constant 1 : index
    %c0_23 = arith.constant 0 : index
    %c0_24 = arith.constant 0 : index
    %34 = vector.load %arg2[%c1_21, %c1_22, %c0_23, %c0_24] : memref<3x3x4x12xbf16, #tpu.memory_space<vmem>>, vector<1x1x4x12xbf16>
    %35 = vector.shape_cast %34 : vector<1x1x4x12xbf16> to vector<4x12xbf16>
    %cst_25 = arith.constant dense<0.000000e+00> : vector<256x12xf32>
    %36 = tpu.matmul %33, %35, %cst_25 {dimension_numbers = #tpu.dot_dimension_numbers<[1], [0], [0], [1], [0, 0, 1, 1], [], []>} : vector<256x4xbf16>, vector<4x12xbf16>, vector<256x12xf32> -> vector<256x12xf32>
    %37 = arith.addf %30, %36 : vector<256x12xf32>
    %38 = vector.extract_strided_slice %1 {offsets = [1, 2, 0], sizes = [16, 16, 4], strides = [1, 1, 1]} : vector<18x18x4xf32> to vector<16x16x4xf32>
    %39 = vector.shape_cast %38 : vector<16x16x4xf32> to vector<256x4xf32>
    %40 = arith.truncf %39 : vector<256x4xf32> to vector<256x4xbf16>
    %c1_26 = arith.constant 1 : index
    %c2_27 = arith.constant 2 : index
    %c0_28 = arith.constant 0 : index
    %c0_29 = arith.constant 0 : index
    %41 = vector.load %arg2[%c1_26, %c2_27, %c0_28, %c0_29] : memref<3x3x4x12xbf16, #tpu.memory_space<vmem>>, vector<1x1x4x12xbf16>
    %42 = vector.shape_cast %41 : vector<1x1x4x12xbf16> to vector<4x12xbf16>
    %cst_30 = arith.constant dense<0.000000e+00> : vector<256x12xf32>
    %43 = tpu.matmul %40, %42, %cst_30 {dimension_numbers = #tpu.dot_dimension_numbers<[1], [0], [0], [1], [0, 0, 1, 1], [], []>} : vector<256x4xbf16>, vector<4x12xbf16>, vector<256x12xf32> -> vector<256x12xf32>
    %44 = arith.addf %37, %43 : vector<256x12xf32>
    %45 = vector.extract_strided_slice %1 {offsets = [2, 0, 0], sizes = [16, 16, 4], strides = [1, 1, 1]} : vector<18x18x4xf32> to vector<16x16x4xf32>
    %46 = vector.shape_cast %45 : vector<16x16x4xf32> to vector<256x4xf32>
    %47 = arith.truncf %46 : vector<256x4xf32> to vector<256x4xbf16>
    %c2_31 = arith.constant 2 : index
    %c0_32 = arith.constant 0 : index
    %c0_33 = arith.constant 0 : index
    %c0_34 = arith.constant 0 : index
    %48 = vector.load %arg2[%c2_31, %c0_32, %c0_33, %c0_34] : memref<3x3x4x12xbf16, #tpu.memory_space<vmem>>, vector<1x1x4x12xbf16>
    %49 = vector.shape_cast %48 : vector<1x1x4x12xbf16> to vector<4x12xbf16>
    %cst_35 = arith.constant dense<0.000000e+00> : vector<256x12xf32>
    %50 = tpu.matmul %47, %49, %cst_35 {dimension_numbers = #tpu.dot_dimension_numbers<[1], [0], [0], [1], [0, 0, 1, 1], [], []>} : vector<256x4xbf16>, vector<4x12xbf16>, vector<256x12xf32> -> vector<256x12xf32>
    %51 = arith.addf %44, %50 : vector<256x12xf32>
    %52 = vector.extract_strided_slice %1 {offsets = [2, 1, 0], sizes = [16, 16, 4], strides = [1, 1, 1]} : vector<18x18x4xf32> to vector<16x16x4xf32>
    %53 = vector.shape_cast %52 : vector<16x16x4xf32> to vector<256x4xf32>
    %54 = arith.truncf %53 : vector<256x4xf32> to vector<256x4xbf16>
    %c2_36 = arith.constant 2 : index
    %c1_37 = arith.constant 1 : index
    %c0_38 = arith.constant 0 : index
    %c0_39 = arith.constant 0 : index
    %55 = vector.load %arg2[%c2_36, %c1_37, %c0_38, %c0_39] : memref<3x3x4x12xbf16, #tpu.memory_space<vmem>>, vector<1x1x4x12xbf16>
    %56 = vector.shape_cast %55 : vector<1x1x4x12xbf16> to vector<4x12xbf16>
    %cst_40 = arith.constant dense<0.000000e+00> : vector<256x12xf32>
    %57 = tpu.matmul %54, %56, %cst_40 {dimension_numbers = #tpu.dot_dimension_numbers<[1], [0], [0], [1], [0, 0, 1, 1], [], []>} : vector<256x4xbf16>, vector<4x12xbf16>, vector<256x12xf32> -> vector<256x12xf32>
    %58 = arith.addf %51, %57 : vector<256x12xf32>
    %59 = vector.extract_strided_slice %1 {offsets = [2, 2, 0], sizes = [16, 16, 4], strides = [1, 1, 1]} : vector<18x18x4xf32> to vector<16x16x4xf32>
    %60 = vector.shape_cast %59 : vector<16x16x4xf32> to vector<256x4xf32>
    %61 = arith.truncf %60 : vector<256x4xf32> to vector<256x4xbf16>
    %c2_41 = arith.constant 2 : index
    %c2_42 = arith.constant 2 : index
    %c0_43 = arith.constant 0 : index
    %c0_44 = arith.constant 0 : index
    %62 = vector.load %arg2[%c2_41, %c2_42, %c0_43, %c0_44] : memref<3x3x4x12xbf16, #tpu.memory_space<vmem>>, vector<1x1x4x12xbf16>
    %63 = vector.shape_cast %62 : vector<1x1x4x12xbf16> to vector<4x12xbf16>
    %cst_45 = arith.constant dense<0.000000e+00> : vector<256x12xf32>
    %64 = tpu.matmul %61, %63, %cst_45 {dimension_numbers = #tpu.dot_dimension_numbers<[1], [0], [0], [1], [0, 0, 1, 1], [], []>} : vector<256x4xbf16>, vector<4x12xbf16>, vector<256x12xf32> -> vector<256x12xf32>
    %65 = arith.addf %58, %64 : vector<256x12xf32>
    %66 = arith.index_cast %arg0 : i32 to index
    %c0_46 = arith.constant 0 : index
    %c0_47 = arith.constant 0 : index
    %67 = vector.load %arg4[%66, %c0_46, %c0_47] : memref<2x256x12xf32, #tpu.memory_space<vmem>>, vector<1x256x12xf32>
    %68 = vector.shape_cast %67 : vector<1x256x12xf32> to vector<256x12xf32>
    %69 = vector.shape_cast %65 : vector<256x12xf32> to vector<1x256x12xf32>
    tpu.vector_store %arg4[%66, %c0_46, %c0_47], %69 {strides = array<i32>} : memref<2x256x12xf32, #tpu.memory_space<vmem>>, vector<1x256x12xf32>,
    %c1_i32 = arith.constant 1 : i32
    %70 = arith.cmpi eq, %arg0, %c1_i32 : i32
    %71 = arith.extui %70 : i1 to i32
    %c0_i32 = arith.constant 0 : i32
    %72 = arith.cmpi ne, %71, %c0_i32 : i32
    scf.if %72 {
      %c0_48 = arith.constant 0 : index
      %c0_49 = arith.constant 0 : index
      %c0_50 = arith.constant 0 : index
      %73 = vector.load %arg4[%c0_48, %c0_49, %c0_50] : memref<2x256x12xf32, #tpu.memory_space<vmem>>, vector<2x256x12xf32>
      %cst_51 = arith.constant dense<0.000000e+00> : vector<12xf32>
      %74 = vector.multi_reduction <add>, %73, %cst_51 [0, 1] : vector<2x256x12xf32> to vector<12xf32>
      %75 = vector.shape_cast %74 : vector<12xf32> to vector<1x1x12xf32>
      %cst_52 = arith.constant 5.120000e+02 : f32
      %76 = vector.broadcast %cst_52 : f32 to vector<1x1x12xf32>
      %77 = arith.divf %75, %76 : vector<1x1x12xf32>
      %78 = vector.broadcast %77 : vector<1x1x12xf32> to vector<2x256x12xf32>
      %79 = arith.subf %73, %78 : vector<2x256x12xf32>
      %80 = arith.mulf %79, %79 : vector<2x256x12xf32>
      %cst_53 = arith.constant dense<0.000000e+00> : vector<12xf32>
      %81 = vector.multi_reduction <add>, %80, %cst_53 [0, 1] : vector<2x256x12xf32> to vector<12xf32>
      %82 = vector.shape_cast %81 : vector<12xf32> to vector<1x1x12xf32>
      %cst_54 = arith.constant 5.120000e+02 : f32
      %83 = vector.broadcast %cst_54 : f32 to vector<1x1x12xf32>
      %84 = arith.divf %82, %83 : vector<1x1x12xf32>
      %85 = vector.broadcast %77 : vector<1x1x12xf32> to vector<2x256x12xf32>
      %86 = arith.subf %73, %85 : vector<2x256x12xf32>
      %cst_55 = arith.constant 9.99999974E-6 : f32
      %87 = vector.broadcast %cst_55 : f32 to vector<1x1x12xf32>
      %88 = arith.addf %84, %87 : vector<1x1x12xf32>
      %89 = math.rsqrt %88 : vector<1x1x12xf32>
      %90 = vector.broadcast %89 : vector<1x1x12xf32> to vector<2x256x12xf32>
      %91 = arith.mulf %86, %90 : vector<2x256x12xf32>
      %92 = arith.truncf %91 : vector<2x256x12xf32> to vector<2x256x12xbf16>
      %c0_56 = arith.constant 0 : index
      %c0_57 = arith.constant 0 : index
      %c0_58 = arith.constant 0 : index
      %93 = vector.load %arg3[%c0_56, %c0_57, %c0_58] : memref<2x256x12xbf16, #tpu.memory_space<vmem>>, vector<2x256x12xbf16>
      tpu.vector_store %arg3[%c0_56, %c0_57, %c0_58], %92 {strides = array<i32>} : memref<2x256x12xbf16, #tpu.memory_space<vmem>>, vector<2x256x12xbf16>,
    } else {
    }
    return
  }
  func.func @transform_0(%arg0: i32) -> (i32, i32, i32, i32) {
    %c0_i32 = arith.constant 0 : i32
    %c0_i32_0 = arith.constant 0 : i32
    %c0_i32_1 = arith.constant 0 : i32
    %c0_i32_2 = arith.constant 0 : i32
    return %arg0, %c0_i32, %c0_i32_0, %c0_i32_1 : i32, i32, i32, i32
  }
  func.func @transform_1(%arg0: i32) -> (i32, i32, i32, i32) {
    %c0_i32 = arith.constant 0 : i32
    %c0_i32_0 = arith.constant 0 : i32
    %c0_i32_1 = arith.constant 0 : i32
    %c0_i32_2 = arith.constant 0 : i32
    %c0_i32_3 = arith.constant 0 : i32
    return %c0_i32, %c0_i32_0, %c0_i32_1, %c0_i32_2 : i32, i32, i32, i32
  }
  func.func @transform_2(%arg0: i32) -> (i32, i32, i32) {
    %c0_i32 = arith.constant 0 : i32
    %c0_i32_0 = arith.constant 0 : i32
    %c0_i32_1 = arith.constant 0 : i32
    %c0_i32_2 = arith.constant 0 : i32
    return %c0_i32, %c0_i32_0, %c0_i32_1 : i32, i32, i32
  }
}

module attributes {stable_mosaic.version = 11 : i64} {
  func.func @_stdconv_bn_kernel(%arg0: i32, %arg1: memref<512x8xbf16, #tpu.memory_space<vmem>>, %arg2: memref<8x8xbf16, #tpu.memory_space<vmem>>, %arg3: memref<512x8xbf16, #tpu.memory_space<vmem>>, %arg4: memref<512x8xf32, #tpu.memory_space<vmem>>) attributes {dimension_semantics = [#tpu.dimension_semantics<arbitrary>], iteration_bounds = array<i64: 1>, scalar_prefetch = 0 : i64, scratch_operands = 1 : i64, tpu.core_type = #tpu.core_type<tc>, window_params = [{transform_indices = @transform_0, window_bounds = array<i64: 512, 8>}, {pipeline_mode = #tpu.pipeline_mode<synchronous>, transform_indices = @transform_1, window_bounds = array<i64: 8, 8>}, {pipeline_mode = #tpu.pipeline_mode<synchronous>, transform_indices = @transform_2, window_bounds = array<i64: 512, 8>}]} {
    %c0 = arith.constant 0 : index
    %c0_0 = arith.constant 0 : index
    %0 = vector.load %arg1[%c0, %c0_0] : memref<512x8xbf16, #tpu.memory_space<vmem>>, vector<512x8xbf16>
    %cst = arith.constant 0.000000e+00 : bf16
    %1 = vector.broadcast %cst : bf16 to vector<512x8xbf16>
    %2 = arith.maximumf %0, %1 : vector<512x8xbf16>
    %c0_1 = arith.constant 0 : index
    %c0_2 = arith.constant 0 : index
    %3 = vector.load %arg2[%c0_1, %c0_2] : memref<8x8xbf16, #tpu.memory_space<vmem>>, vector<8x8xbf16>
    %cst_3 = arith.constant dense<0.000000e+00> : vector<512x8xf32>
    %4 = tpu.matmul %2, %3, %cst_3 {dimension_numbers = #tpu.dot_dimension_numbers<[1], [0], [0], [1], [0, 0, 1, 1], [], []>} : vector<512x8xbf16>, vector<8x8xbf16>, vector<512x8xf32> -> vector<512x8xf32>
    %c512_i32 = arith.constant 512 : i32
    %5 = arith.muli %arg0, %c512_i32 : i32
    %6 = tpu.assume_multiple %5, 8 : i32
    %7 = arith.index_cast %6 : i32 to index
    %c0_4 = arith.constant 0 : index
    %8 = vector.load %arg4[%7, %c0_4] : memref<512x8xf32, #tpu.memory_space<vmem>>, vector<512x8xf32>
    tpu.vector_store %arg4[%7, %c0_4], %4 {strides = array<i32>} : memref<512x8xf32, #tpu.memory_space<vmem>>, vector<512x8xf32>,
    %c0_i32 = arith.constant 0 : i32
    %9 = arith.cmpi eq, %arg0, %c0_i32 : i32
    %10 = arith.extui %9 : i1 to i32
    %c0_i32_5 = arith.constant 0 : i32
    %11 = arith.cmpi ne, %10, %c0_i32_5 : i32
    scf.if %11 {
      %c0_6 = arith.constant 0 : index
      %c0_7 = arith.constant 0 : index
      %12 = vector.load %arg4[%c0_6, %c0_7] : memref<512x8xf32, #tpu.memory_space<vmem>>, vector<512x8xf32>
      %cst_8 = arith.constant dense<0.000000e+00> : vector<8xf32>
      %13 = vector.multi_reduction <add>, %12, %cst_8 [0] : vector<512x8xf32> to vector<8xf32>
      %14 = vector.shape_cast %13 : vector<8xf32> to vector<1x8xf32>
      %cst_9 = arith.constant 5.120000e+02 : f32
      %15 = vector.broadcast %cst_9 : f32 to vector<1x8xf32>
      %16 = arith.divf %14, %15 : vector<1x8xf32>
      %17 = vector.broadcast %16 : vector<1x8xf32> to vector<512x8xf32>
      %18 = arith.subf %12, %17 : vector<512x8xf32>
      %19 = arith.mulf %18, %18 : vector<512x8xf32>
      %cst_10 = arith.constant dense<0.000000e+00> : vector<8xf32>
      %20 = vector.multi_reduction <add>, %19, %cst_10 [0] : vector<512x8xf32> to vector<8xf32>
      %21 = vector.shape_cast %20 : vector<8xf32> to vector<1x8xf32>
      %cst_11 = arith.constant 5.120000e+02 : f32
      %22 = vector.broadcast %cst_11 : f32 to vector<1x8xf32>
      %23 = arith.divf %21, %22 : vector<1x8xf32>
      %24 = vector.broadcast %16 : vector<1x8xf32> to vector<512x8xf32>
      %25 = arith.subf %12, %24 : vector<512x8xf32>
      %cst_12 = arith.constant 9.99999974E-6 : f32
      %26 = vector.broadcast %cst_12 : f32 to vector<1x8xf32>
      %27 = arith.addf %23, %26 : vector<1x8xf32>
      %28 = math.rsqrt %27 : vector<1x8xf32>
      %29 = vector.broadcast %28 : vector<1x8xf32> to vector<512x8xf32>
      %30 = arith.mulf %25, %29 : vector<512x8xf32>
      %31 = arith.truncf %30 : vector<512x8xf32> to vector<512x8xbf16>
      %c0_13 = arith.constant 0 : index
      %c0_14 = arith.constant 0 : index
      %32 = vector.load %arg3[%c0_13, %c0_14] : memref<512x8xbf16, #tpu.memory_space<vmem>>, vector<512x8xbf16>
      tpu.vector_store %arg3[%c0_13, %c0_14], %31 {strides = array<i32>} : memref<512x8xbf16, #tpu.memory_space<vmem>>, vector<512x8xbf16>,
    } else {
    }
    return
  }
  func.func @transform_0(%arg0: i32) -> (i32, i32) {
    %c0_i32 = arith.constant 0 : i32
    %c0_i32_0 = arith.constant 0 : i32
    return %arg0, %c0_i32 : i32, i32
  }
  func.func @transform_1(%arg0: i32) -> (i32, i32) {
    %c0_i32 = arith.constant 0 : i32
    %c0_i32_0 = arith.constant 0 : i32
    %c0_i32_1 = arith.constant 0 : i32
    return %c0_i32, %c0_i32_0 : i32, i32
  }
  func.func @transform_2(%arg0: i32) -> (i32, i32) {
    %c0_i32 = arith.constant 0 : i32
    %c0_i32_0 = arith.constant 0 : i32
    %c0_i32_1 = arith.constant 0 : i32
    return %c0_i32, %c0_i32_0 : i32, i32
  }
}

module attributes {stable_mosaic.version = 11 : i64} {
  func.func @_stdconv_bn_kernel(%arg0: i32, %arg1: memref<512x12xbf16, #tpu.memory_space<vmem>>, %arg2: memref<12x8xbf16, #tpu.memory_space<vmem>>, %arg3: memref<512x8xbf16, #tpu.memory_space<vmem>>, %arg4: memref<512x8xf32, #tpu.memory_space<vmem>>) attributes {dimension_semantics = [#tpu.dimension_semantics<arbitrary>], iteration_bounds = array<i64: 1>, scalar_prefetch = 0 : i64, scratch_operands = 1 : i64, tpu.core_type = #tpu.core_type<tc>, window_params = [{transform_indices = @transform_0, window_bounds = array<i64: 512, 12>}, {pipeline_mode = #tpu.pipeline_mode<synchronous>, transform_indices = @transform_1, window_bounds = array<i64: 12, 8>}, {pipeline_mode = #tpu.pipeline_mode<synchronous>, transform_indices = @transform_2, window_bounds = array<i64: 512, 8>}]} {
    %c0 = arith.constant 0 : index
    %c0_0 = arith.constant 0 : index
    %0 = vector.load %arg1[%c0, %c0_0] : memref<512x12xbf16, #tpu.memory_space<vmem>>, vector<512x12xbf16>
    %cst = arith.constant 0.000000e+00 : bf16
    %1 = vector.broadcast %cst : bf16 to vector<512x12xbf16>
    %2 = arith.maximumf %0, %1 : vector<512x12xbf16>
    %c0_1 = arith.constant 0 : index
    %c0_2 = arith.constant 0 : index
    %3 = vector.load %arg2[%c0_1, %c0_2] : memref<12x8xbf16, #tpu.memory_space<vmem>>, vector<12x8xbf16>
    %cst_3 = arith.constant dense<0.000000e+00> : vector<512x8xf32>
    %4 = tpu.matmul %2, %3, %cst_3 {dimension_numbers = #tpu.dot_dimension_numbers<[1], [0], [0], [1], [0, 0, 1, 1], [], []>} : vector<512x12xbf16>, vector<12x8xbf16>, vector<512x8xf32> -> vector<512x8xf32>
    %c512_i32 = arith.constant 512 : i32
    %5 = arith.muli %arg0, %c512_i32 : i32
    %6 = tpu.assume_multiple %5, 8 : i32
    %7 = arith.index_cast %6 : i32 to index
    %c0_4 = arith.constant 0 : index
    %8 = vector.load %arg4[%7, %c0_4] : memref<512x8xf32, #tpu.memory_space<vmem>>, vector<512x8xf32>
    tpu.vector_store %arg4[%7, %c0_4], %4 {strides = array<i32>} : memref<512x8xf32, #tpu.memory_space<vmem>>, vector<512x8xf32>,
    %c0_i32 = arith.constant 0 : i32
    %9 = arith.cmpi eq, %arg0, %c0_i32 : i32
    %10 = arith.extui %9 : i1 to i32
    %c0_i32_5 = arith.constant 0 : i32
    %11 = arith.cmpi ne, %10, %c0_i32_5 : i32
    scf.if %11 {
      %c0_6 = arith.constant 0 : index
      %c0_7 = arith.constant 0 : index
      %12 = vector.load %arg4[%c0_6, %c0_7] : memref<512x8xf32, #tpu.memory_space<vmem>>, vector<512x8xf32>
      %cst_8 = arith.constant dense<0.000000e+00> : vector<8xf32>
      %13 = vector.multi_reduction <add>, %12, %cst_8 [0] : vector<512x8xf32> to vector<8xf32>
      %14 = vector.shape_cast %13 : vector<8xf32> to vector<1x8xf32>
      %cst_9 = arith.constant 5.120000e+02 : f32
      %15 = vector.broadcast %cst_9 : f32 to vector<1x8xf32>
      %16 = arith.divf %14, %15 : vector<1x8xf32>
      %17 = vector.broadcast %16 : vector<1x8xf32> to vector<512x8xf32>
      %18 = arith.subf %12, %17 : vector<512x8xf32>
      %19 = arith.mulf %18, %18 : vector<512x8xf32>
      %cst_10 = arith.constant dense<0.000000e+00> : vector<8xf32>
      %20 = vector.multi_reduction <add>, %19, %cst_10 [0] : vector<512x8xf32> to vector<8xf32>
      %21 = vector.shape_cast %20 : vector<8xf32> to vector<1x8xf32>
      %cst_11 = arith.constant 5.120000e+02 : f32
      %22 = vector.broadcast %cst_11 : f32 to vector<1x8xf32>
      %23 = arith.divf %21, %22 : vector<1x8xf32>
      %24 = vector.broadcast %16 : vector<1x8xf32> to vector<512x8xf32>
      %25 = arith.subf %12, %24 : vector<512x8xf32>
      %cst_12 = arith.constant 9.99999974E-6 : f32
      %26 = vector.broadcast %cst_12 : f32 to vector<1x8xf32>
      %27 = arith.addf %23, %26 : vector<1x8xf32>
      %28 = math.rsqrt %27 : vector<1x8xf32>
      %29 = vector.broadcast %28 : vector<1x8xf32> to vector<512x8xf32>
      %30 = arith.mulf %25, %29 : vector<512x8xf32>
      %31 = arith.truncf %30 : vector<512x8xf32> to vector<512x8xbf16>
      %c0_13 = arith.constant 0 : index
      %c0_14 = arith.constant 0 : index
      %32 = vector.load %arg3[%c0_13, %c0_14] : memref<512x8xbf16, #tpu.memory_space<vmem>>, vector<512x8xbf16>
      tpu.vector_store %arg3[%c0_13, %c0_14], %31 {strides = array<i32>} : memref<512x8xbf16, #tpu.memory_space<vmem>>, vector<512x8xbf16>,
    } else {
    }
    return
  }
  func.func @transform_0(%arg0: i32) -> (i32, i32) {
    %c0_i32 = arith.constant 0 : i32
    %c0_i32_0 = arith.constant 0 : i32
    return %arg0, %c0_i32 : i32, i32
  }
  func.func @transform_1(%arg0: i32) -> (i32, i32) {
    %c0_i32 = arith.constant 0 : i32
    %c0_i32_0 = arith.constant 0 : i32
    %c0_i32_1 = arith.constant 0 : i32
    return %c0_i32, %c0_i32_0 : i32, i32
  }
  func.func @transform_2(%arg0: i32) -> (i32, i32) {
    %c0_i32 = arith.constant 0 : i32
    %c0_i32_0 = arith.constant 0 : i32
    %c0_i32_1 = arith.constant 0 : i32
    return %c0_i32, %c0_i32_0 : i32, i32
  }
}

module attributes {stable_mosaic.version = 11 : i64} {
  func.func @_fr_bn_kernel(%arg0: i32, %arg1: memref<1x128x16xbf16, #tpu.memory_space<vmem>>, %arg2: memref<1x16x8xbf16, #tpu.memory_space<vmem>>, %arg3: memref<1x128x8xbf16, #tpu.memory_space<vmem>>) attributes {dimension_semantics = [#tpu.dimension_semantics<parallel>], iteration_bounds = array<i64: 4>, scalar_prefetch = 0 : i64, scratch_operands = 0 : i64, tpu.core_type = #tpu.core_type<tc>, window_params = [{transform_indices = @transform_0, window_bounds = array<i64: 1, 128, 16>}, {transform_indices = @transform_1, window_bounds = array<i64: 1, 16, 8>}, {transform_indices = @transform_2, window_bounds = array<i64: 1, 128, 8>}]} {
    %c0 = arith.constant 0 : index
    %c0_0 = arith.constant 0 : index
    %c0_1 = arith.constant 0 : index
    %0 = vector.load %arg1[%c0, %c0_0, %c0_1] : memref<1x128x16xbf16, #tpu.memory_space<vmem>>, vector<1x128x16xbf16>
    %1 = vector.shape_cast %0 : vector<1x128x16xbf16> to vector<128x16xbf16>
    %cst = arith.constant 0.000000e+00 : bf16
    %2 = vector.broadcast %cst : bf16 to vector<128x16xbf16>
    %3 = arith.maximumf %1, %2 : vector<128x16xbf16>
    %c0_2 = arith.constant 0 : index
    %c0_3 = arith.constant 0 : index
    %c0_4 = arith.constant 0 : index
    %4 = vector.load %arg2[%c0_2, %c0_3, %c0_4] : memref<1x16x8xbf16, #tpu.memory_space<vmem>>, vector<1x16x8xbf16>
    %5 = vector.shape_cast %4 : vector<1x16x8xbf16> to vector<16x8xbf16>
    %cst_5 = arith.constant dense<0.000000e+00> : vector<128x8xf32>
    %6 = tpu.matmul %3, %5, %cst_5 {dimension_numbers = #tpu.dot_dimension_numbers<[1], [0], [0], [1], [0, 0, 1, 1], [], []>} : vector<128x16xbf16>, vector<16x8xbf16>, vector<128x8xf32> -> vector<128x8xf32>
    %cst_6 = arith.constant dense<0.000000e+00> : vector<8xf32>
    %7 = vector.multi_reduction <add>, %6, %cst_6 [0] : vector<128x8xf32> to vector<8xf32>
    %8 = vector.shape_cast %7 : vector<8xf32> to vector<1x8xf32>
    %cst_7 = arith.constant 1.280000e+02 : f32
    %9 = vector.broadcast %cst_7 : f32 to vector<1x8xf32>
    %10 = arith.divf %8, %9 : vector<1x8xf32>
    %11 = vector.broadcast %10 : vector<1x8xf32> to vector<128x8xf32>
    %12 = arith.subf %6, %11 : vector<128x8xf32>
    %13 = arith.mulf %12, %12 : vector<128x8xf32>
    %cst_8 = arith.constant dense<0.000000e+00> : vector<8xf32>
    %14 = vector.multi_reduction <add>, %13, %cst_8 [0] : vector<128x8xf32> to vector<8xf32>
    %15 = vector.shape_cast %14 : vector<8xf32> to vector<1x8xf32>
    %cst_9 = arith.constant 1.280000e+02 : f32
    %16 = vector.broadcast %cst_9 : f32 to vector<1x8xf32>
    %17 = arith.divf %15, %16 : vector<1x8xf32>
    %18 = vector.broadcast %10 : vector<1x8xf32> to vector<128x8xf32>
    %19 = arith.subf %6, %18 : vector<128x8xf32>
    %cst_10 = arith.constant 9.99999974E-6 : f32
    %20 = vector.broadcast %cst_10 : f32 to vector<1x8xf32>
    %21 = arith.addf %17, %20 : vector<1x8xf32>
    %22 = math.rsqrt %21 : vector<1x8xf32>
    %23 = vector.broadcast %22 : vector<1x8xf32> to vector<128x8xf32>
    %24 = arith.mulf %19, %23 : vector<128x8xf32>
    %25 = arith.truncf %24 : vector<128x8xf32> to vector<128x8xbf16>
    %c0_11 = arith.constant 0 : index
    %c0_12 = arith.constant 0 : index
    %c0_13 = arith.constant 0 : index
    %26 = vector.load %arg3[%c0_11, %c0_12, %c0_13] : memref<1x128x8xbf16, #tpu.memory_space<vmem>>, vector<1x128x8xbf16>
    %27 = vector.shape_cast %26 : vector<1x128x8xbf16> to vector<128x8xbf16>
    %28 = vector.shape_cast %25 : vector<128x8xbf16> to vector<1x128x8xbf16>
    tpu.vector_store %arg3[%c0_11, %c0_12, %c0_13], %28 {strides = array<i32>} : memref<1x128x8xbf16, #tpu.memory_space<vmem>>, vector<1x128x8xbf16>,
    return
  }
  func.func @transform_0(%arg0: i32) -> (i32, i32, i32) {
    %c0_i32 = arith.constant 0 : i32
    %c0_i32_0 = arith.constant 0 : i32
    %c0_i32_1 = arith.constant 0 : i32
    return %arg0, %c0_i32, %c0_i32_0 : i32, i32, i32
  }
  func.func @transform_1(%arg0: i32) -> (i32, i32, i32) {
    %c0_i32 = arith.constant 0 : i32
    %c0_i32_0 = arith.constant 0 : i32
    %c0_i32_1 = arith.constant 0 : i32
    return %arg0, %c0_i32, %c0_i32_0 : i32, i32, i32
  }
  func.func @transform_2(%arg0: i32) -> (i32, i32, i32) {
    %c0_i32 = arith.constant 0 : i32
    %c0_i32_0 = arith.constant 0 : i32
    %c0_i32_1 = arith.constant 0 : i32
    return %arg0, %c0_i32, %c0_i32_0 : i32, i32, i32
  }
}

module attributes {stable_mosaic.version = 11 : i64} {
  func.func @_stdconv_bn_kernel(%arg0: i32, %arg1: memref<128x16xbf16, #tpu.memory_space<vmem>>, %arg2: memref<16x16xbf16, #tpu.memory_space<vmem>>, %arg3: memref<128x16xbf16, #tpu.memory_space<vmem>>, %arg4: memref<128x16xf32, #tpu.memory_space<vmem>>) attributes {dimension_semantics = [#tpu.dimension_semantics<arbitrary>], iteration_bounds = array<i64: 1>, scalar_prefetch = 0 : i64, scratch_operands = 1 : i64, tpu.core_type = #tpu.core_type<tc>, window_params = [{transform_indices = @transform_0, window_bounds = array<i64: 128, 16>}, {pipeline_mode = #tpu.pipeline_mode<synchronous>, transform_indices = @transform_1, window_bounds = array<i64: 16, 16>}, {pipeline_mode = #tpu.pipeline_mode<synchronous>, transform_indices = @transform_2, window_bounds = array<i64: 128, 16>}]} {
    %c0 = arith.constant 0 : index
    %c0_0 = arith.constant 0 : index
    %0 = vector.load %arg1[%c0, %c0_0] : memref<128x16xbf16, #tpu.memory_space<vmem>>, vector<128x16xbf16>
    %cst = arith.constant 0.000000e+00 : bf16
    %1 = vector.broadcast %cst : bf16 to vector<128x16xbf16>
    %2 = arith.maximumf %0, %1 : vector<128x16xbf16>
    %c0_1 = arith.constant 0 : index
    %c0_2 = arith.constant 0 : index
    %3 = vector.load %arg2[%c0_1, %c0_2] : memref<16x16xbf16, #tpu.memory_space<vmem>>, vector<16x16xbf16>
    %cst_3 = arith.constant dense<0.000000e+00> : vector<128x16xf32>
    %4 = tpu.matmul %2, %3, %cst_3 {dimension_numbers = #tpu.dot_dimension_numbers<[1], [0], [0], [1], [0, 0, 1, 1], [], []>} : vector<128x16xbf16>, vector<16x16xbf16>, vector<128x16xf32> -> vector<128x16xf32>
    %c128_i32 = arith.constant 128 : i32
    %5 = arith.muli %arg0, %c128_i32 : i32
    %6 = tpu.assume_multiple %5, 8 : i32
    %7 = arith.index_cast %6 : i32 to index
    %c0_4 = arith.constant 0 : index
    %8 = vector.load %arg4[%7, %c0_4] : memref<128x16xf32, #tpu.memory_space<vmem>>, vector<128x16xf32>
    tpu.vector_store %arg4[%7, %c0_4], %4 {strides = array<i32>} : memref<128x16xf32, #tpu.memory_space<vmem>>, vector<128x16xf32>,
    %c0_i32 = arith.constant 0 : i32
    %9 = arith.cmpi eq, %arg0, %c0_i32 : i32
    %10 = arith.extui %9 : i1 to i32
    %c0_i32_5 = arith.constant 0 : i32
    %11 = arith.cmpi ne, %10, %c0_i32_5 : i32
    scf.if %11 {
      %c0_6 = arith.constant 0 : index
      %c0_7 = arith.constant 0 : index
      %12 = vector.load %arg4[%c0_6, %c0_7] : memref<128x16xf32, #tpu.memory_space<vmem>>, vector<128x16xf32>
      %cst_8 = arith.constant dense<0.000000e+00> : vector<16xf32>
      %13 = vector.multi_reduction <add>, %12, %cst_8 [0] : vector<128x16xf32> to vector<16xf32>
      %14 = vector.shape_cast %13 : vector<16xf32> to vector<1x16xf32>
      %cst_9 = arith.constant 1.280000e+02 : f32
      %15 = vector.broadcast %cst_9 : f32 to vector<1x16xf32>
      %16 = arith.divf %14, %15 : vector<1x16xf32>
      %17 = vector.broadcast %16 : vector<1x16xf32> to vector<128x16xf32>
      %18 = arith.subf %12, %17 : vector<128x16xf32>
      %19 = arith.mulf %18, %18 : vector<128x16xf32>
      %cst_10 = arith.constant dense<0.000000e+00> : vector<16xf32>
      %20 = vector.multi_reduction <add>, %19, %cst_10 [0] : vector<128x16xf32> to vector<16xf32>
      %21 = vector.shape_cast %20 : vector<16xf32> to vector<1x16xf32>
      %cst_11 = arith.constant 1.280000e+02 : f32
      %22 = vector.broadcast %cst_11 : f32 to vector<1x16xf32>
      %23 = arith.divf %21, %22 : vector<1x16xf32>
      %24 = vector.broadcast %16 : vector<1x16xf32> to vector<128x16xf32>
      %25 = arith.subf %12, %24 : vector<128x16xf32>
      %cst_12 = arith.constant 9.99999974E-6 : f32
      %26 = vector.broadcast %cst_12 : f32 to vector<1x16xf32>
      %27 = arith.addf %23, %26 : vector<1x16xf32>
      %28 = math.rsqrt %27 : vector<1x16xf32>
      %29 = vector.broadcast %28 : vector<1x16xf32> to vector<128x16xf32>
      %30 = arith.mulf %25, %29 : vector<128x16xf32>
      %31 = arith.truncf %30 : vector<128x16xf32> to vector<128x16xbf16>
      %c0_13 = arith.constant 0 : index
      %c0_14 = arith.constant 0 : index
      %32 = vector.load %arg3[%c0_13, %c0_14] : memref<128x16xbf16, #tpu.memory_space<vmem>>, vector<128x16xbf16>
      tpu.vector_store %arg3[%c0_13, %c0_14], %31 {strides = array<i32>} : memref<128x16xbf16, #tpu.memory_space<vmem>>, vector<128x16xbf16>,
    } else {
    }
    return
  }
  func.func @transform_0(%arg0: i32) -> (i32, i32) {
    %c0_i32 = arith.constant 0 : i32
    %c0_i32_0 = arith.constant 0 : i32
    return %arg0, %c0_i32 : i32, i32
  }
  func.func @transform_1(%arg0: i32) -> (i32, i32) {
    %c0_i32 = arith.constant 0 : i32
    %c0_i32_0 = arith.constant 0 : i32
    %c0_i32_1 = arith.constant 0 : i32
    return %c0_i32, %c0_i32_0 : i32, i32
  }
  func.func @transform_2(%arg0: i32) -> (i32, i32) {
    %c0_i32 = arith.constant 0 : i32
    %c0_i32_0 = arith.constant 0 : i32
    %c0_i32_1 = arith.constant 0 : i32
    return %c0_i32, %c0_i32_0 : i32, i32
  }
}

module attributes {stable_mosaic.version = 11 : i64} {
  func.func @_fr_bn_kernel(%arg0: i32, %arg1: memref<1x128x16xbf16, #tpu.memory_space<vmem>>, %arg2: memref<1x16x16xbf16, #tpu.memory_space<vmem>>, %arg3: memref<1x128x16xbf16, #tpu.memory_space<vmem>>) attributes {dimension_semantics = [#tpu.dimension_semantics<parallel>], iteration_bounds = array<i64: 1>, scalar_prefetch = 0 : i64, scratch_operands = 0 : i64, tpu.core_type = #tpu.core_type<tc>, window_params = [{transform_indices = @transform_0, window_bounds = array<i64: 1, 128, 16>}, {transform_indices = @transform_1, window_bounds = array<i64: 1, 16, 16>}, {transform_indices = @transform_2, window_bounds = array<i64: 1, 128, 16>}]} {
    %c0 = arith.constant 0 : index
    %c0_0 = arith.constant 0 : index
    %c0_1 = arith.constant 0 : index
    %0 = vector.load %arg1[%c0, %c0_0, %c0_1] : memref<1x128x16xbf16, #tpu.memory_space<vmem>>, vector<1x128x16xbf16>
    %1 = vector.shape_cast %0 : vector<1x128x16xbf16> to vector<128x16xbf16>
    %cst = arith.constant 0.000000e+00 : bf16
    %2 = vector.broadcast %cst : bf16 to vector<128x16xbf16>
    %3 = arith.maximumf %1, %2 : vector<128x16xbf16>
    %c0_2 = arith.constant 0 : index
    %c0_3 = arith.constant 0 : index
    %c0_4 = arith.constant 0 : index
    %4 = vector.load %arg2[%c0_2, %c0_3, %c0_4] : memref<1x16x16xbf16, #tpu.memory_space<vmem>>, vector<1x16x16xbf16>
    %5 = vector.shape_cast %4 : vector<1x16x16xbf16> to vector<16x16xbf16>
    %cst_5 = arith.constant dense<0.000000e+00> : vector<128x16xf32>
    %6 = tpu.matmul %3, %5, %cst_5 {dimension_numbers = #tpu.dot_dimension_numbers<[1], [0], [0], [1], [0, 0, 1, 1], [], []>} : vector<128x16xbf16>, vector<16x16xbf16>, vector<128x16xf32> -> vector<128x16xf32>
    %cst_6 = arith.constant dense<0.000000e+00> : vector<16xf32>
    %7 = vector.multi_reduction <add>, %6, %cst_6 [0] : vector<128x16xf32> to vector<16xf32>
    %8 = vector.shape_cast %7 : vector<16xf32> to vector<1x16xf32>
    %cst_7 = arith.constant 1.280000e+02 : f32
    %9 = vector.broadcast %cst_7 : f32 to vector<1x16xf32>
    %10 = arith.divf %8, %9 : vector<1x16xf32>
    %11 = vector.broadcast %10 : vector<1x16xf32> to vector<128x16xf32>
    %12 = arith.subf %6, %11 : vector<128x16xf32>
    %13 = arith.mulf %12, %12 : vector<128x16xf32>
    %cst_8 = arith.constant dense<0.000000e+00> : vector<16xf32>
    %14 = vector.multi_reduction <add>, %13, %cst_8 [0] : vector<128x16xf32> to vector<16xf32>
    %15 = vector.shape_cast %14 : vector<16xf32> to vector<1x16xf32>
    %cst_9 = arith.constant 1.280000e+02 : f32
    %16 = vector.broadcast %cst_9 : f32 to vector<1x16xf32>
    %17 = arith.divf %15, %16 : vector<1x16xf32>
    %18 = vector.broadcast %10 : vector<1x16xf32> to vector<128x16xf32>
    %19 = arith.subf %6, %18 : vector<128x16xf32>
    %cst_10 = arith.constant 9.99999974E-6 : f32
    %20 = vector.broadcast %cst_10 : f32 to vector<1x16xf32>
    %21 = arith.addf %17, %20 : vector<1x16xf32>
    %22 = math.rsqrt %21 : vector<1x16xf32>
    %23 = vector.broadcast %22 : vector<1x16xf32> to vector<128x16xf32>
    %24 = arith.mulf %19, %23 : vector<128x16xf32>
    %25 = arith.truncf %24 : vector<128x16xf32> to vector<128x16xbf16>
    %c0_11 = arith.constant 0 : index
    %c0_12 = arith.constant 0 : index
    %c0_13 = arith.constant 0 : index
    %26 = vector.load %arg3[%c0_11, %c0_12, %c0_13] : memref<1x128x16xbf16, #tpu.memory_space<vmem>>, vector<1x128x16xbf16>
    %27 = vector.shape_cast %26 : vector<1x128x16xbf16> to vector<128x16xbf16>
    %28 = vector.shape_cast %25 : vector<128x16xbf16> to vector<1x128x16xbf16>
    tpu.vector_store %arg3[%c0_11, %c0_12, %c0_13], %28 {strides = array<i32>} : memref<1x128x16xbf16, #tpu.memory_space<vmem>>, vector<1x128x16xbf16>,
    return
  }
  func.func @transform_0(%arg0: i32) -> (i32, i32, i32) {
    %c0_i32 = arith.constant 0 : i32
    %c0_i32_0 = arith.constant 0 : i32
    %c0_i32_1 = arith.constant 0 : i32
    return %arg0, %c0_i32, %c0_i32_0 : i32, i32, i32
  }
  func.func @transform_1(%arg0: i32) -> (i32, i32, i32) {
    %c0_i32 = arith.constant 0 : i32
    %c0_i32_0 = arith.constant 0 : i32
    %c0_i32_1 = arith.constant 0 : i32
    return %arg0, %c0_i32, %c0_i32_0 : i32, i32, i32
  }
  func.func @transform_2(%arg0: i32) -> (i32, i32, i32) {
    %c0_i32 = arith.constant 0 : i32
    %c0_i32_0 = arith.constant 0 : i32
    %c0_i32_1 = arith.constant 0 : i32
    return %arg0, %c0_i32, %c0_i32_0 : i32, i32, i32
  }
}

module attributes {stable_mosaic.version = 11 : i64} {
  func.func @_fr_bn_kernel(%arg0: i32, %arg1: memref<1x32x32xbf16, #tpu.memory_space<vmem>>, %arg2: memref<1x32x16xbf16, #tpu.memory_space<vmem>>, %arg3: memref<1x32x16xbf16, #tpu.memory_space<vmem>>) attributes {dimension_semantics = [#tpu.dimension_semantics<parallel>], iteration_bounds = array<i64: 4>, scalar_prefetch = 0 : i64, scratch_operands = 0 : i64, tpu.core_type = #tpu.core_type<tc>, window_params = [{transform_indices = @transform_0, window_bounds = array<i64: 1, 32, 32>}, {transform_indices = @transform_1, window_bounds = array<i64: 1, 32, 16>}, {transform_indices = @transform_2, window_bounds = array<i64: 1, 32, 16>}]} {
    %c0 = arith.constant 0 : index
    %c0_0 = arith.constant 0 : index
    %c0_1 = arith.constant 0 : index
    %0 = vector.load %arg1[%c0, %c0_0, %c0_1] : memref<1x32x32xbf16, #tpu.memory_space<vmem>>, vector<1x32x32xbf16>
    %1 = vector.shape_cast %0 : vector<1x32x32xbf16> to vector<32x32xbf16>
    %cst = arith.constant 0.000000e+00 : bf16
    %2 = vector.broadcast %cst : bf16 to vector<32x32xbf16>
    %3 = arith.maximumf %1, %2 : vector<32x32xbf16>
    %c0_2 = arith.constant 0 : index
    %c0_3 = arith.constant 0 : index
    %c0_4 = arith.constant 0 : index
    %4 = vector.load %arg2[%c0_2, %c0_3, %c0_4] : memref<1x32x16xbf16, #tpu.memory_space<vmem>>, vector<1x32x16xbf16>
    %5 = vector.shape_cast %4 : vector<1x32x16xbf16> to vector<32x16xbf16>
    %cst_5 = arith.constant dense<0.000000e+00> : vector<32x16xf32>
    %6 = tpu.matmul %3, %5, %cst_5 {dimension_numbers = #tpu.dot_dimension_numbers<[1], [0], [0], [1], [0, 0, 1, 1], [], []>} : vector<32x32xbf16>, vector<32x16xbf16>, vector<32x16xf32> -> vector<32x16xf32>
    %cst_6 = arith.constant dense<0.000000e+00> : vector<16xf32>
    %7 = vector.multi_reduction <add>, %6, %cst_6 [0] : vector<32x16xf32> to vector<16xf32>
    %8 = vector.shape_cast %7 : vector<16xf32> to vector<1x16xf32>
    %cst_7 = arith.constant 3.200000e+01 : f32
    %9 = vector.broadcast %cst_7 : f32 to vector<1x16xf32>
    %10 = arith.divf %8, %9 : vector<1x16xf32>
    %11 = vector.broadcast %10 : vector<1x16xf32> to vector<32x16xf32>
    %12 = arith.subf %6, %11 : vector<32x16xf32>
    %13 = arith.mulf %12, %12 : vector<32x16xf32>
    %cst_8 = arith.constant dense<0.000000e+00> : vector<16xf32>
    %14 = vector.multi_reduction <add>, %13, %cst_8 [0] : vector<32x16xf32> to vector<16xf32>
    %15 = vector.shape_cast %14 : vector<16xf32> to vector<1x16xf32>
    %cst_9 = arith.constant 3.200000e+01 : f32
    %16 = vector.broadcast %cst_9 : f32 to vector<1x16xf32>
    %17 = arith.divf %15, %16 : vector<1x16xf32>
    %18 = vector.broadcast %10 : vector<1x16xf32> to vector<32x16xf32>
    %19 = arith.subf %6, %18 : vector<32x16xf32>
    %cst_10 = arith.constant 9.99999974E-6 : f32
    %20 = vector.broadcast %cst_10 : f32 to vector<1x16xf32>
    %21 = arith.addf %17, %20 : vector<1x16xf32>
    %22 = math.rsqrt %21 : vector<1x16xf32>
    %23 = vector.broadcast %22 : vector<1x16xf32> to vector<32x16xf32>
    %24 = arith.mulf %19, %23 : vector<32x16xf32>
    %25 = arith.truncf %24 : vector<32x16xf32> to vector<32x16xbf16>
    %c0_11 = arith.constant 0 : index
    %c0_12 = arith.constant 0 : index
    %c0_13 = arith.constant 0 : index
    %26 = vector.load %arg3[%c0_11, %c0_12, %c0_13] : memref<1x32x16xbf16, #tpu.memory_space<vmem>>, vector<1x32x16xbf16>
    %27 = vector.shape_cast %26 : vector<1x32x16xbf16> to vector<32x16xbf16>
    %28 = vector.shape_cast %25 : vector<32x16xbf16> to vector<1x32x16xbf16>
    tpu.vector_store %arg3[%c0_11, %c0_12, %c0_13], %28 {strides = array<i32>} : memref<1x32x16xbf16, #tpu.memory_space<vmem>>, vector<1x32x16xbf16>,
    return
  }
  func.func @transform_0(%arg0: i32) -> (i32, i32, i32) {
    %c0_i32 = arith.constant 0 : i32
    %c0_i32_0 = arith.constant 0 : i32
    %c0_i32_1 = arith.constant 0 : i32
    return %arg0, %c0_i32, %c0_i32_0 : i32, i32, i32
  }
  func.func @transform_1(%arg0: i32) -> (i32, i32, i32) {
    %c0_i32 = arith.constant 0 : i32
    %c0_i32_0 = arith.constant 0 : i32
    %c0_i32_1 = arith.constant 0 : i32
    return %arg0, %c0_i32, %c0_i32_0 : i32, i32, i32
  }
  func.func @transform_2(%arg0: i32) -> (i32, i32, i32) {
    %c0_i32 = arith.constant 0 : i32
    %c0_i32_0 = arith.constant 0 : i32
    %c0_i32_1 = arith.constant 0 : i32
    return %arg0, %c0_i32, %c0_i32_0 : i32, i32, i32
  }
}

module attributes {stable_mosaic.version = 11 : i64} {
  func.func @_head_kernel(%arg0: i32, %arg1: memref<2x16x32xbf16, #tpu.memory_space<vmem>>, %arg2: memref<32x10xf32, #tpu.memory_space<vmem>>, %arg3: memref<1x10xf32, #tpu.memory_space<vmem>>, %arg4: memref<2x10xf32, #tpu.memory_space<vmem>>) attributes {dimension_semantics = [#tpu.dimension_semantics<arbitrary>], iteration_bounds = array<i64: 1>, scalar_prefetch = 0 : i64, scratch_operands = 0 : i64, tpu.core_type = #tpu.core_type<tc>, window_params = [{pipeline_mode = #tpu.pipeline_mode<synchronous>, transform_indices = @transform_0, window_bounds = array<i64: 2, 16, 32>}, {pipeline_mode = #tpu.pipeline_mode<synchronous>, transform_indices = @transform_1, window_bounds = array<i64: 32, 10>}, {pipeline_mode = #tpu.pipeline_mode<synchronous>, transform_indices = @transform_2, window_bounds = array<i64: 1, 10>}, {pipeline_mode = #tpu.pipeline_mode<synchronous>, transform_indices = @transform_3, window_bounds = array<i64: 2, 10>}]} {
    %c0 = arith.constant 0 : index
    %c0_0 = arith.constant 0 : index
    %c0_1 = arith.constant 0 : index
    %0 = vector.load %arg1[%c0, %c0_0, %c0_1] : memref<2x16x32xbf16, #tpu.memory_space<vmem>>, vector<2x16x32xbf16>
    %1 = arith.extf %0 : vector<2x16x32xbf16> to vector<2x16x32xf32>
    %cst = arith.constant dense<0.000000e+00> : vector<2x32xf32>
    %2 = vector.multi_reduction <add>, %1, %cst [1] : vector<2x16x32xf32> to vector<2x32xf32>
    %cst_2 = arith.constant 1.600000e+01 : f32
    %3 = vector.broadcast %cst_2 : f32 to vector<2x32xf32>
    %4 = arith.divf %2, %3 : vector<2x32xf32>
    %c0_3 = arith.constant 0 : index
    %c0_4 = arith.constant 0 : index
    %5 = vector.load %arg2[%c0_3, %c0_4] : memref<32x10xf32, #tpu.memory_space<vmem>>, vector<32x10xf32>
    %cst_5 = arith.constant dense<0.000000e+00> : vector<2x10xf32>
    %6 = tpu.matmul %4, %5, %cst_5 {dimension_numbers = #tpu.dot_dimension_numbers<[1], [0], [0], [1], [0, 0, 1, 1], [], []>} : vector<2x32xf32>, vector<32x10xf32>, vector<2x10xf32> -> vector<2x10xf32>
    %c0_6 = arith.constant 0 : index
    %c0_7 = arith.constant 0 : index
    %7 = vector.load %arg3[%c0_6, %c0_7] : memref<1x10xf32, #tpu.memory_space<vmem>>, vector<1x10xf32>
    %8 = vector.broadcast %7 : vector<1x10xf32> to vector<2x10xf32>
    %9 = arith.addf %6, %8 : vector<2x10xf32>
    %c0_8 = arith.constant 0 : index
    %c0_9 = arith.constant 0 : index
    %10 = vector.load %arg4[%c0_8, %c0_9] : memref<2x10xf32, #tpu.memory_space<vmem>>, vector<2x10xf32>
    tpu.vector_store %arg4[%c0_8, %c0_9], %9 {strides = array<i32>} : memref<2x10xf32, #tpu.memory_space<vmem>>, vector<2x10xf32>,
    return
  }
  func.func @transform_0(%arg0: i32) -> (i32, i32, i32) {
    %c0_i32 = arith.constant 0 : i32
    %c0_i32_0 = arith.constant 0 : i32
    %c0_i32_1 = arith.constant 0 : i32
    %c0_i32_2 = arith.constant 0 : i32
    return %c0_i32, %c0_i32_0, %c0_i32_1 : i32, i32, i32
  }
  func.func @transform_1(%arg0: i32) -> (i32, i32) {
    %c0_i32 = arith.constant 0 : i32
    %c0_i32_0 = arith.constant 0 : i32
    %c0_i32_1 = arith.constant 0 : i32
    return %c0_i32, %c0_i32_0 : i32, i32
  }
  func.func @transform_2(%arg0: i32) -> (i32, i32) {
    %c0_i32 = arith.constant 0 : i32
    %c0_i32_0 = arith.constant 0 : i32
    %c0_i32_1 = arith.constant 0 : i32
    return %c0_i32, %c0_i32_0 : i32, i32
  }
  func.func @transform_3(%arg0: i32) -> (i32, i32) {
    %c0_i32 = arith.constant 0 : i32
    %c0_i32_0 = arith.constant 0 : i32
    %c0_i32_1 = arith.constant 0 : i32
    return %c0_i32, %c0_i32_0 : i32, i32
  }
}

</mosaic_0001>

<llo_original>
// kernel: _lambda_.11
$region0: #{_lambda_.11}
  #allocation0 [shape = 'u32[]', space=smem, size = 0x4, offset = 0x4, fixed_abs, tag = 'smem constant byte address 0x4 - core index']
  #allocation1 [shape = 'u32[144,128]{1,0:T(1,128)}', space=vmem, size = 0x12000, scoped, tag = 'internal scratch']
  #allocation2 [shape = 'f32[512,4]{1,0:T(8,128)}', space=vmem, size = 0x40000, scoped, tag = 'scratch operand']
  %s0 = inlined_call_operand.vmem [shape: bf16[512,12], index: 0, kind: input, shape index: {}]
  %s1 = inlined_call_operand.vmem [shape: bf16[12,4], index: 1, kind: input, shape index: {}]
  %s2 = inlined_call_operand.vmem [shape: bf16[512,4], index: 2, kind: output, shape index: {}]
  %s3 = sld [smem:[#allocation0]]
  $region22: #{_lambda_.11} parent=0
    _
  %s5 = ssub.s32 1, %s3
  %s6 = scalar_select 0, %s5, %s3
  // Predicated region
  $region2: #{_lambda_.11} parent=0 // pred_check
    _
  $region3: #{_lambda_.11} parent=0 // pred_check_branch
    %8 = sbr.rel (0) target = $region5
  $region4: #{_lambda_.11} parent=0 // pred_region
    _
  $region5: #{_lambda_.11} parent=0 // pred_fallthru
    _
  // Predicated region
  $region6: #{_lambda_.11} parent=0 // pred_check
    _
  $region7: #{_lambda_.11} parent=0 // pred_check_branch
    %10 = sbr.rel (0) target = $region9
  $region8: #{_lambda_.11} parent=0 // pred_region
    _
  $region9: #{_lambda_.11} parent=0 // pred_fallthru
    _
  %v12 = vld [vmem:[%s0] sm:$0xf]
  %v13 = vld [vmem:[%s0 + $0x4] sm:$0xf]
  %v14 = vld [vmem:[%s0 + $0x8] sm:$0xf]
  %v15 = vld [vmem:[%s0 + $0xc] sm:$0xf]
  %v16 = vld [vmem:[%s0 + $0x10] sm:$0xf]
  %v17 = vld [vmem:[%s0 + $0x14] sm:$0xf]
  %v18 = vld [vmem:[%s0 + $0x18] sm:$0xf]
  %v19 = vld [vmem:[%s0 + $0x1c] sm:$0xf]
  %v20 = vld [vmem:[%s0 + $0x20] sm:$0xf]
  %v21 = vld [vmem:[%s0 + $0x24] sm:$0xf]
  %v22 = vld [vmem:[%s0 + $0x28] sm:$0xf]
  %v23 = vld [vmem:[%s0 + $0x2c] sm:$0xf]
  %v24 = vld [vmem:[%s0 + $0x30] sm:$0xf]
  %v25 = vld [vmem:[%s0 + $0x34] sm:$0xf]
  %v26 = vld [vmem:[%s0 + $0x38] sm:$0xf]
  %v27 = vld [vmem:[%s0 + $0x3c] sm:$0xf]
  %v28 = vld [vmem:[%s0 + $0x40] sm:$0xf]
  %v29 = vld [vmem:[%s0 + $0x44] sm:$0xf]
  %v30 = vld [vmem:[%s0 + $0x48] sm:$0xf]
  %v31 = vld [vmem:[%s0 + $0x4c] sm:$0xf]
  %v32 = vld [vmem:[%s0 + $0x50] sm:$0xf]
  %v33 = vld [vmem:[%s0 + $0x54] sm:$0xf]
  %v34 = vld [vmem:[%s0 + $0x58] sm:$0xf]
  %v35 = vld [vmem:[%s0 + $0x5c] sm:$0xf]
  %v36 = vld [vmem:[%s0 + $0x60] sm:$0xf]
  %v37 = vld [vmem:[%s0 + $0x64] sm:$0xf]
  %v38 = vld [vmem:[%s0 + $0x68] sm:$0xf]
  %v39 = vld [vmem:[%s0 + $0x6c] sm:$0xf]
  %v40 = vld [vmem:[%s0 + $0x70] sm:$0xf]
  %v41 = vld [vmem:[%s0 + $0x74] sm:$0xf]
  %v42 = vld [vmem:[%s0 + $0x78] sm:$0xf]
  %v43 = vld [vmem:[%s0 + $0x7c] sm:$0xf]
  %v44 = vld [vmem:[%s0 + $0x80] sm:$0xf]
  %v45 = vld [vmem:[%s0 + $0x84] sm:$0xf]
  %v46 = vld [vmem:[%s0 + $0x88] sm:$0xf]
  %v47 = vld [vmem:[%s0 + $0x8c] sm:$0xf]
  %v48 = vld [vmem:[%s0 + $0x90] sm:$0xf]
  %v49 = vld [vmem:[%s0 + $0x94] sm:$0xf]
  %v50 = vld [vmem:[%s0 + $0x98] sm:$0xf]
  %v51 = vld [vmem:[%s0 + $0x9c] sm:$0xf]
  %v52 = vld [vmem:[%s0 + $0xa0] sm:$0xf]
  %v53 = vld [vmem:[%s0 + $0xa4] sm:$0xf]
  %v54 = vld [vmem:[%s0 + $0xa8] sm:$0xf]
  %v55 = vld [vmem:[%s0 + $0xac] sm:$0xf]
  %v56 = vld [vmem:[%s0 + $0xb0] sm:$0xf]
  %v57 = vld [vmem:[%s0 + $0xb4] sm:$0xf]
  %v58 = vld [vmem:[%s0 + $0xb8] sm:$0xf]
  %v59 = vld [vmem:[%s0 + $0xbc] sm:$0xf]
  %v60 = vld [vmem:[%s0 + $0xc0] sm:$0xf]
  %v61 = vld [vmem:[%s0 + $0xc4] sm:$0xf]
  %v62 = vld [vmem:[%s0 + $0xc8] sm:$0xf]
  %v63 = vld [vmem:[%s0 + $0xcc] sm:$0xf]
  %v64 = vld [vmem:[%s0 + $0xd0] sm:$0xf]
  %v65 = vld [vmem:[%s0 + $0xd4] sm:$0xf]
  %v66 = vld [vmem:[%s0 + $0xd8] sm:$0xf]
  %v67 = vld [vmem:[%s0 + $0xdc] sm:$0xf]
  %v68 = vld [vmem:[%s0 + $0xe0] sm:$0xf]
  %v69 = vld [vmem:[%s0 + $0xe4] sm:$0xf]
  %v70 = vld [vmem:[%s0 + $0xe8] sm:$0xf]
  %v71 = vld [vmem:[%s0 + $0xec] sm:$0xf]
  %v72 = vld [vmem:[%s0 + $0xf0] sm:$0xf]
  %v73 = vld [vmem:[%s0 + $0xf4] sm:$0xf]
  %v74 = vld [vmem:[%s0 + $0xf8] sm:$0xf]
  %v75 = vld [vmem:[%s0 + $0xfc] sm:$0xf]
  %v76 = vmax.bf16 %v12, 0
  %v77 = vmax.bf16 %v13, 0
  %v78 = vmax.bf16 %v14, 0
  %v79 = vmax.bf16 %v15, 0
  %v80 = vmax.bf16 %v16, 0
  %v81 = vmax.bf16 %v17, 0
  %v82 = vmax.bf16 %v18, 0
  %v83 = vmax.bf16 %v19, 0
  %v84 = vmax.bf16 %v20, 0
  %v85 = vmax.bf16 %v21, 0
  %v86 = vmax.bf16 %v22, 0
  %v87 = vmax.bf16 %v23, 0
  %v88 = vmax.bf16 %v24, 0
  %v89 = vmax.bf16 %v25, 0
  %v90 = vmax.bf16 %v26, 0
  %v91 = vmax.bf16 %v27, 0
  %v92 = vmax.bf16 %v28, 0
  %v93 = vmax.bf16 %v29, 0
  %v94 = vmax.bf16 %v30, 0
  %v95 = vmax.bf16 %v31, 0
  %v96 = vmax.bf16 %v32, 0
  %v97 = vmax.bf16 %v33, 0
  %v98 = vmax.bf16 %v34, 0
  %v99 = vmax.bf16 %v35, 0
  %v100 = vmax.bf16 %v36, 0
  %v101 = vmax.bf16 %v37, 0
  %v102 = vmax.bf16 %v38, 0
  %v103 = vmax.bf16 %v39, 0
  %v104 = vmax.bf16 %v40, 0
  %v105 = vmax.bf16 %v41, 0
  %v106 = vmax.bf16 %v42, 0
  %v107 = vmax.bf16 %v43, 0
  %v108 = vmax.bf16 %v44, 0
  %v109 = vmax.bf16 %v45, 0
  %v110 = vmax.bf16 %v46, 0
  %v111 = vmax.bf16 %v47, 0
  %v112 = vmax.bf16 %v48, 0
  %v113 = vmax.bf16 %v49, 0
  %v114 = vmax.bf16 %v50, 0
  %v115 = vmax.bf16 %v51, 0
  %v116 = vmax.bf16 %v52, 0
  %v117 = vmax.bf16 %v53, 0
  %v118 = vmax.bf16 %v54, 0
  %v119 = vmax.bf16 %v55, 0
  %v120 = vmax.bf16 %v56, 0
  %v121 = vmax.bf16 %v57, 0
  %v122 = vmax.bf16 %v58, 0
  %v123 = vmax.bf16 %v59, 0
  %v124 = vmax.bf16 %v60, 0
  %v125 = vmax.bf16 %v61, 0
  %v126 = vmax.bf16 %v62, 0
  %v127 = vmax.bf16 %v63, 0
  %v128 = vmax.bf16 %v64, 0
  %v129 = vmax.bf16 %v65, 0
  %v130 = vmax.bf16 %v66, 0
  %v131 = vmax.bf16 %v67, 0
  %v132 = vmax.bf16 %v68, 0
  %v133 = vmax.bf16 %v69, 0
  %v134 = vmax.bf16 %v70, 0
  %v135 = vmax.bf16 %v71, 0
  %v136 = vmax.bf16 %v72, 0
  %v137 = vmax.bf16 %v73, 0
  %v138 = vmax.bf16 %v74, 0
  %v139 = vmax.bf16 %v75, 0
  %v140 = vld [vmem:[%s1] sm:$0xf]
  %v141 = vld [vmem:[%s1 + $0x4] sm:$0x3]
  %v206 = vunpack.c.l.b16 %v76
  %v207 = vunpack.c.l.b16 %v77
  %v208 = vunpack.c.l.b16 %v78
  %v209 = vunpack.c.l.b16 %v79
  %v210 = vunpack.c.l.b16 %v80
  %v211 = vunpack.c.l.b16 %v81
  %v212 = vunpack.c.l.b16 %v82
  %v213 = vunpack.c.l.b16 %v83
  %v214 = vunpack.c.l.b16 %v84
  %v215 = vunpack.c.l.b16 %v85
  %v216 = vunpack.c.l.b16 %v86
  %v217 = vunpack.c.l.b16 %v87
  %v218 = vunpack.c.l.b16 %v88
  %v219 = vunpack.c.l.b16 %v89
  %v220 = vunpack.c.l.b16 %v90
  %v221 = vunpack.c.l.b16 %v91
  %v222 = vunpack.c.l.b16 %v92
  %v223 = vunpack.c.l.b16 %v93
  %v224 = vunpack.c.l.b16 %v94
  %v225 = vunpack.c.l.b16 %v95
  %v226 = vunpack.c.l.b16 %v96
  %v227 = vunpack.c.l.b16 %v97
  %v228 = vunpack.c.l.b16 %v98
  %v229 = vunpack.c.l.b16 %v99
  %v230 = vunpack.c.l.b16 %v100
  %v231 = vunpack.c.l.b16 %v101
  %v232 = vunpack.c.l.b16 %v102
  %v233 = vunpack.c.l.b16 %v103
  %v234 = vunpack.c.l.b16 %v104
  %v235 = vunpack.c.l.b16 %v105
  %v236 = vunpack.c.l.b16 %v106
  %v237 = vunpack.c.l.b16 %v107
  %v238 = vunpack.c.l.b16 %v108
  %v239 = vunpack.c.l.b16 %v109
  %v240 = vunpack.c.l.b16 %v110
  %v241 = vunpack.c.l.b16 %v111
  %v242 = vunpack.c.l.b16 %v112
  %v243 = vunpack.c.l.b16 %v113
  %v244 = vunpack.c.l.b16 %v114
  %v245 = vunpack.c.l.b16 %v115
  %v246 = vunpack.c.l.b16 %v116
  %v247 = vunpack.c.l.b16 %v117
  %v248 = vunpack.c.l.b16 %v118
  %v249 = vunpack.c.l.b16 %v119
  %v250 = vunpack.c.l.b16 %v120
  %v251 = vunpack.c.l.b16 %v121
  %v252 = vunpack.c.l.b16 %v122
  %v253 = vunpack.c.l.b16 %v123
  %v254 = vunpack.c.l.b16 %v124
  %v255 = vunpack.c.l.b16 %v125
  %v256 = vunpack.c.l.b16 %v126
  %v257 = vunpack.c.l.b16 %v127
  %v258 = vunpack.c.l.b16 %v128
  %v259 = vunpack.c.l.b16 %v129
  %v260 = vunpack.c.l.b16 %v130
  %v261 = vunpack.c.l.b16 %v131
  %v262 = vunpack.c.l.b16 %v132
  %v263 = vunpack.c.l.b16 %v133
  %v264 = vunpack.c.l.b16 %v134
  %v265 = vunpack.c.l.b16 %v135
  %v266 = vunpack.c.l.b16 %v136
  %v267 = vunpack.c.l.b16 %v137
  %v268 = vunpack.c.l.b16 %v138
  %v269 = vunpack.c.l.b16 %v139
  %v270 = vpack.c.b16 %v207, %v206
  %v271 = vpack.c.b16 %v209, %v208
  %v272 = vpack.c.b16 %v211, %v210
  %v273 = vpack.c.b16 %v213, %v212
  %v274 = vpack.c.b16 %v215, %v214
  %v275 = vpack.c.b16 %v217, %v216
  %v276 = vpack.c.b16 %v219, %v218
  %v277 = vpack.c.b16 %v221, %v220
  %v278 = vpack.c.b16 %v223, %v222
  %v279 = vpack.c.b16 %v225, %v224
  %v280 = vpack.c.b16 %v227, %v226
  %v281 = vpack.c.b16 %v229, %v228
  %v282 = vpack.c.b16 %v231, %v230
  %v283 = vpack.c.b16 %v233, %v232
  %v284 = vpack.c.b16 %v235, %v234
  %v285 = vpack.c.b16 %v237, %v236
  %v286 = vpack.c.b16 %v239, %v238
  %v287 = vpack.c.b16 %v241, %v240
  %v288 = vpack.c.b16 %v243, %v242
  %v289 = vpack.c.b16 %v245, %v244
  %v290 = vpack.c.b16 %v247, %v246
  %v291 = vpack.c.b16 %v249, %v248
  %v292 = vpack.c.b16 %v251, %v250
  %v293 = vpack.c.b16 %v253, %v252
  %v294 = vpack.c.b16 %v255, %v254
  %v295 = vpack.c.b16 %v257, %v256
  %v296 = vpack.c.b16 %v259, %v258
  %v297 = vpack.c.b16 %v261, %v260
  %v298 = vpack.c.b16 %v263, %v262
  %v299 = vpack.c.b16 %v265, %v264
  %v300 = vpack.c.b16 %v267, %v266
  %v301 = vpack.c.b16 %v269, %v268
  %v304 = vunpack.c.l.b16 %v140
  %v305 = vunpack.c.l.b16 %v141
  %v306 = vpack.c.b16 %v305, %v304
  %vm307 = vcmask 97280
  %v309 = vsel %vm307, %v270, 0
  %v312 = vsel %vm307, %v271, 0
  %v315 = vsel %vm307, %v272, 0
  %v318 = vsel %vm307, %v273, 0
  %v321 = vsel %vm307, %v274, 0
  %v324 = vsel %vm307, %v275, 0
  %v327 = vsel %vm307, %v276, 0
  %v330 = vsel %vm307, %v277, 0
  %v333 = vsel %vm307, %v278, 0
  %v336 = vsel %vm307, %v279, 0
  %v339 = vsel %vm307, %v280, 0
  %v342 = vsel %vm307, %v281, 0
  %v345 = vsel %vm307, %v282, 0
  %v348 = vsel %vm307, %v283, 0
  %v351 = vsel %vm307, %v284, 0
  %v354 = vsel %vm307, %v285, 0
  %v357 = vsel %vm307, %v286, 0
  %v360 = vsel %vm307, %v287, 0
  %v363 = vsel %vm307, %v288, 0
  %v366 = vsel %vm307, %v289, 0
  %v369 = vsel %vm307, %v290, 0
  %v372 = vsel %vm307, %v291, 0
  %v375 = vsel %vm307, %v292, 0
  %v378 = vsel %vm307, %v293, 0
  %v381 = vsel %vm307, %v294, 0
  %v384 = vsel %vm307, %v295, 0
  %v387 = vsel %vm307, %v296, 0
  %v390 = vsel %vm307, %v297, 0
  %v393 = vsel %vm307, %v298, 0
  %v396 = vsel %vm307, %v299, 0
  %v399 = vsel %vm307, %v300, 0
  %v402 = vsel %vm307, %v301, 0
  %vm404 = vcmask 1045504
  %v406 = vsel %vm404, %v306, 0
  %408 = vmatprep.subr.bf16.mxu0 0
  %409 = vmatpush1.bf16.msra.mxu0 %v406
  %410 = vmatprep.subr.bf16.mxu0 0
  %411 = vmatpush1.bf16.msra.mxu0 0
  %412 = vmatprep.subr.bf16.mxu0 0
  %413 = vmatpush1.bf16.msra.mxu0 0
  %414 = vmatprep.subr.bf16.mxu0 0
  %415 = vmatpush1.bf16.msra.mxu0 0
  %416 = vmatprep.subr.bf16.mxu0 0
  %417 = vmatpush1.bf16.msra.mxu0 0
  %418 = vmatprep.subr.bf16.mxu0 0
  %419 = vmatpush1.bf16.msra.mxu0 0
  %420 = vmatprep.subr.bf16.mxu0 0
  %421 = vmatpush1.bf16.msra.mxu0 0
  %422 = vmatprep.subr.bf16.mxu0 0
  %423 = vmatpush1.bf16.msra.mxu0 0
  %424 = vmatprep.subr.bf16.mxu0 0
  %425 = vmatpush1.bf16.msra.mxu0 0
  %426 = vmatprep.subr.bf16.mxu0 0
  %427 = vmatpush1.bf16.msra.mxu0 0
  %428 = vmatprep.subr.bf16.mxu0 0
  %429 = vmatpush1.bf16.msra.mxu0 0
  %430 = vmatprep.subr.bf16.mxu0 0
  %431 = vmatpush1.bf16.msra.mxu0 0
  %432 = vmatprep.subr.bf16.mxu0 0
  %433 = vmatpush1.bf16.msra.mxu0 0
  %434 = vmatprep.subr.bf16.mxu0 0
  %435 = vmatpush1.bf16.msra.mxu0 0
  %436 = vmatprep.subr.bf16.mxu0 0
  %437 = vmatpush1.bf16.msra.mxu0 0
  %438 = vmatprep.subr.bf16.mxu0 0
  %439 = vmatpush1.bf16.msra.mxu0 0
  %440 = vmatprep.mubr.bf16.mxu0 0
  %441 = vmatmul.mubr.bf16.gmra.mrb[0].mxu0 %v309
  %v442 = vpop.f32.mrb[0].mxu0
  %v443 = vadd.f32 0.0, %v442
  %v444 = vpop.f32.mrb[0].mxu0
  %v445 = vpop.f32.mrb[0].mxu0
  %v446 = vadd.f32 0.0, %v445
  %v447 = vpop.f32.mrb[0].mxu0
  %448 = vmatprep.mubr.bf16.mxu0 0
  %449 = vmatmul.mubr.bf16.gmra.mrb[0].mxu0 %v312
  %v450 = vpop.f32.mrb[0].mxu0
  %v451 = vadd.f32 0.0, %v450
  %v452 = vpop.f32.mrb[0].mxu0
  %v453 = vpop.f32.mrb[0].mxu0
  %v454 = vadd.f32 0.0, %v453
  %v455 = vpop.f32.mrb[0].mxu0
  %456 = vmatprep.mubr.bf16.mxu0 0
  %457 = vmatmul.mubr.bf16.gmra.mrb[0].mxu0 %v315
  %v458 = vpop.f32.mrb[0].mxu0
  %v459 = vadd.f32 0.0, %v458
  %v460 = vpop.f32.mrb[0].mxu0
  %v461 = vpop.f32.mrb[0].mxu0
  %v462 = vadd.f32 0.0, %v461
  %v463 = vpop.f32.mrb[0].mxu0
  %464 = vmatprep.mubr.bf16.mxu0 0
  %465 = vmatmul.mubr.bf16.gmra.mrb[0].mxu0 %v318
  %v466 = vpop.f32.mrb[0].mxu0
  %v467 = vadd.f32 0.0, %v466
  %v468 = vpop.f32.mrb[0].mxu0
  %v469 = vpop.f32.mrb[0].mxu0
  %v470 = vadd.f32 0.0, %v469
  %v471 = vpop.f32.mrb[0].mxu0
  %472 = vmatprep.mubr.bf16.mxu0 0
  %473 = vmatmul.mubr.bf16.gmra.mrb[0].mxu0 %v321
  %v474 = vpop.f32.mrb[0].mxu0
  %v475 = vadd.f32 0.0, %v474
  %v476 = vpop.f32.mrb[0].mxu0
  %v477 = vpop.f32.mrb[0].mxu0
  %v478 = vadd.f32 0.0, %v477
  %v479 = vpop.f32.mrb[0].mxu0
  %480 = vmatprep.mubr.bf16.mxu0 0
  %481 = vmatmul.mubr.bf16.gmra.mrb[0].mxu0 %v324
  %v482 = vpop.f32.mrb[0].mxu0
  %v483 = vadd.f32 0.0, %v482
  %v484 = vpop.f32.mrb[0].mxu0
  %v485 = vpop.f32.mrb[0].mxu0
  %v486 = vadd.f32 0.0, %v485
  %v487 = vpop.f32.mrb[0].mxu0
  %488 = vmatprep.mubr.bf16.mxu0 0
  %489 = vmatmul.mubr.bf16.gmra.mrb[0].mxu0 %v327
  %v490 = vpop.f32.mrb[0].mxu0
  %v491 = vadd.f32 0.0, %v490
  %v492 = vpop.f32.mrb[0].mxu0
  %v493 = vpop.f32.mrb[0].mxu0
  %v494 = vadd.f32 0.0, %v493
  %v495 = vpop.f32.mrb[0].mxu0
  %496 = vmatprep.mubr.bf16.mxu0 0
  %497 = vmatmul.mubr.bf16.gmra.mrb[0].mxu0 %v330
  %v498 = vpop.f32.mrb[0].mxu0
  %v499 = vadd.f32 0.0, %v498
  %v500 = vpop.f32.mrb[0].mxu0
  %v501 = vpop.f32.mrb[0].mxu0
  %v502 = vadd.f32 0.0, %v501
  %v503 = vpop.f32.mrb[0].mxu0
  %504 = vmatprep.mubr.bf16.mxu0 0
  %505 = vmatmul.mubr.bf16.gmra.mrb[0].mxu0 %v333
  %v506 = vpop.f32.mrb[0].mxu0
  %v507 = vadd.f32 0.0, %v506
  %v508 = vpop.f32.mrb[0].mxu0
  %v509 = vpop.f32.mrb[0].mxu0
  %v510 = vadd.f32 0.0, %v509
  %v511 = vpop.f32.mrb[0].mxu0
  %512 = vmatprep.mubr.bf16.mxu0 0
  %513 = vmatmul.mubr.bf16.gmra.mrb[0].mxu0 %v336
  %v514 = vpop.f32.mrb[0].mxu0
  %v515 = vadd.f32 0.0, %v514
  %v516 = vpop.f32.mrb[0].mxu0
  %v517 = vpop.f32.mrb[0].mxu0
  %v518 = vadd.f32 0.0, %v517
  %v519 = vpop.f32.mrb[0].mxu0
  %520 = vmatprep.mubr.bf16.mxu0 0
  %521 = vmatmul.mubr.bf16.gmra.mrb[0].mxu0 %v339
  %v522 = vpop.f32.mrb[0].mxu0
  %v523 = vadd.f32 0.0, %v522
  %v524 = vpop.f32.mrb[0].mxu0
  %v525 = vpop.f32.mrb[0].mxu0
  %v526 = vadd.f32 0.0, %v525
  %v527 = vpop.f32.mrb[0].mxu0
  %528 = vmatprep.mubr.bf16.mxu0 0
  %529 = vmatmul.mubr.bf16.gmra.mrb[0].mxu0 %v342
  %v530 = vpop.f32.mrb[0].mxu0
  %v531 = vadd.f32 0.0, %v530
  %v532 = vpop.f32.mrb[0].mxu0
  %v533 = vpop.f32.mrb[0].mxu0
  %v534 = vadd.f32 0.0, %v533
  %v535 = vpop.f32.mrb[0].mxu0
  %536 = vmatprep.mubr.bf16.mxu0 0
  %537 = vmatmul.mubr.bf16.gmra.mrb[0].mxu0 %v345
  %v538 = vpop.f32.mrb[0].mxu0
  %v539 = vadd.f32 0.0, %v538
  %v540 = vpop.f32.mrb[0].mxu0
  %v541 = vpop.f32.mrb[0].mxu0
  %v542 = vadd.f32 0.0, %v541
  %v543 = vpop.f32.mrb[0].mxu0
  %544 = vmatprep.mubr.bf16.mxu0 0
  %545 = vmatmul.mubr.bf16.gmra.mrb[0].mxu0 %v348
  %v546 = vpop.f32.mrb[0].mxu0
  %v547 = vadd.f32 0.0, %v546
  %v548 = vpop.f32.mrb[0].mxu0
  %v549 = vpop.f32.mrb[0].mxu0
  %v550 = vadd.f32 0.0, %v549
  %v551 = vpop.f32.mrb[0].mxu0
  %552 = vmatprep.mubr.bf16.mxu0 0
  %553 = vmatmul.mubr.bf16.gmra.mrb[0].mxu0 %v351
  %v554 = vpop.f32.mrb[0].mxu0
  %v555 = vadd.f32 0.0, %v554
  %v556 = vpop.f32.mrb[0].mxu0
  %v557 = vpop.f32.mrb[0].mxu0
  %v558 = vadd.f32 0.0, %v557
  %v559 = vpop.f32.mrb[0].mxu0
  %560 = vmatprep.mubr.bf16.mxu0 0
  %561 = vmatmul.mubr.bf16.gmra.mrb[0].mxu0 %v354
  %v562 = vpop.f32.mrb[0].mxu0
  %v563 = vadd.f32 0.0, %v562
  %v564 = vpop.f32.mrb[0].mxu0
  %v565 = vpop.f32.mrb[0].mxu0
  %v566 = vadd.f32 0.0, %v565
  %v567 = vpop.f32.mrb[0].mxu0
  %568 = vmatprep.mubr.bf16.mxu0 0
  %569 = vmatmul.mubr.bf16.gmra.mrb[0].mxu0 %v357
  %v570 = vpop.f32.mrb[0].mxu0
  %v571 = vadd.f32 0.0, %v570
  %v572 = vpop.f32.mrb[0].mxu0
  %v573 = vpop.f32.mrb[0].mxu0
  %v574 = vadd.f32 0.0, %v573
  %v575 = vpop.f32.mrb[0].mxu0
  %576 = vmatprep.mubr.bf16.mxu0 0
  %577 = vmatmul.mubr.bf16.gmra.mrb[0].mxu0 %v360
  %v578 = vpop.f32.mrb[0].mxu0
  %v579 = vadd.f32 0.0, %v578
  %v580 = vpop.f32.mrb[0].mxu0
  %v581 = vpop.f32.mrb[0].mxu0
  %v582 = vadd.f32 0.0, %v581
  %v583 = vpop.f32.mrb[0].mxu0
  %584 = vmatprep.mubr.bf16.mxu0 0
  %585 = vmatmul.mubr.bf16.gmra.mrb[0].mxu0 %v363
  %v586 = vpop.f32.mrb[0].mxu0
  %v587 = vadd.f32 0.0, %v586
  %v588 = vpop.f32.mrb[0].mxu0
  %v589 = vpop.f32.mrb[0].mxu0
  %v590 = vadd.f32 0.0, %v589
  %v591 = vpop.f32.mrb[0].mxu0
  %592 = vmatprep.mubr.bf16.mxu0 0
  %593 = vmatmul.mubr.bf16.gmra.mrb[0].mxu0 %v366
  %v594 = vpop.f32.mrb[0].mxu0
  %v595 = vadd.f32 0.0, %v594
  %v596 = vpop.f32.mrb[0].mxu0
  %v597 = vpop.f32.mrb[0].mxu0
  %v598 = vadd.f32 0.0, %v597
  %v599 = vpop.f32.mrb[0].mxu0
  %600 = vmatprep.mubr.bf16.mxu0 0
  %601 = vmatmul.mubr.bf16.gmra.mrb[0].mxu0 %v369
  %v602 = vpop.f32.mrb[0].mxu0
  %v603 = vadd.f32 0.0, %v602
  %v604 = vpop.f32.mrb[0].mxu0
  %v605 = vpop.f32.mrb[0].mxu0
  %v606 = vadd.f32 0.0, %v605
  %v607 = vpop.f32.mrb[0].mxu0
  %608 = vmatprep.mubr.bf16.mxu0 0
  %609 = vmatmul.mubr.bf16.gmra.mrb[0].mxu0 %v372
  %v610 = vpop.f32.mrb[0].mxu0
  %v611 = vadd.f32 0.0, %v610
  %v612 = vpop.f32.mrb[0].mxu0
  %v613 = vpop.f32.mrb[0].mxu0
  %v614 = vadd.f32 0.0, %v613
  %v615 = vpop.f32.mrb[0].mxu0
  %616 = vmatprep.mubr.bf16.mxu0 0
  %617 = vmatmul.mubr.bf16.gmra.mrb[0].mxu0 %v375
  %v618 = vpop.f32.mrb[0].mxu0
  %v619 = vadd.f32 0.0, %v618
  %v620 = vpop.f32.mrb[0].mxu0
  %v621 = vpop.f32.mrb[0].mxu0
  %v622 = vadd.f32 0.0, %v621
  %v623 = vpop.f32.mrb[0].mxu0
  %624 = vmatprep.mubr.bf16.mxu0 0
  %625 = vmatmul.mubr.bf16.gmra.mrb[0].mxu0 %v378
  %v626 = vpop.f32.mrb[0].mxu0
  %v627 = vadd.f32 0.0, %v626
  %v628 = vpop.f32.mrb[0].mxu0
  %v629 = vpop.f32.mrb[0].mxu0
  %v630 = vadd.f32 0.0, %v629
  %v631 = vpop.f32.mrb[0].mxu0
  %632 = vmatprep.mubr.bf16.mxu0 0
  %633 = vmatmul.mubr.bf16.gmra.mrb[0].mxu0 %v381
  %v634 = vpop.f32.mrb[0].mxu0
  %v635 = vadd.f32 0.0, %v634
  %v636 = vpop.f32.mrb[0].mxu0
  %v637 = vpop.f32.mrb[0].mxu0
  %v638 = vadd.f32 0.0, %v637
  %v639 = vpop.f32.mrb[0].mxu0
  %640 = vmatprep.mubr.bf16.mxu0 0
  %641 = vmatmul.mubr.bf16.gmra.mrb[0].mxu0 %v384
  %v642 = vpop.f32.mrb[0].mxu0
  %v643 = vadd.f32 0.0, %v642
  %v644 = vpop.f32.mrb[0].mxu0
  %v645 = vpop.f32.mrb[0].mxu0
  %v646 = vadd.f32 0.0, %v645
  %v647 = vpop.f32.mrb[0].mxu0
  %648 = vmatprep.mubr.bf16.mxu0 0
  %649 = vmatmul.mubr.bf16.gmra.mrb[0].mxu0 %v387
  %v650 = vpop.f32.mrb[0].mxu0
  %v651 = vadd.f32 0.0, %v650
  %v652 = vpop.f32.mrb[0].mxu0
  %v653 = vpop.f32.mrb[0].mxu0
  %v654 = vadd.f32 0.0, %v653
  %v655 = vpop.f32.mrb[0].mxu0
  %656 = vmatprep.mubr.bf16.mxu0 0
  %657 = vmatmul.mubr.bf16.gmra.mrb[0].mxu0 %v390
  %v658 = vpop.f32.mrb[0].mxu0
  %v659 = vadd.f32 0.0, %v658
  %v660 = vpop.f32.mrb[0].mxu0
  %v661 = vpop.f32.mrb[0].mxu0
  %v662 = vadd.f32 0.0, %v661
  %v663 = vpop.f32.mrb[0].mxu0
  %664 = vmatprep.mubr.bf16.mxu0 0
  %665 = vmatmul.mubr.bf16.gmra.mrb[0].mxu0 %v393
  %v666 = vpop.f32.mrb[0].mxu0
  %v667 = vadd.f32 0.0, %v666
  %v668 = vpop.f32.mrb[0].mxu0
  %v669 = vpop.f32.mrb[0].mxu0
  %v670 = vadd.f32 0.0, %v669
  %v671 = vpop.f32.mrb[0].mxu0
  %672 = vmatprep.mubr.bf16.mxu0 0
  %673 = vmatmul.mubr.bf16.gmra.mrb[0].mxu0 %v396
  %v674 = vpop.f32.mrb[0].mxu0
  %v675 = vadd.f32 0.0, %v674
  %v676 = vpop.f32.mrb[0].mxu0
  %v677 = vpop.f32.mrb[0].mxu0
  %v678 = vadd.f32 0.0, %v677
  %v679 = vpop.f32.mrb[0].mxu0
  %680 = vmatprep.mubr.bf16.mxu0 0
  %681 = vmatmul.mubr.bf16.gmra.mrb[0].mxu0 %v399
  %v682 = vpop.f32.mrb[0].mxu0
  %v683 = vadd.f32 0.0, %v682
  %v684 = vpop.f32.mrb[0].mxu0
  %v685 = vpop.f32.mrb[0].mxu0
  %v686 = vadd.f32 0.0, %v685
  %v687 = vpop.f32.mrb[0].mxu0
  %688 = vmatprep.mubr.bf16.mxu0 0
  %689 = vmatmul.mubr.bf16.gmra.mrb[0].mxu0 %v402
  %v690 = vpop.f32.mrb[0].mxu0
  %v691 = vadd.f32 0.0, %v690
  %v692 = vpop.f32.mrb[0].mxu0
  %v693 = vpop.f32.mrb[0].mxu0
  %v694 = vadd.f32 0.0, %v693
  %v695 = vpop.f32.mrb[0].mxu0
  %696 = vdwg.mxu0
  %s697 = smul.u32 0, 512
  %s698 = scalar_lea.vmem [#allocation2], %s697
  %vm699 = vcmask 31744
  %700 = vst.msk [vmem:[%s698] sm:$0xff] %vm699, %v443
  %701 = vst.msk [vmem:[%s698 + $0x8] sm:$0xff] %vm699, %v446
  %702 = vst.msk [vmem:[%s698 + $0x10] sm:$0xff] %vm699, %v451
  %703 = vst.msk [vmem:[%s698 + $0x18] sm:$0xff] %vm699, %v454
  %704 = vst.msk [vmem:[%s698 + $0x20] sm:$0xff] %vm699, %v459
  %705 = vst.msk [vmem:[%s698 + $0x28] sm:$0xff] %vm699, %v462
  %706 = vst.msk [vmem:[%s698 + $0x30] sm:$0xff] %vm699, %v467
  %707 = vst.msk [vmem:[%s698 + $0x38] sm:$0xff] %vm699, %v470
  %708 = vst.msk [vmem:[%s698 + $0x40] sm:$0xff] %vm699, %v475
  %709 = vst.msk [vmem:[%s698 + $0x48] sm:$0xff] %vm699, %v478
  %710 = vst.msk [vmem:[%s698 + $0x50] sm:$0xff] %vm699, %v483
  %711 = vst.msk [vmem:[%s698 + $0x58] sm:$0xff] %vm699, %v486
  %712 = vst.msk [vmem:[%s698 + $0x60] sm:$0xff] %vm699, %v491
  %713 = vst.msk [vmem:[%s698 + $0x68] sm:$0xff] %vm699, %v494
  %714 = vst.msk [vmem:[%s698 + $0x70] sm:$0xff] %vm699, %v499
  %715 = vst.msk [vmem:[%s698 + $0x78] sm:$0xff] %vm699, %v502
  %716 = vst.msk [vmem:[%s698 + $0x80] sm:$0xff] %vm699, %v507
  %717 = vst.msk [vmem:[%s698 + $0x88] sm:$0xff] %vm699, %v510
  %718 = vst.msk [vmem:[%s698 + $0x90] sm:$0xff] %vm699, %v515
  %719 = vst.msk [vmem:[%s698 + $0x98] sm:$0xff] %vm699, %v518
  %720 = vst.msk [vmem:[%s698 + $0xa0] sm:$0xff] %vm699, %v523
  %721 = vst.msk [vmem:[%s698 + $0xa8] sm:$0xff] %vm699, %v526
  %722 = vst.msk [vmem:[%s698 + $0xb0] sm:$0xff] %vm699, %v531
  %723 = vst.msk [vmem:[%s698 + $0xb8] sm:$0xff] %vm699, %v534
  %724 = vst.msk [vmem:[%s698 + $0xc0] sm:$0xff] %vm699, %v539
  %725 = vst.msk [vmem:[%s698 + $0xc8] sm:$0xff] %vm699, %v542
  %726 = vst.msk [vmem:[%s698 + $0xd0] sm:$0xff] %vm699, %v547
  %727 = vst.msk [vmem:[%s698 + $0xd8] sm:$0xff] %vm699, %v550
  %728 = vst.msk [vmem:[%s698 + $0xe0] sm:$0xff] %vm699, %v555
  %729 = vst.msk [vmem:[%s698 + $0xe8] sm:$0xff] %vm699, %v558
  %730 = vst.msk [vmem:[%s698 + $0xf0] sm:$0xff] %vm699, %v563
  %731 = vst.msk [vmem:[%s698 + $0xf8] sm:$0xff] %vm699, %v566
  %732 = vst.msk [vmem:[%s698 + $0x100] sm:$0xff] %vm699, %v571
  %733 = vst.msk [vmem:[%s698 + $0x108] sm:$0xff] %vm699, %v574
  %734 = vst.msk [vmem:[%s698 + $0x110] sm:$0xff] %vm699, %v579
  %735 = vst.msk [vmem:[%s698 + $0x118] sm:$0xff] %vm699, %v582
  %736 = vst.msk [vmem:[%s698 + $0x120] sm:$0xff] %vm699, %v587
  %737 = vst.msk [vmem:[%s698 + $0x128] sm:$0xff] %vm699, %v590
  %738 = vst.msk [vmem:[%s698 + $0x130] sm:$0xff] %vm699, %v595
  %739 = vst.msk [vmem:[%s698 + $0x138] sm:$0xff] %vm699, %v598
  %740 = vst.msk [vmem:[%s698 + $0x140] sm:$0xff] %vm699, %v603
  %741 = vst.msk [vmem:[%s698 + $0x148] sm:$0xff] %vm699, %v606
  %742 = vst.msk [vmem:[%s698 + $0x150] sm:$0xff] %vm699, %v611
  %743 = vst.msk [vmem:[%s698 + $0x158] sm:$0xff] %vm699, %v614
  %744 = vst.msk [vmem:[%s698 + $0x160] sm:$0xff] %vm699, %v619
  %745 = vst.msk [vmem:[%s698 + $0x168] sm:$0xff] %vm699, %v622
  %746 = vst.msk [vmem:[%s698 + $0x170] sm:$0xff] %vm699, %v627
  %747 = vst.msk [vmem:[%s698 + $0x178] sm:$0xff] %vm699, %v630
  %748 = vst.msk [vmem:[%s698 + $0x180] sm:$0xff] %vm699, %v635
  %749 = vst.msk [vmem:[%s698 + $0x188] sm:$0xff] %vm699, %v638
  %750 = vst.msk [vmem:[%s698 + $0x190] sm:$0xff] %vm699, %v643
  %751 = vst.msk [vmem:[%s698 + $0x198] sm:$0xff] %vm699, %v646
  %752 = vst.msk [vmem:[%s698 + $0x1a0] sm:$0xff] %vm699, %v651
  %753 = vst.msk [vmem:[%s698 + $0x1a8] sm:$0xff] %vm699, %v654
  %754 = vst.msk [vmem:[%s698 + $0x1b0] sm:$0xff] %vm699, %v659
  %755 = vst.msk [vmem:[%s698 + $0x1b8] sm:$0xff] %vm699, %v662
  %756 = vst.msk [vmem:[%s698 + $0x1c0] sm:$0xff] %vm699, %v667
  %757 = vst.msk [vmem:[%s698 + $0x1c8] sm:$0xff] %vm699, %v670
  %758 = vst.msk [vmem:[%s698 + $0x1d0] sm:$0xff] %vm699, %v675
  %759 = vst.msk [vmem:[%s698 + $0x1d8] sm:$0xff] %vm699, %v678
  %760 = vst.msk [vmem:[%s698 + $0x1e0] sm:$0xff] %vm699, %v683
  %761 = vst.msk [vmem:[%s698 + $0x1e8] sm:$0xff] %vm699, %v686
  %762 = vst.msk [vmem:[%s698 + $0x1f0] sm:$0xff] %vm699, %v691
  %763 = vst.msk [vmem:[%s698 + $0x1f8] sm:$0xff] %vm699, %v694
  %p764 = scmp.eq.s32.totalorder 0, 0
  // Predicated region
  $region10: #{_lambda_.11} parent=0 // pred_check
    %p765 = pneg %p764
  $region11: #{_lambda_.11} parent=0 // pred_check_branch
    %767 = sbr.rel (%p765) target = $region13
  $region12: #{_lambda_.11} parent=0 // pred_region
    %v768 = vld [vmem:[#allocation2] sm:$0xff]
    %v769 = vld [vmem:[#allocation2 + $0x8] sm:$0xff]
    %v770 = vld [vmem:[#allocation2 + $0x10] sm:$0xff]
    %v771 = vld [vmem:[#allocation2 + $0x18] sm:$0xff]
    %v772 = vld [vmem:[#allocation2 + $0x20] sm:$0xff]
    %v773 = vld [vmem:[#allocation2 + $0x28] sm:$0xff]
    %v774 = vld [vmem:[#allocation2 + $0x30] sm:$0xff]
    %v775 = vld [vmem:[#allocation2 + $0x38] sm:$0xff]
    %v776 = vld [vmem:[#allocation2 + $0x40] sm:$0xff]
    %v777 = vld [vmem:[#allocation2 + $0x48] sm:$0xff]
    %v778 = vld [vmem:[#allocation2 + $0x50] sm:$0xff]
    %v779 = vld [vmem:[#allocation2 + $0x58] sm:$0xff]
    %v780 = vld [vmem:[#allocation2 + $0x60] sm:$0xff]
    %v781 = vld [vmem:[#allocation2 + $0x68] sm:$0xff]
    %v782 = vld [vmem:[#allocation2 + $0x70] sm:$0xff]
    %v783 = vld [vmem:[#allocation2 + $0x78] sm:$0xff]
    %v784 = vld [vmem:[#allocation2 + $0x80] sm:$0xff]
    %v785 = vld [vmem:[#allocation2 + $0x88] sm:$0xff]
    %v786 = vld [vmem:[#allocation2 + $0x90] sm:$0xff]
    %v787 = vld [vmem:[#allocation2 + $0x98] sm:$0xff]
    %v788 = vld [vmem:[#allocation2 + $0xa0] sm:$0xff]
    %v789 = vld [vmem:[#allocation2 + $0xa8] sm:$0xff]
    %v790 = vld [vmem:[#allocation2 + $0xb0] sm:$0xff]
    %v791 = vld [vmem:[#allocation2 + $0xb8] sm:$0xff]
    %v792 = vld [vmem:[#allocation2 + $0xc0] sm:$0xff]
    %v793 = vld [vmem:[#allocation2 + $0xc8] sm:$0xff]
    %v794 = vld [vmem:[#allocation2 + $0xd0] sm:$0xff]
    %v795 = vld [vmem:[#allocation2 + $0xd8] sm:$0xff]
    %v796 = vld [vmem:[#allocation2 + $0xe0] sm:$0xff]
    %v797 = vld [vmem:[#allocation2 + $0xe8] sm:$0xff]
    %v798 = vld [vmem:[#allocation2 + $0xf0] sm:$0xff]
    %v799 = vld [vmem:[#allocation2 + $0xf8] sm:$0xff]
    %v800 = vld [vmem:[#allocation2 + $0x100] sm:$0xff]
    %v801 = vld [vmem:[#allocation2 + $0x108] sm:$0xff]
    %v802 = vld [vmem:[#allocation2 + $0x110] sm:$0xff]
    %v803 = vld [vmem:[#allocation2 + $0x118] sm:$0xff]
    %v804 = vld [vmem:[#allocation2 + $0x120] sm:$0xff]
    %v805 = vld [vmem:[#allocation2 + $0x128] sm:$0xff]
    %v806 = vld [vmem:[#allocation2 + $0x130] sm:$0xff]
    %v807 = vld [vmem:[#allocation2 + $0x138] sm:$0xff]
    %v808 = vld [vmem:[#allocation2 + $0x140] sm:$0xff]
    %v809 = vld [vmem:[#allocation2 + $0x148] sm:$0xff]
    %v810 = vld [vmem:[#allocation2 + $0x150] sm:$0xff]
    %v811 = vld [vmem:[#allocation2 + $0x158] sm:$0xff]
    %v812 = vld [vmem:[#allocation2 + $0x160] sm:$0xff]
    %v813 = vld [vmem:[#allocation2 + $0x168] sm:$0xff]
    %v814 = vld [vmem:[#allocation2 + $0x170] sm:$0xff]
    %v815 = vld [vmem:[#allocation2 + $0x178] sm:$0xff]
    %v816 = vld [vmem:[#allocation2 + $0x180] sm:$0xff]
    %v817 = vld [vmem:[#allocation2 + $0x188] sm:$0xff]
    %v818 = vld [vmem:[#allocation2 + $0x190] sm:$0xff]
    %v819 = vld [vmem:[#allocation2 + $0x198] sm:$0xff]
    %v820 = vld [vmem:[#allocation2 + $0x1a0] sm:$0xff]
    %v821 = vld [vmem:[#allocation2 + $0x1a8] sm:$0xff]
    %v822 = vld [vmem:[#allocation2 + $0x1b0] sm:$0xff]
    %v823 = vld [vmem:[#allocation2 + $0x1b8] sm:$0xff]
    %v824 = vld [vmem:[#allocation2 + $0x1c0] sm:$0xff]
    %v825 = vld [vmem:[#allocation2 + $0x1c8] sm:$0xff]
    %v826 = vld [vmem:[#allocation2 + $0x1d0] sm:$0xff]
    %v827 = vld [vmem:[#allocation2 + $0x1d8] sm:$0xff]
    %v828 = vld [vmem:[#allocation2 + $0x1e0] sm:$0xff]
    %v829 = vld [vmem:[#allocation2 + $0x1e8] sm:$0xff]
    %v830 = vld [vmem:[#allocation2 + $0x1f0] sm:$0xff]
    %v831 = vld [vmem:[#allocation2 + $0x1f8] sm:$0xff]
    %v832 = vsel %vm699, %v768, 0.0
    %v833 = vsel %vm699, %v769, 0.0
    %v834 = vadd.f32 %v832, %v833
    %v835 = vsel %vm699, %v770, 0.0
    %v836 = vadd.f32 %v834, %v835
    %v837 = vsel %vm699, %v771, 0.0
    %v838 = vadd.f32 %v836, %v837
    %v839 = vsel %vm699, %v772, 0.0
    %v840 = vadd.f32 %v838, %v839
    %v841 = vsel %vm699, %v773, 0.0
    %v842 = vadd.f32 %v840, %v841
    %v843 = vsel %vm699, %v774, 0.0
    %v844 = vadd.f32 %v842, %v843
    %v845 = vsel %vm699, %v775, 0.0
    %v846 = vadd.f32 %v844, %v845
    %v847 = vsel %vm699, %v776, 0.0
    %v848 = vadd.f32 %v846, %v847
    %v849 = vsel %vm699, %v777, 0.0
    %v850 = vadd.f32 %v848, %v849
    %v851 = vsel %vm699, %v778, 0.0
    %v852 = vadd.f32 %v850, %v851
    %v853 = vsel %vm699, %v779, 0.0
    %v854 = vadd.f32 %v852, %v853
    %v855 = vsel %vm699, %v780, 0.0
    %v856 = vadd.f32 %v854, %v855
    %v857 = vsel %vm699, %v781, 0.0
    %v858 = vadd.f32 %v856, %v857
    %v859 = vsel %vm699, %v782, 0.0
    %v860 = vadd.f32 %v858, %v859
    %v861 = vsel %vm699, %v783, 0.0
    %v862 = vadd.f32 %v860, %v861
    %v863 = vsel %vm699, %v784, 0.0
    %v864 = vadd.f32 %v862, %v863
    %v865 = vsel %vm699, %v785, 0.0
    %v866 = vadd.f32 %v864, %v865
    %v867 = vsel %vm699, %v786, 0.0
    %v868 = vadd.f32 %v866, %v867
    %v869 = vsel %vm699, %v787, 0.0
    %v870 = vadd.f32 %v868, %v869
    %v871 = vsel %vm699, %v788, 0.0
    %v872 = vadd.f32 %v870, %v871
    %v873 = vsel %vm699, %v789, 0.0
    %v874 = vadd.f32 %v872, %v873
    %v875 = vsel %vm699, %v790, 0.0
    %v876 = vadd.f32 %v874, %v875
    %v877 = vsel %vm699, %v791, 0.0
    %v878 = vadd.f32 %v876, %v877
    %v879 = vsel %vm699, %v792, 0.0
    %v880 = vadd.f32 %v878, %v879
    %v881 = vsel %vm699, %v793, 0.0
    %v882 = vadd.f32 %v880, %v881
    %v883 = vsel %vm699, %v794, 0.0
    %v884 = vadd.f32 %v882, %v883
    %v885 = vsel %vm699, %v795, 0.0
    %v886 = vadd.f32 %v884, %v885
    %v887 = vsel %vm699, %v796, 0.0
    %v888 = vadd.f32 %v886, %v887
    %v889 = vsel %vm699, %v797, 0.0
    %v890 = vadd.f32 %v888, %v889
    %v891 = vsel %vm699, %v798, 0.0
    %v892 = vadd.f32 %v890, %v891
    %v893 = vsel %vm699, %v799, 0.0
    %v894 = vadd.f32 %v892, %v893
    %v895 = vsel %vm699, %v800, 0.0
    %v896 = vadd.f32 %v894, %v895
    %v897 = vsel %vm699, %v801, 0.0
    %v898 = vadd.f32 %v896, %v897
    %v899 = vsel %vm699, %v802, 0.0
    %v900 = vadd.f32 %v898, %v899
    %v901 = vsel %vm699, %v803, 0.0
    %v902 = vadd.f32 %v900, %v901
    %v903 = vsel %vm699, %v804, 0.0
    %v904 = vadd.f32 %v902, %v903
    %v905 = vsel %vm699, %v805, 0.0
    %v906 = vadd.f32 %v904, %v905
    %v907 = vsel %vm699, %v806, 0.0
    %v908 = vadd.f32 %v906, %v907
    %v909 = vsel %vm699, %v807, 0.0
    %v910 = vadd.f32 %v908, %v909
    %v911 = vsel %vm699, %v808, 0.0
    %v912 = vadd.f32 %v910, %v911
    %v913 = vsel %vm699, %v809, 0.0
    %v914 = vadd.f32 %v912, %v913
    %v915 = vsel %vm699, %v810, 0.0
    %v916 = vadd.f32 %v914, %v915
    %v917 = vsel %vm699, %v811, 0.0
    %v918 = vadd.f32 %v916, %v917
    %v919 = vsel %vm699, %v812, 0.0
    %v920 = vadd.f32 %v918, %v919
    %v921 = vsel %vm699, %v813, 0.0
    %v922 = vadd.f32 %v920, %v921
    %v923 = vsel %vm699, %v814, 0.0
    %v924 = vadd.f32 %v922, %v923
    %v925 = vsel %vm699, %v815, 0.0
    %v926 = vadd.f32 %v924, %v925
    %v927 = vsel %vm699, %v816, 0.0
    %v928 = vadd.f32 %v926, %v927
    %v929 = vsel %vm699, %v817, 0.0
    %v930 = vadd.f32 %v928, %v929
    %v931 = vsel %vm699, %v818, 0.0
    %v932 = vadd.f32 %v930, %v931
    %v933 = vsel %vm699, %v819, 0.0
    %v934 = vadd.f32 %v932, %v933
    %v935 = vsel %vm699, %v820, 0.0
    %v936 = vadd.f32 %v934, %v935
    %v937 = vsel %vm699, %v821, 0.0
    %v938 = vadd.f32 %v936, %v937
    %v939 = vsel %vm699, %v822, 0.0
    %v940 = vadd.f32 %v938, %v939
    %v941 = vsel %vm699, %v823, 0.0
    %v942 = vadd.f32 %v940, %v941
    %v943 = vsel %vm699, %v824, 0.0
    %v944 = vadd.f32 %v942, %v943
    %v945 = vsel %vm699, %v825, 0.0
    %v946 = vadd.f32 %v944, %v945
    %v947 = vsel %vm699, %v826, 0.0
    %v948 = vadd.f32 %v946, %v947
    %v949 = vsel %vm699, %v827, 0.0
    %v950 = vadd.f32 %v948, %v949
    %v951 = vsel %vm699, %v828, 0.0
    %v952 = vadd.f32 %v950, %v951
    %v953 = vsel %vm699, %v829, 0.0
    %v954 = vadd.f32 %v952, %v953
    %v955 = vsel %vm699, %v830, 0.0
    %v956 = vadd.f32 %v954, %v955
    %v957 = vsel %vm699, %v831, 0.0
    %v958 = vadd.f32 %v956, %v957
    %v959 = vrot.slane %v958, 4
    %v960 = vadd.f32 %v958, %v959
    %v961 = vrot.slane %v960, 2
    %v962 = vadd.f32 %v960, %v961
    %v963 = vrot.slane %v962, 1
    %v964 = vadd.f32 %v962, %v963
    %v965 = vrcp.pop 512.0
    %v966 = vmul.f32 %v964, %v965
    %v967 = vsub.f32 %v768, %v966
    %v968 = vsub.f32 %v769, %v966
    %v969 = vsub.f32 %v770, %v966
    %v970 = vsub.f32 %v771, %v966
    %v971 = vsub.f32 %v772, %v966
    %v972 = vsub.f32 %v773, %v966
    %v973 = vsub.f32 %v774, %v966
    %v974 = vsub.f32 %v775, %v966
    %v975 = vsub.f32 %v776, %v966
    %v976 = vsub.f32 %v777, %v966
    %v977 = vsub.f32 %v778, %v966
    %v978 = vsub.f32 %v779, %v966
    %v979 = vsub.f32 %v780, %v966
    %v980 = vsub.f32 %v781, %v966
    %v981 = vsub.f32 %v782, %v966
    %v982 = vsub.f32 %v783, %v966
    %v983 = vsub.f32 %v784, %v966
    %v984 = vsub.f32 %v785, %v966
    %v985 = vsub.f32 %v786, %v966
    %v986 = vsub.f32 %v787, %v966
    %v987 = vsub.f32 %v788, %v966
    %v988 = vsub.f32 %v789, %v966
    %v989 = vsub.f32 %v790, %v966
    %v990 = vsub.f32 %v791, %v966
    %v991 = vsub.f32 %v792, %v966
    %v992 = vsub.f32 %v793, %v966
    %v993 = vsub.f32 %v794, %v966
    %v994 = vsub.f32 %v795, %v966
    %v995 = vsub.f32 %v796, %v966
    %v996 = vsub.f32 %v797, %v966
    %v997 = vsub.f32 %v798, %v966
    %v998 = vsub.f32 %v799, %v966
    %v999 = vsub.f32 %v800, %v966
    %v1000 = vsub.f32 %v801, %v966
    %v1001 = vsub.f32 %v802, %v966
    %v1002 = vsub.f32 %v803, %v966
    %v1003 = vsub.f32 %v804, %v966
    %v1004 = vsub.f32 %v805, %v966
    %v1005 = vsub.f32 %v806, %v966
    %v1006 = vsub.f32 %v807, %v966
    %v1007 = vsub.f32 %v808, %v966
    %v1008 = vsub.f32 %v809, %v966
    %v1009 = vsub.f32 %v810, %v966
    %v1010 = vsub.f32 %v811, %v966
    %v1011 = vsub.f32 %v812, %v966
    %v1012 = vsub.f32 %v813, %v966
    %v1013 = vsub.f32 %v814, %v966
    %v1014 = vsub.f32 %v815, %v966
    %v1015 = vsub.f32 %v816, %v966
    %v1016 = vsub.f32 %v817, %v966
    %v1017 = vsub.f32 %v818, %v966
    %v1018 = vsub.f32 %v819, %v966
    %v1019 = vsub.f32 %v820, %v966
    %v1020 = vsub.f32 %v821, %v966
    %v1021 = vsub.f32 %v822, %v966
    %v1022 = vsub.f32 %v823, %v966
    %v1023 = vsub.f32 %v824, %v966
    %v1024 = vsub.f32 %v825, %v966
    %v1025 = vsub.f32 %v826, %v966
    %v1026 = vsub.f32 %v827, %v966
    %v1027 = vsub.f32 %v828, %v966
    %v1028 = vsub.f32 %v829, %v966
    %v1029 = vsub.f32 %v830, %v966
    %v1030 = vsub.f32 %v831, %v966
    %v1031 = vmul.f32 %v967, %v967
    %v1032 = vmul.f32 %v968, %v968
    %v1033 = vmul.f32 %v969, %v969
    %v1034 = vmul.f32 %v970, %v970
    %v1035 = vmul.f32 %v971, %v971
    %v1036 = vmul.f32 %v972, %v972
    %v1037 = vmul.f32 %v973, %v973
    %v1038 = vmul.f32 %v974, %v974
    %v1039 = vmul.f32 %v975, %v975
    %v1040 = vmul.f32 %v976, %v976
    %v1041 = vmul.f32 %v977, %v977
    %v1042 = vmul.f32 %v978, %v978
    %v1043 = vmul.f32 %v979, %v979
    %v1044 = vmul.f32 %v980, %v980
    %v1045 = vmul.f32 %v981, %v981
    %v1046 = vmul.f32 %v982, %v982
    %v1047 = vmul.f32 %v983, %v983
    %v1048 = vmul.f32 %v984, %v984
    %v1049 = vmul.f32 %v985, %v985
    %v1050 = vmul.f32 %v986, %v986
    %v1051 = vmul.f32 %v987, %v987
    %v1052 = vmul.f32 %v988, %v988
    %v1053 = vmul.f32 %v989, %v989
    %v1054 = vmul.f32 %v990, %v990
    %v1055 = vmul.f32 %v991, %v991
    %v1056 = vmul.f32 %v992, %v992
    %v1057 = vmul.f32 %v993, %v993
    %v1058 = vmul.f32 %v994, %v994
    %v1059 = vmul.f32 %v995, %v995
    %v1060 = vmul.f32 %v996, %v996
    %v1061 = vmul.f32 %v997, %v997
    %v1062 = vmul.f32 %v998, %v998
    %v1063 = vmul.f32 %v999, %v999
    %v1064 = vmul.f32 %v1000, %v1000
    %v1065 = vmul.f32 %v1001, %v1001
    %v1066 = vmul.f32 %v1002, %v1002
    %v1067 = vmul.f32 %v1003, %v1003
    %v1068 = vmul.f32 %v1004, %v1004
    %v1069 = vmul.f32 %v1005, %v1005
    %v1070 = vmul.f32 %v1006, %v1006
    %v1071 = vmul.f32 %v1007, %v1007
    %v1072 = vmul.f32 %v1008, %v1008
    %v1073 = vmul.f32 %v1009, %v1009
    %v1074 = vmul.f32 %v1010, %v1010
    %v1075 = vmul.f32 %v1011, %v1011
    %v1076 = vmul.f32 %v1012, %v1012
    %v1077 = vmul.f32 %v1013, %v1013
    %v1078 = vmul.f32 %v1014, %v1014
    %v1079 = vmul.f32 %v1015, %v1015
    %v1080 = vmul.f32 %v1016, %v1016
    %v1081 = vmul.f32 %v1017, %v1017
    %v1082 = vmul.f32 %v1018, %v1018
    %v1083 = vmul.f32 %v1019, %v1019
    %v1084 = vmul.f32 %v1020, %v1020
    %v1085 = vmul.f32 %v1021, %v1021
    %v1086 = vmul.f32 %v1022, %v1022
    %v1087 = vmul.f32 %v1023, %v1023
    %v1088 = vmul.f32 %v1024, %v1024
    %v1089 = vmul.f32 %v1025, %v1025
    %v1090 = vmul.f32 %v1026, %v1026
    %v1091 = vmul.f32 %v1027, %v1027
    %v1092 = vmul.f32 %v1028, %v1028
    %v1093 = vmul.f32 %v1029, %v1029
    %v1094 = vmul.f32 %v1030, %v1030
    %v1095 = vsel %vm699, %v1031, 0.0
    %v1096 = vsel %vm699, %v1032, 0.0
    %v1097 = vadd.f32 %v1095, %v1096
    %v1098 = vsel %vm699, %v1033, 0.0
    %v1099 = vadd.f32 %v1097, %v1098
    %v1100 = vsel %vm699, %v1034, 0.0
    %v1101 = vadd.f32 %v1099, %v1100
    %v1102 = vsel %vm699, %v1035, 0.0
    %v1103 = vadd.f32 %v1101, %v1102
    %v1104 = vsel %vm699, %v1036, 0.0
    %v1105 = vadd.f32 %v1103, %v1104
    %v1106 = vsel %vm699, %v1037, 0.0
    %v1107 = vadd.f32 %v1105, %v1106
    %v1108 = vsel %vm699, %v1038, 0.0
    %v1109 = vadd.f32 %v1107, %v1108
    %v1110 = vsel %vm699, %v1039, 0.0
    %v1111 = vadd.f32 %v1109, %v1110
    %v1112 = vsel %vm699, %v1040, 0.0
    %v1113 = vadd.f32 %v1111, %v1112
    %v1114 = vsel %vm699, %v1041, 0.0
    %v1115 = vadd.f32 %v1113, %v1114
    %v1116 = vsel %vm699, %v1042, 0.0
    %v1117 = vadd.f32 %v1115, %v1116
    %v1118 = vsel %vm699, %v1043, 0.0
    %v1119 = vadd.f32 %v1117, %v1118
    %v1120 = vsel %vm699, %v1044, 0.0
    %v1121 = vadd.f32 %v1119, %v1120
    %v1122 = vsel %vm699, %v1045, 0.0
    %v1123 = vadd.f32 %v1121, %v1122
    %v1124 = vsel %vm699, %v1046, 0.0
    %v1125 = vadd.f32 %v1123, %v1124
    %v1126 = vsel %vm699, %v1047, 0.0
    %v1127 = vadd.f32 %v1125, %v1126
    %v1128 = vsel %vm699, %v1048, 0.0
    %v1129 = vadd.f32 %v1127, %v1128
    %v1130 = vsel %vm699, %v1049, 0.0
    %v1131 = vadd.f32 %v1129, %v1130
    %v1132 = vsel %vm699, %v1050, 0.0
    %v1133 = vadd.f32 %v1131, %v1132
    %v1134 = vsel %vm699, %v1051, 0.0
    %v1135 = vadd.f32 %v1133, %v1134
    %v1136 = vsel %vm699, %v1052, 0.0
    %v1137 = vadd.f32 %v1135, %v1136
    %v1138 = vsel %vm699, %v1053, 0.0
    %v1139 = vadd.f32 %v1137, %v1138
    %v1140 = vsel %vm699, %v1054, 0.0
    %v1141 = vadd.f32 %v1139, %v1140
    %v1142 = vsel %vm699, %v1055, 0.0
    %v1143 = vadd.f32 %v1141, %v1142
    %v1144 = vsel %vm699, %v1056, 0.0
    %v1145 = vadd.f32 %v1143, %v1144
    %v1146 = vsel %vm699, %v1057, 0.0
    %v1147 = vadd.f32 %v1145, %v1146
    %v1148 = vsel %vm699, %v1058, 0.0
    %v1149 = vadd.f32 %v1147, %v1148
    %v1150 = vsel %vm699, %v1059, 0.0
    %v1151 = vadd.f32 %v1149, %v1150
    %v1152 = vsel %vm699, %v1060, 0.0
    %v1153 = vadd.f32 %v1151, %v1152
    %v1154 = vsel %vm699, %v1061, 0.0
    %v1155 = vadd.f32 %v1153, %v1154
    %v1156 = vsel %vm699, %v1062, 0.0
    %v1157 = vadd.f32 %v1155, %v1156
    %v1158 = vsel %vm699, %v1063, 0.0
    %v1159 = vadd.f32 %v1157, %v1158
    %v1160 = vsel %vm699, %v1064, 0.0
    %v1161 = vadd.f32 %v1159, %v1160
    %v1162 = vsel %vm699, %v1065, 0.0
    %v1163 = vadd.f32 %v1161, %v1162
    %v1164 = vsel %vm699, %v1066, 0.0
    %v1165 = vadd.f32 %v1163, %v1164
    %v1166 = vsel %vm699, %v1067, 0.0
    %v1167 = vadd.f32 %v1165, %v1166
    %v1168 = vsel %vm699, %v1068, 0.0
    %v1169 = vadd.f32 %v1167, %v1168
    %v1170 = vsel %vm699, %v1069, 0.0
    %v1171 = vadd.f32 %v1169, %v1170
    %v1172 = vsel %vm699, %v1070, 0.0
    %v1173 = vadd.f32 %v1171, %v1172
    %v1174 = vsel %vm699, %v1071, 0.0
    %v1175 = vadd.f32 %v1173, %v1174
    %v1176 = vsel %vm699, %v1072, 0.0
    %v1177 = vadd.f32 %v1175, %v1176
    %v1178 = vsel %vm699, %v1073, 0.0
    %v1179 = vadd.f32 %v1177, %v1178
    %v1180 = vsel %vm699, %v1074, 0.0
    %v1181 = vadd.f32 %v1179, %v1180
    %v1182 = vsel %vm699, %v1075, 0.0
    %v1183 = vadd.f32 %v1181, %v1182
    %v1184 = vsel %vm699, %v1076, 0.0
    %v1185 = vadd.f32 %v1183, %v1184
    %v1186 = vsel %vm699, %v1077, 0.0
    %v1187 = vadd.f32 %v1185, %v1186
    %v1188 = vsel %vm699, %v1078, 0.0
    %v1189 = vadd.f32 %v1187, %v1188
    %v1190 = vsel %vm699, %v1079, 0.0
    %v1191 = vadd.f32 %v1189, %v1190
    %v1192 = vsel %vm699, %v1080, 0.0
    %v1193 = vadd.f32 %v1191, %v1192
    %v1194 = vsel %vm699, %v1081, 0.0
    %v1195 = vadd.f32 %v1193, %v1194
    %v1196 = vsel %vm699, %v1082, 0.0
    %v1197 = vadd.f32 %v1195, %v1196
    %v1198 = vsel %vm699, %v1083, 0.0
    %v1199 = vadd.f32 %v1197, %v1198
    %v1200 = vsel %vm699, %v1084, 0.0
    %v1201 = vadd.f32 %v1199, %v1200
    %v1202 = vsel %vm699, %v1085, 0.0
    %v1203 = vadd.f32 %v1201, %v1202
    %v1204 = vsel %vm699, %v1086, 0.0
    %v1205 = vadd.f32 %v1203, %v1204
    %v1206 = vsel %vm699, %v1087, 0.0
    %v1207 = vadd.f32 %v1205, %v1206
    %v1208 = vsel %vm699, %v1088, 0.0
    %v1209 = vadd.f32 %v1207, %v1208
    %v1210 = vsel %vm699, %v1089, 0.0
    %v1211 = vadd.f32 %v1209, %v1210
    %v1212 = vsel %vm699, %v1090, 0.0
    %v1213 = vadd.f32 %v1211, %v1212
    %v1214 = vsel %vm699, %v1091, 0.0
    %v1215 = vadd.f32 %v1213, %v1214
    %v1216 = vsel %vm699, %v1092, 0.0
    %v1217 = vadd.f32 %v1215, %v1216
    %v1218 = vsel %vm699, %v1093, 0.0
    %v1219 = vadd.f32 %v1217, %v1218
    %v1220 = vsel %vm699, %v1094, 0.0
    %v1221 = vadd.f32 %v1219, %v1220
    %v1222 = vrot.slane %v1221, 4
    %v1223 = vadd.f32 %v1221, %v1222
    %v1224 = vrot.slane %v1223, 2
    %v1225 = vadd.f32 %v1223, %v1224
    %v1226 = vrot.slane %v1225, 1
    %v1227 = vadd.f32 %v1225, %v1226
    %v1228 = vmul.f32 %v1227, %v965
    %v1229 = vadd.f32 %v1228, 1e-05
    %v1230 = vrsqrt.pop %v1229
    %v1231 = vmul.f32 %v967, %v1230
    %v1232 = vmul.f32 %v968, %v1230
    %v1233 = vmul.f32 %v969, %v1230
    %v1234 = vmul.f32 %v970, %v1230
    %v1235 = vmul.f32 %v971, %v1230
    %v1236 = vmul.f32 %v972, %v1230
    %v1237 = vmul.f32 %v973, %v1230
    %v1238 = vmul.f32 %v974, %v1230
    %v1239 = vmul.f32 %v975, %v1230
    %v1240 = vmul.f32 %v976, %v1230
    %v1241 = vmul.f32 %v977, %v1230
    %v1242 = vmul.f32 %v978, %v1230
    %v1243 = vmul.f32 %v979, %v1230
    %v1244 = vmul.f32 %v980, %v1230
    %v1245 = vmul.f32 %v981, %v1230
    %v1246 = vmul.f32 %v982, %v1230
    %v1247 = vmul.f32 %v983, %v1230
    %v1248 = vmul.f32 %v984, %v1230
    %v1249 = vmul.f32 %v985, %v1230
    %v1250 = vmul.f32 %v986, %v1230
    %v1251 = vmul.f32 %v987, %v1230
    %v1252 = vmul.f32 %v988, %v1230
    %v1253 = vmul.f32 %v989, %v1230
    %v1254 = vmul.f32 %v990, %v1230
    %v1255 = vmul.f32 %v991, %v1230
    %v1256 = vmul.f32 %v992, %v1230
    %v1257 = vmul.f32 %v993, %v1230
    %v1258 = vmul.f32 %v994, %v1230
    %v1259 = vmul.f32 %v995, %v1230
    %v1260 = vmul.f32 %v996, %v1230
    %v1261 = vmul.f32 %v997, %v1230
    %v1262 = vmul.f32 %v998, %v1230
    %v1263 = vmul.f32 %v999, %v1230
    %v1264 = vmul.f32 %v1000, %v1230
    %v1265 = vmul.f32 %v1001, %v1230
    %v1266 = vmul.f32 %v1002, %v1230
    %v1267 = vmul.f32 %v1003, %v1230
    %v1268 = vmul.f32 %v1004, %v1230
    %v1269 = vmul.f32 %v1005, %v1230
    %v1270 = vmul.f32 %v1006, %v1230
    %v1271 = vmul.f32 %v1007, %v1230
    %v1272 = vmul.f32 %v1008, %v1230
    %v1273 = vmul.f32 %v1009, %v1230
    %v1274 = vmul.f32 %v1010, %v1230
    %v1275 = vmul.f32 %v1011, %v1230
    %v1276 = vmul.f32 %v1012, %v1230
    %v1277 = vmul.f32 %v1013, %v1230
    %v1278 = vmul.f32 %v1014, %v1230
    %v1279 = vmul.f32 %v1015, %v1230
    %v1280 = vmul.f32 %v1016, %v1230
    %v1281 = vmul.f32 %v1017, %v1230
    %v1282 = vmul.f32 %v1018, %v1230
    %v1283 = vmul.f32 %v1019, %v1230
    %v1284 = vmul.f32 %v1020, %v1230
    %v1285 = vmul.f32 %v1021, %v1230
    %v1286 = vmul.f32 %v1022, %v1230
    %v1287 = vmul.f32 %v1023, %v1230
    %v1288 = vmul.f32 %v1024, %v1230
    %v1289 = vmul.f32 %v1025, %v1230
    %v1290 = vmul.f32 %v1026, %v1230
    %v1291 = vmul.f32 %v1027, %v1230
    %v1292 = vmul.f32 %v1028, %v1230
    %v1293 = vmul.f32 %v1029, %v1230
    %v1294 = vmul.f32 %v1030, %v1230
    %v1295 = vpack.c.bf16 %v1232, %v1231
    %v1296 = vpack.c.bf16 %v1234, %v1233
    %v1297 = vpack.c.bf16 %v1236, %v1235
    %v1298 = vpack.c.bf16 %v1238, %v1237
    %v1299 = vpack.c.bf16 %v1240, %v1239
    %v1300 = vpack.c.bf16 %v1242, %v1241
    %v1301 = vpack.c.bf16 %v1244, %v1243
    %v1302 = vpack.c.bf16 %v1246, %v1245
    %v1303 = vpack.c.bf16 %v1248, %v1247
    %v1304 = vpack.c.bf16 %v1250, %v1249
    %v1305 = vpack.c.bf16 %v1252, %v1251
    %v1306 = vpack.c.bf16 %v1254, %v1253
    %v1307 = vpack.c.bf16 %v1256, %v1255
    %v1308 = vpack.c.bf16 %v1258, %v1257
    %v1309 = vpack.c.bf16 %v1260, %v1259
    %v1310 = vpack.c.bf16 %v1262, %v1261
    %v1311 = vpack.c.bf16 %v1264, %v1263
    %v1312 = vpack.c.bf16 %v1266, %v1265
    %v1313 = vpack.c.bf16 %v1268, %v1267
    %v1314 = vpack.c.bf16 %v1270, %v1269
    %v1315 = vpack.c.bf16 %v1272, %v1271
    %v1316 = vpack.c.bf16 %v1274, %v1273
    %v1317 = vpack.c.bf16 %v1276, %v1275
    %v1318 = vpack.c.bf16 %v1278, %v1277
    %v1319 = vpack.c.bf16 %v1280, %v1279
    %v1320 = vpack.c.bf16 %v1282, %v1281
    %v1321 = vpack.c.bf16 %v1284, %v1283
    %v1322 = vpack.c.bf16 %v1286, %v1285
    %v1323 = vpack.c.bf16 %v1288, %v1287
    %v1324 = vpack.c.bf16 %v1290, %v1289
    %v1325 = vpack.c.bf16 %v1292, %v1291
    %v1326 = vpack.c.bf16 %v1294, %v1293
    %v1359 = vunpack.c.l.b16 %v1295
    %v1360 = vunpack.c.h.b16 %v1295
    %v1361 = vunpack.c.l.b16 %v1296
    %v1362 = vunpack.c.h.b16 %v1296
    %v1363 = vunpack.c.l.b16 %v1297
    %v1364 = vunpack.c.h.b16 %v1297
    %v1365 = vunpack.c.l.b16 %v1298
    %v1366 = vunpack.c.h.b16 %v1298
    %v1367 = vunpack.c.l.b16 %v1299
    %v1368 = vunpack.c.h.b16 %v1299
    %v1369 = vunpack.c.l.b16 %v1300
    %v1370 = vunpack.c.h.b16 %v1300
    %v1371 = vunpack.c.l.b16 %v1301
    %v1372 = vunpack.c.h.b16 %v1301
    %v1373 = vunpack.c.l.b16 %v1302
    %v1374 = vunpack.c.h.b16 %v1302
    %v1375 = vunpack.c.l.b16 %v1303
    %v1376 = vunpack.c.h.b16 %v1303
    %v1377 = vunpack.c.l.b16 %v1304
    %v1378 = vunpack.c.h.b16 %v1304
    %v1379 = vunpack.c.l.b16 %v1305
    %v1380 = vunpack.c.h.b16 %v1305
    %v1381 = vunpack.c.l.b16 %v1306
    %v1382 = vunpack.c.h.b16 %v1306
    %v1383 = vunpack.c.l.b16 %v1307
    %v1384 = vunpack.c.h.b16 %v1307
    %v1385 = vunpack.c.l.b16 %v1308
    %v1386 = vunpack.c.h.b16 %v1308
    %v1387 = vunpack.c.l.b16 %v1309
    %v1388 = vunpack.c.h.b16 %v1309
    %v1389 = vunpack.c.l.b16 %v1310
    %v1390 = vunpack.c.h.b16 %v1310
    %v1391 = vunpack.c.l.b16 %v1311
    %v1392 = vunpack.c.h.b16 %v1311
    %v1393 = vunpack.c.l.b16 %v1312
    %v1394 = vunpack.c.h.b16 %v1312
    %v1395 = vunpack.c.l.b16 %v1313
    %v1396 = vunpack.c.h.b16 %v1313
    %v1397 = vunpack.c.l.b16 %v1314
    %v1398 = vunpack.c.h.b16 %v1314
    %v1399 = vunpack.c.l.b16 %v1315
    %v1400 = vunpack.c.h.b16 %v1315
    %v1401 = vunpack.c.l.b16 %v1316
    %v1402 = vunpack.c.h.b16 %v1316
    %v1403 = vunpack.c.l.b16 %v1317
    %v1404 = vunpack.c.h.b16 %v1317
    %v1405 = vunpack.c.l.b16 %v1318
    %v1406 = vunpack.c.h.b16 %v1318
    %v1407 = vunpack.c.l.b16 %v1319
    %v1408 = vunpack.c.h.b16 %v1319
    %v1409 = vunpack.c.l.b16 %v1320
    %v1410 = vunpack.c.h.b16 %v1320
    %v1411 = vunpack.c.l.b16 %v1321
    %v1412 = vunpack.c.h.b16 %v1321
    %v1413 = vunpack.c.l.b16 %v1322
    %v1414 = vunpack.c.h.b16 %v1322
    %v1415 = vunpack.c.l.b16 %v1323
    %v1416 = vunpack.c.h.b16 %v1323
    %v1417 = vunpack.c.l.b16 %v1324
    %v1418 = vunpack.c.h.b16 %v1324
    %v1419 = vunpack.c.l.b16 %v1325
    %v1420 = vunpack.c.h.b16 %v1325
    %v1421 = vunpack.c.l.b16 %v1326
    %v1422 = vunpack.c.h.b16 %v1326
    %v1423 = vpack.c.b16 %v1359, %v1359
    %v1424 = vpack.c.b16 %v1360, %v1360
    %v1425 = vpack.c.b16 %v1361, %v1361
    %v1426 = vpack.c.b16 %v1362, %v1362
    %v1427 = vpack.c.b16 %v1363, %v1363
    %v1428 = vpack.c.b16 %v1364, %v1364
    %v1429 = vpack.c.b16 %v1365, %v1365
    %v1430 = vpack.c.b16 %v1366, %v1366
    %v1431 = vpack.c.b16 %v1367, %v1367
    %v1432 = vpack.c.b16 %v1368, %v1368
    %v1433 = vpack.c.b16 %v1369, %v1369
    %v1434 = vpack.c.b16 %v1370, %v1370
    %v1435 = vpack.c.b16 %v1371, %v1371
    %v1436 = vpack.c.b16 %v1372, %v1372
    %v1437 = vpack.c.b16 %v1373, %v1373
    %v1438 = vpack.c.b16 %v1374, %v1374
    %v1439 = vpack.c.b16 %v1375, %v1375
    %v1440 = vpack.c.b16 %v1376, %v1376
    %v1441 = vpack.c.b16 %v1377, %v1377
    %v1442 = vpack.c.b16 %v1378, %v1378
    %v1443 = vpack.c.b16 %v1379, %v1379
    %v1444 = vpack.c.b16 %v1380, %v1380
    %v1445 = vpack.c.b16 %v1381, %v1381
    %v1446 = vpack.c.b16 %v1382, %v1382
    %v1447 = vpack.c.b16 %v1383, %v1383
    %v1448 = vpack.c.b16 %v1384, %v1384
    %v1449 = vpack.c.b16 %v1385, %v1385
    %v1450 = vpack.c.b16 %v1386, %v1386
    %v1451 = vpack.c.b16 %v1387, %v1387
    %v1452 = vpack.c.b16 %v1388, %v1388
    %v1453 = vpack.c.b16 %v1389, %v1389
    %v1454 = vpack.c.b16 %v1390, %v1390
    %v1455 = vpack.c.b16 %v1391, %v1391
    %v1456 = vpack.c.b16 %v1392, %v1392
    %v1457 = vpack.c.b16 %v1393, %v1393
    %v1458 = vpack.c.b16 %v1394, %v1394
    %v1459 = vpack.c.b16 %v1395, %v1395
    %v1460 = vpack.c.b16 %v1396, %v1396
    %v1461 = vpack.c.b16 %v1397, %v1397
    %v1462 = vpack.c.b16 %v1398, %v1398
    %v1463 = vpack.c.b16 %v1399, %v1399
    %v1464 = vpack.c.b16 %v1400, %v1400
    %v1465 = vpack.c.b16 %v1401, %v1401
    %v1466 = vpack.c.b16 %v1402, %v1402
    %v1467 = vpack.c.b16 %v1403, %v1403
    %v1468 = vpack.c.b16 %v1404, %v1404
    %v1469 = vpack.c.b16 %v1405, %v1405
    %v1470 = vpack.c.b16 %v1406, %v1406
    %v1471 = vpack.c.b16 %v1407, %v1407
    %v1472 = vpack.c.b16 %v1408, %v1408
    %v1473 = vpack.c.b16 %v1409, %v1409
    %v1474 = vpack.c.b16 %v1410, %v1410
    %v1475 = vpack.c.b16 %v1411, %v1411
    %v1476 = vpack.c.b16 %v1412, %v1412
    %v1477 = vpack.c.b16 %v1413, %v1413
    %v1478 = vpack.c.b16 %v1414, %v1414
    %v1479 = vpack.c.b16 %v1415, %v1415
    %v1480 = vpack.c.b16 %v1416, %v1416
    %v1481 = vpack.c.b16 %v1417, %v1417
    %v1482 = vpack.c.b16 %v1418, %v1418
    %v1483 = vpack.c.b16 %v1419, %v1419
    %v1484 = vpack.c.b16 %v1420, %v1420
    %v1485 = vpack.c.b16 %v1421, %v1421
    %v1486 = vpack.c.b16 %v1422, %v1422
    %vm1551 = vcmask 27648
    %1552 = vst.msk [vmem:[%s2] sm:$0xf] %vm1551, %v1423
    %1553 = vst.msk [vmem:[%s2 + $0x4] sm:$0xf] %vm1551, %v1424
    %1554 = vst.msk [vmem:[%s2 + $0x8] sm:$0xf] %vm1551, %v1425
    %1555 = vst.msk [vmem:[%s2 + $0xc] sm:$0xf] %vm1551, %v1426
    %1556 = vst.msk [vmem:[%s2 + $0x10] sm:$0xf] %vm1551, %v1427
    %1557 = vst.msk [vmem:[%s2 + $0x14] sm:$0xf] %vm1551, %v1428
    %1558 = vst.msk [vmem:[%s2 + $0x18] sm:$0xf] %vm1551, %v1429
    %1559 = vst.msk [vmem:[%s2 + $0x1c] sm:$0xf] %vm1551, %v1430
    %1560 = vst.msk [vmem:[%s2 + $0x20] sm:$0xf] %vm1551, %v1431
    %1561 = vst.msk [vmem:[%s2 + $0x24] sm:$0xf] %vm1551, %v1432
    %1562 = vst.msk [vmem:[%s2 + $0x28] sm:$0xf] %vm1551, %v1433
    %1563 = vst.msk [vmem:[%s2 + $0x2c] sm:$0xf] %vm1551, %v1434
    %1564 = vst.msk [vmem:[%s2 + $0x30] sm:$0xf] %vm1551, %v1435
    %1565 = vst.msk [vmem:[%s2 + $0x34] sm:$0xf] %vm1551, %v1436
    %1566 = vst.msk [vmem:[%s2 + $0x38] sm:$0xf] %vm1551, %v1437
    %1567 = vst.msk [vmem:[%s2 + $0x3c] sm:$0xf] %vm1551, %v1438
    %1568 = vst.msk [vmem:[%s2 + $0x40] sm:$0xf] %vm1551, %v1439
    %1569 = vst.msk [vmem:[%s2 + $0x44] sm:$0xf] %vm1551, %v1440
    %1570 = vst.msk [vmem:[%s2 + $0x48] sm:$0xf] %vm1551, %v1441
    %1571 = vst.msk [vmem:[%s2 + $0x4c] sm:$0xf] %vm1551, %v1442
    %1572 = vst.msk [vmem:[%s2 + $0x50] sm:$0xf] %vm1551, %v1443
    %1573 = vst.msk [vmem:[%s2 + $0x54] sm:$0xf] %vm1551, %v1444
    %1574 = vst.msk [vmem:[%s2 + $0x58] sm:$0xf] %vm1551, %v1445
    %1575 = vst.msk [vmem:[%s2 + $0x5c] sm:$0xf] %vm1551, %v1446
    %1576 = vst.msk [vmem:[%s2 + $0x60] sm:$0xf] %vm1551, %v1447
    %1577 = vst.msk [vmem:[%s2 + $0x64] sm:$0xf] %vm1551, %v1448
    %1578 = vst.msk [vmem:[%s2 + $0x68] sm:$0xf] %vm1551, %v1449
    %1579 = vst.msk [vmem:[%s2 + $0x6c] sm:$0xf] %vm1551, %v1450
    %1580 = vst.msk [vmem:[%s2 + $0x70] sm:$0xf] %vm1551, %v1451
    %1581 = vst.msk [vmem:[%s2 + $0x74] sm:$0xf] %vm1551, %v1452
    %1582 = vst.msk [vmem:[%s2 + $0x78] sm:$0xf] %vm1551, %v1453
    %1583 = vst.msk [vmem:[%s2 + $0x7c] sm:$0xf] %vm1551, %v1454
    %1584 = vst.msk [vmem:[%s2 + $0x80] sm:$0xf] %vm1551, %v1455
    %1585 = vst.msk [vmem:[%s2 + $0x84] sm:$0xf] %vm1551, %v1456
    %1586 = vst.msk [vmem:[%s2 + $0x88] sm:$0xf] %vm1551, %v1457
    %1587 = vst.msk [vmem:[%s2 + $0x8c] sm:$0xf] %vm1551, %v1458
    %1588 = vst.msk [vmem:[%s2 + $0x90] sm:$0xf] %vm1551, %v1459
    %1589 = vst.msk [vmem:[%s2 + $0x94] sm:$0xf] %vm1551, %v1460
    %1590 = vst.msk [vmem:[%s2 + $0x98] sm:$0xf] %vm1551, %v1461
    %1591 = vst.msk [vmem:[%s2 + $0x9c] sm:$0xf] %vm1551, %v1462
    %1592 = vst.msk [vmem:[%s2 + $0xa0] sm:$0xf] %vm1551, %v1463
    %1593 = vst.msk [vmem:[%s2 + $0xa4] sm:$0xf] %vm1551, %v1464
    %1594 = vst.msk [vmem:[%s2 + $0xa8] sm:$0xf] %vm1551, %v1465
    %1595 = vst.msk [vmem:[%s2 + $0xac] sm:$0xf] %vm1551, %v1466
    %1596 = vst.msk [vmem:[%s2 + $0xb0] sm:$0xf] %vm1551, %v1467
    %1597 = vst.msk [vmem:[%s2 + $0xb4] sm:$0xf] %vm1551, %v1468
    %1598 = vst.msk [vmem:[%s2 + $0xb8] sm:$0xf] %vm1551, %v1469
    %1599 = vst.msk [vmem:[%s2 + $0xbc] sm:$0xf] %vm1551, %v1470
    %1600 = vst.msk [vmem:[%s2 + $0xc0] sm:$0xf] %vm1551, %v1471
    %1601 = vst.msk [vmem:[%s2 + $0xc4] sm:$0xf] %vm1551, %v1472
    %1602 = vst.msk [vmem:[%s2 + $0xc8] sm:$0xf] %vm1551, %v1473
    %1603 = vst.msk [vmem:[%s2 + $0xcc] sm:$0xf] %vm1551, %v1474
    %1604 = vst.msk [vmem:[%s2 + $0xd0] sm:$0xf] %vm1551, %v1475
    %1605 = vst.msk [vmem:[%s2 + $0xd4] sm:$0xf] %vm1551, %v1476
    %1606 = vst.msk [vmem:[%s2 + $0xd8] sm:$0xf] %vm1551, %v1477
    %1607 = vst.msk [vmem:[%s2 + $0xdc] sm:$0xf] %vm1551, %v1478
    %1608 = vst.msk [vmem:[%s2 + $0xe0] sm:$0xf] %vm1551, %v1479
    %1609 = vst.msk [vmem:[%s2 + $0xe4] sm:$0xf] %vm1551, %v1480
    %1610 = vst.msk [vmem:[%s2 + $0xe8] sm:$0xf] %vm1551, %v1481
    %1611 = vst.msk [vmem:[%s2 + $0xec] sm:$0xf] %vm1551, %v1482
    %1612 = vst.msk [vmem:[%s2 + $0xf0] sm:$0xf] %vm1551, %v1483
    %1613 = vst.msk [vmem:[%s2 + $0xf4] sm:$0xf] %vm1551, %v1484
    %1614 = vst.msk [vmem:[%s2 + $0xf8] sm:$0xf] %vm1551, %v1485
    %1615 = vst.msk [vmem:[%s2 + $0xfc] sm:$0xf] %vm1551, %v1486
  $region13: #{_lambda_.11} parent=0 // pred_fallthru
    _
  // Predicated region
  $region14: #{_lambda_.11} parent=0 // pred_check
    _
  $region15: #{_lambda_.11} parent=0 // pred_check_branch
    %1617 = sbr.rel (0) target = $region17
  $region16: #{_lambda_.11} parent=0 // pred_region
    _
  $region17: #{_lambda_.11} parent=0 // pred_fallthru
    _
  // Predicated region
  $region18: #{_lambda_.11} parent=0 // pred_check
    _
  $region19: #{_lambda_.11} parent=0 // pred_check_branch
    %1619 = sbr.rel (0) target = $region21
  $region20: #{_lambda_.11} parent=0 // pred_region
    _
  $region21: #{_lambda_.11} parent=0 // pred_fallthru
    _

// kernel: _lambda_.10
$region0: #{_lambda_.10}
  #allocation0 [shape = 'u32[]', space=smem, size = 0x4, offset = 0x4, fixed_abs, tag = 'smem constant byte address 0x4 - core index']
  #allocation1 [shape = 'u32[144,128]{1,0:T(1,128)}', space=vmem, size = 0x12000, scoped, tag = 'internal scratch']
  #allocation2 [shape = 'f32[2,256,12]{2,1,0:T(8,128)}', space=vmem, size = 0x40000, scoped, tag = 'scratch operand']
  %s0 = inlined_call_operand.vmem [shape: f32[2,18,18,4], index: 0, kind: input, shape index: {}]
  %s1 = inlined_call_operand.vmem [shape: bf16[3,3,4,12], index: 1, kind: input, shape index: {}]
  %s2 = inlined_call_operand.vmem [shape: bf16[2,256,12], index: 2, kind: output, shape index: {}]
  %s3 = sld [smem:[#allocation0]]
  $region45: #{_lambda_.10} parent=0
    _
  %s5 = ssub.s32 1, %s3
  %s6 = scalar_select 0, %s5, %s3
  loop: start=0, step=1, limit=4
  $region2: #{_lambda_.10} parent=0 // loop_pre_header
    _
  $region3: #{_lambda_.10} parent=0 // loop_header
    %s8 = sphi 0, %s12
    %p9 = scmp.ge.s32.totalorder %s8, 4
    %s18 = sphi 0, %s20
    %s21 = sphi 0, %s18
    %s22 = sphi 0, %s21
    %s38 = sphi 0, %s22
    %s42 = sphi 0, %s42
    %s44 = sphi 0, %s42
    %s45 = sphi 0, %s44
    %s59 = sphi 0, %s45
    %s63 = sphi 0, %s63
    %s65 = sphi 0, %s63
    %s66 = sphi 0, %s65
    %s80 = sphi 0, %s66
  $region4: #{_lambda_.10} parent=0 // loop_header_branch
    %11 = sbr.rel (%p9) target = $region8
  $region5: #{_lambda_.10} parent=0 // loop_body
    %s13 = ssub.s32 %s8, 1
    %s14 = ssub.s32 %s8, 2
    %s15 = sadd.s32 %s8, 1
    %s16 = ssub.s32 %s8, %s15
    %p17 = scmp.eq.s32.totalorder %s16, 0
    %s19 = sadd.s32 %s18, 1
    %s20 = scalar_select %p17, %s18, %s19
    %p23 = pneg %p17
    %p24 = scmp.eq.s32.totalorder %s8, 1
    %p25 = por %p23, %p24
    %p26 = scmp.ne.s32.totalorder %s18, %s21
    %p27 = scmp.eq.s32.totalorder %s8, 0
    %p28 = por %p26, %p27
    %p29 = scmp.ne.s32.totalorder %s18, %s21
    %p30 = scmp.eq.s32.totalorder %s13, 1
    %p31 = por %p29, %p30
    %p32 = scmp.ne.s32.totalorder %s21, %s22
    %p33 = scmp.eq.s32.totalorder %s13, 0
    %p34 = por %p32, %p33
    %p35 = scmp.ne.s32.totalorder %s21, %s22
    %p36 = scmp.eq.s32.totalorder %s14, 1
    %p37 = por %p35, %p36
    %p39 = scmp.ne.s32.totalorder %s22, %s38
    %p40 = scmp.eq.s32.totalorder %s14, 0
    %p41 = por %p39, %p40
    %s43 = sadd.s32 %s42, 1
    %p46 = scmp.eq.s32.totalorder %s8, 1
    %p47 = scmp.ne.s32.totalorder %s42, %s44
    %p48 = scmp.eq.s32.totalorder %s8, 0
    %p49 = por %p47, %p48
    %p50 = scmp.ne.s32.totalorder %s42, %s44
    %p51 = scmp.eq.s32.totalorder %s13, 1
    %p52 = por %p50, %p51
    %p53 = scmp.ne.s32.totalorder %s44, %s45
    %p54 = scmp.eq.s32.totalorder %s13, 0
    %p55 = por %p53, %p54
    %p56 = scmp.ne.s32.totalorder %s44, %s45
    %p57 = scmp.eq.s32.totalorder %s14, 1
    %p58 = por %p56, %p57
    %p60 = scmp.ne.s32.totalorder %s45, %s59
    %p61 = scmp.eq.s32.totalorder %s14, 0
    %p62 = por %p60, %p61
    %s64 = sadd.s32 %s63, 1
    %p67 = scmp.eq.s32.totalorder %s8, 1
    %p68 = scmp.ne.s32.totalorder %s63, %s65
    %p69 = scmp.eq.s32.totalorder %s8, 0
    %p70 = por %p68, %p69
    %p71 = scmp.ne.s32.totalorder %s63, %s65
    %p72 = scmp.eq.s32.totalorder %s13, 1
    %p73 = por %p71, %p72
    %p74 = scmp.ne.s32.totalorder %s65, %s66
    %p75 = scmp.eq.s32.totalorder %s13, 0
    %p76 = por %p74, %p75
    %p77 = scmp.ne.s32.totalorder %s65, %s66
    %p78 = scmp.eq.s32.totalorder %s14, 1
    %p79 = por %p77, %p78
    %p81 = scmp.ne.s32.totalorder %s66, %s80
    %p82 = scmp.eq.s32.totalorder %s14, 0
    %p83 = por %p81, %p82
    %p84 = scmp.le.s32.totalorder 1, %s8
    %p85 = scmp.lt.s32.totalorder %s8, 3
    %p86 = pnand %p84, %p85
    %p87 = pneg %p86
    // Predicated region
    $region9: #{_lambda_.10} parent=5 // pred_check
      _
    $region10: #{_lambda_.10} parent=5 // pred_check_branch
      %89 = sbr.rel (%p86) target = $region12
    $region11: #{_lambda_.10} parent=5 // pred_region
      %s90 = ssub.s32 %s8, 1
      // Predicated region
      $region13: #{_lambda_.10} parent=11 // pred_check
        %p91 = pneg %p55
      $region14: #{_lambda_.10} parent=11 // pred_check_branch
        %93 = sbr.rel (%p91) target = $region16
      $region15: #{_lambda_.10} parent=11 // pred_region
        _
      $region16: #{_lambda_.10} parent=11 // pred_fallthru
        _
    $region12: #{_lambda_.10} parent=5 // pred_fallthru
      _
    %p94 = scmp.lt.s32.totalorder %s8, 2
    // Predicated region
    $region17: #{_lambda_.10} parent=5 // pred_check
      %p95 = pneg %p94
    $region18: #{_lambda_.10} parent=5 // pred_check_branch
      %97 = sbr.rel (%p95) target = $region20
    $region19: #{_lambda_.10} parent=5 // pred_region
      // Predicated region
      $region21: #{_lambda_.10} parent=19 // pred_check
        %p98 = pneg %p28
      $region22: #{_lambda_.10} parent=19 // pred_check_branch
        %100 = sbr.rel (%p98) target = $region24
      $region23: #{_lambda_.10} parent=19 // pred_region
        %p101 = scmp.lt.s32.totalorder %s8, 1
        %s102 = scalar_select %p101, %s8, 1
        %s103 = smul.addr %s102, 54
        %s104 = smul.addr %s103, 8
        %s105 = scalar_lea.vmem %s0, %s104
      $region24: #{_lambda_.10} parent=19 // pred_fallthru
        _
    $region20: #{_lambda_.10} parent=5 // pred_fallthru
      _
    %p106 = scmp.le.s32.totalorder 1, %s8
    %p107 = scmp.lt.s32.totalorder %s8, 3
    %p108 = pnand %p106, %p107
    %p109 = pneg %p108
    // Predicated region
    $region25: #{_lambda_.10} parent=5 // pred_check
      _
    $region26: #{_lambda_.10} parent=5 // pred_check_branch
      %111 = sbr.rel (%p108) target = $region28
    $region27: #{_lambda_.10} parent=5 // pred_region
      %s112 = ssub.s32 %s8, 1
      %p113 = scmp.lt.s32.totalorder %s13, 1
      %s114 = scalar_select %p113, %s13, 1
      %s115 = smul.addr %s114, 54
      %s116 = smul.addr %s115, 8
      %s117 = scalar_lea.vmem %s0, %s116
      %p118 = pneg %p34
      %p119 = pneg %p31
      %p120 = pneg %p55
      %p121 = pneg %p52
      %p122 = pneg %p76
      %p123 = pneg %p73
      %p124 = scmp.lt.s32.totalorder %s13, 1
      %s125 = scalar_select %p124, %s13, 1
      %s126 = smul.addr %s125, 54
      %s127 = smul.addr %s126, 8
      %s128 = scalar_lea.vmem %s0, %s127
      %v130 = vld [vmem:[%s128] sm:$0xff]
      %v131 = vld [vmem:[%s128 + $0x8] sm:$0xff]
      %v132 = vld [vmem:[%s128 + $0x10] sm:$0x3]
      %v133 = vld [vmem:[%s128 + $0x18] sm:$0xff]
      %v134 = vld [vmem:[%s128 + $0x20] sm:$0xff]
      %v135 = vld [vmem:[%s128 + $0x28] sm:$0x3]
      %v136 = vld [vmem:[%s128 + $0x30] sm:$0xff]
      %v137 = vld [vmem:[%s128 + $0x38] sm:$0xff]
      %v138 = vld [vmem:[%s128 + $0x40] sm:$0x3]
      %v139 = vld [vmem:[%s128 + $0x48] sm:$0xff]
      %v140 = vld [vmem:[%s128 + $0x50] sm:$0xff]
      %v141 = vld [vmem:[%s128 + $0x58] sm:$0x3]
      %v142 = vld [vmem:[%s128 + $0x60] sm:$0xff]
      %v143 = vld [vmem:[%s128 + $0x68] sm:$0xff]
      %v144 = vld [vmem:[%s128 + $0x70] sm:$0x3]
      %v145 = vld [vmem:[%s128 + $0x78] sm:$0xff]
      %v146 = vld [vmem:[%s128 + $0x80] sm:$0xff]
      %v147 = vld [vmem:[%s128 + $0x88] sm:$0x3]
      %v148 = vld [vmem:[%s128 + $0x90] sm:$0xff]
      %v149 = vld [vmem:[%s128 + $0x98] sm:$0xff]
      %v150 = vld [vmem:[%s128 + $0xa0] sm:$0x3]
      %v151 = vld [vmem:[%s128 + $0xa8] sm:$0xff]
      %v152 = vld [vmem:[%s128 + $0xb0] sm:$0xff]
      %v153 = vld [vmem:[%s128 + $0xb8] sm:$0x3]
      %v154 = vld [vmem:[%s128 + $0xc0] sm:$0xff]
      %v155 = vld [vmem:[%s128 + $0xc8] sm:$0xff]
      %v156 = vld [vmem:[%s128 + $0xd0] sm:$0x3]
      %v157 = vld [vmem:[%s128 + $0xd8] sm:$0xff]
      %v158 = vld [vmem:[%s128 + $0xe0] sm:$0xff]
      %v159 = vld [vmem:[%s128 + $0xe8] sm:$0x3]
      %v160 = vld [vmem:[%s128 + $0xf0] sm:$0xff]
      %v161 = vld [vmem:[%s128 + $0xf8] sm:$0xff]
      %v162 = vld [vmem:[%s128 + $0x100] sm:$0x3]
      %v163 = vld [vmem:[%s128 + $0x108] sm:$0xff]
      %v164 = vld [vmem:[%s128 + $0x110] sm:$0xff]
      %v165 = vld [vmem:[%s128 + $0x118] sm:$0x3]
      %v166 = vld [vmem:[%s128 + $0x120] sm:$0xff]
      %v167 = vld [vmem:[%s128 + $0x128] sm:$0xff]
      %v168 = vld [vmem:[%s128 + $0x130] sm:$0x3]
      %v169 = vld [vmem:[%s128 + $0x138] sm:$0xff]
      %v170 = vld [vmem:[%s128 + $0x140] sm:$0xff]
      %v171 = vld [vmem:[%s128 + $0x148] sm:$0x3]
      %v172 = vld [vmem:[%s128 + $0x150] sm:$0xff]
      %v173 = vld [vmem:[%s128 + $0x158] sm:$0xff]
      %v174 = vld [vmem:[%s128 + $0x160] sm:$0x3]
      %v175 = vld [vmem:[%s128 + $0x168] sm:$0xff]
      %v176 = vld [vmem:[%s128 + $0x170] sm:$0xff]
      %v177 = vld [vmem:[%s128 + $0x178] sm:$0x3]
      %v178 = vld [vmem:[%s128 + $0x180] sm:$0xff]
      %v179 = vld [vmem:[%s128 + $0x188] sm:$0xff]
      %v180 = vld [vmem:[%s128 + $0x190] sm:$0x3]
      %v181 = vld [vmem:[%s128 + $0x198] sm:$0xff]
      %v182 = vld [vmem:[%s128 + $0x1a0] sm:$0xff]
      %v183 = vld [vmem:[%s128 + $0x1a8] sm:$0x3]
      %v184 = vpack.c.bf16 %v131, %v130
      %v185 = vpack.c.bf16 %v134, %v133
      %v186 = vpack.c.bf16 %v137, %v136
      %v187 = vpack.c.bf16 %v140, %v139
      %v188 = vpack.c.bf16 %v143, %v142
      %v189 = vpack.c.bf16 %v146, %v145
      %v190 = vpack.c.bf16 %v149, %v148
      %v191 = vpack.c.bf16 %v152, %v151
      %v192 = vpack.c.bf16 %v155, %v154
      %v193 = vpack.c.bf16 %v158, %v157
      %v194 = vpack.c.bf16 %v161, %v160
      %v195 = vpack.c.bf16 %v164, %v163
      %v196 = vpack.c.bf16 %v167, %v166
      %v197 = vpack.c.bf16 %v170, %v169
      %v198 = vpack.c.bf16 %v173, %v172
      %v199 = vpack.c.bf16 %v176, %v175
      %v200 = vld [vmem:[%s1] sm:$0x3]
      %vm249 = vcmask 1046528
      %v250 = vrot.slane %v130, 1
      %v251 = vrot.slane %v131, 1
      %v252 = vsel %vm249, %v250, %v251
      %v253 = vrot.slane %v132, 1
      %v254 = vsel %vm249, %v251, %v253
      %v255 = vrot.slane %v133, 1
      %v256 = vrot.slane %v134, 1
      %v257 = vsel %vm249, %v255, %v256
      %v258 = vrot.slane %v135, 1
      %v259 = vsel %vm249, %v256, %v258
      %v260 = vrot.slane %v136, 1
      %v261 = vrot.slane %v137, 1
      %v262 = vsel %vm249, %v260, %v261
      %v263 = vrot.slane %v138, 1
      %v264 = vsel %vm249, %v261, %v263
      %v265 = vrot.slane %v139, 1
      %v266 = vrot.slane %v140, 1
      %v267 = vsel %vm249, %v265, %v266
      %v268 = vrot.slane %v141, 1
      %v269 = vsel %vm249, %v266, %v268
      %v270 = vrot.slane %v142, 1
      %v271 = vrot.slane %v143, 1
      %v272 = vsel %vm249, %v270, %v271
      %v273 = vrot.slane %v144, 1
      %v274 = vsel %vm249, %v271, %v273
      %v275 = vrot.slane %v145, 1
      %v276 = vrot.slane %v146, 1
      %v277 = vsel %vm249, %v275, %v276
      %v278 = vrot.slane %v147, 1
      %v279 = vsel %vm249, %v276, %v278
      %v280 = vrot.slane %v148, 1
      %v281 = vrot.slane %v149, 1
      %v282 = vsel %vm249, %v280, %v281
      %v283 = vrot.slane %v150, 1
      %v284 = vsel %vm249, %v281, %v283
      %v285 = vrot.slane %v151, 1
      %v286 = vrot.slane %v152, 1
      %v287 = vsel %vm249, %v285, %v286
      %v288 = vrot.slane %v153, 1
      %v289 = vsel %vm249, %v286, %v288
      %v290 = vrot.slane %v154, 1
      %v291 = vrot.slane %v155, 1
      %v292 = vsel %vm249, %v290, %v291
      %v293 = vrot.slane %v156, 1
      %v294 = vsel %vm249, %v291, %v293
      %v295 = vrot.slane %v157, 1
      %v296 = vrot.slane %v158, 1
      %v297 = vsel %vm249, %v295, %v296
      %v298 = vrot.slane %v159, 1
      %v299 = vsel %vm249, %v296, %v298
      %v300 = vrot.slane %v160, 1
      %v301 = vrot.slane %v161, 1
      %v302 = vsel %vm249, %v300, %v301
      %v303 = vrot.slane %v162, 1
      %v304 = vsel %vm249, %v301, %v303
      %v305 = vrot.slane %v163, 1
      %v306 = vrot.slane %v164, 1
      %v307 = vsel %vm249, %v305, %v306
      %v308 = vrot.slane %v165, 1
      %v309 = vsel %vm249, %v306, %v308
      %v310 = vrot.slane %v166, 1
      %v311 = vrot.slane %v167, 1
      %v312 = vsel %vm249, %v310, %v311
      %v313 = vrot.slane %v168, 1
      %v314 = vsel %vm249, %v311, %v313
      %v315 = vrot.slane %v169, 1
      %v316 = vrot.slane %v170, 1
      %v317 = vsel %vm249, %v315, %v316
      %v318 = vrot.slane %v171, 1
      %v319 = vsel %vm249, %v316, %v318
      %v320 = vrot.slane %v172, 1
      %v321 = vrot.slane %v173, 1
      %v322 = vsel %vm249, %v320, %v321
      %v323 = vrot.slane %v174, 1
      %v324 = vsel %vm249, %v321, %v323
      %v325 = vrot.slane %v175, 1
      %v326 = vrot.slane %v176, 1
      %v327 = vsel %vm249, %v325, %v326
      %v328 = vrot.slane %v177, 1
      %v329 = vsel %vm249, %v326, %v328
      %v362 = vpack.c.bf16 %v254, %v252
      %v363 = vpack.c.bf16 %v259, %v257
      %v364 = vpack.c.bf16 %v264, %v262
      %v365 = vpack.c.bf16 %v269, %v267
      %v366 = vpack.c.bf16 %v274, %v272
      %v367 = vpack.c.bf16 %v279, %v277
      %v368 = vpack.c.bf16 %v284, %v282
      %v369 = vpack.c.bf16 %v289, %v287
      %v370 = vpack.c.bf16 %v294, %v292
      %v371 = vpack.c.bf16 %v299, %v297
      %v372 = vpack.c.bf16 %v304, %v302
      %v373 = vpack.c.bf16 %v309, %v307
      %v374 = vpack.c.bf16 %v314, %v312
      %v375 = vpack.c.bf16 %v319, %v317
      %v376 = vpack.c.bf16 %v324, %v322
      %v377 = vpack.c.bf16 %v329, %v327
      %s378 = scalar_lea.vmem %s1, 2
      %v379 = vld [vmem:[%s378] sm:$0x3]
      %vm380 = vcmask 31744
      %v382 = vsel %vm380, %v362, 0
      %v385 = vsel %vm380, %v363, 0
      %v388 = vsel %vm380, %v364, 0
      %v391 = vsel %vm380, %v365, 0
      %v394 = vsel %vm380, %v366, 0
      %v397 = vsel %vm380, %v367, 0
      %v400 = vsel %vm380, %v368, 0
      %v403 = vsel %vm380, %v369, 0
      %v406 = vsel %vm380, %v370, 0
      %v409 = vsel %vm380, %v371, 0
      %v412 = vsel %vm380, %v372, 0
      %v415 = vsel %vm380, %v373, 0
      %v418 = vsel %vm380, %v374, 0
      %v421 = vsel %vm380, %v375, 0
      %v424 = vsel %vm380, %v376, 0
      %v427 = vsel %vm380, %v377, 0
      %vm429 = vcmask 1041408
      %v431 = vsel %vm429, %v379, 0
      %433 = vmatprep.subr.bf16.mxu0 0
      %434 = vmatpush1.bf16.msra.mxu0 %v431
      %435 = vmatprep.subr.bf16.mxu0 0
      %436 = vmatpush1.bf16.msra.mxu0 0
      %437 = vmatprep.subr.bf16.mxu0 0
      %438 = vmatpush1.bf16.msra.mxu0 0
      %439 = vmatprep.subr.bf16.mxu0 0
      %440 = vmatpush1.bf16.msra.mxu0 0
      %441 = vmatprep.subr.bf16.mxu0 0
      %442 = vmatpush1.bf16.msra.mxu0 0
      %443 = vmatprep.subr.bf16.mxu0 0
      %444 = vmatpush1.bf16.msra.mxu0 0
      %445 = vmatprep.subr.bf16.mxu0 0
      %446 = vmatpush1.bf16.msra.mxu0 0
      %447 = vmatprep.subr.bf16.mxu0 0
      %448 = vmatpush1.bf16.msra.mxu0 0
      %449 = vmatprep.subr.bf16.mxu0 0
      %450 = vmatpush1.bf16.msra.mxu0 0
      %451 = vmatprep.subr.bf16.mxu0 0
      %452 = vmatpush1.bf16.msra.mxu0 0
      %453 = vmatprep.subr.bf16.mxu0 0
      %454 = vmatpush1.bf16.msra.mxu0 0
      %455 = vmatprep.subr.bf16.mxu0 0
      %456 = vmatpush1.bf16.msra.mxu0 0
      %457 = vmatprep.subr.bf16.mxu0 0
      %458 = vmatpush1.bf16.msra.mxu0 0
      %459 = vmatprep.subr.bf16.mxu0 0
      %460 = vmatpush1.bf16.msra.mxu0 0
      %461 = vmatprep.subr.bf16.mxu0 0
      %462 = vmatpush1.bf16.msra.mxu0 0
      %463 = vmatprep.subr.bf16.mxu0 0
      %464 = vmatpush1.bf16.msra.mxu0 0
      %465 = vmatprep.mubr.bf16.mxu0 0
      %466 = vmatmul.mubr.bf16.gmra.mrb[0].mxu0 %v382
      %v467 = vpop.f32.mrb[0].mxu0
      %v468 = vadd.f32 0.0, %v467
      %v469 = vpop.f32.mrb[0].mxu0
      %v470 = vpop.f32.mrb[0].mxu0
      %v471 = vadd.f32 0.0, %v470
      %v472 = vpop.f32.mrb[0].mxu0
      %473 = vmatprep.mubr.bf16.mxu0 0
      %474 = vmatmul.mubr.bf16.gmra.mrb[0].mxu0 %v385
      %v475 = vpop.f32.mrb[0].mxu0
      %v476 = vadd.f32 0.0, %v475
      %v477 = vpop.f32.mrb[0].mxu0
      %v478 = vpop.f32.mrb[0].mxu0
      %v479 = vadd.f32 0.0, %v478
      %v480 = vpop.f32.mrb[0].mxu0
      %481 = vmatprep.mubr.bf16.mxu0 0
      %482 = vmatmul.mubr.bf16.gmra.mrb[0].mxu0 %v388
      %v483 = vpop.f32.mrb[0].mxu0
      %v484 = vadd.f32 0.0, %v483
      %v485 = vpop.f32.mrb[0].mxu0
      %v486 = vpop.f32.mrb[0].mxu0
      %v487 = vadd.f32 0.0, %v486
      %v488 = vpop.f32.mrb[0].mxu0
      %489 = vmatprep.mubr.bf16.mxu0 0
      %490 = vmatmul.mubr.bf16.gmra.mrb[0].mxu0 %v391
      %v491 = vpop.f32.mrb[0].mxu0
      %v492 = vadd.f32 0.0, %v491
      %v493 = vpop.f32.mrb[0].mxu0
      %v494 = vpop.f32.mrb[0].mxu0
      %v495 = vadd.f32 0.0, %v494
      %v496 = vpop.f32.mrb[0].mxu0
      %497 = vmatprep.mubr.bf16.mxu0 0
      %498 = vmatmul.mubr.bf16.gmra.mrb[0].mxu0 %v394
      %v499 = vpop.f32.mrb[0].mxu0
      %v500 = vadd.f32 0.0, %v499
      %v501 = vpop.f32.mrb[0].mxu0
      %v502 = vpop.f32.mrb[0].mxu0
      %v503 = vadd.f32 0.0, %v502
      %v504 = vpop.f32.mrb[0].mxu0
      %505 = vmatprep.mubr.bf16.mxu0 0
      %506 = vmatmul.mubr.bf16.gmra.mrb[0].mxu0 %v397
      %v507 = vpop.f32.mrb[0].mxu0
      %v508 = vadd.f32 0.0, %v507
      %v509 = vpop.f32.mrb[0].mxu0
      %v510 = vpop.f32.mrb[0].mxu0
      %v511 = vadd.f32 0.0, %v510
      %v512 = vpop.f32.mrb[0].mxu0
      %513 = vmatprep.mubr.bf16.mxu0 0
      %514 = vmatmul.mubr.bf16.gmra.mrb[0].mxu0 %v400
      %v515 = vpop.f32.mrb[0].mxu0
      %v516 = vadd.f32 0.0, %v515
      %v517 = vpop.f32.mrb[0].mxu0
      %v518 = vpop.f32.mrb[0].mxu0
      %v519 = vadd.f32 0.0, %v518
      %v520 = vpop.f32.mrb[0].mxu0
      %521 = vmatprep.mubr.bf16.mxu0 0
      %522 = vmatmul.mubr.bf16.gmra.mrb[0].mxu0 %v403
      %v523 = vpop.f32.mrb[0].mxu0
      %v524 = vadd.f32 0.0, %v523
      %v525 = vpop.f32.mrb[0].mxu0
      %v526 = vpop.f32.mrb[0].mxu0
      %v527 = vadd.f32 0.0, %v526
      %v528 = vpop.f32.mrb[0].mxu0
      %529 = vmatprep.mubr.bf16.mxu0 0
      %530 = vmatmul.mubr.bf16.gmra.mrb[0].mxu0 %v406
      %v531 = vpop.f32.mrb[0].mxu0
      %v532 = vadd.f32 0.0, %v531
      %v533 = vpop.f32.mrb[0].mxu0
      %v534 = vpop.f32.mrb[0].mxu0
      %v535 = vadd.f32 0.0, %v534
      %v536 = vpop.f32.mrb[0].mxu0
      %537 = vmatprep.mubr.bf16.mxu0 0
      %538 = vmatmul.mubr.bf16.gmra.mrb[0].mxu0 %v409
      %v539 = vpop.f32.mrb[0].mxu0
      %v540 = vadd.f32 0.0, %v539
      %v541 = vpop.f32.mrb[0].mxu0
      %v542 = vpop.f32.mrb[0].mxu0
      %v543 = vadd.f32 0.0, %v542
      %v544 = vpop.f32.mrb[0].mxu0
      %545 = vmatprep.mubr.bf16.mxu0 0
      %546 = vmatmul.mubr.bf16.gmra.mrb[0].mxu0 %v412
      %v547 = vpop.f32.mrb[0].mxu0
      %v548 = vadd.f32 0.0, %v547
      %v549 = vpop.f32.mrb[0].mxu0
      %v550 = vpop.f32.mrb[0].mxu0
      %v551 = vadd.f32 0.0, %v550
      %v552 = vpop.f32.mrb[0].mxu0
      %553 = vmatprep.mubr.bf16.mxu0 0
      %554 = vmatmul.mubr.bf16.gmra.mrb[0].mxu0 %v415
      %v555 = vpop.f32.mrb[0].mxu0
      %v556 = vadd.f32 0.0, %v555
      %v557 = vpop.f32.mrb[0].mxu0
      %v558 = vpop.f32.mrb[0].mxu0
      %v559 = vadd.f32 0.0, %v558
      %v560 = vpop.f32.mrb[0].mxu0
      %561 = vmatprep.mubr.bf16.mxu0 0
      %562 = vmatmul.mubr.bf16.gmra.mrb[0].mxu0 %v418
      %v563 = vpop.f32.mrb[0].mxu0
      %v564 = vadd.f32 0.0, %v563
      %v565 = vpop.f32.mrb[0].mxu0
      %v566 = vpop.f32.mrb[0].mxu0
      %v567 = vadd.f32 0.0, %v566
      %v568 = vpop.f32.mrb[0].mxu0
      %569 = vmatprep.mubr.bf16.mxu0 0
      %570 = vmatmul.mubr.bf16.gmra.mrb[0].mxu0 %v421
      %v571 = vpop.f32.mrb[0].mxu0
      %v572 = vadd.f32 0.0, %v571
      %v573 = vpop.f32.mrb[0].mxu0
      %v574 = vpop.f32.mrb[0].mxu0
      %v575 = vadd.f32 0.0, %v574
      %v576 = vpop.f32.mrb[0].mxu0
      %577 = vmatprep.mubr.bf16.mxu0 0
      %578 = vmatmul.mubr.bf16.gmra.mrb[0].mxu0 %v424
      %v579 = vpop.f32.mrb[0].mxu0
      %v580 = vadd.f32 0.0, %v579
      %v581 = vpop.f32.mrb[0].mxu0
      %v582 = vpop.f32.mrb[0].mxu0
      %v583 = vadd.f32 0.0, %v582
      %v584 = vpop.f32.mrb[0].mxu0
      %585 = vmatprep.mubr.bf16.mxu0 0
      %586 = vmatmul.mubr.bf16.gmra.mrb[0].mxu0 %v427
      %v587 = vpop.f32.mrb[0].mxu0
      %v588 = vadd.f32 0.0, %v587
      %v589 = vpop.f32.mrb[0].mxu0
      %v590 = vpop.f32.mrb[0].mxu0
      %v591 = vadd.f32 0.0, %v590
      %v592 = vpop.f32.mrb[0].mxu0
      %593 = vdwg.mxu0
      %v595 = vsel %vm380, %v184, 0
      %v598 = vsel %vm380, %v185, 0
      %v601 = vsel %vm380, %v186, 0
      %v604 = vsel %vm380, %v187, 0
      %v607 = vsel %vm380, %v188, 0
      %v610 = vsel %vm380, %v189, 0
      %v613 = vsel %vm380, %v190, 0
      %v616 = vsel %vm380, %v191, 0
      %v619 = vsel %vm380, %v192, 0
      %v622 = vsel %vm380, %v193, 0
      %v625 = vsel %vm380, %v194, 0
      %v628 = vsel %vm380, %v195, 0
      %v631 = vsel %vm380, %v196, 0
      %v634 = vsel %vm380, %v197, 0
      %v637 = vsel %vm380, %v198, 0
      %v640 = vsel %vm380, %v199, 0
      %v643 = vsel %vm429, %v200, 0
      %645 = vmatprep.subr.bf16.mxu0 0
      %646 = vmatpush1.bf16.msra.mxu0 %v643
      %647 = vmatprep.subr.bf16.mxu0 0
      %648 = vmatpush1.bf16.msra.mxu0 0
      %649 = vmatprep.subr.bf16.mxu0 0
      %650 = vmatpush1.bf16.msra.mxu0 0
      %651 = vmatprep.subr.bf16.mxu0 0
      %652 = vmatpush1.bf16.msra.mxu0 0
      %653 = vmatprep.subr.bf16.mxu0 0
      %654 = vmatpush1.bf16.msra.mxu0 0
      %655 = vmatprep.subr.bf16.mxu0 0
      %656 = vmatpush1.bf16.msra.mxu0 0
      %657 = vmatprep.subr.bf16.mxu0 0
      %658 = vmatpush1.bf16.msra.mxu0 0
      %659 = vmatprep.subr.bf16.mxu0 0
      %660 = vmatpush1.bf16.msra.mxu0 0
      %661 = vmatprep.subr.bf16.mxu0 0
      %662 = vmatpush1.bf16.msra.mxu0 0
      %663 = vmatprep.subr.bf16.mxu0 0
      %664 = vmatpush1.bf16.msra.mxu0 0
      %665 = vmatprep.subr.bf16.mxu0 0
      %666 = vmatpush1.bf16.msra.mxu0 0
      %667 = vmatprep.subr.bf16.mxu0 0
      %668 = vmatpush1.bf16.msra.mxu0 0
      %669 = vmatprep.subr.bf16.mxu0 0
      %670 = vmatpush1.bf16.msra.mxu0 0
      %671 = vmatprep.subr.bf16.mxu0 0
      %672 = vmatpush1.bf16.msra.mxu0 0
      %673 = vmatprep.subr.bf16.mxu0 0
      %674 = vmatpush1.bf16.msra.mxu0 0
      %675 = vmatprep.subr.bf16.mxu0 0
      %676 = vmatpush1.bf16.msra.mxu0 0
      %677 = vmatprep.mubr.bf16.mxu0 0
      %678 = vmatmul.mubr.bf16.gmra.mrb[0].mxu0 %v595
      %v679 = vpop.f32.mrb[0].mxu0
      %v680 = vadd.f32 %v468, %v679
      %v681 = vpop.f32.mrb[0].mxu0
      %v682 = vpop.f32.mrb[0].mxu0
      %v683 = vadd.f32 %v471, %v682
      %v684 = vpop.f32.mrb[0].mxu0
      %685 = vmatprep.mubr.bf16.mxu0 0
      %686 = vmatmul.mubr.bf16.gmra.mrb[0].mxu0 %v598
      %v687 = vpop.f32.mrb[0].mxu0
      %v688 = vadd.f32 %v476, %v687
      %v689 = vpop.f32.mrb[0].mxu0
      %v690 = vpop.f32.mrb[0].mxu0
      %v691 = vadd.f32 %v479, %v690
      %v692 = vpop.f32.mrb[0].mxu0
      %693 = vmatprep.mubr.bf16.mxu0 0
      %694 = vmatmul.mubr.bf16.gmra.mrb[0].mxu0 %v601
      %v695 = vpop.f32.mrb[0].mxu0
      %v696 = vadd.f32 %v484, %v695
      %v697 = vpop.f32.mrb[0].mxu0
      %v698 = vpop.f32.mrb[0].mxu0
      %v699 = vadd.f32 %v487, %v698
      %v700 = vpop.f32.mrb[0].mxu0
      %701 = vmatprep.mubr.bf16.mxu0 0
      %702 = vmatmul.mubr.bf16.gmra.mrb[0].mxu0 %v604
      %v703 = vpop.f32.mrb[0].mxu0
      %v704 = vadd.f32 %v492, %v703
      %v705 = vpop.f32.mrb[0].mxu0
      %v706 = vpop.f32.mrb[0].mxu0
      %v707 = vadd.f32 %v495, %v706
      %v708 = vpop.f32.mrb[0].mxu0
      %709 = vmatprep.mubr.bf16.mxu0 0
      %710 = vmatmul.mubr.bf16.gmra.mrb[0].mxu0 %v607
      %v711 = vpop.f32.mrb[0].mxu0
      %v712 = vadd.f32 %v500, %v711
      %v713 = vpop.f32.mrb[0].mxu0
      %v714 = vpop.f32.mrb[0].mxu0
      %v715 = vadd.f32 %v503, %v714
      %v716 = vpop.f32.mrb[0].mxu0
      %717 = vmatprep.mubr.bf16.mxu0 0
      %718 = vmatmul.mubr.bf16.gmra.mrb[0].mxu0 %v610
      %v719 = vpop.f32.mrb[0].mxu0
      %v720 = vadd.f32 %v508, %v719
      %v721 = vpop.f32.mrb[0].mxu0
      %v722 = vpop.f32.mrb[0].mxu0
      %v723 = vadd.f32 %v511, %v722
      %v724 = vpop.f32.mrb[0].mxu0
      %725 = vmatprep.mubr.bf16.mxu0 0
      %726 = vmatmul.mubr.bf16.gmra.mrb[0].mxu0 %v613
      %v727 = vpop.f32.mrb[0].mxu0
      %v728 = vadd.f32 %v516, %v727
      %v729 = vpop.f32.mrb[0].mxu0
      %v730 = vpop.f32.mrb[0].mxu0
      %v731 = vadd.f32 %v519, %v730
      %v732 = vpop.f32.mrb[0].mxu0
      %733 = vmatprep.mubr.bf16.mxu0 0
      %734 = vmatmul.mubr.bf16.gmra.mrb[0].mxu0 %v616
      %v735 = vpop.f32.mrb[0].mxu0
      %v736 = vadd.f32 %v524, %v735
      %v737 = vpop.f32.mrb[0].mxu0
      %v738 = vpop.f32.mrb[0].mxu0
      %v739 = vadd.f32 %v527, %v738
      %v740 = vpop.f32.mrb[0].mxu0
      %741 = vmatprep.mubr.bf16.mxu0 0
      %742 = vmatmul.mubr.bf16.gmra.mrb[0].mxu0 %v619
      %v743 = vpop.f32.mrb[0].mxu0
      %v744 = vadd.f32 %v532, %v743
      %v745 = vpop.f32.mrb[0].mxu0
      %v746 = vpop.f32.mrb[0].mxu0
      %v747 = vadd.f32 %v535, %v746
      %v748 = vpop.f32.mrb[0].mxu0
      %749 = vmatprep.mubr.bf16.mxu0 0
      %750 = vmatmul.mubr.bf16.gmra.mrb[0].mxu0 %v622
      %v751 = vpop.f32.mrb[0].mxu0
      %v752 = vadd.f32 %v540, %v751
      %v753 = vpop.f32.mrb[0].mxu0
      %v754 = vpop.f32.mrb[0].mxu0
      %v755 = vadd.f32 %v543, %v754
      %v756 = vpop.f32.mrb[0].mxu0
      %757 = vmatprep.mubr.bf16.mxu0 0
      %758 = vmatmul.mubr.bf16.gmra.mrb[0].mxu0 %v625
      %v759 = vpop.f32.mrb[0].mxu0
      %v760 = vadd.f32 %v548, %v759
      %v761 = vpop.f32.mrb[0].mxu0
      %v762 = vpop.f32.mrb[0].mxu0
      %v763 = vadd.f32 %v551, %v762
      %v764 = vpop.f32.mrb[0].mxu0
      %765 = vmatprep.mubr.bf16.mxu0 0
      %766 = vmatmul.mubr.bf16.gmra.mrb[0].mxu0 %v628
      %v767 = vpop.f32.mrb[0].mxu0
      %v768 = vadd.f32 %v556, %v767
      %v769 = vpop.f32.mrb[0].mxu0
      %v770 = vpop.f32.mrb[0].mxu0
      %v771 = vadd.f32 %v559, %v770
      %v772 = vpop.f32.mrb[0].mxu0
      %773 = vmatprep.mubr.bf16.mxu0 0
      %774 = vmatmul.mubr.bf16.gmra.mrb[0].mxu0 %v631
      %v775 = vpop.f32.mrb[0].mxu0
      %v776 = vadd.f32 %v564, %v775
      %v777 = vpop.f32.mrb[0].mxu0
      %v778 = vpop.f32.mrb[0].mxu0
      %v779 = vadd.f32 %v567, %v778
      %v780 = vpop.f32.mrb[0].mxu0
      %781 = vmatprep.mubr.bf16.mxu0 0
      %782 = vmatmul.mubr.bf16.gmra.mrb[0].mxu0 %v634
      %v783 = vpop.f32.mrb[0].mxu0
      %v784 = vadd.f32 %v572, %v783
      %v785 = vpop.f32.mrb[0].mxu0
      %v786 = vpop.f32.mrb[0].mxu0
      %v787 = vadd.f32 %v575, %v786
      %v788 = vpop.f32.mrb[0].mxu0
      %789 = vmatprep.mubr.bf16.mxu0 0
      %790 = vmatmul.mubr.bf16.gmra.mrb[0].mxu0 %v637
      %v791 = vpop.f32.mrb[0].mxu0
      %v792 = vadd.f32 %v580, %v791
      %v793 = vpop.f32.mrb[0].mxu0
      %v794 = vpop.f32.mrb[0].mxu0
      %v795 = vadd.f32 %v583, %v794
      %v796 = vpop.f32.mrb[0].mxu0
      %797 = vmatprep.mubr.bf16.mxu0 0
      %798 = vmatmul.mubr.bf16.gmra.mrb[0].mxu0 %v640
      %v799 = vpop.f32.mrb[0].mxu0
      %v800 = vadd.f32 %v588, %v799
      %v801 = vpop.f32.mrb[0].mxu0
      %v802 = vpop.f32.mrb[0].mxu0
      %v803 = vadd.f32 %v591, %v802
      %v804 = vpop.f32.mrb[0].mxu0
      %805 = vdwg.mxu0
      %vm806 = vcmask 1045504
      %v807 = vrot.slane %v130, 2
      %v808 = vrot.slane %v131, 2
      %v809 = vsel %vm806, %v807, %v808
      %v810 = vrot.slane %v132, 2
      %v811 = vsel %vm806, %v808, %v810
      %v812 = vrot.slane %v133, 2
      %v813 = vrot.slane %v134, 2
      %v814 = vsel %vm806, %v812, %v813
      %v815 = vrot.slane %v135, 2
      %v816 = vsel %vm806, %v813, %v815
      %v817 = vrot.slane %v136, 2
      %v818 = vrot.slane %v137, 2
      %v819 = vsel %vm806, %v817, %v818
      %v820 = vrot.slane %v138, 2
      %v821 = vsel %vm806, %v818, %v820
      %v822 = vrot.slane %v139, 2
      %v823 = vrot.slane %v140, 2
      %v824 = vsel %vm806, %v822, %v823
      %v825 = vrot.slane %v141, 2
      %v826 = vsel %vm806, %v823, %v825
      %v827 = vrot.slane %v142, 2
      %v828 = vrot.slane %v143, 2
      %v829 = vsel %vm806, %v827, %v828
      %v830 = vrot.slane %v144, 2
      %v831 = vsel %vm806, %v828, %v830
      %v832 = vrot.slane %v145, 2
      %v833 = vrot.slane %v146, 2
      %v834 = vsel %vm806, %v832, %v833
      %v835 = vrot.slane %v147, 2
      %v836 = vsel %vm806, %v833, %v835
      %v837 = vrot.slane %v148, 2
      %v838 = vrot.slane %v149, 2
      %v839 = vsel %vm806, %v837, %v838
      %v840 = vrot.slane %v150, 2
      %v841 = vsel %vm806, %v838, %v840
      %v842 = vrot.slane %v151, 2
      %v843 = vrot.slane %v152, 2
      %v844 = vsel %vm806, %v842, %v843
      %v845 = vrot.slane %v153, 2
      %v846 = vsel %vm806, %v843, %v845
      %v847 = vrot.slane %v154, 2
      %v848 = vrot.slane %v155, 2
      %v849 = vsel %vm806, %v847, %v848
      %v850 = vrot.slane %v156, 2
      %v851 = vsel %vm806, %v848, %v850
      %v852 = vrot.slane %v157, 2
      %v853 = vrot.slane %v158, 2
      %v854 = vsel %vm806, %v852, %v853
      %v855 = vrot.slane %v159, 2
      %v856 = vsel %vm806, %v853, %v855
      %v857 = vrot.slane %v160, 2
      %v858 = vrot.slane %v161, 2
      %v859 = vsel %vm806, %v857, %v858
      %v860 = vrot.slane %v162, 2
      %v861 = vsel %vm806, %v858, %v860
      %v862 = vrot.slane %v163, 2
      %v863 = vrot.slane %v164, 2
      %v864 = vsel %vm806, %v862, %v863
      %v865 = vrot.slane %v165, 2
      %v866 = vsel %vm806, %v863, %v865
      %v867 = vrot.slane %v166, 2
      %v868 = vrot.slane %v167, 2
      %v869 = vsel %vm806, %v867, %v868
      %v870 = vrot.slane %v168, 2
      %v871 = vsel %vm806, %v868, %v870
      %v872 = vrot.slane %v169, 2
      %v873 = vrot.slane %v170, 2
      %v874 = vsel %vm806, %v872, %v873
      %v875 = vrot.slane %v171, 2
      %v876 = vsel %vm806, %v873, %v875
      %v877 = vrot.slane %v172, 2
      %v878 = vrot.slane %v173, 2
      %v879 = vsel %vm806, %v877, %v878
      %v880 = vrot.slane %v174, 2
      %v881 = vsel %vm806, %v878, %v880
      %v882 = vrot.slane %v175, 2
      %v883 = vrot.slane %v176, 2
      %v884 = vsel %vm806, %v882, %v883
      %v885 = vrot.slane %v177, 2
      %v886 = vsel %vm806, %v883, %v885
      %v919 = vpack.c.bf16 %v811, %v809
      %v920 = vpack.c.bf16 %v816, %v814
      %v921 = vpack.c.bf16 %v821, %v819
      %v922 = vpack.c.bf16 %v826, %v824
      %v923 = vpack.c.bf16 %v831, %v829
      %v924 = vpack.c.bf16 %v836, %v834
      %v925 = vpack.c.bf16 %v841, %v839
      %v926 = vpack.c.bf16 %v846, %v844
      %v927 = vpack.c.bf16 %v851, %v849
      %v928 = vpack.c.bf16 %v856, %v854
      %v929 = vpack.c.bf16 %v861, %v859
      %v930 = vpack.c.bf16 %v866, %v864
      %v931 = vpack.c.bf16 %v871, %v869
      %v932 = vpack.c.bf16 %v876, %v874
      %v933 = vpack.c.bf16 %v881, %v879
      %v934 = vpack.c.bf16 %v886, %v884
      %s935 = scalar_lea.vmem %s1, 4
      %v936 = vld [vmem:[%s935] sm:$0x3]
      %v938 = vsel %vm380, %v919, 0
      %v941 = vsel %vm380, %v920, 0
      %v944 = vsel %vm380, %v921, 0
      %v947 = vsel %vm380, %v922, 0
      %v950 = vsel %vm380, %v923, 0
      %v953 = vsel %vm380, %v924, 0
      %v956 = vsel %vm380, %v925, 0
      %v959 = vsel %vm380, %v926, 0
      %v962 = vsel %vm380, %v927, 0
      %v965 = vsel %vm380, %v928, 0
      %v968 = vsel %vm380, %v929, 0
      %v971 = vsel %vm380, %v930, 0
      %v974 = vsel %vm380, %v931, 0
      %v977 = vsel %vm380, %v932, 0
      %v980 = vsel %vm380, %v933, 0
      %v983 = vsel %vm380, %v934, 0
      %v986 = vsel %vm429, %v936, 0
      %988 = vmatprep.subr.bf16.mxu0 0
      %989 = vmatpush1.bf16.msra.mxu0 %v986
      %990 = vmatprep.subr.bf16.mxu0 0
      %991 = vmatpush1.bf16.msra.mxu0 0
      %992 = vmatprep.subr.bf16.mxu0 0
      %993 = vmatpush1.bf16.msra.mxu0 0
      %994 = vmatprep.subr.bf16.mxu0 0
      %995 = vmatpush1.bf16.msra.mxu0 0
      %996 = vmatprep.subr.bf16.mxu0 0
      %997 = vmatpush1.bf16.msra.mxu0 0
      %998 = vmatprep.subr.bf16.mxu0 0
      %999 = vmatpush1.bf16.msra.mxu0 0
      %1000 = vmatprep.subr.bf16.mxu0 0
      %1001 = vmatpush1.bf16.msra.mxu0 0
      %1002 = vmatprep.subr.bf16.mxu0 0
      %1003 = vmatpush1.bf16.msra.mxu0 0
      %1004 = vmatprep.subr.bf16.mxu0 0
      %1005 = vmatpush1.bf16.msra.mxu0 0
      %1006 = vmatprep.subr.bf16.mxu0 0
      %1007 = vmatpush1.bf16.msra.mxu0 0
      %1008 = vmatprep.subr.bf16.mxu0 0
      %1009 = vmatpush1.bf16.msra.mxu0 0
      %1010 = vmatprep.subr.bf16.mxu0 0
      %1011 = vmatpush1.bf16.msra.mxu0 0
      %1012 = vmatprep.subr.bf16.mxu0 0
      %1013 = vmatpush1.bf16.msra.mxu0 0
      %1014 = vmatprep.subr.bf16.mxu0 0
      %1015 = vmatpush1.bf16.msra.mxu0 0
      %1016 = vmatprep.subr.bf16.mxu0 0
      %1017 = vmatpush1.bf16.msra.mxu0 0
      %1018 = vmatprep.subr.bf16.mxu0 0
      %1019 = vmatpush1.bf16.msra.mxu0 0
      %1020 = vmatprep.mubr.bf16.mxu0 0
      %1021 = vmatmul.mubr.bf16.gmra.mrb[0].mxu0 %v938
      %v1022 = vpop.f32.mrb[0].mxu0
      %v1023 = vadd.f32 0.0, %v1022
      %v1024 = vpop.f32.mrb[0].mxu0
      %v1025 = vpop.f32.mrb[0].mxu0
      %v1026 = vadd.f32 0.0, %v1025
      %v1027 = vpop.f32.mrb[0].mxu0
      %1028 = vmatprep.mubr.bf16.mxu0 0
      %1029 = vmatmul.mubr.bf16.gmra.mrb[0].mxu0 %v941
      %v1030 = vpop.f32.mrb[0].mxu0
      %v1031 = vadd.f32 0.0, %v1030
      %v1032 = vpop.f32.mrb[0].mxu0
      %v1033 = vpop.f32.mrb[0].mxu0
      %v1034 = vadd.f32 0.0, %v1033
      %v1035 = vpop.f32.mrb[0].mxu0
      %1036 = vmatprep.mubr.bf16.mxu0 0
      %1037 = vmatmul.mubr.bf16.gmra.mrb[0].mxu0 %v944
      %v1038 = vpop.f32.mrb[0].mxu0
      %v1039 = vadd.f32 0.0, %v1038
      %v1040 = vpop.f32.mrb[0].mxu0
      %v1041 = vpop.f32.mrb[0].mxu0
      %v1042 = vadd.f32 0.0, %v1041
      %v1043 = vpop.f32.mrb[0].mxu0
      %1044 = vmatprep.mubr.bf16.mxu0 0
      %1045 = vmatmul.mubr.bf16.gmra.mrb[0].mxu0 %v947
      %v1046 = vpop.f32.mrb[0].mxu0
      %v1047 = vadd.f32 0.0, %v1046
      %v1048 = vpop.f32.mrb[0].mxu0
      %v1049 = vpop.f32.mrb[0].mxu0
      %v1050 = vadd.f32 0.0, %v1049
      %v1051 = vpop.f32.mrb[0].mxu0
      %1052 = vmatprep.mubr.bf16.mxu0 0
      %1053 = vmatmul.mubr.bf16.gmra.mrb[0].mxu0 %v950
      %v1054 = vpop.f32.mrb[0].mxu0
      %v1055 = vadd.f32 0.0, %v1054
      %v1056 = vpop.f32.mrb[0].mxu0
      %v1057 = vpop.f32.mrb[0].mxu0
      %v1058 = vadd.f32 0.0, %v1057
      %v1059 = vpop.f32.mrb[0].mxu0
      %1060 = vmatprep.mubr.bf16.mxu0 0
      %1061 = vmatmul.mubr.bf16.gmra.mrb[0].mxu0 %v953
      %v1062 = vpop.f32.mrb[0].mxu0
      %v1063 = vadd.f32 0.0, %v1062
      %v1064 = vpop.f32.mrb[0].mxu0
      %v1065 = vpop.f32.mrb[0].mxu0
      %v1066 = vadd.f32 0.0, %v1065
      %v1067 = vpop.f32.mrb[0].mxu0
      %1068 = vmatprep.mubr.bf16.mxu0 0
      %1069 = vmatmul.mubr.bf16.gmra.mrb[0].mxu0 %v956
      %v1070 = vpop.f32.mrb[0].mxu0
      %v1071 = vadd.f32 0.0, %v1070
      %v1072 = vpop.f32.mrb[0].mxu0
      %v1073 = vpop.f32.mrb[0].mxu0
      %v1074 = vadd.f32 0.0, %v1073
      %v1075 = vpop.f32.mrb[0].mxu0
      %1076 = vmatprep.mubr.bf16.mxu0 0
      %1077 = vmatmul.mubr.bf16.gmra.mrb[0].mxu0 %v959
      %v1078 = vpop.f32.mrb[0].mxu0
      %v1079 = vadd.f32 0.0, %v1078
      %v1080 = vpop.f32.mrb[0].mxu0
      %v1081 = vpop.f32.mrb[0].mxu0
      %v1082 = vadd.f32 0.0, %v1081
      %v1083 = vpop.f32.mrb[0].mxu0
      %1084 = vmatprep.mubr.bf16.mxu0 0
      %1085 = vmatmul.mubr.bf16.gmra.mrb[0].mxu0 %v962
      %v1086 = vpop.f32.mrb[0].mxu0
      %v1087 = vadd.f32 0.0, %v1086
      %v1088 = vpop.f32.mrb[0].mxu0
      %v1089 = vpop.f32.mrb[0].mxu0
      %v1090 = vadd.f32 0.0, %v1089
      %v1091 = vpop.f32.mrb[0].mxu0
      %1092 = vmatprep.mubr.bf16.mxu0 0
      %1093 = vmatmul.mubr.bf16.gmra.mrb[0].mxu0 %v965
      %v1094 = vpop.f32.mrb[0].mxu0
      %v1095 = vadd.f32 0.0, %v1094
      %v1096 = vpop.f32.mrb[0].mxu0
      %v1097 = vpop.f32.mrb[0].mxu0
      %v1098 = vadd.f32 0.0, %v1097
      %v1099 = vpop.f32.mrb[0].mxu0
      %1100 = vmatprep.mubr.bf16.mxu0 0
      %1101 = vmatmul.mubr.bf16.gmra.mrb[0].mxu0 %v968
      %v1102 = vpop.f32.mrb[0].mxu0
      %v1103 = vadd.f32 0.0, %v1102
      %v1104 = vpop.f32.mrb[0].mxu0
      %v1105 = vpop.f32.mrb[0].mxu0
      %v1106 = vadd.f32 0.0, %v1105
      %v1107 = vpop.f32.mrb[0].mxu0
      %1108 = vmatprep.mubr.bf16.mxu0 0
      %1109 = vmatmul.mubr.bf16.gmra.mrb[0].mxu0 %v971
      %v1110 = vpop.f32.mrb[0].mxu0
      %v1111 = vadd.f32 0.0, %v1110
      %v1112 = vpop.f32.mrb[0].mxu0
      %v1113 = vpop.f32.mrb[0].mxu0
      %v1114 = vadd.f32 0.0, %v1113
      %v1115 = vpop.f32.mrb[0].mxu0
      %1116 = vmatprep.mubr.bf16.mxu0 0
      %1117 = vmatmul.mubr.bf16.gmra.mrb[0].mxu0 %v974
      %v1118 = vpop.f32.mrb[0].mxu0
      %v1119 = vadd.f32 0.0, %v1118
      %v1120 = vpop.f32.mrb[0].mxu0
      %v1121 = vpop.f32.mrb[0].mxu0
      %v1122 = vadd.f32 0.0, %v1121
      %v1123 = vpop.f32.mrb[0].mxu0
      %1124 = vmatprep.mubr.bf16.mxu0 0
      %1125 = vmatmul.mubr.bf16.gmra.mrb[0].mxu0 %v977
      %v1126 = vpop.f32.mrb[0].mxu0
      %v1127 = vadd.f32 0.0, %v1126
      %v1128 = vpop.f32.mrb[0].mxu0
      %v1129 = vpop.f32.mrb[0].mxu0
      %v1130 = vadd.f32 0.0, %v1129
      %v1131 = vpop.f32.mrb[0].mxu0
      %1132 = vmatprep.mubr.bf16.mxu0 0
      %1133 = vmatmul.mubr.bf16.gmra.mrb[0].mxu0 %v980
      %v1134 = vpop.f32.mrb[0].mxu0
      %v1135 = vadd.f32 0.0, %v1134
      %v1136 = vpop.f32.mrb[0].mxu0
      %v1137 = vpop.f32.mrb[0].mxu0
      %v1138 = vadd.f32 0.0, %v1137
      %v1139 = vpop.f32.mrb[0].mxu0
      %1140 = vmatprep.mubr.bf16.mxu0 0
      %1141 = vmatmul.mubr.bf16.gmra.mrb[0].mxu0 %v983
      %v1142 = vpop.f32.mrb[0].mxu0
      %v1143 = vadd.f32 0.0, %v1142
      %v1144 = vpop.f32.mrb[0].mxu0
      %v1145 = vpop.f32.mrb[0].mxu0
      %v1146 = vadd.f32 0.0, %v1145
      %v1147 = vpop.f32.mrb[0].mxu0
      %1148 = vdwg.mxu0
      %v1149 = vadd.f32 %v680, %v1023
      %v1150 = vadd.f32 %v683, %v1026
      %v1151 = vadd.f32 %v688, %v1031
      %v1152 = vadd.f32 %v691, %v1034
      %v1153 = vadd.f32 %v696, %v1039
      %v1154 = vadd.f32 %v699, %v1042
      %v1155 = vadd.f32 %v704, %v1047
      %v1156 = vadd.f32 %v707, %v1050
      %v1157 = vadd.f32 %v712, %v1055
      %v1158 = vadd.f32 %v715, %v1058
      %v1159 = vadd.f32 %v720, %v1063
      %v1160 = vadd.f32 %v723, %v1066
      %v1161 = vadd.f32 %v728, %v1071
      %v1162 = vadd.f32 %v731, %v1074
      %v1163 = vadd.f32 %v736, %v1079
      %v1164 = vadd.f32 %v739, %v1082
      %v1165 = vadd.f32 %v744, %v1087
      %v1166 = vadd.f32 %v747, %v1090
      %v1167 = vadd.f32 %v752, %v1095
      %v1168 = vadd.f32 %v755, %v1098
      %v1169 = vadd.f32 %v760, %v1103
      %v1170 = vadd.f32 %v763, %v1106
      %v1171 = vadd.f32 %v768, %v1111
      %v1172 = vadd.f32 %v771, %v1114
      %v1173 = vadd.f32 %v776, %v1119
      %v1174 = vadd.f32 %v779, %v1122
      %v1175 = vadd.f32 %v784, %v1127
      %v1176 = vadd.f32 %v787, %v1130
      %v1177 = vadd.f32 %v792, %v1135
      %v1178 = vadd.f32 %v795, %v1138
      %v1179 = vadd.f32 %v800, %v1143
      %v1180 = vadd.f32 %v803, %v1146
      %v1181 = vpack.c.bf16 %v179, %v178
      %s1182 = scalar_lea.vmem %s1, 6
      %v1183 = vld [vmem:[%s1182] sm:$0x3]
      %v1185 = vsel %vm380, %v1181, 0
      %v1188 = vsel %vm429, %v1183, 0
      %1190 = vmatprep.subr.bf16.mxu0 0
      %1191 = vmatpush1.bf16.msra.mxu0 %v1188
      %1192 = vmatprep.subr.bf16.mxu0 0
      %1193 = vmatpush1.bf16.msra.mxu0 0
      %1194 = vmatprep.subr.bf16.mxu0 0
      %1195 = vmatpush1.bf16.msra.mxu0 0
      %1196 = vmatprep.subr.bf16.mxu0 0
      %1197 = vmatpush1.bf16.msra.mxu0 0
      %1198 = vmatprep.subr.bf16.mxu0 0
      %1199 = vmatpush1.bf16.msra.mxu0 0
      %1200 = vmatprep.subr.bf16.mxu0 0
      %1201 = vmatpush1.bf16.msra.mxu0 0
      %1202 = vmatprep.subr.bf16.mxu0 0
      %1203 = vmatpush1.bf16.msra.mxu0 0
      %1204 = vmatprep.subr.bf16.mxu0 0
      %1205 = vmatpush1.bf16.msra.mxu0 0
      %1206 = vmatprep.subr.bf16.mxu0 0
      %1207 = vmatpush1.bf16.msra.mxu0 0
      %1208 = vmatprep.subr.bf16.mxu0 0
      %1209 = vmatpush1.bf16.msra.mxu0 0
      %1210 = vmatprep.subr.bf16.mxu0 0
      %1211 = vmatpush1.bf16.msra.mxu0 0
      %1212 = vmatprep.subr.bf16.mxu0 0
      %1213 = vmatpush1.bf16.msra.mxu0 0
      %1214 = vmatprep.subr.bf16.mxu0 0
      %1215 = vmatpush1.bf16.msra.mxu0 0
      %1216 = vmatprep.subr.bf16.mxu0 0
      %1217 = vmatpush1.bf16.msra.mxu0 0
      %1218 = vmatprep.subr.bf16.mxu0 0
      %1219 = vmatpush1.bf16.msra.mxu0 0
      %1220 = vmatprep.subr.bf16.mxu0 0
      %1221 = vmatpush1.bf16.msra.mxu0 0
      %1222 = vmatprep.mubr.bf16.mxu0 0
      %1223 = vmatmul.mubr.bf16.gmra.mrb[0].mxu0 %v598
      %v1224 = vpop.f32.mrb[0].mxu0
      %v1225 = vadd.f32 0.0, %v1224
      %v1226 = vpop.f32.mrb[0].mxu0
      %v1227 = vpop.f32.mrb[0].mxu0
      %v1228 = vadd.f32 0.0, %v1227
      %v1229 = vpop.f32.mrb[0].mxu0
      %1230 = vmatprep.mubr.bf16.mxu0 0
      %1231 = vmatmul.mubr.bf16.gmra.mrb[0].mxu0 %v601
      %v1232 = vpop.f32.mrb[0].mxu0
      %v1233 = vadd.f32 0.0, %v1232
      %v1234 = vpop.f32.mrb[0].mxu0
      %v1235 = vpop.f32.mrb[0].mxu0
      %v1236 = vadd.f32 0.0, %v1235
      %v1237 = vpop.f32.mrb[0].mxu0
      %1238 = vmatprep.mubr.bf16.mxu0 0
      %1239 = vmatmul.mubr.bf16.gmra.mrb[0].mxu0 %v604
      %v1240 = vpop.f32.mrb[0].mxu0
      %v1241 = vadd.f32 0.0, %v1240
      %v1242 = vpop.f32.mrb[0].mxu0
      %v1243 = vpop.f32.mrb[0].mxu0
      %v1244 = vadd.f32 0.0, %v1243
      %v1245 = vpop.f32.mrb[0].mxu0
      %1246 = vmatprep.mubr.bf16.mxu0 0
      %1247 = vmatmul.mubr.bf16.gmra.mrb[0].mxu0 %v607
      %v1248 = vpop.f32.mrb[0].mxu0
      %v1249 = vadd.f32 0.0, %v1248
      %v1250 = vpop.f32.mrb[0].mxu0
      %v1251 = vpop.f32.mrb[0].mxu0
      %v1252 = vadd.f32 0.0, %v1251
      %v1253 = vpop.f32.mrb[0].mxu0
      %1254 = vmatprep.mubr.bf16.mxu0 0
      %1255 = vmatmul.mubr.bf16.gmra.mrb[0].mxu0 %v610
      %v1256 = vpop.f32.mrb[0].mxu0
      %v1257 = vadd.f32 0.0, %v1256
      %v1258 = vpop.f32.mrb[0].mxu0
      %v1259 = vpop.f32.mrb[0].mxu0
      %v1260 = vadd.f32 0.0, %v1259
      %v1261 = vpop.f32.mrb[0].mxu0
      %1262 = vmatprep.mubr.bf16.mxu0 0
      %1263 = vmatmul.mubr.bf16.gmra.mrb[0].mxu0 %v613
      %v1264 = vpop.f32.mrb[0].mxu0
      %v1265 = vadd.f32 0.0, %v1264
      %v1266 = vpop.f32.mrb[0].mxu0
      %v1267 = vpop.f32.mrb[0].mxu0
      %v1268 = vadd.f32 0.0, %v1267
      %v1269 = vpop.f32.mrb[0].mxu0
      %1270 = vmatprep.mubr.bf16.mxu0 0
      %1271 = vmatmul.mubr.bf16.gmra.mrb[0].mxu0 %v616
      %v1272 = vpop.f32.mrb[0].mxu0
      %v1273 = vadd.f32 0.0, %v1272
      %v1274 = vpop.f32.mrb[0].mxu0
      %v1275 = vpop.f32.mrb[0].mxu0
      %v1276 = vadd.f32 0.0, %v1275
      %v1277 = vpop.f32.mrb[0].mxu0
      %1278 = vmatprep.mubr.bf16.mxu0 0
      %1279 = vmatmul.mubr.bf16.gmra.mrb[0].mxu0 %v619
      %v1280 = vpop.f32.mrb[0].mxu0
      %v1281 = vadd.f32 0.0, %v1280
      %v1282 = vpop.f32.mrb[0].mxu0
      %v1283 = vpop.f32.mrb[0].mxu0
      %v1284 = vadd.f32 0.0, %v1283
      %v1285 = vpop.f32.mrb[0].mxu0
      %1286 = vmatprep.mubr.bf16.mxu0 0
      %1287 = vmatmul.mubr.bf16.gmra.mrb[0].mxu0 %v622
      %v1288 = vpop.f32.mrb[0].mxu0
      %v1289 = vadd.f32 0.0, %v1288
      %v1290 = vpop.f32.mrb[0].mxu0
      %v1291 = vpop.f32.mrb[0].mxu0
      %v1292 = vadd.f32 0.0, %v1291
      %v1293 = vpop.f32.mrb[0].mxu0
      %1294 = vmatprep.mubr.bf16.mxu0 0
      %1295 = vmatmul.mubr.bf16.gmra.mrb[0].mxu0 %v625
      %v1296 = vpop.f32.mrb[0].mxu0
      %v1297 = vadd.f32 0.0, %v1296
      %v1298 = vpop.f32.mrb[0].mxu0
      %v1299 = vpop.f32.mrb[0].mxu0
      %v1300 = vadd.f32 0.0, %v1299
      %v1301 = vpop.f32.mrb[0].mxu0
      %1302 = vmatprep.mubr.bf16.mxu0 0
      %1303 = vmatmul.mubr.bf16.gmra.mrb[0].mxu0 %v628
      %v1304 = vpop.f32.mrb[0].mxu0
      %v1305 = vadd.f32 0.0, %v1304
      %v1306 = vpop.f32.mrb[0].mxu0
      %v1307 = vpop.f32.mrb[0].mxu0
      %v1308 = vadd.f32 0.0, %v1307
      %v1309 = vpop.f32.mrb[0].mxu0
      %1310 = vmatprep.mubr.bf16.mxu0 0
      %1311 = vmatmul.mubr.bf16.gmra.mrb[0].mxu0 %v631
      %v1312 = vpop.f32.mrb[0].mxu0
      %v1313 = vadd.f32 0.0, %v1312
      %v1314 = vpop.f32.mrb[0].mxu0
      %v1315 = vpop.f32.mrb[0].mxu0
      %v1316 = vadd.f32 0.0, %v1315
      %v1317 = vpop.f32.mrb[0].mxu0
      %1318 = vmatprep.mubr.bf16.mxu0 0
      %1319 = vmatmul.mubr.bf16.gmra.mrb[0].mxu0 %v634
      %v1320 = vpop.f32.mrb[0].mxu0
      %v1321 = vadd.f32 0.0, %v1320
      %v1322 = vpop.f32.mrb[0].mxu0
      %v1323 = vpop.f32.mrb[0].mxu0
      %v1324 = vadd.f32 0.0, %v1323
      %v1325 = vpop.f32.mrb[0].mxu0
      %1326 = vmatprep.mubr.bf16.mxu0 0
      %1327 = vmatmul.mubr.bf16.gmra.mrb[0].mxu0 %v637
      %v1328 = vpop.f32.mrb[0].mxu0
      %v1329 = vadd.f32 0.0, %v1328
      %v1330 = vpop.f32.mrb[0].mxu0
      %v1331 = vpop.f32.mrb[0].mxu0
      %v1332 = vadd.f32 0.0, %v1331
      %v1333 = vpop.f32.mrb[0].mxu0
      %1334 = vmatprep.mubr.bf16.mxu0 0
      %1335 = vmatmul.mubr.bf16.gmra.mrb[0].mxu0 %v640
      %v1336 = vpop.f32.mrb[0].mxu0
      %v1337 = vadd.f32 0.0, %v1336
      %v1338 = vpop.f32.mrb[0].mxu0
      %v1339 = vpop.f32.mrb[0].mxu0
      %v1340 = vadd.f32 0.0, %v1339
      %v1341 = vpop.f32.mrb[0].mxu0
      %1342 = vmatprep.mubr.bf16.mxu0 0
      %1343 = vmatmul.mubr.bf16.gmra.mrb[0].mxu0 %v1185
      %v1344 = vpop.f32.mrb[0].mxu0
      %v1345 = vadd.f32 0.0, %v1344
      %v1346 = vpop.f32.mrb[0].mxu0
      %v1347 = vpop.f32.mrb[0].mxu0
      %v1348 = vadd.f32 0.0, %v1347
      %v1349 = vpop.f32.mrb[0].mxu0
      %1350 = vdwg.mxu0
      %v1351 = vadd.f32 %v1149, %v1225
      %v1352 = vadd.f32 %v1150, %v1228
      %v1353 = vadd.f32 %v1151, %v1233
      %v1354 = vadd.f32 %v1152, %v1236
      %v1355 = vadd.f32 %v1153, %v1241
      %v1356 = vadd.f32 %v1154, %v1244
      %v1357 = vadd.f32 %v1155, %v1249
      %v1358 = vadd.f32 %v1156, %v1252
      %v1359 = vadd.f32 %v1157, %v1257
      %v1360 = vadd.f32 %v1158, %v1260
      %v1361 = vadd.f32 %v1159, %v1265
      %v1362 = vadd.f32 %v1160, %v1268
      %v1363 = vadd.f32 %v1161, %v1273
      %v1364 = vadd.f32 %v1162, %v1276
      %v1365 = vadd.f32 %v1163, %v1281
      %v1366 = vadd.f32 %v1164, %v1284
      %v1367 = vadd.f32 %v1165, %v1289
      %v1368 = vadd.f32 %v1166, %v1292
      %v1369 = vadd.f32 %v1167, %v1297
      %v1370 = vadd.f32 %v1168, %v1300
      %v1371 = vadd.f32 %v1169, %v1305
      %v1372 = vadd.f32 %v1170, %v1308
      %v1373 = vadd.f32 %v1171, %v1313
      %v1374 = vadd.f32 %v1172, %v1316
      %v1375 = vadd.f32 %v1173, %v1321
      %v1376 = vadd.f32 %v1174, %v1324
      %v1377 = vadd.f32 %v1175, %v1329
      %v1378 = vadd.f32 %v1176, %v1332
      %v1379 = vadd.f32 %v1177, %v1337
      %v1380 = vadd.f32 %v1178, %v1340
      %v1381 = vadd.f32 %v1179, %v1345
      %v1382 = vadd.f32 %v1180, %v1348
      %v1386 = vrot.slane %v178, 1
      %v1387 = vrot.slane %v179, 1
      %v1388 = vsel %vm249, %v1386, %v1387
      %v1389 = vrot.slane %v180, 1
      %v1390 = vsel %vm249, %v1387, %v1389
      %v1393 = vpack.c.bf16 %v1390, %v1388
      %s1394 = scalar_lea.vmem %s1, 8
      %v1395 = vld [vmem:[%s1394] sm:$0x3]
      %v1397 = vsel %vm380, %v1393, 0
      %v1400 = vsel %vm429, %v1395, 0
      %1402 = vmatprep.subr.bf16.mxu0 0
      %1403 = vmatpush1.bf16.msra.mxu0 %v1400
      %1404 = vmatprep.subr.bf16.mxu0 0
      %1405 = vmatpush1.bf16.msra.mxu0 0
      %1406 = vmatprep.subr.bf16.mxu0 0
      %1407 = vmatpush1.bf16.msra.mxu0 0
      %1408 = vmatprep.subr.bf16.mxu0 0
      %1409 = vmatpush1.bf16.msra.mxu0 0
      %1410 = vmatprep.subr.bf16.mxu0 0
      %1411 = vmatpush1.bf16.msra.mxu0 0
      %1412 = vmatprep.subr.bf16.mxu0 0
      %1413 = vmatpush1.bf16.msra.mxu0 0
      %1414 = vmatprep.subr.bf16.mxu0 0
      %1415 = vmatpush1.bf16.msra.mxu0 0
      %1416 = vmatprep.subr.bf16.mxu0 0
      %1417 = vmatpush1.bf16.msra.mxu0 0
      %1418 = vmatprep.subr.bf16.mxu0 0
      %1419 = vmatpush1.bf16.msra.mxu0 0
      %1420 = vmatprep.subr.bf16.mxu0 0
      %1421 = vmatpush1.bf16.msra.mxu0 0
      %1422 = vmatprep.subr.bf16.mxu0 0
      %1423 = vmatpush1.bf16.msra.mxu0 0
      %1424 = vmatprep.subr.bf16.mxu0 0
      %1425 = vmatpush1.bf16.msra.mxu0 0
      %1426 = vmatprep.subr.bf16.mxu0 0
      %1427 = vmatpush1.bf16.msra.mxu0 0
      %1428 = vmatprep.subr.bf16.mxu0 0
      %1429 = vmatpush1.bf16.msra.mxu0 0
      %1430 = vmatprep.subr.bf16.mxu0 0
      %1431 = vmatpush1.bf16.msra.mxu0 0
      %1432 = vmatprep.subr.bf16.mxu0 0
      %1433 = vmatpush1.bf16.msra.mxu0 0
      %1434 = vmatprep.mubr.bf16.mxu0 0
      %1435 = vmatmul.mubr.bf16.gmra.mrb[0].mxu0 %v385
      %v1436 = vpop.f32.mrb[0].mxu0
      %v1437 = vadd.f32 0.0, %v1436
      %v1438 = vpop.f32.mrb[0].mxu0
      %v1439 = vpop.f32.mrb[0].mxu0
      %v1440 = vadd.f32 0.0, %v1439
      %v1441 = vpop.f32.mrb[0].mxu0
      %1442 = vmatprep.mubr.bf16.mxu0 0
      %1443 = vmatmul.mubr.bf16.gmra.mrb[0].mxu0 %v388
      %v1444 = vpop.f32.mrb[0].mxu0
      %v1445 = vadd.f32 0.0, %v1444
      %v1446 = vpop.f32.mrb[0].mxu0
      %v1447 = vpop.f32.mrb[0].mxu0
      %v1448 = vadd.f32 0.0, %v1447
      %v1449 = vpop.f32.mrb[0].mxu0
      %1450 = vmatprep.mubr.bf16.mxu0 0
      %1451 = vmatmul.mubr.bf16.gmra.mrb[0].mxu0 %v391
      %v1452 = vpop.f32.mrb[0].mxu0
      %v1453 = vadd.f32 0.0, %v1452
      %v1454 = vpop.f32.mrb[0].mxu0
      %v1455 = vpop.f32.mrb[0].mxu0
      %v1456 = vadd.f32 0.0, %v1455
      %v1457 = vpop.f32.mrb[0].mxu0
      %1458 = vmatprep.mubr.bf16.mxu0 0
      %1459 = vmatmul.mubr.bf16.gmra.mrb[0].mxu0 %v394
      %v1460 = vpop.f32.mrb[0].mxu0
      %v1461 = vadd.f32 0.0, %v1460
      %v1462 = vpop.f32.mrb[0].mxu0
      %v1463 = vpop.f32.mrb[0].mxu0
      %v1464 = vadd.f32 0.0, %v1463
      %v1465 = vpop.f32.mrb[0].mxu0
      %1466 = vmatprep.mubr.bf16.mxu0 0
      %1467 = vmatmul.mubr.bf16.gmra.mrb[0].mxu0 %v397
      %v1468 = vpop.f32.mrb[0].mxu0
      %v1469 = vadd.f32 0.0, %v1468
      %v1470 = vpop.f32.mrb[0].mxu0
      %v1471 = vpop.f32.mrb[0].mxu0
      %v1472 = vadd.f32 0.0, %v1471
      %v1473 = vpop.f32.mrb[0].mxu0
      %1474 = vmatprep.mubr.bf16.mxu0 0
      %1475 = vmatmul.mubr.bf16.gmra.mrb[0].mxu0 %v400
      %v1476 = vpop.f32.mrb[0].mxu0
      %v1477 = vadd.f32 0.0, %v1476
      %v1478 = vpop.f32.mrb[0].mxu0
      %v1479 = vpop.f32.mrb[0].mxu0
      %v1480 = vadd.f32 0.0, %v1479
      %v1481 = vpop.f32.mrb[0].mxu0
      %1482 = vmatprep.mubr.bf16.mxu0 0
      %1483 = vmatmul.mubr.bf16.gmra.mrb[0].mxu0 %v403
      %v1484 = vpop.f32.mrb[0].mxu0
      %v1485 = vadd.f32 0.0, %v1484
      %v1486 = vpop.f32.mrb[0].mxu0
      %v1487 = vpop.f32.mrb[0].mxu0
      %v1488 = vadd.f32 0.0, %v1487
      %v1489 = vpop.f32.mrb[0].mxu0
      %1490 = vmatprep.mubr.bf16.mxu0 0
      %1491 = vmatmul.mubr.bf16.gmra.mrb[0].mxu0 %v406
      %v1492 = vpop.f32.mrb[0].mxu0
      %v1493 = vadd.f32 0.0, %v1492
      %v1494 = vpop.f32.mrb[0].mxu0
      %v1495 = vpop.f32.mrb[0].mxu0
      %v1496 = vadd.f32 0.0, %v1495
      %v1497 = vpop.f32.mrb[0].mxu0
      %1498 = vmatprep.mubr.bf16.mxu0 0
      %1499 = vmatmul.mubr.bf16.gmra.mrb[0].mxu0 %v409
      %v1500 = vpop.f32.mrb[0].mxu0
      %v1501 = vadd.f32 0.0, %v1500
      %v1502 = vpop.f32.mrb[0].mxu0
      %v1503 = vpop.f32.mrb[0].mxu0
      %v1504 = vadd.f32 0.0, %v1503
      %v1505 = vpop.f32.mrb[0].mxu0
      %1506 = vmatprep.mubr.bf16.mxu0 0
      %1507 = vmatmul.mubr.bf16.gmra.mrb[0].mxu0 %v412
      %v1508 = vpop.f32.mrb[0].mxu0
      %v1509 = vadd.f32 0.0, %v1508
      %v1510 = vpop.f32.mrb[0].mxu0
      %v1511 = vpop.f32.mrb[0].mxu0
      %v1512 = vadd.f32 0.0, %v1511
      %v1513 = vpop.f32.mrb[0].mxu0
      %1514 = vmatprep.mubr.bf16.mxu0 0
      %1515 = vmatmul.mubr.bf16.gmra.mrb[0].mxu0 %v415
      %v1516 = vpop.f32.mrb[0].mxu0
      %v1517 = vadd.f32 0.0, %v1516
      %v1518 = vpop.f32.mrb[0].mxu0
      %v1519 = vpop.f32.mrb[0].mxu0
      %v1520 = vadd.f32 0.0, %v1519
      %v1521 = vpop.f32.mrb[0].mxu0
      %1522 = vmatprep.mubr.bf16.mxu0 0
      %1523 = vmatmul.mubr.bf16.gmra.mrb[0].mxu0 %v418
      %v1524 = vpop.f32.mrb[0].mxu0
      %v1525 = vadd.f32 0.0, %v1524
      %v1526 = vpop.f32.mrb[0].mxu0
      %v1527 = vpop.f32.mrb[0].mxu0
      %v1528 = vadd.f32 0.0, %v1527
      %v1529 = vpop.f32.mrb[0].mxu0
      %1530 = vmatprep.mubr.bf16.mxu0 0
      %1531 = vmatmul.mubr.bf16.gmra.mrb[0].mxu0 %v421
      %v1532 = vpop.f32.mrb[0].mxu0
      %v1533 = vadd.f32 0.0, %v1532
      %v1534 = vpop.f32.mrb[0].mxu0
      %v1535 = vpop.f32.mrb[0].mxu0
      %v1536 = vadd.f32 0.0, %v1535
      %v1537 = vpop.f32.mrb[0].mxu0
      %1538 = vmatprep.mubr.bf16.mxu0 0
      %1539 = vmatmul.mubr.bf16.gmra.mrb[0].mxu0 %v424
      %v1540 = vpop.f32.mrb[0].mxu0
      %v1541 = vadd.f32 0.0, %v1540
      %v1542 = vpop.f32.mrb[0].mxu0
      %v1543 = vpop.f32.mrb[0].mxu0
      %v1544 = vadd.f32 0.0, %v1543
      %v1545 = vpop.f32.mrb[0].mxu0
      %1546 = vmatprep.mubr.bf16.mxu0 0
      %1547 = vmatmul.mubr.bf16.gmra.mrb[0].mxu0 %v427
      %v1548 = vpop.f32.mrb[0].mxu0
      %v1549 = vadd.f32 0.0, %v1548
      %v1550 = vpop.f32.mrb[0].mxu0
      %v1551 = vpop.f32.mrb[0].mxu0
      %v1552 = vadd.f32 0.0, %v1551
      %v1553 = vpop.f32.mrb[0].mxu0
      %1554 = vmatprep.mubr.bf16.mxu0 0
      %1555 = vmatmul.mubr.bf16.gmra.mrb[0].mxu0 %v1397
      %v1556 = vpop.f32.mrb[0].mxu0
      %v1557 = vadd.f32 0.0, %v1556
      %v1558 = vpop.f32.mrb[0].mxu0
      %v1559 = vpop.f32.mrb[0].mxu0
      %v1560 = vadd.f32 0.0, %v1559
      %v1561 = vpop.f32.mrb[0].mxu0
      %1562 = vdwg.mxu0
      %v1563 = vadd.f32 %v1351, %v1437
      %v1564 = vadd.f32 %v1352, %v1440
      %v1565 = vadd.f32 %v1353, %v1445
      %v1566 = vadd.f32 %v1354, %v1448
      %v1567 = vadd.f32 %v1355, %v1453
      %v1568 = vadd.f32 %v1356, %v1456
      %v1569 = vadd.f32 %v1357, %v1461
      %v1570 = vadd.f32 %v1358, %v1464
      %v1571 = vadd.f32 %v1359, %v1469
      %v1572 = vadd.f32 %v1360, %v1472
      %v1573 = vadd.f32 %v1361, %v1477
      %v1574 = vadd.f32 %v1362, %v1480
      %v1575 = vadd.f32 %v1363, %v1485
      %v1576 = vadd.f32 %v1364, %v1488
      %v1577 = vadd.f32 %v1365, %v1493
      %v1578 = vadd.f32 %v1366, %v1496
      %v1579 = vadd.f32 %v1367, %v1501
      %v1580 = vadd.f32 %v1368, %v1504
      %v1581 = vadd.f32 %v1369, %v1509
      %v1582 = vadd.f32 %v1370, %v1512
      %v1583 = vadd.f32 %v1371, %v1517
      %v1584 = vadd.f32 %v1372, %v1520
      %v1585 = vadd.f32 %v1373, %v1525
      %v1586 = vadd.f32 %v1374, %v1528
      %v1587 = vadd.f32 %v1375, %v1533
      %v1588 = vadd.f32 %v1376, %v1536
      %v1589 = vadd.f32 %v1377, %v1541
      %v1590 = vadd.f32 %v1378, %v1544
      %v1591 = vadd.f32 %v1379, %v1549
      %v1592 = vadd.f32 %v1380, %v1552
      %v1593 = vadd.f32 %v1381, %v1557
      %v1594 = vadd.f32 %v1382, %v1560
      %v1595 = vrot.slane %v178, 2
      %v1596 = vrot.slane %v179, 2
      %v1597 = vsel %vm806, %v1595, %v1596
      %v1598 = vrot.slane %v180, 2
      %v1599 = vsel %vm806, %v1596, %v1598
      %v1602 = vpack.c.bf16 %v1599, %v1597
      %s1603 = scalar_lea.vmem %s1, 10
      %v1604 = vld [vmem:[%s1603] sm:$0x3]
      %v1606 = vsel %vm380, %v1602, 0
      %v1609 = vsel %vm429, %v1604, 0
      %1611 = vmatprep.subr.bf16.mxu0 0
      %1612 = vmatpush1.bf16.msra.mxu0 %v1609
      %1613 = vmatprep.subr.bf16.mxu0 0
      %1614 = vmatpush1.bf16.msra.mxu0 0
      %1615 = vmatprep.subr.bf16.mxu0 0
      %1616 = vmatpush1.bf16.msra.mxu0 0
      %1617 = vmatprep.subr.bf16.mxu0 0
      %1618 = vmatpush1.bf16.msra.mxu0 0
      %1619 = vmatprep.subr.bf16.mxu0 0
      %1620 = vmatpush1.bf16.msra.mxu0 0
      %1621 = vmatprep.subr.bf16.mxu0 0
      %1622 = vmatpush1.bf16.msra.mxu0 0
      %1623 = vmatprep.subr.bf16.mxu0 0
      %1624 = vmatpush1.bf16.msra.mxu0 0
      %1625 = vmatprep.subr.bf16.mxu0 0
      %1626 = vmatpush1.bf16.msra.mxu0 0
      %1627 = vmatprep.subr.bf16.mxu0 0
      %1628 = vmatpush1.bf16.msra.mxu0 0
      %1629 = vmatprep.subr.bf16.mxu0 0
      %1630 = vmatpush1.bf16.msra.mxu0 0
      %1631 = vmatprep.subr.bf16.mxu0 0
      %1632 = vmatpush1.bf16.msra.mxu0 0
      %1633 = vmatprep.subr.bf16.mxu0 0
      %1634 = vmatpush1.bf16.msra.mxu0 0
      %1635 = vmatprep.subr.bf16.mxu0 0
      %1636 = vmatpush1.bf16.msra.mxu0 0
      %1637 = vmatprep.subr.bf16.mxu0 0
      %1638 = vmatpush1.bf16.msra.mxu0 0
      %1639 = vmatprep.subr.bf16.mxu0 0
      %1640 = vmatpush1.bf16.msra.mxu0 0
      %1641 = vmatprep.subr.bf16.mxu0 0
      %1642 = vmatpush1.bf16.msra.mxu0 0
      %1643 = vmatprep.mubr.bf16.mxu0 0
      %1644 = vmatmul.mubr.bf16.gmra.mrb[0].mxu0 %v941
      %v1645 = vpop.f32.mrb[0].mxu0
      %v1646 = vadd.f32 0.0, %v1645
      %v1647 = vpop.f32.mrb[0].mxu0
      %v1648 = vpop.f32.mrb[0].mxu0
      %v1649 = vadd.f32 0.0, %v1648
      %v1650 = vpop.f32.mrb[0].mxu0
      %1651 = vmatprep.mubr.bf16.mxu0 0
      %1652 = vmatmul.mubr.bf16.gmra.mrb[0].mxu0 %v944
      %v1653 = vpop.f32.mrb[0].mxu0
      %v1654 = vadd.f32 0.0, %v1653
      %v1655 = vpop.f32.mrb[0].mxu0
      %v1656 = vpop.f32.mrb[0].mxu0
      %v1657 = vadd.f32 0.0, %v1656
      %v1658 = vpop.f32.mrb[0].mxu0
      %1659 = vmatprep.mubr.bf16.mxu0 0
      %1660 = vmatmul.mubr.bf16.gmra.mrb[0].mxu0 %v947
      %v1661 = vpop.f32.mrb[0].mxu0
      %v1662 = vadd.f32 0.0, %v1661
      %v1663 = vpop.f32.mrb[0].mxu0
      %v1664 = vpop.f32.mrb[0].mxu0
      %v1665 = vadd.f32 0.0, %v1664
      %v1666 = vpop.f32.mrb[0].mxu0
      %1667 = vmatprep.mubr.bf16.mxu0 0
      %1668 = vmatmul.mubr.bf16.gmra.mrb[0].mxu0 %v950
      %v1669 = vpop.f32.mrb[0].mxu0
      %v1670 = vadd.f32 0.0, %v1669
      %v1671 = vpop.f32.mrb[0].mxu0
      %v1672 = vpop.f32.mrb[0].mxu0
      %v1673 = vadd.f32 0.0, %v1672
      %v1674 = vpop.f32.mrb[0].mxu0
      %1675 = vmatprep.mubr.bf16.mxu0 0
      %1676 = vmatmul.mubr.bf16.gmra.mrb[0].mxu0 %v953
      %v1677 = vpop.f32.mrb[0].mxu0
      %v1678 = vadd.f32 0.0, %v1677
      %v1679 = vpop.f32.mrb[0].mxu0
      %v1680 = vpop.f32.mrb[0].mxu0
      %v1681 = vadd.f32 0.0, %v1680
      %v1682 = vpop.f32.mrb[0].mxu0
      %1683 = vmatprep.mubr.bf16.mxu0 0
      %1684 = vmatmul.mubr.bf16.gmra.mrb[0].mxu0 %v956
      %v1685 = vpop.f32.mrb[0].mxu0
      %v1686 = vadd.f32 0.0, %v1685
      %v1687 = vpop.f32.mrb[0].mxu0
      %v1688 = vpop.f32.mrb[0].mxu0
      %v1689 = vadd.f32 0.0, %v1688
      %v1690 = vpop.f32.mrb[0].mxu0
      %1691 = vmatprep.mubr.bf16.mxu0 0
      %1692 = vmatmul.mubr.bf16.gmra.mrb[0].mxu0 %v959
      %v1693 = vpop.f32.mrb[0].mxu0
      %v1694 = vadd.f32 0.0, %v1693
      %v1695 = vpop.f32.mrb[0].mxu0
      %v1696 = vpop.f32.mrb[0].mxu0
      %v1697 = vadd.f32 0.0, %v1696
      %v1698 = vpop.f32.mrb[0].mxu0
      %1699 = vmatprep.mubr.bf16.mxu0 0
      %1700 = vmatmul.mubr.bf16.gmra.mrb[0].mxu0 %v962
      %v1701 = vpop.f32.mrb[0].mxu0
      %v1702 = vadd.f32 0.0, %v1701
      %v1703 = vpop.f32.mrb[0].mxu0
      %v1704 = vpop.f32.mrb[0].mxu0
      %v1705 = vadd.f32 0.0, %v1704
      %v1706 = vpop.f32.mrb[0].mxu0
      %1707 = vmatprep.mubr.bf16.mxu0 0
      %1708 = vmatmul.mubr.bf16.gmra.mrb[0].mxu0 %v965
      %v1709 = vpop.f32.mrb[0].mxu0
      %v1710 = vadd.f32 0.0, %v1709
      %v1711 = vpop.f32.mrb[0].mxu0
      %v1712 = vpop.f32.mrb[0].mxu0
      %v1713 = vadd.f32 0.0, %v1712
      %v1714 = vpop.f32.mrb[0].mxu0
      %1715 = vmatprep.mubr.bf16.mxu0 0
      %1716 = vmatmul.mubr.bf16.gmra.mrb[0].mxu0 %v968
      %v1717 = vpop.f32.mrb[0].mxu0
      %v1718 = vadd.f32 0.0, %v1717
      %v1719 = vpop.f32.mrb[0].mxu0
      %v1720 = vpop.f32.mrb[0].mxu0
      %v1721 = vadd.f32 0.0, %v1720
      %v1722 = vpop.f32.mrb[0].mxu0
      %1723 = vmatprep.mubr.bf16.mxu0 0
      %1724 = vmatmul.mubr.bf16.gmra.mrb[0].mxu0 %v971
      %v1725 = vpop.f32.mrb[0].mxu0
      %v1726 = vadd.f32 0.0, %v1725
      %v1727 = vpop.f32.mrb[0].mxu0
      %v1728 = vpop.f32.mrb[0].mxu0
      %v1729 = vadd.f32 0.0, %v1728
      %v1730 = vpop.f32.mrb[0].mxu0
      %1731 = vmatprep.mubr.bf16.mxu0 0
      %1732 = vmatmul.mubr.bf16.gmra.mrb[0].mxu0 %v974
      %v1733 = vpop.f32.mrb[0].mxu0
      %v1734 = vadd.f32 0.0, %v1733
      %v1735 = vpop.f32.mrb[0].mxu0
      %v1736 = vpop.f32.mrb[0].mxu0
      %v1737 = vadd.f32 0.0, %v1736
      %v1738 = vpop.f32.mrb[0].mxu0
      %1739 = vmatprep.mubr.bf16.mxu0 0
      %1740 = vmatmul.mubr.bf16.gmra.mrb[0].mxu0 %v977
      %v1741 = vpop.f32.mrb[0].mxu0
      %v1742 = vadd.f32 0.0, %v1741
      %v1743 = vpop.f32.mrb[0].mxu0
      %v1744 = vpop.f32.mrb[0].mxu0
      %v1745 = vadd.f32 0.0, %v1744
      %v1746 = vpop.f32.mrb[0].mxu0
      %1747 = vmatprep.mubr.bf16.mxu0 0
      %1748 = vmatmul.mubr.bf16.gmra.mrb[0].mxu0 %v980
      %v1749 = vpop.f32.mrb[0].mxu0
      %v1750 = vadd.f32 0.0, %v1749
      %v1751 = vpop.f32.mrb[0].mxu0
      %v1752 = vpop.f32.mrb[0].mxu0
      %v1753 = vadd.f32 0.0, %v1752
      %v1754 = vpop.f32.mrb[0].mxu0
      %1755 = vmatprep.mubr.bf16.mxu0 0
      %1756 = vmatmul.mubr.bf16.gmra.mrb[0].mxu0 %v983
      %v1757 = vpop.f32.mrb[0].mxu0
      %v1758 = vadd.f32 0.0, %v1757
      %v1759 = vpop.f32.mrb[0].mxu0
      %v1760 = vpop.f32.mrb[0].mxu0
      %v1761 = vadd.f32 0.0, %v1760
      %v1762 = vpop.f32.mrb[0].mxu0
      %1763 = vmatprep.mubr.bf16.mxu0 0
      %1764 = vmatmul.mubr.bf16.gmra.mrb[0].mxu0 %v1606
      %v1765 = vpop.f32.mrb[0].mxu0
      %v1766 = vadd.f32 0.0, %v1765
      %v1767 = vpop.f32.mrb[0].mxu0
      %v1768 = vpop.f32.mrb[0].mxu0
      %v1769 = vadd.f32 0.0, %v1768
      %v1770 = vpop.f32.mrb[0].mxu0
      %1771 = vdwg.mxu0
      %v1772 = vadd.f32 %v1563, %v1646
      %v1773 = vadd.f32 %v1564, %v1649
      %v1774 = vadd.f32 %v1565, %v1654
      %v1775 = vadd.f32 %v1566, %v1657
      %v1776 = vadd.f32 %v1567, %v1662
      %v1777 = vadd.f32 %v1568, %v1665
      %v1778 = vadd.f32 %v1569, %v1670
      %v1779 = vadd.f32 %v1570, %v1673
      %v1780 = vadd.f32 %v1571, %v1678
      %v1781 = vadd.f32 %v1572, %v1681
      %v1782 = vadd.f32 %v1573, %v1686
      %v1783 = vadd.f32 %v1574, %v1689
      %v1784 = vadd.f32 %v1575, %v1694
      %v1785 = vadd.f32 %v1576, %v1697
      %v1786 = vadd.f32 %v1577, %v1702
      %v1787 = vadd.f32 %v1578, %v1705
      %v1788 = vadd.f32 %v1579, %v1710
      %v1789 = vadd.f32 %v1580, %v1713
      %v1790 = vadd.f32 %v1581, %v1718
      %v1791 = vadd.f32 %v1582, %v1721
      %v1792 = vadd.f32 %v1583, %v1726
      %v1793 = vadd.f32 %v1584, %v1729
      %v1794 = vadd.f32 %v1585, %v1734
      %v1795 = vadd.f32 %v1586, %v1737
      %v1796 = vadd.f32 %v1587, %v1742
      %v1797 = vadd.f32 %v1588, %v1745
      %v1798 = vadd.f32 %v1589, %v1750
      %v1799 = vadd.f32 %v1590, %v1753
      %v1800 = vadd.f32 %v1591, %v1758
      %v1801 = vadd.f32 %v1592, %v1761
      %v1802 = vadd.f32 %v1593, %v1766
      %v1803 = vadd.f32 %v1594, %v1769
      %v1804 = vpack.c.bf16 %v182, %v181
      %s1805 = scalar_lea.vmem %s1, 12
      %v1806 = vld [vmem:[%s1805] sm:$0x3]
      %v1808 = vsel %vm380, %v1804, 0
      %v1811 = vsel %vm429, %v1806, 0
      %1813 = vmatprep.subr.bf16.mxu0 0
      %1814 = vmatpush1.bf16.msra.mxu0 %v1811
      %1815 = vmatprep.subr.bf16.mxu0 0
      %1816 = vmatpush1.bf16.msra.mxu0 0
      %1817 = vmatprep.subr.bf16.mxu0 0
      %1818 = vmatpush1.bf16.msra.mxu0 0
      %1819 = vmatprep.subr.bf16.mxu0 0
      %1820 = vmatpush1.bf16.msra.mxu0 0
      %1821 = vmatprep.subr.bf16.mxu0 0
      %1822 = vmatpush1.bf16.msra.mxu0 0
      %1823 = vmatprep.subr.bf16.mxu0 0
      %1824 = vmatpush1.bf16.msra.mxu0 0
      %1825 = vmatprep.subr.bf16.mxu0 0
      %1826 = vmatpush1.bf16.msra.mxu0 0
      %1827 = vmatprep.subr.bf16.mxu0 0
      %1828 = vmatpush1.bf16.msra.mxu0 0
      %1829 = vmatprep.subr.bf16.mxu0 0
      %1830 = vmatpush1.bf16.msra.mxu0 0
      %1831 = vmatprep.subr.bf16.mxu0 0
      %1832 = vmatpush1.bf16.msra.mxu0 0
      %1833 = vmatprep.subr.bf16.mxu0 0
      %1834 = vmatpush1.bf16.msra.mxu0 0
      %1835 = vmatprep.subr.bf16.mxu0 0
      %1836 = vmatpush1.bf16.msra.mxu0 0
      %1837 = vmatprep.subr.bf16.mxu0 0
      %1838 = vmatpush1.bf16.msra.mxu0 0
      %1839 = vmatprep.subr.bf16.mxu0 0
      %1840 = vmatpush1.bf16.msra.mxu0 0
      %1841 = vmatprep.subr.bf16.mxu0 0
      %1842 = vmatpush1.bf16.msra.mxu0 0
      %1843 = vmatprep.subr.bf16.mxu0 0
      %1844 = vmatpush1.bf16.msra.mxu0 0
      %1845 = vmatprep.mubr.bf16.mxu0 0
      %1846 = vmatmul.mubr.bf16.gmra.mrb[0].mxu0 %v601
      %v1847 = vpop.f32.mrb[0].mxu0
      %v1848 = vadd.f32 0.0, %v1847
      %v1849 = vpop.f32.mrb[0].mxu0
      %v1850 = vpop.f32.mrb[0].mxu0
      %v1851 = vadd.f32 0.0, %v1850
      %v1852 = vpop.f32.mrb[0].mxu0
      %1853 = vmatprep.mubr.bf16.mxu0 0
      %1854 = vmatmul.mubr.bf16.gmra.mrb[0].mxu0 %v604
      %v1855 = vpop.f32.mrb[0].mxu0
      %v1856 = vadd.f32 0.0, %v1855
      %v1857 = vpop.f32.mrb[0].mxu0
      %v1858 = vpop.f32.mrb[0].mxu0
      %v1859 = vadd.f32 0.0, %v1858
      %v1860 = vpop.f32.mrb[0].mxu0
      %1861 = vmatprep.mubr.bf16.mxu0 0
      %1862 = vmatmul.mubr.bf16.gmra.mrb[0].mxu0 %v607
      %v1863 = vpop.f32.mrb[0].mxu0
      %v1864 = vadd.f32 0.0, %v1863
      %v1865 = vpop.f32.mrb[0].mxu0
      %v1866 = vpop.f32.mrb[0].mxu0
      %v1867 = vadd.f32 0.0, %v1866
      %v1868 = vpop.f32.mrb[0].mxu0
      %1869 = vmatprep.mubr.bf16.mxu0 0
      %1870 = vmatmul.mubr.bf16.gmra.mrb[0].mxu0 %v610
      %v1871 = vpop.f32.mrb[0].mxu0
      %v1872 = vadd.f32 0.0, %v1871
      %v1873 = vpop.f32.mrb[0].mxu0
      %v1874 = vpop.f32.mrb[0].mxu0
      %v1875 = vadd.f32 0.0, %v1874
      %v1876 = vpop.f32.mrb[0].mxu0
      %1877 = vmatprep.mubr.bf16.mxu0 0
      %1878 = vmatmul.mubr.bf16.gmra.mrb[0].mxu0 %v613
      %v1879 = vpop.f32.mrb[0].mxu0
      %v1880 = vadd.f32 0.0, %v1879
      %v1881 = vpop.f32.mrb[0].mxu0
      %v1882 = vpop.f32.mrb[0].mxu0
      %v1883 = vadd.f32 0.0, %v1882
      %v1884 = vpop.f32.mrb[0].mxu0
      %1885 = vmatprep.mubr.bf16.mxu0 0
      %1886 = vmatmul.mubr.bf16.gmra.mrb[0].mxu0 %v616
      %v1887 = vpop.f32.mrb[0].mxu0
      %v1888 = vadd.f32 0.0, %v1887
      %v1889 = vpop.f32.mrb[0].mxu0
      %v1890 = vpop.f32.mrb[0].mxu0
      %v1891 = vadd.f32 0.0, %v1890
      %v1892 = vpop.f32.mrb[0].mxu0
      %1893 = vmatprep.mubr.bf16.mxu0 0
      %1894 = vmatmul.mubr.bf16.gmra.mrb[0].mxu0 %v619
      %v1895 = vpop.f32.mrb[0].mxu0
      %v1896 = vadd.f32 0.0, %v1895
      %v1897 = vpop.f32.mrb[0].mxu0
      %v1898 = vpop.f32.mrb[0].mxu0
      %v1899 = vadd.f32 0.0, %v1898
      %v1900 = vpop.f32.mrb[0].mxu0
      %1901 = vmatprep.mubr.bf16.mxu0 0
      %1902 = vmatmul.mubr.bf16.gmra.mrb[0].mxu0 %v622
      %v1903 = vpop.f32.mrb[0].mxu0
      %v1904 = vadd.f32 0.0, %v1903
      %v1905 = vpop.f32.mrb[0].mxu0
      %v1906 = vpop.f32.mrb[0].mxu0
      %v1907 = vadd.f32 0.0, %v1906
      %v1908 = vpop.f32.mrb[0].mxu0
      %1909 = vmatprep.mubr.bf16.mxu0 0
      %1910 = vmatmul.mubr.bf16.gmra.mrb[0].mxu0 %v625
      %v1911 = vpop.f32.mrb[0].mxu0
      %v1912 = vadd.f32 0.0, %v1911
      %v1913 = vpop.f32.mrb[0].mxu0
      %v1914 = vpop.f32.mrb[0].mxu0
      %v1915 = vadd.f32 0.0, %v1914
      %v1916 = vpop.f32.mrb[0].mxu0
      %1917 = vmatprep.mubr.bf16.mxu0 0
      %1918 = vmatmul.mubr.bf16.gmra.mrb[0].mxu0 %v628
      %v1919 = vpop.f32.mrb[0].mxu0
      %v1920 = vadd.f32 0.0, %v1919
      %v1921 = vpop.f32.mrb[0].mxu0
      %v1922 = vpop.f32.mrb[0].mxu0
      %v1923 = vadd.f32 0.0, %v1922
      %v1924 = vpop.f32.mrb[0].mxu0
      %1925 = vmatprep.mubr.bf16.mxu0 0
      %1926 = vmatmul.mubr.bf16.gmra.mrb[0].mxu0 %v631
      %v1927 = vpop.f32.mrb[0].mxu0
      %v1928 = vadd.f32 0.0, %v1927
      %v1929 = vpop.f32.mrb[0].mxu0
      %v1930 = vpop.f32.mrb[0].mxu0
      %v1931 = vadd.f32 0.0, %v1930
      %v1932 = vpop.f32.mrb[0].mxu0
      %1933 = vmatprep.mubr.bf16.mxu0 0
      %1934 = vmatmul.mubr.bf16.gmra.mrb[0].mxu0 %v634
      %v1935 = vpop.f32.mrb[0].mxu0
      %v1936 = vadd.f32 0.0, %v1935
      %v1937 = vpop.f32.mrb[0].mxu0
      %v1938 = vpop.f32.mrb[0].mxu0
      %v1939 = vadd.f32 0.0, %v1938
      %v1940 = vpop.f32.mrb[0].mxu0
      %1941 = vmatprep.mubr.bf16.mxu0 0
      %1942 = vmatmul.mubr.bf16.gmra.mrb[0].mxu0 %v637
      %v1943 = vpop.f32.mrb[0].mxu0
      %v1944 = vadd.f32 0.0, %v1943
      %v1945 = vpop.f32.mrb[0].mxu0
      %v1946 = vpop.f32.mrb[0].mxu0
      %v1947 = vadd.f32 0.0, %v1946
      %v1948 = vpop.f32.mrb[0].mxu0
      %1949 = vmatprep.mubr.bf16.mxu0 0
      %1950 = vmatmul.mubr.bf16.gmra.mrb[0].mxu0 %v640
      %v1951 = vpop.f32.mrb[0].mxu0
      %v1952 = vadd.f32 0.0, %v1951
      %v1953 = vpop.f32.mrb[0].mxu0
      %v1954 = vpop.f32.mrb[0].mxu0
      %v1955 = vadd.f32 0.0, %v1954
      %v1956 = vpop.f32.mrb[0].mxu0
      %1957 = vmatprep.mubr.bf16.mxu0 0
      %1958 = vmatmul.mubr.bf16.gmra.mrb[0].mxu0 %v1185
      %v1959 = vpop.f32.mrb[0].mxu0
      %v1960 = vadd.f32 0.0, %v1959
      %v1961 = vpop.f32.mrb[0].mxu0
      %v1962 = vpop.f32.mrb[0].mxu0
      %v1963 = vadd.f32 0.0, %v1962
      %v1964 = vpop.f32.mrb[0].mxu0
      %1965 = vmatprep.mubr.bf16.mxu0 0
      %1966 = vmatmul.mubr.bf16.gmra.mrb[0].mxu0 %v1808
      %v1967 = vpop.f32.mrb[0].mxu0
      %v1968 = vadd.f32 0.0, %v1967
      %v1969 = vpop.f32.mrb[0].mxu0
      %v1970 = vpop.f32.mrb[0].mxu0
      %v1971 = vadd.f32 0.0, %v1970
      %v1972 = vpop.f32.mrb[0].mxu0
      %1973 = vdwg.mxu0
      %v1974 = vadd.f32 %v1772, %v1848
      %v1975 = vadd.f32 %v1773, %v1851
      %v1976 = vadd.f32 %v1774, %v1856
      %v1977 = vadd.f32 %v1775, %v1859
      %v1978 = vadd.f32 %v1776, %v1864
      %v1979 = vadd.f32 %v1777, %v1867
      %v1980 = vadd.f32 %v1778, %v1872
      %v1981 = vadd.f32 %v1779, %v1875
      %v1982 = vadd.f32 %v1780, %v1880
      %v1983 = vadd.f32 %v1781, %v1883
      %v1984 = vadd.f32 %v1782, %v1888
      %v1985 = vadd.f32 %v1783, %v1891
      %v1986 = vadd.f32 %v1784, %v1896
      %v1987 = vadd.f32 %v1785, %v1899
      %v1988 = vadd.f32 %v1786, %v1904
      %v1989 = vadd.f32 %v1787, %v1907
      %v1990 = vadd.f32 %v1788, %v1912
      %v1991 = vadd.f32 %v1789, %v1915
      %v1992 = vadd.f32 %v1790, %v1920
      %v1993 = vadd.f32 %v1791, %v1923
      %v1994 = vadd.f32 %v1792, %v1928
      %v1995 = vadd.f32 %v1793, %v1931
      %v1996 = vadd.f32 %v1794, %v1936
      %v1997 = vadd.f32 %v1795, %v1939
      %v1998 = vadd.f32 %v1796, %v1944
      %v1999 = vadd.f32 %v1797, %v1947
      %v2000 = vadd.f32 %v1798, %v1952
      %v2001 = vadd.f32 %v1799, %v1955
      %v2002 = vadd.f32 %v1800, %v1960
      %v2003 = vadd.f32 %v1801, %v1963
      %v2004 = vadd.f32 %v1802, %v1968
      %v2005 = vadd.f32 %v1803, %v1971
      %v2009 = vrot.slane %v181, 1
      %v2010 = vrot.slane %v182, 1
      %v2011 = vsel %vm249, %v2009, %v2010
      %v2012 = vrot.slane %v183, 1
      %v2013 = vsel %vm249, %v2010, %v2012
      %v2016 = vpack.c.bf16 %v2013, %v2011
      %s2017 = scalar_lea.vmem %s1, 14
      %v2018 = vld [vmem:[%s2017] sm:$0x3]
      %v2020 = vsel %vm380, %v2016, 0
      %v2023 = vsel %vm429, %v2018, 0
      %2025 = vmatprep.subr.bf16.mxu0 0
      %2026 = vmatpush1.bf16.msra.mxu0 %v2023
      %2027 = vmatprep.subr.bf16.mxu0 0
      %2028 = vmatpush1.bf16.msra.mxu0 0
      %2029 = vmatprep.subr.bf16.mxu0 0
      %2030 = vmatpush1.bf16.msra.mxu0 0
      %2031 = vmatprep.subr.bf16.mxu0 0
      %2032 = vmatpush1.bf16.msra.mxu0 0
      %2033 = vmatprep.subr.bf16.mxu0 0
      %2034 = vmatpush1.bf16.msra.mxu0 0
      %2035 = vmatprep.subr.bf16.mxu0 0
      %2036 = vmatpush1.bf16.msra.mxu0 0
      %2037 = vmatprep.subr.bf16.mxu0 0
      %2038 = vmatpush1.bf16.msra.mxu0 0
      %2039 = vmatprep.subr.bf16.mxu0 0
      %2040 = vmatpush1.bf16.msra.mxu0 0
      %2041 = vmatprep.subr.bf16.mxu0 0
      %2042 = vmatpush1.bf16.msra.mxu0 0
      %2043 = vmatprep.subr.bf16.mxu0 0
      %2044 = vmatpush1.bf16.msra.mxu0 0
      %2045 = vmatprep.subr.bf16.mxu0 0
      %2046 = vmatpush1.bf16.msra.mxu0 0
      %2047 = vmatprep.subr.bf16.mxu0 0
      %2048 = vmatpush1.bf16.msra.mxu0 0
      %2049 = vmatprep.subr.bf16.mxu0 0
      %2050 = vmatpush1.bf16.msra.mxu0 0
      %2051 = vmatprep.subr.bf16.mxu0 0
      %2052 = vmatpush1.bf16.msra.mxu0 0
      %2053 = vmatprep.subr.bf16.mxu0 0
      %2054 = vmatpush1.bf16.msra.mxu0 0
      %2055 = vmatprep.subr.bf16.mxu0 0
      %2056 = vmatpush1.bf16.msra.mxu0 0
      %2057 = vmatprep.mubr.bf16.mxu0 0
      %2058 = vmatmul.mubr.bf16.gmra.mrb[0].mxu0 %v388
      %v2059 = vpop.f32.mrb[0].mxu0
      %v2060 = vadd.f32 0.0, %v2059
      %v2061 = vpop.f32.mrb[0].mxu0
      %v2062 = vpop.f32.mrb[0].mxu0
      %v2063 = vadd.f32 0.0, %v2062
      %v2064 = vpop.f32.mrb[0].mxu0
      %2065 = vmatprep.mubr.bf16.mxu0 0
      %2066 = vmatmul.mubr.bf16.gmra.mrb[0].mxu0 %v391
      %v2067 = vpop.f32.mrb[0].mxu0
      %v2068 = vadd.f32 0.0, %v2067
      %v2069 = vpop.f32.mrb[0].mxu0
      %v2070 = vpop.f32.mrb[0].mxu0
      %v2071 = vadd.f32 0.0, %v2070
      %v2072 = vpop.f32.mrb[0].mxu0
      %2073 = vmatprep.mubr.bf16.mxu0 0
      %2074 = vmatmul.mubr.bf16.gmra.mrb[0].mxu0 %v394
      %v2075 = vpop.f32.mrb[0].mxu0
      %v2076 = vadd.f32 0.0, %v2075
      %v2077 = vpop.f32.mrb[0].mxu0
      %v2078 = vpop.f32.mrb[0].mxu0
      %v2079 = vadd.f32 0.0, %v2078
      %v2080 = vpop.f32.mrb[0].mxu0
      %2081 = vmatprep.mubr.bf16.mxu0 0
      %2082 = vmatmul.mubr.bf16.gmra.mrb[0].mxu0 %v397
      %v2083 = vpop.f32.mrb[0].mxu0
      %v2084 = vadd.f32 0.0, %v2083
      %v2085 = vpop.f32.mrb[0].mxu0
      %v2086 = vpop.f32.mrb[0].mxu0
      %v2087 = vadd.f32 0.0, %v2086
      %v2088 = vpop.f32.mrb[0].mxu0
      %2089 = vmatprep.mubr.bf16.mxu0 0
      %2090 = vmatmul.mubr.bf16.gmra.mrb[0].mxu0 %v400
      %v2091 = vpop.f32.mrb[0].mxu0
      %v2092 = vadd.f32 0.0, %v2091
      %v2093 = vpop.f32.mrb[0].mxu0
      %v2094 = vpop.f32.mrb[0].mxu0
      %v2095 = vadd.f32 0.0, %v2094
      %v2096 = vpop.f32.mrb[0].mxu0
      %2097 = vmatprep.mubr.bf16.mxu0 0
      %2098 = vmatmul.mubr.bf16.gmra.mrb[0].mxu0 %v403
      %v2099 = vpop.f32.mrb[0].mxu0
      %v2100 = vadd.f32 0.0, %v2099
      %v2101 = vpop.f32.mrb[0].mxu0
      %v2102 = vpop.f32.mrb[0].mxu0
      %v2103 = vadd.f32 0.0, %v2102
      %v2104 = vpop.f32.mrb[0].mxu0
      %2105 = vmatprep.mubr.bf16.mxu0 0
      %2106 = vmatmul.mubr.bf16.gmra.mrb[0].mxu0 %v406
      %v2107 = vpop.f32.mrb[0].mxu0
      %v2108 = vadd.f32 0.0, %v2107
      %v2109 = vpop.f32.mrb[0].mxu0
      %v2110 = vpop.f32.mrb[0].mxu0
      %v2111 = vadd.f32 0.0, %v2110
      %v2112 = vpop.f32.mrb[0].mxu0
      %2113 = vmatprep.mubr.bf16.mxu0 0
      %2114 = vmatmul.mubr.bf16.gmra.mrb[0].mxu0 %v409
      %v2115 = vpop.f32.mrb[0].mxu0
      %v2116 = vadd.f32 0.0, %v2115
      %v2117 = vpop.f32.mrb[0].mxu0
      %v2118 = vpop.f32.mrb[0].mxu0
      %v2119 = vadd.f32 0.0, %v2118
      %v2120 = vpop.f32.mrb[0].mxu0
      %2121 = vmatprep.mubr.bf16.mxu0 0
      %2122 = vmatmul.mubr.bf16.gmra.mrb[0].mxu0 %v412
      %v2123 = vpop.f32.mrb[0].mxu0
      %v2124 = vadd.f32 0.0, %v2123
      %v2125 = vpop.f32.mrb[0].mxu0
      %v2126 = vpop.f32.mrb[0].mxu0
      %v2127 = vadd.f32 0.0, %v2126
      %v2128 = vpop.f32.mrb[0].mxu0
      %2129 = vmatprep.mubr.bf16.mxu0 0
      %2130 = vmatmul.mubr.bf16.gmra.mrb[0].mxu0 %v415
      %v2131 = vpop.f32.mrb[0].mxu0
      %v2132 = vadd.f32 0.0, %v2131
      %v2133 = vpop.f32.mrb[0].mxu0
      %v2134 = vpop.f32.mrb[0].mxu0
      %v2135 = vadd.f32 0.0, %v2134
      %v2136 = vpop.f32.mrb[0].mxu0
      %2137 = vmatprep.mubr.bf16.mxu0 0
      %2138 = vmatmul.mubr.bf16.gmra.mrb[0].mxu0 %v418
      %v2139 = vpop.f32.mrb[0].mxu0
      %v2140 = vadd.f32 0.0, %v2139
      %v2141 = vpop.f32.mrb[0].mxu0
      %v2142 = vpop.f32.mrb[0].mxu0
      %v2143 = vadd.f32 0.0, %v2142
      %v2144 = vpop.f32.mrb[0].mxu0
      %2145 = vmatprep.mubr.bf16.mxu0 0
      %2146 = vmatmul.mubr.bf16.gmra.mrb[0].mxu0 %v421
      %v2147 = vpop.f32.mrb[0].mxu0
      %v2148 = vadd.f32 0.0, %v2147
      %v2149 = vpop.f32.mrb[0].mxu0
      %v2150 = vpop.f32.mrb[0].mxu0
      %v2151 = vadd.f32 0.0, %v2150
      %v2152 = vpop.f32.mrb[0].mxu0
      %2153 = vmatprep.mubr.bf16.mxu0 0
      %2154 = vmatmul.mubr.bf16.gmra.mrb[0].mxu0 %v424
      %v2155 = vpop.f32.mrb[0].mxu0
      %v2156 = vadd.f32 0.0, %v2155
      %v2157 = vpop.f32.mrb[0].mxu0
      %v2158 = vpop.f32.mrb[0].mxu0
      %v2159 = vadd.f32 0.0, %v2158
      %v2160 = vpop.f32.mrb[0].mxu0
      %2161 = vmatprep.mubr.bf16.mxu0 0
      %2162 = vmatmul.mubr.bf16.gmra.mrb[0].mxu0 %v427
      %v2163 = vpop.f32.mrb[0].mxu0
      %v2164 = vadd.f32 0.0, %v2163
      %v2165 = vpop.f32.mrb[0].mxu0
      %v2166 = vpop.f32.mrb[0].mxu0
      %v2167 = vadd.f32 0.0, %v2166
      %v2168 = vpop.f32.mrb[0].mxu0
      %2169 = vmatprep.mubr.bf16.mxu0 0
      %2170 = vmatmul.mubr.bf16.gmra.mrb[0].mxu0 %v1397
      %v2171 = vpop.f32.mrb[0].mxu0
      %v2172 = vadd.f32 0.0, %v2171
      %v2173 = vpop.f32.mrb[0].mxu0
      %v2174 = vpop.f32.mrb[0].mxu0
      %v2175 = vadd.f32 0.0, %v2174
      %v2176 = vpop.f32.mrb[0].mxu0
      %2177 = vmatprep.mubr.bf16.mxu0 0
      %2178 = vmatmul.mubr.bf16.gmra.mrb[0].mxu0 %v2020
      %v2179 = vpop.f32.mrb[0].mxu0
      %v2180 = vadd.f32 0.0, %v2179
      %v2181 = vpop.f32.mrb[0].mxu0
      %v2182 = vpop.f32.mrb[0].mxu0
      %v2183 = vadd.f32 0.0, %v2182
      %v2184 = vpop.f32.mrb[0].mxu0
      %2185 = vdwg.mxu0
      %v2186 = vadd.f32 %v1974, %v2060
      %v2187 = vadd.f32 %v1975, %v2063
      %v2188 = vadd.f32 %v1976, %v2068
      %v2189 = vadd.f32 %v1977, %v2071
      %v2190 = vadd.f32 %v1978, %v2076
      %v2191 = vadd.f32 %v1979, %v2079
      %v2192 = vadd.f32 %v1980, %v2084
      %v2193 = vadd.f32 %v1981, %v2087
      %v2194 = vadd.f32 %v1982, %v2092
      %v2195 = vadd.f32 %v1983, %v2095
      %v2196 = vadd.f32 %v1984, %v2100
      %v2197 = vadd.f32 %v1985, %v2103
      %v2198 = vadd.f32 %v1986, %v2108
      %v2199 = vadd.f32 %v1987, %v2111
      %v2200 = vadd.f32 %v1988, %v2116
      %v2201 = vadd.f32 %v1989, %v2119
      %v2202 = vadd.f32 %v1990, %v2124
      %v2203 = vadd.f32 %v1991, %v2127
      %v2204 = vadd.f32 %v1992, %v2132
      %v2205 = vadd.f32 %v1993, %v2135
      %v2206 = vadd.f32 %v1994, %v2140
      %v2207 = vadd.f32 %v1995, %v2143
      %v2208 = vadd.f32 %v1996, %v2148
      %v2209 = vadd.f32 %v1997, %v2151
      %v2210 = vadd.f32 %v1998, %v2156
      %v2211 = vadd.f32 %v1999, %v2159
      %v2212 = vadd.f32 %v2000, %v2164
      %v2213 = vadd.f32 %v2001, %v2167
      %v2214 = vadd.f32 %v2002, %v2172
      %v2215 = vadd.f32 %v2003, %v2175
      %v2216 = vadd.f32 %v2004, %v2180
      %v2217 = vadd.f32 %v2005, %v2183
      %v2218 = vrot.slane %v181, 2
      %v2219 = vrot.slane %v182, 2
      %v2220 = vsel %vm806, %v2218, %v2219
      %v2221 = vrot.slane %v183, 2
      %v2222 = vsel %vm806, %v2219, %v2221
      %v2225 = vpack.c.bf16 %v2222, %v2220
      %s2226 = scalar_lea.vmem %s1, 16
      %v2227 = vld [vmem:[%s2226] sm:$0x3]
      %v2229 = vsel %vm380, %v2225, 0
      %v2232 = vsel %vm429, %v2227, 0
      %2234 = vmatprep.subr.bf16.mxu0 0
      %2235 = vmatpush1.bf16.msra.mxu0 %v2232
      %2236 = vmatprep.subr.bf16.mxu0 0
      %2237 = vmatpush1.bf16.msra.mxu0 0
      %2238 = vmatprep.subr.bf16.mxu0 0
      %2239 = vmatpush1.bf16.msra.mxu0 0
      %2240 = vmatprep.subr.bf16.mxu0 0
      %2241 = vmatpush1.bf16.msra.mxu0 0
      %2242 = vmatprep.subr.bf16.mxu0 0
      %2243 = vmatpush1.bf16.msra.mxu0 0
      %2244 = vmatprep.subr.bf16.mxu0 0
      %2245 = vmatpush1.bf16.msra.mxu0 0
      %2246 = vmatprep.subr.bf16.mxu0 0
      %2247 = vmatpush1.bf16.msra.mxu0 0
      %2248 = vmatprep.subr.bf16.mxu0 0
      %2249 = vmatpush1.bf16.msra.mxu0 0
      %2250 = vmatprep.subr.bf16.mxu0 0
      %2251 = vmatpush1.bf16.msra.mxu0 0
      %2252 = vmatprep.subr.bf16.mxu0 0
      %2253 = vmatpush1.bf16.msra.mxu0 0
      %2254 = vmatprep.subr.bf16.mxu0 0
      %2255 = vmatpush1.bf16.msra.mxu0 0
      %2256 = vmatprep.subr.bf16.mxu0 0
      %2257 = vmatpush1.bf16.msra.mxu0 0
      %2258 = vmatprep.subr.bf16.mxu0 0
      %2259 = vmatpush1.bf16.msra.mxu0 0
      %2260 = vmatprep.subr.bf16.mxu0 0
      %2261 = vmatpush1.bf16.msra.mxu0 0
      %2262 = vmatprep.subr.bf16.mxu0 0
      %2263 = vmatpush1.bf16.msra.mxu0 0
      %2264 = vmatprep.subr.bf16.mxu0 0
      %2265 = vmatpush1.bf16.msra.mxu0 0
      %2266 = vmatprep.mubr.bf16.mxu0 0
      %2267 = vmatmul.mubr.bf16.gmra.mrb[0].mxu0 %v944
      %v2268 = vpop.f32.mrb[0].mxu0
      %v2269 = vadd.f32 0.0, %v2268
      %v2270 = vpop.f32.mrb[0].mxu0
      %v2271 = vpop.f32.mrb[0].mxu0
      %v2272 = vadd.f32 0.0, %v2271
      %v2273 = vpop.f32.mrb[0].mxu0
      %2274 = vmatprep.mubr.bf16.mxu0 0
      %2275 = vmatmul.mubr.bf16.gmra.mrb[0].mxu0 %v947
      %v2276 = vpop.f32.mrb[0].mxu0
      %v2277 = vadd.f32 0.0, %v2276
      %v2278 = vpop.f32.mrb[0].mxu0
      %v2279 = vpop.f32.mrb[0].mxu0
      %v2280 = vadd.f32 0.0, %v2279
      %v2281 = vpop.f32.mrb[0].mxu0
      %2282 = vmatprep.mubr.bf16.mxu0 0
      %2283 = vmatmul.mubr.bf16.gmra.mrb[0].mxu0 %v950
      %v2284 = vpop.f32.mrb[0].mxu0
      %v2285 = vadd.f32 0.0, %v2284
      %v2286 = vpop.f32.mrb[0].mxu0
      %v2287 = vpop.f32.mrb[0].mxu0
      %v2288 = vadd.f32 0.0, %v2287
      %v2289 = vpop.f32.mrb[0].mxu0
      %2290 = vmatprep.mubr.bf16.mxu0 0
      %2291 = vmatmul.mubr.bf16.gmra.mrb[0].mxu0 %v953
      %v2292 = vpop.f32.mrb[0].mxu0
      %v2293 = vadd.f32 0.0, %v2292
      %v2294 = vpop.f32.mrb[0].mxu0
      %v2295 = vpop.f32.mrb[0].mxu0
      %v2296 = vadd.f32 0.0, %v2295
      %v2297 = vpop.f32.mrb[0].mxu0
      %2298 = vmatprep.mubr.bf16.mxu0 0
      %2299 = vmatmul.mubr.bf16.gmra.mrb[0].mxu0 %v956
      %v2300 = vpop.f32.mrb[0].mxu0
      %v2301 = vadd.f32 0.0, %v2300
      %v2302 = vpop.f32.mrb[0].mxu0
      %v2303 = vpop.f32.mrb[0].mxu0
      %v2304 = vadd.f32 0.0, %v2303
      %v2305 = vpop.f32.mrb[0].mxu0
      %2306 = vmatprep.mubr.bf16.mxu0 0
      %2307 = vmatmul.mubr.bf16.gmra.mrb[0].mxu0 %v959
      %v2308 = vpop.f32.mrb[0].mxu0
      %v2309 = vadd.f32 0.0, %v2308
      %v2310 = vpop.f32.mrb[0].mxu0
      %v2311 = vpop.f32.mrb[0].mxu0
      %v2312 = vadd.f32 0.0, %v2311
      %v2313 = vpop.f32.mrb[0].mxu0
      %2314 = vmatprep.mubr.bf16.mxu0 0
      %2315 = vmatmul.mubr.bf16.gmra.mrb[0].mxu0 %v962
      %v2316 = vpop.f32.mrb[0].mxu0
      %v2317 = vadd.f32 0.0, %v2316
      %v2318 = vpop.f32.mrb[0].mxu0
      %v2319 = vpop.f32.mrb[0].mxu0
      %v2320 = vadd.f32 0.0, %v2319
      %v2321 = vpop.f32.mrb[0].mxu0
      %2322 = vmatprep.mubr.bf16.mxu0 0
      %2323 = vmatmul.mubr.bf16.gmra.mrb[0].mxu0 %v965
      %v2324 = vpop.f32.mrb[0].mxu0
      %v2325 = vadd.f32 0.0, %v2324
      %v2326 = vpop.f32.mrb[0].mxu0
      %v2327 = vpop.f32.mrb[0].mxu0
      %v2328 = vadd.f32 0.0, %v2327
      %v2329 = vpop.f32.mrb[0].mxu0
      %2330 = vmatprep.mubr.bf16.mxu0 0
      %2331 = vmatmul.mubr.bf16.gmra.mrb[0].mxu0 %v968
      %v2332 = vpop.f32.mrb[0].mxu0
      %v2333 = vadd.f32 0.0, %v2332
      %v2334 = vpop.f32.mrb[0].mxu0
      %v2335 = vpop.f32.mrb[0].mxu0
      %v2336 = vadd.f32 0.0, %v2335
      %v2337 = vpop.f32.mrb[0].mxu0
      %2338 = vmatprep.mubr.bf16.mxu0 0
      %2339 = vmatmul.mubr.bf16.gmra.mrb[0].mxu0 %v971
      %v2340 = vpop.f32.mrb[0].mxu0
      %v2341 = vadd.f32 0.0, %v2340
      %v2342 = vpop.f32.mrb[0].mxu0
      %v2343 = vpop.f32.mrb[0].mxu0
      %v2344 = vadd.f32 0.0, %v2343
      %v2345 = vpop.f32.mrb[0].mxu0
      %2346 = vmatprep.mubr.bf16.mxu0 0
      %2347 = vmatmul.mubr.bf16.gmra.mrb[0].mxu0 %v974
      %v2348 = vpop.f32.mrb[0].mxu0
      %v2349 = vadd.f32 0.0, %v2348
      %v2350 = vpop.f32.mrb[0].mxu0
      %v2351 = vpop.f32.mrb[0].mxu0
      %v2352 = vadd.f32 0.0, %v2351
      %v2353 = vpop.f32.mrb[0].mxu0
      %2354 = vmatprep.mubr.bf16.mxu0 0
      %2355 = vmatmul.mubr.bf16.gmra.mrb[0].mxu0 %v977
      %v2356 = vpop.f32.mrb[0].mxu0
      %v2357 = vadd.f32 0.0, %v2356
      %v2358 = vpop.f32.mrb[0].mxu0
      %v2359 = vpop.f32.mrb[0].mxu0
      %v2360 = vadd.f32 0.0, %v2359
      %v2361 = vpop.f32.mrb[0].mxu0
      %2362 = vmatprep.mubr.bf16.mxu0 0
      %2363 = vmatmul.mubr.bf16.gmra.mrb[0].mxu0 %v980
      %v2364 = vpop.f32.mrb[0].mxu0
      %v2365 = vadd.f32 0.0, %v2364
      %v2366 = vpop.f32.mrb[0].mxu0
      %v2367 = vpop.f32.mrb[0].mxu0
      %v2368 = vadd.f32 0.0, %v2367
      %v2369 = vpop.f32.mrb[0].mxu0
      %2370 = vmatprep.mubr.bf16.mxu0 0
      %2371 = vmatmul.mubr.bf16.gmra.mrb[0].mxu0 %v983
      %v2372 = vpop.f32.mrb[0].mxu0
      %v2373 = vadd.f32 0.0, %v2372
      %v2374 = vpop.f32.mrb[0].mxu0
      %v2375 = vpop.f32.mrb[0].mxu0
      %v2376 = vadd.f32 0.0, %v2375
      %v2377 = vpop.f32.mrb[0].mxu0
      %2378 = vmatprep.mubr.bf16.mxu0 0
      %2379 = vmatmul.mubr.bf16.gmra.mrb[0].mxu0 %v1606
      %v2380 = vpop.f32.mrb[0].mxu0
      %v2381 = vadd.f32 0.0, %v2380
      %v2382 = vpop.f32.mrb[0].mxu0
      %v2383 = vpop.f32.mrb[0].mxu0
      %v2384 = vadd.f32 0.0, %v2383
      %v2385 = vpop.f32.mrb[0].mxu0
      %2386 = vmatprep.mubr.bf16.mxu0 0
      %2387 = vmatmul.mubr.bf16.gmra.mrb[0].mxu0 %v2229
      %v2388 = vpop.f32.mrb[0].mxu0
      %v2389 = vadd.f32 0.0, %v2388
      %v2390 = vpop.f32.mrb[0].mxu0
      %v2391 = vpop.f32.mrb[0].mxu0
      %v2392 = vadd.f32 0.0, %v2391
      %v2393 = vpop.f32.mrb[0].mxu0
      %2394 = vdwg.mxu0
      %v2395 = vadd.f32 %v2186, %v2269
      %v2396 = vadd.f32 %v2187, %v2272
      %v2397 = vadd.f32 %v2188, %v2277
      %v2398 = vadd.f32 %v2189, %v2280
      %v2399 = vadd.f32 %v2190, %v2285
      %v2400 = vadd.f32 %v2191, %v2288
      %v2401 = vadd.f32 %v2192, %v2293
      %v2402 = vadd.f32 %v2193, %v2296
      %v2403 = vadd.f32 %v2194, %v2301
      %v2404 = vadd.f32 %v2195, %v2304
      %v2405 = vadd.f32 %v2196, %v2309
      %v2406 = vadd.f32 %v2197, %v2312
      %v2407 = vadd.f32 %v2198, %v2317
      %v2408 = vadd.f32 %v2199, %v2320
      %v2409 = vadd.f32 %v2200, %v2325
      %v2410 = vadd.f32 %v2201, %v2328
      %v2411 = vadd.f32 %v2202, %v2333
      %v2412 = vadd.f32 %v2203, %v2336
      %v2413 = vadd.f32 %v2204, %v2341
      %v2414 = vadd.f32 %v2205, %v2344
      %v2415 = vadd.f32 %v2206, %v2349
      %v2416 = vadd.f32 %v2207, %v2352
      %v2417 = vadd.f32 %v2208, %v2357
      %v2418 = vadd.f32 %v2209, %v2360
      %v2419 = vadd.f32 %v2210, %v2365
      %v2420 = vadd.f32 %v2211, %v2368
      %v2421 = vadd.f32 %v2212, %v2373
      %v2422 = vadd.f32 %v2213, %v2376
      %v2423 = vadd.f32 %v2214, %v2381
      %v2424 = vadd.f32 %v2215, %v2384
      %v2425 = vadd.f32 %v2216, %v2389
      %v2426 = vadd.f32 %v2217, %v2392
      %s2427 = smul.u32 %s13, 256
      %s2428 = scalar_lea.vmem [#allocation2], %s2427
      %vm2429 = vcmask 97280
      %2430 = vst.msk [vmem:[%s2428] sm:$0xff] %vm2429, %v2395
      %2431 = vst.msk [vmem:[%s2428 + $0x8] sm:$0xff] %vm2429, %v2396
      %2432 = vst.msk [vmem:[%s2428 + $0x10] sm:$0xff] %vm2429, %v2397
      %2433 = vst.msk [vmem:[%s2428 + $0x18] sm:$0xff] %vm2429, %v2398
      %2434 = vst.msk [vmem:[%s2428 + $0x20] sm:$0xff] %vm2429, %v2399
      %2435 = vst.msk [vmem:[%s2428 + $0x28] sm:$0xff] %vm2429, %v2400
      %2436 = vst.msk [vmem:[%s2428 + $0x30] sm:$0xff] %vm2429, %v2401
      %2437 = vst.msk [vmem:[%s2428 + $0x38] sm:$0xff] %vm2429, %v2402
      %2438 = vst.msk [vmem:[%s2428 + $0x40] sm:$0xff] %vm2429, %v2403
      %2439 = vst.msk [vmem:[%s2428 + $0x48] sm:$0xff] %vm2429, %v2404
      %2440 = vst.msk [vmem:[%s2428 + $0x50] sm:$0xff] %vm2429, %v2405
      %2441 = vst.msk [vmem:[%s2428 + $0x58] sm:$0xff] %vm2429, %v2406
      %2442 = vst.msk [vmem:[%s2428 + $0x60] sm:$0xff] %vm2429, %v2407
      %2443 = vst.msk [vmem:[%s2428 + $0x68] sm:$0xff] %vm2429, %v2408
      %2444 = vst.msk [vmem:[%s2428 + $0x70] sm:$0xff] %vm2429, %v2409
      %2445 = vst.msk [vmem:[%s2428 + $0x78] sm:$0xff] %vm2429, %v2410
      %2446 = vst.msk [vmem:[%s2428 + $0x80] sm:$0xff] %vm2429, %v2411
      %2447 = vst.msk [vmem:[%s2428 + $0x88] sm:$0xff] %vm2429, %v2412
      %2448 = vst.msk [vmem:[%s2428 + $0x90] sm:$0xff] %vm2429, %v2413
      %2449 = vst.msk [vmem:[%s2428 + $0x98] sm:$0xff] %vm2429, %v2414
      %2450 = vst.msk [vmem:[%s2428 + $0xa0] sm:$0xff] %vm2429, %v2415
      %2451 = vst.msk [vmem:[%s2428 + $0xa8] sm:$0xff] %vm2429, %v2416
      %2452 = vst.msk [vmem:[%s2428 + $0xb0] sm:$0xff] %vm2429, %v2417
      %2453 = vst.msk [vmem:[%s2428 + $0xb8] sm:$0xff] %vm2429, %v2418
      %2454 = vst.msk [vmem:[%s2428 + $0xc0] sm:$0xff] %vm2429, %v2419
      %2455 = vst.msk [vmem:[%s2428 + $0xc8] sm:$0xff] %vm2429, %v2420
      %2456 = vst.msk [vmem:[%s2428 + $0xd0] sm:$0xff] %vm2429, %v2421
      %2457 = vst.msk [vmem:[%s2428 + $0xd8] sm:$0xff] %vm2429, %v2422
      %2458 = vst.msk [vmem:[%s2428 + $0xe0] sm:$0xff] %vm2429, %v2423
      %2459 = vst.msk [vmem:[%s2428 + $0xe8] sm:$0xff] %vm2429, %v2424
      %2460 = vst.msk [vmem:[%s2428 + $0xf0] sm:$0xff] %vm2429, %v2425
      %2461 = vst.msk [vmem:[%s2428 + $0xf8] sm:$0xff] %vm2429, %v2426
      %p2462 = scmp.eq.s32.totalorder %s13, 1
      // Predicated region
      $region29: #{_lambda_.10} parent=27 // pred_check
        %p2463 = pneg %p2462
      $region30: #{_lambda_.10} parent=27 // pred_check_branch
        %2465 = sbr.rel (%p2463) target = $region32
      $region31: #{_lambda_.10} parent=27 // pred_region
        %v2466 = vld [vmem:[#allocation2] sm:$0xff]
        %v2467 = vld [vmem:[#allocation2 + $0x8] sm:$0xff]
        %v2468 = vld [vmem:[#allocation2 + $0x10] sm:$0xff]
        %v2469 = vld [vmem:[#allocation2 + $0x18] sm:$0xff]
        %v2470 = vld [vmem:[#allocation2 + $0x20] sm:$0xff]
        %v2471 = vld [vmem:[#allocation2 + $0x28] sm:$0xff]
        %v2472 = vld [vmem:[#allocation2 + $0x30] sm:$0xff]
        %v2473 = vld [vmem:[#allocation2 + $0x38] sm:$0xff]
        %v2474 = vld [vmem:[#allocation2 + $0x40] sm:$0xff]
        %v2475 = vld [vmem:[#allocation2 + $0x48] sm:$0xff]
        %v2476 = vld [vmem:[#allocation2 + $0x50] sm:$0xff]
        %v2477 = vld [vmem:[#allocation2 + $0x58] sm:$0xff]
        %v2478 = vld [vmem:[#allocation2 + $0x60] sm:$0xff]
        %v2479 = vld [vmem:[#allocation2 + $0x68] sm:$0xff]
        %v2480 = vld [vmem:[#allocation2 + $0x70] sm:$0xff]
        %v2481 = vld [vmem:[#allocation2 + $0x78] sm:$0xff]
        %v2482 = vld [vmem:[#allocation2 + $0x80] sm:$0xff]
        %v2483 = vld [vmem:[#allocation2 + $0x88] sm:$0xff]
        %v2484 = vld [vmem:[#allocation2 + $0x90] sm:$0xff]
        %v2485 = vld [vmem:[#allocation2 + $0x98] sm:$0xff]
        %v2486 = vld [vmem:[#allocation2 + $0xa0] sm:$0xff]
        %v2487 = vld [vmem:[#allocation2 + $0xa8] sm:$0xff]
        %v2488 = vld [vmem:[#allocation2 + $0xb0] sm:$0xff]
        %v2489 = vld [vmem:[#allocation2 + $0xb8] sm:$0xff]
        %v2490 = vld [vmem:[#allocation2 + $0xc0] sm:$0xff]
        %v2491 = vld [vmem:[#allocation2 + $0xc8] sm:$0xff]
        %v2492 = vld [vmem:[#allocation2 + $0xd0] sm:$0xff]
        %v2493 = vld [vmem:[#allocation2 + $0xd8] sm:$0xff]
        %v2494 = vld [vmem:[#allocation2 + $0xe0] sm:$0xff]
        %v2495 = vld [vmem:[#allocation2 + $0xe8] sm:$0xff]
        %v2496 = vld [vmem:[#allocation2 + $0xf0] sm:$0xff]
        %v2497 = vld [vmem:[#allocation2 + $0xf8] sm:$0xff]
        %v2498 = vld [vmem:[#allocation2 + $0x100] sm:$0xff]
        %v2499 = vld [vmem:[#allocation2 + $0x108] sm:$0xff]
        %v2500 = vld [vmem:[#allocation2 + $0x110] sm:$0xff]
        %v2501 = vld [vmem:[#allocation2 + $0x118] sm:$0xff]
        %v2502 = vld [vmem:[#allocation2 + $0x120] sm:$0xff]
        %v2503 = vld [vmem:[#allocation2 + $0x128] sm:$0xff]
        %v2504 = vld [vmem:[#allocation2 + $0x130] sm:$0xff]
        %v2505 = vld [vmem:[#allocation2 + $0x138] sm:$0xff]
        %v2506 = vld [vmem:[#allocation2 + $0x140] sm:$0xff]
        %v2507 = vld [vmem:[#allocation2 + $0x148] sm:$0xff]
        %v2508 = vld [vmem:[#allocation2 + $0x150] sm:$0xff]
        %v2509 = vld [vmem:[#allocation2 + $0x158] sm:$0xff]
        %v2510 = vld [vmem:[#allocation2 + $0x160] sm:$0xff]
        %v2511 = vld [vmem:[#allocation2 + $0x168] sm:$0xff]
        %v2512 = vld [vmem:[#allocation2 + $0x170] sm:$0xff]
        %v2513 = vld [vmem:[#allocation2 + $0x178] sm:$0xff]
        %v2514 = vld [vmem:[#allocation2 + $0x180] sm:$0xff]
        %v2515 = vld [vmem:[#allocation2 + $0x188] sm:$0xff]
        %v2516 = vld [vmem:[#allocation2 + $0x190] sm:$0xff]
        %v2517 = vld [vmem:[#allocation2 + $0x198] sm:$0xff]
        %v2518 = vld [vmem:[#allocation2 + $0x1a0] sm:$0xff]
        %v2519 = vld [vmem:[#allocation2 + $0x1a8] sm:$0xff]
        %v2520 = vld [vmem:[#allocation2 + $0x1b0] sm:$0xff]
        %v2521 = vld [vmem:[#allocation2 + $0x1b8] sm:$0xff]
        %v2522 = vld [vmem:[#allocation2 + $0x1c0] sm:$0xff]
        %v2523 = vld [vmem:[#allocation2 + $0x1c8] sm:$0xff]
        %v2524 = vld [vmem:[#allocation2 + $0x1d0] sm:$0xff]
        %v2525 = vld [vmem:[#allocation2 + $0x1d8] sm:$0xff]
        %v2526 = vld [vmem:[#allocation2 + $0x1e0] sm:$0xff]
        %v2527 = vld [vmem:[#allocation2 + $0x1e8] sm:$0xff]
        %v2528 = vld [vmem:[#allocation2 + $0x1f0] sm:$0xff]
        %v2529 = vld [vmem:[#allocation2 + $0x1f8] sm:$0xff]
        %v2530 = vsel %vm2429, %v2466, 0.0
        %v2531 = vsel %vm2429, %v2467, 0.0
        %v2532 = vadd.f32 %v2530, %v2531
        %v2533 = vsel %vm2429, %v2468, 0.0
        %v2534 = vadd.f32 %v2532, %v2533
        %v2535 = vsel %vm2429, %v2469, 0.0
        %v2536 = vadd.f32 %v2534, %v2535
        %v2537 = vsel %vm2429, %v2470, 0.0
        %v2538 = vadd.f32 %v2536, %v2537
        %v2539 = vsel %vm2429, %v2471, 0.0
        %v2540 = vadd.f32 %v2538, %v2539
        %v2541 = vsel %vm2429, %v2472, 0.0
        %v2542 = vadd.f32 %v2540, %v2541
        %v2543 = vsel %vm2429, %v2473, 0.0
        %v2544 = vadd.f32 %v2542, %v2543
        %v2545 = vsel %vm2429, %v2474, 0.0
        %v2546 = vadd.f32 %v2544, %v2545
        %v2547 = vsel %vm2429, %v2475, 0.0
        %v2548 = vadd.f32 %v2546, %v2547
        %v2549 = vsel %vm2429, %v2476, 0.0
        %v2550 = vadd.f32 %v2548, %v2549
        %v2551 = vsel %vm2429, %v2477, 0.0
        %v2552 = vadd.f32 %v2550, %v2551
        %v2553 = vsel %vm2429, %v2478, 0.0
        %v2554 = vadd.f32 %v2552, %v2553
        %v2555 = vsel %vm2429, %v2479, 0.0
        %v2556 = vadd.f32 %v2554, %v2555
        %v2557 = vsel %vm2429, %v2480, 0.0
        %v2558 = vadd.f32 %v2556, %v2557
        %v2559 = vsel %vm2429, %v2481, 0.0
        %v2560 = vadd.f32 %v2558, %v2559
        %v2561 = vsel %vm2429, %v2482, 0.0
        %v2562 = vadd.f32 %v2560, %v2561
        %v2563 = vsel %vm2429, %v2483, 0.0
        %v2564 = vadd.f32 %v2562, %v2563
        %v2565 = vsel %vm2429, %v2484, 0.0
        %v2566 = vadd.f32 %v2564, %v2565
        %v2567 = vsel %vm2429, %v2485, 0.0
        %v2568 = vadd.f32 %v2566, %v2567
        %v2569 = vsel %vm2429, %v2486, 0.0
        %v2570 = vadd.f32 %v2568, %v2569
        %v2571 = vsel %vm2429, %v2487, 0.0
        %v2572 = vadd.f32 %v2570, %v2571
        %v2573 = vsel %vm2429, %v2488, 0.0
        %v2574 = vadd.f32 %v2572, %v2573
        %v2575 = vsel %vm2429, %v2489, 0.0
        %v2576 = vadd.f32 %v2574, %v2575
        %v2577 = vsel %vm2429, %v2490, 0.0
        %v2578 = vadd.f32 %v2576, %v2577
        %v2579 = vsel %vm2429, %v2491, 0.0
        %v2580 = vadd.f32 %v2578, %v2579
        %v2581 = vsel %vm2429, %v2492, 0.0
        %v2582 = vadd.f32 %v2580, %v2581
        %v2583 = vsel %vm2429, %v2493, 0.0
        %v2584 = vadd.f32 %v2582, %v2583
        %v2585 = vsel %vm2429, %v2494, 0.0
        %v2586 = vadd.f32 %v2584, %v2585
        %v2587 = vsel %vm2429, %v2495, 0.0
        %v2588 = vadd.f32 %v2586, %v2587
        %v2589 = vsel %vm2429, %v2496, 0.0
        %v2590 = vadd.f32 %v2588, %v2589
        %v2591 = vsel %vm2429, %v2497, 0.0
        %v2592 = vadd.f32 %v2590, %v2591
        %v2593 = vsel %vm2429, %v2498, 0.0
        %v2594 = vadd.f32 %v2592, %v2593
        %v2595 = vsel %vm2429, %v2499, 0.0
        %v2596 = vadd.f32 %v2594, %v2595
        %v2597 = vsel %vm2429, %v2500, 0.0
        %v2598 = vadd.f32 %v2596, %v2597
        %v2599 = vsel %vm2429, %v2501, 0.0
        %v2600 = vadd.f32 %v2598, %v2599
        %v2601 = vsel %vm2429, %v2502, 0.0
        %v2602 = vadd.f32 %v2600, %v2601
        %v2603 = vsel %vm2429, %v2503, 0.0
        %v2604 = vadd.f32 %v2602, %v2603
        %v2605 = vsel %vm2429, %v2504, 0.0
        %v2606 = vadd.f32 %v2604, %v2605
        %v2607 = vsel %vm2429, %v2505, 0.0
        %v2608 = vadd.f32 %v2606, %v2607
        %v2609 = vsel %vm2429, %v2506, 0.0
        %v2610 = vadd.f32 %v2608, %v2609
        %v2611 = vsel %vm2429, %v2507, 0.0
        %v2612 = vadd.f32 %v2610, %v2611
        %v2613 = vsel %vm2429, %v2508, 0.0
        %v2614 = vadd.f32 %v2612, %v2613
        %v2615 = vsel %vm2429, %v2509, 0.0
        %v2616 = vadd.f32 %v2614, %v2615
        %v2617 = vsel %vm2429, %v2510, 0.0
        %v2618 = vadd.f32 %v2616, %v2617
        %v2619 = vsel %vm2429, %v2511, 0.0
        %v2620 = vadd.f32 %v2618, %v2619
        %v2621 = vsel %vm2429, %v2512, 0.0
        %v2622 = vadd.f32 %v2620, %v2621
        %v2623 = vsel %vm2429, %v2513, 0.0
        %v2624 = vadd.f32 %v2622, %v2623
        %v2625 = vsel %vm2429, %v2514, 0.0
        %v2626 = vadd.f32 %v2624, %v2625
        %v2627 = vsel %vm2429, %v2515, 0.0
        %v2628 = vadd.f32 %v2626, %v2627
        %v2629 = vsel %vm2429, %v2516, 0.0
        %v2630 = vadd.f32 %v2628, %v2629
        %v2631 = vsel %vm2429, %v2517, 0.0
        %v2632 = vadd.f32 %v2630, %v2631
        %v2633 = vsel %vm2429, %v2518, 0.0
        %v2634 = vadd.f32 %v2632, %v2633
        %v2635 = vsel %vm2429, %v2519, 0.0
        %v2636 = vadd.f32 %v2634, %v2635
        %v2637 = vsel %vm2429, %v2520, 0.0
        %v2638 = vadd.f32 %v2636, %v2637
        %v2639 = vsel %vm2429, %v2521, 0.0
        %v2640 = vadd.f32 %v2638, %v2639
        %v2641 = vsel %vm2429, %v2522, 0.0
        %v2642 = vadd.f32 %v2640, %v2641
        %v2643 = vsel %vm2429, %v2523, 0.0
        %v2644 = vadd.f32 %v2642, %v2643
        %v2645 = vsel %vm2429, %v2524, 0.0
        %v2646 = vadd.f32 %v2644, %v2645
        %v2647 = vsel %vm2429, %v2525, 0.0
        %v2648 = vadd.f32 %v2646, %v2647
        %v2649 = vsel %vm2429, %v2526, 0.0
        %v2650 = vadd.f32 %v2648, %v2649
        %v2651 = vsel %vm2429, %v2527, 0.0
        %v2652 = vadd.f32 %v2650, %v2651
        %v2653 = vsel %vm2429, %v2528, 0.0
        %v2654 = vadd.f32 %v2652, %v2653
        %v2655 = vsel %vm2429, %v2529, 0.0
        %v2656 = vadd.f32 %v2654, %v2655
        %v2657 = vrot.slane %v2656, 4
        %v2658 = vadd.f32 %v2656, %v2657
        %v2659 = vrot.slane %v2658, 2
        %v2660 = vadd.f32 %v2658, %v2659
        %v2661 = vrot.slane %v2660, 1
        %v2662 = vadd.f32 %v2660, %v2661
        %v2663 = vrcp.pop 512.0
        %v2664 = vmul.f32 %v2662, %v2663
        %v2665 = vsub.f32 %v2466, %v2664
        %v2666 = vsub.f32 %v2467, %v2664
        %v2667 = vsub.f32 %v2468, %v2664
        %v2668 = vsub.f32 %v2469, %v2664
        %v2669 = vsub.f32 %v2470, %v2664
        %v2670 = vsub.f32 %v2471, %v2664
        %v2671 = vsub.f32 %v2472, %v2664
        %v2672 = vsub.f32 %v2473, %v2664
        %v2673 = vsub.f32 %v2474, %v2664
        %v2674 = vsub.f32 %v2475, %v2664
        %v2675 = vsub.f32 %v2476, %v2664
        %v2676 = vsub.f32 %v2477, %v2664
        %v2677 = vsub.f32 %v2478, %v2664
        %v2678 = vsub.f32 %v2479, %v2664
        %v2679 = vsub.f32 %v2480, %v2664
        %v2680 = vsub.f32 %v2481, %v2664
        %v2681 = vsub.f32 %v2482, %v2664
        %v2682 = vsub.f32 %v2483, %v2664
        %v2683 = vsub.f32 %v2484, %v2664
        %v2684 = vsub.f32 %v2485, %v2664
        %v2685 = vsub.f32 %v2486, %v2664
        %v2686 = vsub.f32 %v2487, %v2664
        %v2687 = vsub.f32 %v2488, %v2664
        %v2688 = vsub.f32 %v2489, %v2664
        %v2689 = vsub.f32 %v2490, %v2664
        %v2690 = vsub.f32 %v2491, %v2664
        %v2691 = vsub.f32 %v2492, %v2664
        %v2692 = vsub.f32 %v2493, %v2664
        %v2693 = vsub.f32 %v2494, %v2664
        %v2694 = vsub.f32 %v2495, %v2664
        %v2695 = vsub.f32 %v2496, %v2664
        %v2696 = vsub.f32 %v2497, %v2664
        %v2697 = vsub.f32 %v2498, %v2664
        %v2698 = vsub.f32 %v2499, %v2664
        %v2699 = vsub.f32 %v2500, %v2664
        %v2700 = vsub.f32 %v2501, %v2664
        %v2701 = vsub.f32 %v2502, %v2664
        %v2702 = vsub.f32 %v2503, %v2664
        %v2703 = vsub.f32 %v2504, %v2664
        %v2704 = vsub.f32 %v2505, %v2664
        %v2705 = vsub.f32 %v2506, %v2664
        %v2706 = vsub.f32 %v2507, %v2664
        %v2707 = vsub.f32 %v2508, %v2664
        %v2708 = vsub.f32 %v2509, %v2664
        %v2709 = vsub.f32 %v2510, %v2664
        %v2710 = vsub.f32 %v2511, %v2664
        %v2711 = vsub.f32 %v2512, %v2664
        %v2712 = vsub.f32 %v2513, %v2664
        %v2713 = vsub.f32 %v2514, %v2664
        %v2714 = vsub.f32 %v2515, %v2664
        %v2715 = vsub.f32 %v2516, %v2664
        %v2716 = vsub.f32 %v2517, %v2664
        %v2717 = vsub.f32 %v2518, %v2664
        %v2718 = vsub.f32 %v2519, %v2664
        %v2719 = vsub.f32 %v2520, %v2664
        %v2720 = vsub.f32 %v2521, %v2664
        %v2721 = vsub.f32 %v2522, %v2664
        %v2722 = vsub.f32 %v2523, %v2664
        %v2723 = vsub.f32 %v2524, %v2664
        %v2724 = vsub.f32 %v2525, %v2664
        %v2725 = vsub.f32 %v2526, %v2664
        %v2726 = vsub.f32 %v2527, %v2664
        %v2727 = vsub.f32 %v2528, %v2664
        %v2728 = vsub.f32 %v2529, %v2664
        %v2729 = vmul.f32 %v2665, %v2665
        %v2730 = vmul.f32 %v2666, %v2666
        %v2731 = vmul.f32 %v2667, %v2667
        %v2732 = vmul.f32 %v2668, %v2668
        %v2733 = vmul.f32 %v2669, %v2669
        %v2734 = vmul.f32 %v2670, %v2670
        %v2735 = vmul.f32 %v2671, %v2671
        %v2736 = vmul.f32 %v2672, %v2672
        %v2737 = vmul.f32 %v2673, %v2673
        %v2738 = vmul.f32 %v2674, %v2674
        %v2739 = vmul.f32 %v2675, %v2675
        %v2740 = vmul.f32 %v2676, %v2676
        %v2741 = vmul.f32 %v2677, %v2677
        %v2742 = vmul.f32 %v2678, %v2678
        %v2743 = vmul.f32 %v2679, %v2679
        %v2744 = vmul.f32 %v2680, %v2680
        %v2745 = vmul.f32 %v2681, %v2681
        %v2746 = vmul.f32 %v2682, %v2682
        %v2747 = vmul.f32 %v2683, %v2683
        %v2748 = vmul.f32 %v2684, %v2684
        %v2749 = vmul.f32 %v2685, %v2685
        %v2750 = vmul.f32 %v2686, %v2686
        %v2751 = vmul.f32 %v2687, %v2687
        %v2752 = vmul.f32 %v2688, %v2688
        %v2753 = vmul.f32 %v2689, %v2689
        %v2754 = vmul.f32 %v2690, %v2690
        %v2755 = vmul.f32 %v2691, %v2691
        %v2756 = vmul.f32 %v2692, %v2692
        %v2757 = vmul.f32 %v2693, %v2693
        %v2758 = vmul.f32 %v2694, %v2694
        %v2759 = vmul.f32 %v2695, %v2695
        %v2760 = vmul.f32 %v2696, %v2696
        %v2761 = vmul.f32 %v2697, %v2697
        %v2762 = vmul.f32 %v2698, %v2698
        %v2763 = vmul.f32 %v2699, %v2699
        %v2764 = vmul.f32 %v2700, %v2700
        %v2765 = vmul.f32 %v2701, %v2701
        %v2766 = vmul.f32 %v2702, %v2702
        %v2767 = vmul.f32 %v2703, %v2703
        %v2768 = vmul.f32 %v2704, %v2704
        %v2769 = vmul.f32 %v2705, %v2705
        %v2770 = vmul.f32 %v2706, %v2706
        %v2771 = vmul.f32 %v2707, %v2707
        %v2772 = vmul.f32 %v2708, %v2708
        %v2773 = vmul.f32 %v2709, %v2709
        %v2774 = vmul.f32 %v2710, %v2710
        %v2775 = vmul.f32 %v2711, %v2711
        %v2776 = vmul.f32 %v2712, %v2712
        %v2777 = vmul.f32 %v2713, %v2713
        %v2778 = vmul.f32 %v2714, %v2714
        %v2779 = vmul.f32 %v2715, %v2715
        %v2780 = vmul.f32 %v2716, %v2716
        %v2781 = vmul.f32 %v2717, %v2717
        %v2782 = vmul.f32 %v2718, %v2718
        %v2783 = vmul.f32 %v2719, %v2719
        %v2784 = vmul.f32 %v2720, %v2720
        %v2785 = vmul.f32 %v2721, %v2721
        %v2786 = vmul.f32 %v2722, %v2722
        %v2787 = vmul.f32 %v2723, %v2723
        %v2788 = vmul.f32 %v2724, %v2724
        %v2789 = vmul.f32 %v2725, %v2725
        %v2790 = vmul.f32 %v2726, %v2726
        %v2791 = vmul.f32 %v2727, %v2727
        %v2792 = vmul.f32 %v2728, %v2728
        %v2793 = vsel %vm2429, %v2729, 0.0
        %v2794 = vsel %vm2429, %v2730, 0.0
        %v2795 = vadd.f32 %v2793, %v2794
        %v2796 = vsel %vm2429, %v2731, 0.0
        %v2797 = vadd.f32 %v2795, %v2796
        %v2798 = vsel %vm2429, %v2732, 0.0
        %v2799 = vadd.f32 %v2797, %v2798
        %v2800 = vsel %vm2429, %v2733, 0.0
        %v2801 = vadd.f32 %v2799, %v2800
        %v2802 = vsel %vm2429, %v2734, 0.0
        %v2803 = vadd.f32 %v2801, %v2802
        %v2804 = vsel %vm2429, %v2735, 0.0
        %v2805 = vadd.f32 %v2803, %v2804
        %v2806 = vsel %vm2429, %v2736, 0.0
        %v2807 = vadd.f32 %v2805, %v2806
        %v2808 = vsel %vm2429, %v2737, 0.0
        %v2809 = vadd.f32 %v2807, %v2808
        %v2810 = vsel %vm2429, %v2738, 0.0
        %v2811 = vadd.f32 %v2809, %v2810
        %v2812 = vsel %vm2429, %v2739, 0.0
        %v2813 = vadd.f32 %v2811, %v2812
        %v2814 = vsel %vm2429, %v2740, 0.0
        %v2815 = vadd.f32 %v2813, %v2814
        %v2816 = vsel %vm2429, %v2741, 0.0
        %v2817 = vadd.f32 %v2815, %v2816
        %v2818 = vsel %vm2429, %v2742, 0.0
        %v2819 = vadd.f32 %v2817, %v2818
        %v2820 = vsel %vm2429, %v2743, 0.0
        %v2821 = vadd.f32 %v2819, %v2820
        %v2822 = vsel %vm2429, %v2744, 0.0
        %v2823 = vadd.f32 %v2821, %v2822
        %v2824 = vsel %vm2429, %v2745, 0.0
        %v2825 = vadd.f32 %v2823, %v2824
        %v2826 = vsel %vm2429, %v2746, 0.0
        %v2827 = vadd.f32 %v2825, %v2826
        %v2828 = vsel %vm2429, %v2747, 0.0
        %v2829 = vadd.f32 %v2827, %v2828
        %v2830 = vsel %vm2429, %v2748, 0.0
        %v2831 = vadd.f32 %v2829, %v2830
        %v2832 = vsel %vm2429, %v2749, 0.0
        %v2833 = vadd.f32 %v2831, %v2832
        %v2834 = vsel %vm2429, %v2750, 0.0
        %v2835 = vadd.f32 %v2833, %v2834
        %v2836 = vsel %vm2429, %v2751, 0.0
        %v2837 = vadd.f32 %v2835, %v2836
        %v2838 = vsel %vm2429, %v2752, 0.0
        %v2839 = vadd.f32 %v2837, %v2838
        %v2840 = vsel %vm2429, %v2753, 0.0
        %v2841 = vadd.f32 %v2839, %v2840
        %v2842 = vsel %vm2429, %v2754, 0.0
        %v2843 = vadd.f32 %v2841, %v2842
        %v2844 = vsel %vm2429, %v2755, 0.0
        %v2845 = vadd.f32 %v2843, %v2844
        %v2846 = vsel %vm2429, %v2756, 0.0
        %v2847 = vadd.f32 %v2845, %v2846
        %v2848 = vsel %vm2429, %v2757, 0.0
        %v2849 = vadd.f32 %v2847, %v2848
        %v2850 = vsel %vm2429, %v2758, 0.0
        %v2851 = vadd.f32 %v2849, %v2850
        %v2852 = vsel %vm2429, %v2759, 0.0
        %v2853 = vadd.f32 %v2851, %v2852
        %v2854 = vsel %vm2429, %v2760, 0.0
        %v2855 = vadd.f32 %v2853, %v2854
        %v2856 = vsel %vm2429, %v2761, 0.0
        %v2857 = vadd.f32 %v2855, %v2856
        %v2858 = vsel %vm2429, %v2762, 0.0
        %v2859 = vadd.f32 %v2857, %v2858
        %v2860 = vsel %vm2429, %v2763, 0.0
        %v2861 = vadd.f32 %v2859, %v2860
        %v2862 = vsel %vm2429, %v2764, 0.0
        %v2863 = vadd.f32 %v2861, %v2862
        %v2864 = vsel %vm2429, %v2765, 0.0
        %v2865 = vadd.f32 %v2863, %v2864
        %v2866 = vsel %vm2429, %v2766, 0.0
        %v2867 = vadd.f32 %v2865, %v2866
        %v2868 = vsel %vm2429, %v2767, 0.0
        %v2869 = vadd.f32 %v2867, %v2868
        %v2870 = vsel %vm2429, %v2768, 0.0
        %v2871 = vadd.f32 %v2869, %v2870
        %v2872 = vsel %vm2429, %v2769, 0.0
        %v2873 = vadd.f32 %v2871, %v2872
        %v2874 = vsel %vm2429, %v2770, 0.0
        %v2875 = vadd.f32 %v2873, %v2874
        %v2876 = vsel %vm2429, %v2771, 0.0
        %v2877 = vadd.f32 %v2875, %v2876
        %v2878 = vsel %vm2429, %v2772, 0.0
        %v2879 = vadd.f32 %v2877, %v2878
        %v2880 = vsel %vm2429, %v2773, 0.0
        %v2881 = vadd.f32 %v2879, %v2880
        %v2882 = vsel %vm2429, %v2774, 0.0
        %v2883 = vadd.f32 %v2881, %v2882
        %v2884 = vsel %vm2429, %v2775, 0.0
        %v2885 = vadd.f32 %v2883, %v2884
        %v2886 = vsel %vm2429, %v2776, 0.0
        %v2887 = vadd.f32 %v2885, %v2886
        %v2888 = vsel %vm2429, %v2777, 0.0
        %v2889 = vadd.f32 %v2887, %v2888
        %v2890 = vsel %vm2429, %v2778, 0.0
        %v2891 = vadd.f32 %v2889, %v2890
        %v2892 = vsel %vm2429, %v2779, 0.0
        %v2893 = vadd.f32 %v2891, %v2892
        %v2894 = vsel %vm2429, %v2780, 0.0
        %v2895 = vadd.f32 %v2893, %v2894
        %v2896 = vsel %vm2429, %v2781, 0.0
        %v2897 = vadd.f32 %v2895, %v2896
        %v2898 = vsel %vm2429, %v2782, 0.0
        %v2899 = vadd.f32 %v2897, %v2898
        %v2900 = vsel %vm2429, %v2783, 0.0
        %v2901 = vadd.f32 %v2899, %v2900
        %v2902 = vsel %vm2429, %v2784, 0.0
        %v2903 = vadd.f32 %v2901, %v2902
        %v2904 = vsel %vm2429, %v2785, 0.0
        %v2905 = vadd.f32 %v2903, %v2904
        %v2906 = vsel %vm2429, %v2786, 0.0
        %v2907 = vadd.f32 %v2905, %v2906
        %v2908 = vsel %vm2429, %v2787, 0.0
        %v2909 = vadd.f32 %v2907, %v2908
        %v2910 = vsel %vm2429, %v2788, 0.0
        %v2911 = vadd.f32 %v2909, %v2910
        %v2912 = vsel %vm2429, %v2789, 0.0
        %v2913 = vadd.f32 %v2911, %v2912
        %v2914 = vsel %vm2429, %v2790, 0.0
        %v2915 = vadd.f32 %v2913, %v2914
        %v2916 = vsel %vm2429, %v2791, 0.0
        %v2917 = vadd.f32 %v2915, %v2916
        %v2918 = vsel %vm2429, %v2792, 0.0
        %v2919 = vadd.f32 %v2917, %v2918
        %v2920 = vrot.slane %v2919, 4
        %v2921 = vadd.f32 %v2919, %v2920
        %v2922 = vrot.slane %v2921, 2
        %v2923 = vadd.f32 %v2921, %v2922
        %v2924 = vrot.slane %v2923, 1
        %v2925 = vadd.f32 %v2923, %v2924
        %v2926 = vmul.f32 %v2925, %v2663
        %v2927 = vadd.f32 %v2926, 1e-05
        %v2928 = vrsqrt.pop %v2927
        %v2929 = vmul.f32 %v2665, %v2928
        %v2930 = vmul.f32 %v2666, %v2928
        %v2931 = vmul.f32 %v2667, %v2928
        %v2932 = vmul.f32 %v2668, %v2928
        %v2933 = vmul.f32 %v2669, %v2928
        %v2934 = vmul.f32 %v2670, %v2928
        %v2935 = vmul.f32 %v2671, %v2928
        %v2936 = vmul.f32 %v2672, %v2928
        %v2937 = vmul.f32 %v2673, %v2928
        %v2938 = vmul.f32 %v2674, %v2928
        %v2939 = vmul.f32 %v2675, %v2928
        %v2940 = vmul.f32 %v2676, %v2928
        %v2941 = vmul.f32 %v2677, %v2928
        %v2942 = vmul.f32 %v2678, %v2928
        %v2943 = vmul.f32 %v2679, %v2928
        %v2944 = vmul.f32 %v2680, %v2928
        %v2945 = vmul.f32 %v2681, %v2928
        %v2946 = vmul.f32 %v2682, %v2928
        %v2947 = vmul.f32 %v2683, %v2928
        %v2948 = vmul.f32 %v2684, %v2928
        %v2949 = vmul.f32 %v2685, %v2928
        %v2950 = vmul.f32 %v2686, %v2928
        %v2951 = vmul.f32 %v2687, %v2928
        %v2952 = vmul.f32 %v2688, %v2928
        %v2953 = vmul.f32 %v2689, %v2928
        %v2954 = vmul.f32 %v2690, %v2928
        %v2955 = vmul.f32 %v2691, %v2928
        %v2956 = vmul.f32 %v2692, %v2928
        %v2957 = vmul.f32 %v2693, %v2928
        %v2958 = vmul.f32 %v2694, %v2928
        %v2959 = vmul.f32 %v2695, %v2928
        %v2960 = vmul.f32 %v2696, %v2928
        %v2961 = vmul.f32 %v2697, %v2928
        %v2962 = vmul.f32 %v2698, %v2928
        %v2963 = vmul.f32 %v2699, %v2928
        %v2964 = vmul.f32 %v2700, %v2928
        %v2965 = vmul.f32 %v2701, %v2928
        %v2966 = vmul.f32 %v2702, %v2928
        %v2967 = vmul.f32 %v2703, %v2928
        %v2968 = vmul.f32 %v2704, %v2928
        %v2969 = vmul.f32 %v2705, %v2928
        %v2970 = vmul.f32 %v2706, %v2928
        %v2971 = vmul.f32 %v2707, %v2928
        %v2972 = vmul.f32 %v2708, %v2928
        %v2973 = vmul.f32 %v2709, %v2928
        %v2974 = vmul.f32 %v2710, %v2928
        %v2975 = vmul.f32 %v2711, %v2928
        %v2976 = vmul.f32 %v2712, %v2928
        %v2977 = vmul.f32 %v2713, %v2928
        %v2978 = vmul.f32 %v2714, %v2928
        %v2979 = vmul.f32 %v2715, %v2928
        %v2980 = vmul.f32 %v2716, %v2928
        %v2981 = vmul.f32 %v2717, %v2928
        %v2982 = vmul.f32 %v2718, %v2928
        %v2983 = vmul.f32 %v2719, %v2928
        %v2984 = vmul.f32 %v2720, %v2928
        %v2985 = vmul.f32 %v2721, %v2928
        %v2986 = vmul.f32 %v2722, %v2928
        %v2987 = vmul.f32 %v2723, %v2928
        %v2988 = vmul.f32 %v2724, %v2928
        %v2989 = vmul.f32 %v2725, %v2928
        %v2990 = vmul.f32 %v2726, %v2928
        %v2991 = vmul.f32 %v2727, %v2928
        %v2992 = vmul.f32 %v2728, %v2928
        %v2993 = vpack.c.bf16 %v2930, %v2929
        %v2994 = vpack.c.bf16 %v2932, %v2931
        %v2995 = vpack.c.bf16 %v2934, %v2933
        %v2996 = vpack.c.bf16 %v2936, %v2935
        %v2997 = vpack.c.bf16 %v2938, %v2937
        %v2998 = vpack.c.bf16 %v2940, %v2939
        %v2999 = vpack.c.bf16 %v2942, %v2941
        %v3000 = vpack.c.bf16 %v2944, %v2943
        %v3001 = vpack.c.bf16 %v2946, %v2945
        %v3002 = vpack.c.bf16 %v2948, %v2947
        %v3003 = vpack.c.bf16 %v2950, %v2949
        %v3004 = vpack.c.bf16 %v2952, %v2951
        %v3005 = vpack.c.bf16 %v2954, %v2953
        %v3006 = vpack.c.bf16 %v2956, %v2955
        %v3007 = vpack.c.bf16 %v2958, %v2957
        %v3008 = vpack.c.bf16 %v2960, %v2959
        %v3009 = vpack.c.bf16 %v2962, %v2961
        %v3010 = vpack.c.bf16 %v2964, %v2963
        %v3011 = vpack.c.bf16 %v2966, %v2965
        %v3012 = vpack.c.bf16 %v2968, %v2967
        %v3013 = vpack.c.bf16 %v2970, %v2969
        %v3014 = vpack.c.bf16 %v2972, %v2971
        %v3015 = vpack.c.bf16 %v2974, %v2973
        %v3016 = vpack.c.bf16 %v2976, %v2975
        %v3017 = vpack.c.bf16 %v2978, %v2977
        %v3018 = vpack.c.bf16 %v2980, %v2979
        %v3019 = vpack.c.bf16 %v2982, %v2981
        %v3020 = vpack.c.bf16 %v2984, %v2983
        %v3021 = vpack.c.bf16 %v2986, %v2985
        %v3022 = vpack.c.bf16 %v2988, %v2987
        %v3023 = vpack.c.bf16 %v2990, %v2989
        %v3024 = vpack.c.bf16 %v2992, %v2991
        %v3057 = vunpack.c.l.b16 %v2993
        %v3058 = vunpack.c.h.b16 %v2993
        %v3059 = vunpack.c.l.b16 %v2994
        %v3060 = vunpack.c.h.b16 %v2994
        %v3061 = vunpack.c.l.b16 %v2995
        %v3062 = vunpack.c.h.b16 %v2995
        %v3063 = vunpack.c.l.b16 %v2996
        %v3064 = vunpack.c.h.b16 %v2996
        %v3065 = vunpack.c.l.b16 %v2997
        %v3066 = vunpack.c.h.b16 %v2997
        %v3067 = vunpack.c.l.b16 %v2998
        %v3068 = vunpack.c.h.b16 %v2998
        %v3069 = vunpack.c.l.b16 %v2999
        %v3070 = vunpack.c.h.b16 %v2999
        %v3071 = vunpack.c.l.b16 %v3000
        %v3072 = vunpack.c.h.b16 %v3000
        %v3073 = vunpack.c.l.b16 %v3001
        %v3074 = vunpack.c.h.b16 %v3001
        %v3075 = vunpack.c.l.b16 %v3002
        %v3076 = vunpack.c.h.b16 %v3002
        %v3077 = vunpack.c.l.b16 %v3003
        %v3078 = vunpack.c.h.b16 %v3003
        %v3079 = vunpack.c.l.b16 %v3004
        %v3080 = vunpack.c.h.b16 %v3004
        %v3081 = vunpack.c.l.b16 %v3005
        %v3082 = vunpack.c.h.b16 %v3005
        %v3083 = vunpack.c.l.b16 %v3006
        %v3084 = vunpack.c.h.b16 %v3006
        %v3085 = vunpack.c.l.b16 %v3007
        %v3086 = vunpack.c.h.b16 %v3007
        %v3087 = vunpack.c.l.b16 %v3008
        %v3088 = vunpack.c.h.b16 %v3008
        %v3089 = vunpack.c.l.b16 %v3009
        %v3090 = vunpack.c.h.b16 %v3009
        %v3091 = vunpack.c.l.b16 %v3010
        %v3092 = vunpack.c.h.b16 %v3010
        %v3093 = vunpack.c.l.b16 %v3011
        %v3094 = vunpack.c.h.b16 %v3011
        %v3095 = vunpack.c.l.b16 %v3012
        %v3096 = vunpack.c.h.b16 %v3012
        %v3097 = vunpack.c.l.b16 %v3013
        %v3098 = vunpack.c.h.b16 %v3013
        %v3099 = vunpack.c.l.b16 %v3014
        %v3100 = vunpack.c.h.b16 %v3014
        %v3101 = vunpack.c.l.b16 %v3015
        %v3102 = vunpack.c.h.b16 %v3015
        %v3103 = vunpack.c.l.b16 %v3016
        %v3104 = vunpack.c.h.b16 %v3016
        %v3105 = vunpack.c.l.b16 %v3017
        %v3106 = vunpack.c.h.b16 %v3017
        %v3107 = vunpack.c.l.b16 %v3018
        %v3108 = vunpack.c.h.b16 %v3018
        %v3109 = vunpack.c.l.b16 %v3019
        %v3110 = vunpack.c.h.b16 %v3019
        %v3111 = vunpack.c.l.b16 %v3020
        %v3112 = vunpack.c.h.b16 %v3020
        %v3113 = vunpack.c.l.b16 %v3021
        %v3114 = vunpack.c.h.b16 %v3021
        %v3115 = vunpack.c.l.b16 %v3022
        %v3116 = vunpack.c.h.b16 %v3022
        %v3117 = vunpack.c.l.b16 %v3023
        %v3118 = vunpack.c.h.b16 %v3023
        %v3119 = vunpack.c.l.b16 %v3024
        %v3120 = vunpack.c.h.b16 %v3024
        %v3121 = vpack.c.b16 %v3057, %v3057
        %v3122 = vpack.c.b16 %v3058, %v3058
        %v3123 = vpack.c.b16 %v3059, %v3059
        %v3124 = vpack.c.b16 %v3060, %v3060
        %v3125 = vpack.c.b16 %v3061, %v3061
        %v3126 = vpack.c.b16 %v3062, %v3062
        %v3127 = vpack.c.b16 %v3063, %v3063
        %v3128 = vpack.c.b16 %v3064, %v3064
        %v3129 = vpack.c.b16 %v3065, %v3065
        %v3130 = vpack.c.b16 %v3066, %v3066
        %v3131 = vpack.c.b16 %v3067, %v3067
        %v3132 = vpack.c.b16 %v3068, %v3068
        %v3133 = vpack.c.b16 %v3069, %v3069
        %v3134 = vpack.c.b16 %v3070, %v3070
        %v3135 = vpack.c.b16 %v3071, %v3071
        %v3136 = vpack.c.b16 %v3072, %v3072
        %v3137 = vpack.c.b16 %v3073, %v3073
        %v3138 = vpack.c.b16 %v3074, %v3074
        %v3139 = vpack.c.b16 %v3075, %v3075
        %v3140 = vpack.c.b16 %v3076, %v3076
        %v3141 = vpack.c.b16 %v3077, %v3077
        %v3142 = vpack.c.b16 %v3078, %v3078
        %v3143 = vpack.c.b16 %v3079, %v3079
        %v3144 = vpack.c.b16 %v3080, %v3080
        %v3145 = vpack.c.b16 %v3081, %v3081
        %v3146 = vpack.c.b16 %v3082, %v3082
        %v3147 = vpack.c.b16 %v3083, %v3083
        %v3148 = vpack.c.b16 %v3084, %v3084
        %v3149 = vpack.c.b16 %v3085, %v3085
        %v3150 = vpack.c.b16 %v3086, %v3086
        %v3151 = vpack.c.b16 %v3087, %v3087
        %v3152 = vpack.c.b16 %v3088, %v3088
        %v3153 = vpack.c.b16 %v3089, %v3089
        %v3154 = vpack.c.b16 %v3090, %v3090
        %v3155 = vpack.c.b16 %v3091, %v3091
        %v3156 = vpack.c.b16 %v3092, %v3092
        %v3157 = vpack.c.b16 %v3093, %v3093
        %v3158 = vpack.c.b16 %v3094, %v3094
        %v3159 = vpack.c.b16 %v3095, %v3095
        %v3160 = vpack.c.b16 %v3096, %v3096
        %v3161 = vpack.c.b16 %v3097, %v3097
        %v3162 = vpack.c.b16 %v3098, %v3098
        %v3163 = vpack.c.b16 %v3099, %v3099
        %v3164 = vpack.c.b16 %v3100, %v3100
        %v3165 = vpack.c.b16 %v3101, %v3101
        %v3166 = vpack.c.b16 %v3102, %v3102
        %v3167 = vpack.c.b16 %v3103, %v3103
        %v3168 = vpack.c.b16 %v3104, %v3104
        %v3169 = vpack.c.b16 %v3105, %v3105
        %v3170 = vpack.c.b16 %v3106, %v3106
        %v3171 = vpack.c.b16 %v3107, %v3107
        %v3172 = vpack.c.b16 %v3108, %v3108
        %v3173 = vpack.c.b16 %v3109, %v3109
        %v3174 = vpack.c.b16 %v3110, %v3110
        %v3175 = vpack.c.b16 %v3111, %v3111
        %v3176 = vpack.c.b16 %v3112, %v3112
        %v3177 = vpack.c.b16 %v3113, %v3113
        %v3178 = vpack.c.b16 %v3114, %v3114
        %v3179 = vpack.c.b16 %v3115, %v3115
        %v3180 = vpack.c.b16 %v3116, %v3116
        %v3181 = vpack.c.b16 %v3117, %v3117
        %v3182 = vpack.c.b16 %v3118, %v3118
        %v3183 = vpack.c.b16 %v3119, %v3119
        %v3184 = vpack.c.b16 %v3120, %v3120
        %vm3249 = vcmask 93184
        %3250 = vst.msk [vmem:[%s2] sm:$0xf] %vm3249, %v3121
        %3251 = vst.msk [vmem:[%s2 + $0x4] sm:$0xf] %vm3249, %v3122
        %3252 = vst.msk [vmem:[%s2 + $0x8] sm:$0xf] %vm3249, %v3123
        %3253 = vst.msk [vmem:[%s2 + $0xc] sm:$0xf] %vm3249, %v3124
        %3254 = vst.msk [vmem:[%s2 + $0x10] sm:$0xf] %vm3249, %v3125
        %3255 = vst.msk [vmem:[%s2 + $0x14] sm:$0xf] %vm3249, %v3126
        %3256 = vst.msk [vmem:[%s2 + $0x18] sm:$0xf] %vm3249, %v3127
        %3257 = vst.msk [vmem:[%s2 + $0x1c] sm:$0xf] %vm3249, %v3128
        %3258 = vst.msk [vmem:[%s2 + $0x20] sm:$0xf] %vm3249, %v3129
        %3259 = vst.msk [vmem:[%s2 + $0x24] sm:$0xf] %vm3249, %v3130
        %3260 = vst.msk [vmem:[%s2 + $0x28] sm:$0xf] %vm3249, %v3131
        %3261 = vst.msk [vmem:[%s2 + $0x2c] sm:$0xf] %vm3249, %v3132
        %3262 = vst.msk [vmem:[%s2 + $0x30] sm:$0xf] %vm3249, %v3133
        %3263 = vst.msk [vmem:[%s2 + $0x34] sm:$0xf] %vm3249, %v3134
        %3264 = vst.msk [vmem:[%s2 + $0x38] sm:$0xf] %vm3249, %v3135
        %3265 = vst.msk [vmem:[%s2 + $0x3c] sm:$0xf] %vm3249, %v3136
        %3266 = vst.msk [vmem:[%s2 + $0x40] sm:$0xf] %vm3249, %v3137
        %3267 = vst.msk [vmem:[%s2 + $0x44] sm:$0xf] %vm3249, %v3138
        %3268 = vst.msk [vmem:[%s2 + $0x48] sm:$0xf] %vm3249, %v3139
        %3269 = vst.msk [vmem:[%s2 + $0x4c] sm:$0xf] %vm3249, %v3140
        %3270 = vst.msk [vmem:[%s2 + $0x50] sm:$0xf] %vm3249, %v3141
        %3271 = vst.msk [vmem:[%s2 + $0x54] sm:$0xf] %vm3249, %v3142
        %3272 = vst.msk [vmem:[%s2 + $0x58] sm:$0xf] %vm3249, %v3143
        %3273 = vst.msk [vmem:[%s2 + $0x5c] sm:$0xf] %vm3249, %v3144
        %3274 = vst.msk [vmem:[%s2 + $0x60] sm:$0xf] %vm3249, %v3145
        %3275 = vst.msk [vmem:[%s2 + $0x64] sm:$0xf] %vm3249, %v3146
        %3276 = vst.msk [vmem:[%s2 + $0x68] sm:$0xf] %vm3249, %v3147
        %3277 = vst.msk [vmem:[%s2 + $0x6c] sm:$0xf] %vm3249, %v3148
        %3278 = vst.msk [vmem:[%s2 + $0x70] sm:$0xf] %vm3249, %v3149
        %3279 = vst.msk [vmem:[%s2 + $0x74] sm:$0xf] %vm3249, %v3150
        %3280 = vst.msk [vmem:[%s2 + $0x78] sm:$0xf] %vm3249, %v3151
        %3281 = vst.msk [vmem:[%s2 + $0x7c] sm:$0xf] %vm3249, %v3152
        %3282 = vst.msk [vmem:[%s2 + $0x80] sm:$0xf] %vm3249, %v3153
        %3283 = vst.msk [vmem:[%s2 + $0x84] sm:$0xf] %vm3249, %v3154
        %3284 = vst.msk [vmem:[%s2 + $0x88] sm:$0xf] %vm3249, %v3155
        %3285 = vst.msk [vmem:[%s2 + $0x8c] sm:$0xf] %vm3249, %v3156
        %3286 = vst.msk [vmem:[%s2 + $0x90] sm:$0xf] %vm3249, %v3157
        %3287 = vst.msk [vmem:[%s2 + $0x94] sm:$0xf] %vm3249, %v3158
        %3288 = vst.msk [vmem:[%s2 + $0x98] sm:$0xf] %vm3249, %v3159
        %3289 = vst.msk [vmem:[%s2 + $0x9c] sm:$0xf] %vm3249, %v3160
        %3290 = vst.msk [vmem:[%s2 + $0xa0] sm:$0xf] %vm3249, %v3161
        %3291 = vst.msk [vmem:[%s2 + $0xa4] sm:$0xf] %vm3249, %v3162
        %3292 = vst.msk [vmem:[%s2 + $0xa8] sm:$0xf] %vm3249, %v3163
        %3293 = vst.msk [vmem:[%s2 + $0xac] sm:$0xf] %vm3249, %v3164
        %3294 = vst.msk [vmem:[%s2 + $0xb0] sm:$0xf] %vm3249, %v3165
        %3295 = vst.msk [vmem:[%s2 + $0xb4] sm:$0xf] %vm3249, %v3166
        %3296 = vst.msk [vmem:[%s2 + $0xb8] sm:$0xf] %vm3249, %v3167
        %3297 = vst.msk [vmem:[%s2 + $0xbc] sm:$0xf] %vm3249, %v3168
        %3298 = vst.msk [vmem:[%s2 + $0xc0] sm:$0xf] %vm3249, %v3169
        %3299 = vst.msk [vmem:[%s2 + $0xc4] sm:$0xf] %vm3249, %v3170
        %3300 = vst.msk [vmem:[%s2 + $0xc8] sm:$0xf] %vm3249, %v3171
        %3301 = vst.msk [vmem:[%s2 + $0xcc] sm:$0xf] %vm3249, %v3172
        %3302 = vst.msk [vmem:[%s2 + $0xd0] sm:$0xf] %vm3249, %v3173
        %3303 = vst.msk [vmem:[%s2 + $0xd4] sm:$0xf] %vm3249, %v3174
        %3304 = vst.msk [vmem:[%s2 + $0xd8] sm:$0xf] %vm3249, %v3175
        %3305 = vst.msk [vmem:[%s2 + $0xdc] sm:$0xf] %vm3249, %v3176
        %3306 = vst.msk [vmem:[%s2 + $0xe0] sm:$0xf] %vm3249, %v3177
        %3307 = vst.msk [vmem:[%s2 + $0xe4] sm:$0xf] %vm3249, %v3178
        %3308 = vst.msk [vmem:[%s2 + $0xe8] sm:$0xf] %vm3249, %v3179
        %3309 = vst.msk [vmem:[%s2 + $0xec] sm:$0xf] %vm3249, %v3180
        %3310 = vst.msk [vmem:[%s2 + $0xf0] sm:$0xf] %vm3249, %v3181
        %3311 = vst.msk [vmem:[%s2 + $0xf4] sm:$0xf] %vm3249, %v3182
        %3312 = vst.msk [vmem:[%s2 + $0xf8] sm:$0xf] %vm3249, %v3183
        %3313 = vst.msk [vmem:[%s2 + $0xfc] sm:$0xf] %vm3249, %v3184
      $region32: #{_lambda_.10} parent=27 // pred_fallthru
        _
      // Predicated region
      $region33: #{_lambda_.10} parent=27 // pred_check
        %p3314 = pneg %p73
      $region34: #{_lambda_.10} parent=27 // pred_check_branch
        %3316 = sbr.rel (%p3314) target = $region36
      $region35: #{_lambda_.10} parent=27 // pred_region
        _
      $region36: #{_lambda_.10} parent=27 // pred_fallthru
        _
      // Predicated region
      $region37: #{_lambda_.10} parent=27 // pred_check
        %p3317 = pneg %p73
      $region38: #{_lambda_.10} parent=27 // pred_check_branch
        %3319 = sbr.rel (%p3317) target = $region40
      $region39: #{_lambda_.10} parent=27 // pred_region
        _
      $region40: #{_lambda_.10} parent=27 // pred_fallthru
        _
    $region28: #{_lambda_.10} parent=5 // pred_fallthru
      _
    %p3320 = scmp.le.s32.totalorder 2, %s8
    // Predicated region
    $region41: #{_lambda_.10} parent=5 // pred_check
      %p3321 = pneg %p3320
    $region42: #{_lambda_.10} parent=5 // pred_check_branch
      %3323 = sbr.rel (%p3321) target = $region44
    $region43: #{_lambda_.10} parent=5 // pred_region
      %s3324 = ssub.s32 %s8, 2
    $region44: #{_lambda_.10} parent=5 // pred_fallthru
      _
  $region6: #{_lambda_.10} parent=0 // loop_footer
    %s12 = sadd.s32 1, %s8
  $region7: #{_lambda_.10} parent=0 // loop_footer_branch
    %7 = sbr.rel target = $region3
  $region8: #{_lambda_.10} parent=0 // loop_exit
    _

// kernel: _lambda_.14
$region0: #{_lambda_.14}
  #allocation0 [shape = 'u32[]', space=smem, size = 0x4, offset = 0x4, fixed_abs, tag = 'smem constant byte address 0x4 - core index']
  #allocation1 [shape = 'u32[144,128]{1,0:T(1,128)}', space=vmem, size = 0x12000, scoped, tag = 'internal scratch']
  #allocation2 [shape = 'f32[512,8]{1,0:T(8,128)}', space=vmem, size = 0x40000, scoped, tag = 'scratch operand']
  %s0 = inlined_call_operand.vmem [shape: bf16[512,8], index: 0, kind: input, shape index: {}]
  %s1 = inlined_call_operand.vmem [shape: bf16[8,8], index: 1, kind: input, shape index: {}]
  %s2 = inlined_call_operand.vmem [shape: bf16[512,8], index: 2, kind: output, shape index: {}]
  %s3 = sld [smem:[#allocation0]]
  $region22: #{_lambda_.14} parent=0
    _
  %s5 = ssub.s32 1, %s3
  %s6 = scalar_select 0, %s5, %s3
  // Predicated region
  $region2: #{_lambda_.14} parent=0 // pred_check
    _
  $region3: #{_lambda_.14} parent=0 // pred_check_branch
    %8 = sbr.rel (0) target = $region5
  $region4: #{_lambda_.14} parent=0 // pred_region
    _
  $region5: #{_lambda_.14} parent=0 // pred_fallthru
    _
  // Predicated region
  $region6: #{_lambda_.14} parent=0 // pred_check
    _
  $region7: #{_lambda_.14} parent=0 // pred_check_branch
    %10 = sbr.rel (0) target = $region9
  $region8: #{_lambda_.14} parent=0 // pred_region
    _
  $region9: #{_lambda_.14} parent=0 // pred_fallthru
    _
  %v12 = vld [vmem:[%s0] sm:$0xf]
  %v13 = vld [vmem:[%s0 + $0x4] sm:$0xf]
  %v14 = vld [vmem:[%s0 + $0x8] sm:$0xf]
  %v15 = vld [vmem:[%s0 + $0xc] sm:$0xf]
  %v16 = vld [vmem:[%s0 + $0x10] sm:$0xf]
  %v17 = vld [vmem:[%s0 + $0x14] sm:$0xf]
  %v18 = vld [vmem:[%s0 + $0x18] sm:$0xf]
  %v19 = vld [vmem:[%s0 + $0x1c] sm:$0xf]
  %v20 = vld [vmem:[%s0 + $0x20] sm:$0xf]
  %v21 = vld [vmem:[%s0 + $0x24] sm:$0xf]
  %v22 = vld [vmem:[%s0 + $0x28] sm:$0xf]
  %v23 = vld [vmem:[%s0 + $0x2c] sm:$0xf]
  %v24 = vld [vmem:[%s0 + $0x30] sm:$0xf]
  %v25 = vld [vmem:[%s0 + $0x34] sm:$0xf]
  %v26 = vld [vmem:[%s0 + $0x38] sm:$0xf]
  %v27 = vld [vmem:[%s0 + $0x3c] sm:$0xf]
  %v28 = vld [vmem:[%s0 + $0x40] sm:$0xf]
  %v29 = vld [vmem:[%s0 + $0x44] sm:$0xf]
  %v30 = vld [vmem:[%s0 + $0x48] sm:$0xf]
  %v31 = vld [vmem:[%s0 + $0x4c] sm:$0xf]
  %v32 = vld [vmem:[%s0 + $0x50] sm:$0xf]
  %v33 = vld [vmem:[%s0 + $0x54] sm:$0xf]
  %v34 = vld [vmem:[%s0 + $0x58] sm:$0xf]
  %v35 = vld [vmem:[%s0 + $0x5c] sm:$0xf]
  %v36 = vld [vmem:[%s0 + $0x60] sm:$0xf]
  %v37 = vld [vmem:[%s0 + $0x64] sm:$0xf]
  %v38 = vld [vmem:[%s0 + $0x68] sm:$0xf]
  %v39 = vld [vmem:[%s0 + $0x6c] sm:$0xf]
  %v40 = vld [vmem:[%s0 + $0x70] sm:$0xf]
  %v41 = vld [vmem:[%s0 + $0x74] sm:$0xf]
  %v42 = vld [vmem:[%s0 + $0x78] sm:$0xf]
  %v43 = vld [vmem:[%s0 + $0x7c] sm:$0xf]
  %v44 = vld [vmem:[%s0 + $0x80] sm:$0xf]
  %v45 = vld [vmem:[%s0 + $0x84] sm:$0xf]
  %v46 = vld [vmem:[%s0 + $0x88] sm:$0xf]
  %v47 = vld [vmem:[%s0 + $0x8c] sm:$0xf]
  %v48 = vld [vmem:[%s0 + $0x90] sm:$0xf]
  %v49 = vld [vmem:[%s0 + $0x94] sm:$0xf]
  %v50 = vld [vmem:[%s0 + $0x98] sm:$0xf]
  %v51 = vld [vmem:[%s0 + $0x9c] sm:$0xf]
  %v52 = vld [vmem:[%s0 + $0xa0] sm:$0xf]
  %v53 = vld [vmem:[%s0 + $0xa4] sm:$0xf]
  %v54 = vld [vmem:[%s0 + $0xa8] sm:$0xf]
  %v55 = vld [vmem:[%s0 + $0xac] sm:$0xf]
  %v56 = vld [vmem:[%s0 + $0xb0] sm:$0xf]
  %v57 = vld [vmem:[%s0 + $0xb4] sm:$0xf]
  %v58 = vld [vmem:[%s0 + $0xb8] sm:$0xf]
  %v59 = vld [vmem:[%s0 + $0xbc] sm:$0xf]
  %v60 = vld [vmem:[%s0 + $0xc0] sm:$0xf]
  %v61 = vld [vmem:[%s0 + $0xc4] sm:$0xf]
  %v62 = vld [vmem:[%s0 + $0xc8] sm:$0xf]
  %v63 = vld [vmem:[%s0 + $0xcc] sm:$0xf]
  %v64 = vld [vmem:[%s0 + $0xd0] sm:$0xf]
  %v65 = vld [vmem:[%s0 + $0xd4] sm:$0xf]
  %v66 = vld [vmem:[%s0 + $0xd8] sm:$0xf]
  %v67 = vld [vmem:[%s0 + $0xdc] sm:$0xf]
  %v68 = vld [vmem:[%s0 + $0xe0] sm:$0xf]
  %v69 = vld [vmem:[%s0 + $0xe4] sm:$0xf]
  %v70 = vld [vmem:[%s0 + $0xe8] sm:$0xf]
  %v71 = vld [vmem:[%s0 + $0xec] sm:$0xf]
  %v72 = vld [vmem:[%s0 + $0xf0] sm:$0xf]
  %v73 = vld [vmem:[%s0 + $0xf4] sm:$0xf]
  %v74 = vld [vmem:[%s0 + $0xf8] sm:$0xf]
  %v75 = vld [vmem:[%s0 + $0xfc] sm:$0xf]
  %v76 = vmax.bf16 %v12, 0
  %v77 = vmax.bf16 %v13, 0
  %v78 = vmax.bf16 %v14, 0
  %v79 = vmax.bf16 %v15, 0
  %v80 = vmax.bf16 %v16, 0
  %v81 = vmax.bf16 %v17, 0
  %v82 = vmax.bf16 %v18, 0
  %v83 = vmax.bf16 %v19, 0
  %v84 = vmax.bf16 %v20, 0
  %v85 = vmax.bf16 %v21, 0
  %v86 = vmax.bf16 %v22, 0
  %v87 = vmax.bf16 %v23, 0
  %v88 = vmax.bf16 %v24, 0
  %v89 = vmax.bf16 %v25, 0
  %v90 = vmax.bf16 %v26, 0
  %v91 = vmax.bf16 %v27, 0
  %v92 = vmax.bf16 %v28, 0
  %v93 = vmax.bf16 %v29, 0
  %v94 = vmax.bf16 %v30, 0
  %v95 = vmax.bf16 %v31, 0
  %v96 = vmax.bf16 %v32, 0
  %v97 = vmax.bf16 %v33, 0
  %v98 = vmax.bf16 %v34, 0
  %v99 = vmax.bf16 %v35, 0
  %v100 = vmax.bf16 %v36, 0
  %v101 = vmax.bf16 %v37, 0
  %v102 = vmax.bf16 %v38, 0
  %v103 = vmax.bf16 %v39, 0
  %v104 = vmax.bf16 %v40, 0
  %v105 = vmax.bf16 %v41, 0
  %v106 = vmax.bf16 %v42, 0
  %v107 = vmax.bf16 %v43, 0
  %v108 = vmax.bf16 %v44, 0
  %v109 = vmax.bf16 %v45, 0
  %v110 = vmax.bf16 %v46, 0
  %v111 = vmax.bf16 %v47, 0
  %v112 = vmax.bf16 %v48, 0
  %v113 = vmax.bf16 %v49, 0
  %v114 = vmax.bf16 %v50, 0
  %v115 = vmax.bf16 %v51, 0
  %v116 = vmax.bf16 %v52, 0
  %v117 = vmax.bf16 %v53, 0
  %v118 = vmax.bf16 %v54, 0
  %v119 = vmax.bf16 %v55, 0
  %v120 = vmax.bf16 %v56, 0
  %v121 = vmax.bf16 %v57, 0
  %v122 = vmax.bf16 %v58, 0
  %v123 = vmax.bf16 %v59, 0
  %v124 = vmax.bf16 %v60, 0
  %v125 = vmax.bf16 %v61, 0
  %v126 = vmax.bf16 %v62, 0
  %v127 = vmax.bf16 %v63, 0
  %v128 = vmax.bf16 %v64, 0
  %v129 = vmax.bf16 %v65, 0
  %v130 = vmax.bf16 %v66, 0
  %v131 = vmax.bf16 %v67, 0
  %v132 = vmax.bf16 %v68, 0
  %v133 = vmax.bf16 %v69, 0
  %v134 = vmax.bf16 %v70, 0
  %v135 = vmax.bf16 %v71, 0
  %v136 = vmax.bf16 %v72, 0
  %v137 = vmax.bf16 %v73, 0
  %v138 = vmax.bf16 %v74, 0
  %v139 = vmax.bf16 %v75, 0
  %v140 = vld [vmem:[%s1] sm:$0xf]
  %v205 = vunpack.c.l.b16 %v76
  %v206 = vunpack.c.l.b16 %v77
  %v207 = vunpack.c.l.b16 %v78
  %v208 = vunpack.c.l.b16 %v79
  %v209 = vunpack.c.l.b16 %v80
  %v210 = vunpack.c.l.b16 %v81
  %v211 = vunpack.c.l.b16 %v82
  %v212 = vunpack.c.l.b16 %v83
  %v213 = vunpack.c.l.b16 %v84
  %v214 = vunpack.c.l.b16 %v85
  %v215 = vunpack.c.l.b16 %v86
  %v216 = vunpack.c.l.b16 %v87
  %v217 = vunpack.c.l.b16 %v88
  %v218 = vunpack.c.l.b16 %v89
  %v219 = vunpack.c.l.b16 %v90
  %v220 = vunpack.c.l.b16 %v91
  %v221 = vunpack.c.l.b16 %v92
  %v222 = vunpack.c.l.b16 %v93
  %v223 = vunpack.c.l.b16 %v94
  %v224 = vunpack.c.l.b16 %v95
  %v225 = vunpack.c.l.b16 %v96
  %v226 = vunpack.c.l.b16 %v97
  %v227 = vunpack.c.l.b16 %v98
  %v228 = vunpack.c.l.b16 %v99
  %v229 = vunpack.c.l.b16 %v100
  %v230 = vunpack.c.l.b16 %v101
  %v231 = vunpack.c.l.b16 %v102
  %v232 = vunpack.c.l.b16 %v103
  %v233 = vunpack.c.l.b16 %v104
  %v234 = vunpack.c.l.b16 %v105
  %v235 = vunpack.c.l.b16 %v106
  %v236 = vunpack.c.l.b16 %v107
  %v237 = vunpack.c.l.b16 %v108
  %v238 = vunpack.c.l.b16 %v109
  %v239 = vunpack.c.l.b16 %v110
  %v240 = vunpack.c.l.b16 %v111
  %v241 = vunpack.c.l.b16 %v112
  %v242 = vunpack.c.l.b16 %v113
  %v243 = vunpack.c.l.b16 %v114
  %v244 = vunpack.c.l.b16 %v115
  %v245 = vunpack.c.l.b16 %v116
  %v246 = vunpack.c.l.b16 %v117
  %v247 = vunpack.c.l.b16 %v118
  %v248 = vunpack.c.l.b16 %v119
  %v249 = vunpack.c.l.b16 %v120
  %v250 = vunpack.c.l.b16 %v121
  %v251 = vunpack.c.l.b16 %v122
  %v252 = vunpack.c.l.b16 %v123
  %v253 = vunpack.c.l.b16 %v124
  %v254 = vunpack.c.l.b16 %v125
  %v255 = vunpack.c.l.b16 %v126
  %v256 = vunpack.c.l.b16 %v127
  %v257 = vunpack.c.l.b16 %v128
  %v258 = vunpack.c.l.b16 %v129
  %v259 = vunpack.c.l.b16 %v130
  %v260 = vunpack.c.l.b16 %v131
  %v261 = vunpack.c.l.b16 %v132
  %v262 = vunpack.c.l.b16 %v133
  %v263 = vunpack.c.l.b16 %v134
  %v264 = vunpack.c.l.b16 %v135
  %v265 = vunpack.c.l.b16 %v136
  %v266 = vunpack.c.l.b16 %v137
  %v267 = vunpack.c.l.b16 %v138
  %v268 = vunpack.c.l.b16 %v139
  %v269 = vpack.c.b16 %v206, %v205
  %v270 = vpack.c.b16 %v208, %v207
  %v271 = vpack.c.b16 %v210, %v209
  %v272 = vpack.c.b16 %v212, %v211
  %v273 = vpack.c.b16 %v214, %v213
  %v274 = vpack.c.b16 %v216, %v215
  %v275 = vpack.c.b16 %v218, %v217
  %v276 = vpack.c.b16 %v220, %v219
  %v277 = vpack.c.b16 %v222, %v221
  %v278 = vpack.c.b16 %v224, %v223
  %v279 = vpack.c.b16 %v226, %v225
  %v280 = vpack.c.b16 %v228, %v227
  %v281 = vpack.c.b16 %v230, %v229
  %v282 = vpack.c.b16 %v232, %v231
  %v283 = vpack.c.b16 %v234, %v233
  %v284 = vpack.c.b16 %v236, %v235
  %v285 = vpack.c.b16 %v238, %v237
  %v286 = vpack.c.b16 %v240, %v239
  %v287 = vpack.c.b16 %v242, %v241
  %v288 = vpack.c.b16 %v244, %v243
  %v289 = vpack.c.b16 %v246, %v245
  %v290 = vpack.c.b16 %v248, %v247
  %v291 = vpack.c.b16 %v250, %v249
  %v292 = vpack.c.b16 %v252, %v251
  %v293 = vpack.c.b16 %v254, %v253
  %v294 = vpack.c.b16 %v256, %v255
  %v295 = vpack.c.b16 %v258, %v257
  %v296 = vpack.c.b16 %v260, %v259
  %v297 = vpack.c.b16 %v262, %v261
  %v298 = vpack.c.b16 %v264, %v263
  %v299 = vpack.c.b16 %v266, %v265
  %v300 = vpack.c.b16 %v268, %v267
  %vm301 = vcmask 64512
  %v303 = vsel %vm301, %v269, 0
  %v306 = vsel %vm301, %v270, 0
  %v309 = vsel %vm301, %v271, 0
  %v312 = vsel %vm301, %v272, 0
  %v315 = vsel %vm301, %v273, 0
  %v318 = vsel %vm301, %v274, 0
  %v321 = vsel %vm301, %v275, 0
  %v324 = vsel %vm301, %v276, 0
  %v327 = vsel %vm301, %v277, 0
  %v330 = vsel %vm301, %v278, 0
  %v333 = vsel %vm301, %v279, 0
  %v336 = vsel %vm301, %v280, 0
  %v339 = vsel %vm301, %v281, 0
  %v342 = vsel %vm301, %v282, 0
  %v345 = vsel %vm301, %v283, 0
  %v348 = vsel %vm301, %v284, 0
  %v351 = vsel %vm301, %v285, 0
  %v354 = vsel %vm301, %v286, 0
  %v357 = vsel %vm301, %v287, 0
  %v360 = vsel %vm301, %v288, 0
  %v363 = vsel %vm301, %v289, 0
  %v366 = vsel %vm301, %v290, 0
  %v369 = vsel %vm301, %v291, 0
  %v372 = vsel %vm301, %v292, 0
  %v375 = vsel %vm301, %v293, 0
  %v378 = vsel %vm301, %v294, 0
  %v381 = vsel %vm301, %v295, 0
  %v384 = vsel %vm301, %v296, 0
  %v387 = vsel %vm301, %v297, 0
  %v390 = vsel %vm301, %v298, 0
  %v393 = vsel %vm301, %v299, 0
  %v396 = vsel %vm301, %v300, 0
  %vm398 = vcmask 1043456
  %v400 = vsel %vm398, %v140, 0
  %402 = vmatprep.subr.bf16.mxu0 0
  %403 = vmatpush1.bf16.msra.mxu0 %v400
  %404 = vmatprep.subr.bf16.mxu0 0
  %405 = vmatpush1.bf16.msra.mxu0 0
  %406 = vmatprep.subr.bf16.mxu0 0
  %407 = vmatpush1.bf16.msra.mxu0 0
  %408 = vmatprep.subr.bf16.mxu0 0
  %409 = vmatpush1.bf16.msra.mxu0 0
  %410 = vmatprep.subr.bf16.mxu0 0
  %411 = vmatpush1.bf16.msra.mxu0 0
  %412 = vmatprep.subr.bf16.mxu0 0
  %413 = vmatpush1.bf16.msra.mxu0 0
  %414 = vmatprep.subr.bf16.mxu0 0
  %415 = vmatpush1.bf16.msra.mxu0 0
  %416 = vmatprep.subr.bf16.mxu0 0
  %417 = vmatpush1.bf16.msra.mxu0 0
  %418 = vmatprep.subr.bf16.mxu0 0
  %419 = vmatpush1.bf16.msra.mxu0 0
  %420 = vmatprep.subr.bf16.mxu0 0
  %421 = vmatpush1.bf16.msra.mxu0 0
  %422 = vmatprep.subr.bf16.mxu0 0
  %423 = vmatpush1.bf16.msra.mxu0 0
  %424 = vmatprep.subr.bf16.mxu0 0
  %425 = vmatpush1.bf16.msra.mxu0 0
  %426 = vmatprep.subr.bf16.mxu0 0
  %427 = vmatpush1.bf16.msra.mxu0 0
  %428 = vmatprep.subr.bf16.mxu0 0
  %429 = vmatpush1.bf16.msra.mxu0 0
  %430 = vmatprep.subr.bf16.mxu0 0
  %431 = vmatpush1.bf16.msra.mxu0 0
  %432 = vmatprep.subr.bf16.mxu0 0
  %433 = vmatpush1.bf16.msra.mxu0 0
  %434 = vmatprep.mubr.bf16.mxu0 0
  %435 = vmatmul.mubr.bf16.gmra.mrb[0].mxu0 %v303
  %v436 = vpop.f32.mrb[0].mxu0
  %v437 = vadd.f32 0.0, %v436
  %v438 = vpop.f32.mrb[0].mxu0
  %v439 = vpop.f32.mrb[0].mxu0
  %v440 = vadd.f32 0.0, %v439
  %v441 = vpop.f32.mrb[0].mxu0
  %442 = vmatprep.mubr.bf16.mxu0 0
  %443 = vmatmul.mubr.bf16.gmra.mrb[0].mxu0 %v306
  %v444 = vpop.f32.mrb[0].mxu0
  %v445 = vadd.f32 0.0, %v444
  %v446 = vpop.f32.mrb[0].mxu0
  %v447 = vpop.f32.mrb[0].mxu0
  %v448 = vadd.f32 0.0, %v447
  %v449 = vpop.f32.mrb[0].mxu0
  %450 = vmatprep.mubr.bf16.mxu0 0
  %451 = vmatmul.mubr.bf16.gmra.mrb[0].mxu0 %v309
  %v452 = vpop.f32.mrb[0].mxu0
  %v453 = vadd.f32 0.0, %v452
  %v454 = vpop.f32.mrb[0].mxu0
  %v455 = vpop.f32.mrb[0].mxu0
  %v456 = vadd.f32 0.0, %v455
  %v457 = vpop.f32.mrb[0].mxu0
  %458 = vmatprep.mubr.bf16.mxu0 0
  %459 = vmatmul.mubr.bf16.gmra.mrb[0].mxu0 %v312
  %v460 = vpop.f32.mrb[0].mxu0
  %v461 = vadd.f32 0.0, %v460
  %v462 = vpop.f32.mrb[0].mxu0
  %v463 = vpop.f32.mrb[0].mxu0
  %v464 = vadd.f32 0.0, %v463
  %v465 = vpop.f32.mrb[0].mxu0
  %466 = vmatprep.mubr.bf16.mxu0 0
  %467 = vmatmul.mubr.bf16.gmra.mrb[0].mxu0 %v315
  %v468 = vpop.f32.mrb[0].mxu0
  %v469 = vadd.f32 0.0, %v468
  %v470 = vpop.f32.mrb[0].mxu0
  %v471 = vpop.f32.mrb[0].mxu0
  %v472 = vadd.f32 0.0, %v471
  %v473 = vpop.f32.mrb[0].mxu0
  %474 = vmatprep.mubr.bf16.mxu0 0
  %475 = vmatmul.mubr.bf16.gmra.mrb[0].mxu0 %v318
  %v476 = vpop.f32.mrb[0].mxu0
  %v477 = vadd.f32 0.0, %v476
  %v478 = vpop.f32.mrb[0].mxu0
  %v479 = vpop.f32.mrb[0].mxu0
  %v480 = vadd.f32 0.0, %v479
  %v481 = vpop.f32.mrb[0].mxu0
  %482 = vmatprep.mubr.bf16.mxu0 0
  %483 = vmatmul.mubr.bf16.gmra.mrb[0].mxu0 %v321
  %v484 = vpop.f32.mrb[0].mxu0
  %v485 = vadd.f32 0.0, %v484
  %v486 = vpop.f32.mrb[0].mxu0
  %v487 = vpop.f32.mrb[0].mxu0
  %v488 = vadd.f32 0.0, %v487
  %v489 = vpop.f32.mrb[0].mxu0
  %490 = vmatprep.mubr.bf16.mxu0 0
  %491 = vmatmul.mubr.bf16.gmra.mrb[0].mxu0 %v324
  %v492 = vpop.f32.mrb[0].mxu0
  %v493 = vadd.f32 0.0, %v492
  %v494 = vpop.f32.mrb[0].mxu0
  %v495 = vpop.f32.mrb[0].mxu0
  %v496 = vadd.f32 0.0, %v495
  %v497 = vpop.f32.mrb[0].mxu0
  %498 = vmatprep.mubr.bf16.mxu0 0
  %499 = vmatmul.mubr.bf16.gmra.mrb[0].mxu0 %v327
  %v500 = vpop.f32.mrb[0].mxu0
  %v501 = vadd.f32 0.0, %v500
  %v502 = vpop.f32.mrb[0].mxu0
  %v503 = vpop.f32.mrb[0].mxu0
  %v504 = vadd.f32 0.0, %v503
  %v505 = vpop.f32.mrb[0].mxu0
  %506 = vmatprep.mubr.bf16.mxu0 0
  %507 = vmatmul.mubr.bf16.gmra.mrb[0].mxu0 %v330
  %v508 = vpop.f32.mrb[0].mxu0
  %v509 = vadd.f32 0.0, %v508
  %v510 = vpop.f32.mrb[0].mxu0
  %v511 = vpop.f32.mrb[0].mxu0
  %v512 = vadd.f32 0.0, %v511
  %v513 = vpop.f32.mrb[0].mxu0
  %514 = vmatprep.mubr.bf16.mxu0 0
  %515 = vmatmul.mubr.bf16.gmra.mrb[0].mxu0 %v333
  %v516 = vpop.f32.mrb[0].mxu0
  %v517 = vadd.f32 0.0, %v516
  %v518 = vpop.f32.mrb[0].mxu0
  %v519 = vpop.f32.mrb[0].mxu0
  %v520 = vadd.f32 0.0, %v519
  %v521 = vpop.f32.mrb[0].mxu0
  %522 = vmatprep.mubr.bf16.mxu0 0
  %523 = vmatmul.mubr.bf16.gmra.mrb[0].mxu0 %v336
  %v524 = vpop.f32.mrb[0].mxu0
  %v525 = vadd.f32 0.0, %v524
  %v526 = vpop.f32.mrb[0].mxu0
  %v527 = vpop.f32.mrb[0].mxu0
  %v528 = vadd.f32 0.0, %v527
  %v529 = vpop.f32.mrb[0].mxu0
  %530 = vmatprep.mubr.bf16.mxu0 0
  %531 = vmatmul.mubr.bf16.gmra.mrb[0].mxu0 %v339
  %v532 = vpop.f32.mrb[0].mxu0
  %v533 = vadd.f32 0.0, %v532
  %v534 = vpop.f32.mrb[0].mxu0
  %v535 = vpop.f32.mrb[0].mxu0
  %v536 = vadd.f32 0.0, %v535
  %v537 = vpop.f32.mrb[0].mxu0
  %538 = vmatprep.mubr.bf16.mxu0 0
  %539 = vmatmul.mubr.bf16.gmra.mrb[0].mxu0 %v342
  %v540 = vpop.f32.mrb[0].mxu0
  %v541 = vadd.f32 0.0, %v540
  %v542 = vpop.f32.mrb[0].mxu0
  %v543 = vpop.f32.mrb[0].mxu0
  %v544 = vadd.f32 0.0, %v543
  %v545 = vpop.f32.mrb[0].mxu0
  %546 = vmatprep.mubr.bf16.mxu0 0
  %547 = vmatmul.mubr.bf16.gmra.mrb[0].mxu0 %v345
  %v548 = vpop.f32.mrb[0].mxu0
  %v549 = vadd.f32 0.0, %v548
  %v550 = vpop.f32.mrb[0].mxu0
  %v551 = vpop.f32.mrb[0].mxu0
  %v552 = vadd.f32 0.0, %v551
  %v553 = vpop.f32.mrb[0].mxu0
  %554 = vmatprep.mubr.bf16.mxu0 0
  %555 = vmatmul.mubr.bf16.gmra.mrb[0].mxu0 %v348
  %v556 = vpop.f32.mrb[0].mxu0
  %v557 = vadd.f32 0.0, %v556
  %v558 = vpop.f32.mrb[0].mxu0
  %v559 = vpop.f32.mrb[0].mxu0
  %v560 = vadd.f32 0.0, %v559
  %v561 = vpop.f32.mrb[0].mxu0
  %562 = vmatprep.mubr.bf16.mxu0 0
  %563 = vmatmul.mubr.bf16.gmra.mrb[0].mxu0 %v351
  %v564 = vpop.f32.mrb[0].mxu0
  %v565 = vadd.f32 0.0, %v564
  %v566 = vpop.f32.mrb[0].mxu0
  %v567 = vpop.f32.mrb[0].mxu0
  %v568 = vadd.f32 0.0, %v567
  %v569 = vpop.f32.mrb[0].mxu0
  %570 = vmatprep.mubr.bf16.mxu0 0
  %571 = vmatmul.mubr.bf16.gmra.mrb[0].mxu0 %v354
  %v572 = vpop.f32.mrb[0].mxu0
  %v573 = vadd.f32 0.0, %v572
  %v574 = vpop.f32.mrb[0].mxu0
  %v575 = vpop.f32.mrb[0].mxu0
  %v576 = vadd.f32 0.0, %v575
  %v577 = vpop.f32.mrb[0].mxu0
  %578 = vmatprep.mubr.bf16.mxu0 0
  %579 = vmatmul.mubr.bf16.gmra.mrb[0].mxu0 %v357
  %v580 = vpop.f32.mrb[0].mxu0
  %v581 = vadd.f32 0.0, %v580
  %v582 = vpop.f32.mrb[0].mxu0
  %v583 = vpop.f32.mrb[0].mxu0
  %v584 = vadd.f32 0.0, %v583
  %v585 = vpop.f32.mrb[0].mxu0
  %586 = vmatprep.mubr.bf16.mxu0 0
  %587 = vmatmul.mubr.bf16.gmra.mrb[0].mxu0 %v360
  %v588 = vpop.f32.mrb[0].mxu0
  %v589 = vadd.f32 0.0, %v588
  %v590 = vpop.f32.mrb[0].mxu0
  %v591 = vpop.f32.mrb[0].mxu0
  %v592 = vadd.f32 0.0, %v591
  %v593 = vpop.f32.mrb[0].mxu0
  %594 = vmatprep.mubr.bf16.mxu0 0
  %595 = vmatmul.mubr.bf16.gmra.mrb[0].mxu0 %v363
  %v596 = vpop.f32.mrb[0].mxu0
  %v597 = vadd.f32 0.0, %v596
  %v598 = vpop.f32.mrb[0].mxu0
  %v599 = vpop.f32.mrb[0].mxu0
  %v600 = vadd.f32 0.0, %v599
  %v601 = vpop.f32.mrb[0].mxu0
  %602 = vmatprep.mubr.bf16.mxu0 0
  %603 = vmatmul.mubr.bf16.gmra.mrb[0].mxu0 %v366
  %v604 = vpop.f32.mrb[0].mxu0
  %v605 = vadd.f32 0.0, %v604
  %v606 = vpop.f32.mrb[0].mxu0
  %v607 = vpop.f32.mrb[0].mxu0
  %v608 = vadd.f32 0.0, %v607
  %v609 = vpop.f32.mrb[0].mxu0
  %610 = vmatprep.mubr.bf16.mxu0 0
  %611 = vmatmul.mubr.bf16.gmra.mrb[0].mxu0 %v369
  %v612 = vpop.f32.mrb[0].mxu0
  %v613 = vadd.f32 0.0, %v612
  %v614 = vpop.f32.mrb[0].mxu0
  %v615 = vpop.f32.mrb[0].mxu0
  %v616 = vadd.f32 0.0, %v615
  %v617 = vpop.f32.mrb[0].mxu0
  %618 = vmatprep.mubr.bf16.mxu0 0
  %619 = vmatmul.mubr.bf16.gmra.mrb[0].mxu0 %v372
  %v620 = vpop.f32.mrb[0].mxu0
  %v621 = vadd.f32 0.0, %v620
  %v622 = vpop.f32.mrb[0].mxu0
  %v623 = vpop.f32.mrb[0].mxu0
  %v624 = vadd.f32 0.0, %v623
  %v625 = vpop.f32.mrb[0].mxu0
  %626 = vmatprep.mubr.bf16.mxu0 0
  %627 = vmatmul.mubr.bf16.gmra.mrb[0].mxu0 %v375
  %v628 = vpop.f32.mrb[0].mxu0
  %v629 = vadd.f32 0.0, %v628
  %v630 = vpop.f32.mrb[0].mxu0
  %v631 = vpop.f32.mrb[0].mxu0
  %v632 = vadd.f32 0.0, %v631
  %v633 = vpop.f32.mrb[0].mxu0
  %634 = vmatprep.mubr.bf16.mxu0 0
  %635 = vmatmul.mubr.bf16.gmra.mrb[0].mxu0 %v378
  %v636 = vpop.f32.mrb[0].mxu0
  %v637 = vadd.f32 0.0, %v636
  %v638 = vpop.f32.mrb[0].mxu0
  %v639 = vpop.f32.mrb[0].mxu0
  %v640 = vadd.f32 0.0, %v639
  %v641 = vpop.f32.mrb[0].mxu0
  %642 = vmatprep.mubr.bf16.mxu0 0
  %643 = vmatmul.mubr.bf16.gmra.mrb[0].mxu0 %v381
  %v644 = vpop.f32.mrb[0].mxu0
  %v645 = vadd.f32 0.0, %v644
  %v646 = vpop.f32.mrb[0].mxu0
  %v647 = vpop.f32.mrb[0].mxu0
  %v648 = vadd.f32 0.0, %v647
  %v649 = vpop.f32.mrb[0].mxu0
  %650 = vmatprep.mubr.bf16.mxu0 0
  %651 = vmatmul.mubr.bf16.gmra.mrb[0].mxu0 %v384
  %v652 = vpop.f32.mrb[0].mxu0
  %v653 = vadd.f32 0.0, %v652
  %v654 = vpop.f32.mrb[0].mxu0
  %v655 = vpop.f32.mrb[0].mxu0
  %v656 = vadd.f32 0.0, %v655
  %v657 = vpop.f32.mrb[0].mxu0
  %658 = vmatprep.mubr.bf16.mxu0 0
  %659 = vmatmul.mubr.bf16.gmra.mrb[0].mxu0 %v387
  %v660 = vpop.f32.mrb[0].mxu0
  %v661 = vadd.f32 0.0, %v660
  %v662 = vpop.f32.mrb[0].mxu0
  %v663 = vpop.f32.mrb[0].mxu0
  %v664 = vadd.f32 0.0, %v663
  %v665 = vpop.f32.mrb[0].mxu0
  %666 = vmatprep.mubr.bf16.mxu0 0
  %667 = vmatmul.mubr.bf16.gmra.mrb[0].mxu0 %v390
  %v668 = vpop.f32.mrb[0].mxu0
  %v669 = vadd.f32 0.0, %v668
  %v670 = vpop.f32.mrb[0].mxu0
  %v671 = vpop.f32.mrb[0].mxu0
  %v672 = vadd.f32 0.0, %v671
  %v673 = vpop.f32.mrb[0].mxu0
  %674 = vmatprep.mubr.bf16.mxu0 0
  %675 = vmatmul.mubr.bf16.gmra.mrb[0].mxu0 %v393
  %v676 = vpop.f32.mrb[0].mxu0
  %v677 = vadd.f32 0.0, %v676
  %v678 = vpop.f32.mrb[0].mxu0
  %v679 = vpop.f32.mrb[0].mxu0
  %v680 = vadd.f32 0.0, %v679
  %v681 = vpop.f32.mrb[0].mxu0
  %682 = vmatprep.mubr.bf16.mxu0 0
  %683 = vmatmul.mubr.bf16.gmra.mrb[0].mxu0 %v396
  %v684 = vpop.f32.mrb[0].mxu0
  %v685 = vadd.f32 0.0, %v684
  %v686 = vpop.f32.mrb[0].mxu0
  %v687 = vpop.f32.mrb[0].mxu0
  %v688 = vadd.f32 0.0, %v687
  %v689 = vpop.f32.mrb[0].mxu0
  %690 = vdwg.mxu0
  %s691 = smul.u32 0, 512
  %s692 = scalar_lea.vmem [#allocation2], %s691
  %693 = vst.msk [vmem:[%s692] sm:$0xff] %vm301, %v437
  %694 = vst.msk [vmem:[%s692 + $0x8] sm:$0xff] %vm301, %v440
  %695 = vst.msk [vmem:[%s692 + $0x10] sm:$0xff] %vm301, %v445
  %696 = vst.msk [vmem:[%s692 + $0x18] sm:$0xff] %vm301, %v448
  %697 = vst.msk [vmem:[%s692 + $0x20] sm:$0xff] %vm301, %v453
  %698 = vst.msk [vmem:[%s692 + $0x28] sm:$0xff] %vm301, %v456
  %699 = vst.msk [vmem:[%s692 + $0x30] sm:$0xff] %vm301, %v461
  %700 = vst.msk [vmem:[%s692 + $0x38] sm:$0xff] %vm301, %v464
  %701 = vst.msk [vmem:[%s692 + $0x40] sm:$0xff] %vm301, %v469
  %702 = vst.msk [vmem:[%s692 + $0x48] sm:$0xff] %vm301, %v472
  %703 = vst.msk [vmem:[%s692 + $0x50] sm:$0xff] %vm301, %v477
  %704 = vst.msk [vmem:[%s692 + $0x58] sm:$0xff] %vm301, %v480
  %705 = vst.msk [vmem:[%s692 + $0x60] sm:$0xff] %vm301, %v485
  %706 = vst.msk [vmem:[%s692 + $0x68] sm:$0xff] %vm301, %v488
  %707 = vst.msk [vmem:[%s692 + $0x70] sm:$0xff] %vm301, %v493
  %708 = vst.msk [vmem:[%s692 + $0x78] sm:$0xff] %vm301, %v496
  %709 = vst.msk [vmem:[%s692 + $0x80] sm:$0xff] %vm301, %v501
  %710 = vst.msk [vmem:[%s692 + $0x88] sm:$0xff] %vm301, %v504
  %711 = vst.msk [vmem:[%s692 + $0x90] sm:$0xff] %vm301, %v509
  %712 = vst.msk [vmem:[%s692 + $0x98] sm:$0xff] %vm301, %v512
  %713 = vst.msk [vmem:[%s692 + $0xa0] sm:$0xff] %vm301, %v517
  %714 = vst.msk [vmem:[%s692 + $0xa8] sm:$0xff] %vm301, %v520
  %715 = vst.msk [vmem:[%s692 + $0xb0] sm:$0xff] %vm301, %v525
  %716 = vst.msk [vmem:[%s692 + $0xb8] sm:$0xff] %vm301, %v528
  %717 = vst.msk [vmem:[%s692 + $0xc0] sm:$0xff] %vm301, %v533
  %718 = vst.msk [vmem:[%s692 + $0xc8] sm:$0xff] %vm301, %v536
  %719 = vst.msk [vmem:[%s692 + $0xd0] sm:$0xff] %vm301, %v541
  %720 = vst.msk [vmem:[%s692 + $0xd8] sm:$0xff] %vm301, %v544
  %721 = vst.msk [vmem:[%s692 + $0xe0] sm:$0xff] %vm301, %v549
  %722 = vst.msk [vmem:[%s692 + $0xe8] sm:$0xff] %vm301, %v552
  %723 = vst.msk [vmem:[%s692 + $0xf0] sm:$0xff] %vm301, %v557
  %724 = vst.msk [vmem:[%s692 + $0xf8] sm:$0xff] %vm301, %v560
  %725 = vst.msk [vmem:[%s692 + $0x100] sm:$0xff] %vm301, %v565
  %726 = vst.msk [vmem:[%s692 + $0x108] sm:$0xff] %vm301, %v568
  %727 = vst.msk [vmem:[%s692 + $0x110] sm:$0xff] %vm301, %v573
  %728 = vst.msk [vmem:[%s692 + $0x118] sm:$0xff] %vm301, %v576
  %729 = vst.msk [vmem:[%s692 + $0x120] sm:$0xff] %vm301, %v581
  %730 = vst.msk [vmem:[%s692 + $0x128] sm:$0xff] %vm301, %v584
  %731 = vst.msk [vmem:[%s692 + $0x130] sm:$0xff] %vm301, %v589
  %732 = vst.msk [vmem:[%s692 + $0x138] sm:$0xff] %vm301, %v592
  %733 = vst.msk [vmem:[%s692 + $0x140] sm:$0xff] %vm301, %v597
  %734 = vst.msk [vmem:[%s692 + $0x148] sm:$0xff] %vm301, %v600
  %735 = vst.msk [vmem:[%s692 + $0x150] sm:$0xff] %vm301, %v605
  %736 = vst.msk [vmem:[%s692 + $0x158] sm:$0xff] %vm301, %v608
  %737 = vst.msk [vmem:[%s692 + $0x160] sm:$0xff] %vm301, %v613
  %738 = vst.msk [vmem:[%s692 + $0x168] sm:$0xff] %vm301, %v616
  %739 = vst.msk [vmem:[%s692 + $0x170] sm:$0xff] %vm301, %v621
  %740 = vst.msk [vmem:[%s692 + $0x178] sm:$0xff] %vm301, %v624
  %741 = vst.msk [vmem:[%s692 + $0x180] sm:$0xff] %vm301, %v629
  %742 = vst.msk [vmem:[%s692 + $0x188] sm:$0xff] %vm301, %v632
  %743 = vst.msk [vmem:[%s692 + $0x190] sm:$0xff] %vm301, %v637
  %744 = vst.msk [vmem:[%s692 + $0x198] sm:$0xff] %vm301, %v640
  %745 = vst.msk [vmem:[%s692 + $0x1a0] sm:$0xff] %vm301, %v645
  %746 = vst.msk [vmem:[%s692 + $0x1a8] sm:$0xff] %vm301, %v648
  %747 = vst.msk [vmem:[%s692 + $0x1b0] sm:$0xff] %vm301, %v653
  %748 = vst.msk [vmem:[%s692 + $0x1b8] sm:$0xff] %vm301, %v656
  %749 = vst.msk [vmem:[%s692 + $0x1c0] sm:$0xff] %vm301, %v661
  %750 = vst.msk [vmem:[%s692 + $0x1c8] sm:$0xff] %vm301, %v664
  %751 = vst.msk [vmem:[%s692 + $0x1d0] sm:$0xff] %vm301, %v669
  %752 = vst.msk [vmem:[%s692 + $0x1d8] sm:$0xff] %vm301, %v672
  %753 = vst.msk [vmem:[%s692 + $0x1e0] sm:$0xff] %vm301, %v677
  %754 = vst.msk [vmem:[%s692 + $0x1e8] sm:$0xff] %vm301, %v680
  %755 = vst.msk [vmem:[%s692 + $0x1f0] sm:$0xff] %vm301, %v685
  %756 = vst.msk [vmem:[%s692 + $0x1f8] sm:$0xff] %vm301, %v688
  %p757 = scmp.eq.s32.totalorder 0, 0
  // Predicated region
  $region10: #{_lambda_.14} parent=0 // pred_check
    %p758 = pneg %p757
  $region11: #{_lambda_.14} parent=0 // pred_check_branch
    %760 = sbr.rel (%p758) target = $region13
  $region12: #{_lambda_.14} parent=0 // pred_region
    %v761 = vld [vmem:[#allocation2] sm:$0xff]
    %v762 = vld [vmem:[#allocation2 + $0x8] sm:$0xff]
    %v763 = vld [vmem:[#allocation2 + $0x10] sm:$0xff]
    %v764 = vld [vmem:[#allocation2 + $0x18] sm:$0xff]
    %v765 = vld [vmem:[#allocation2 + $0x20] sm:$0xff]
    %v766 = vld [vmem:[#allocation2 + $0x28] sm:$0xff]
    %v767 = vld [vmem:[#allocation2 + $0x30] sm:$0xff]
    %v768 = vld [vmem:[#allocation2 + $0x38] sm:$0xff]
    %v769 = vld [vmem:[#allocation2 + $0x40] sm:$0xff]
    %v770 = vld [vmem:[#allocation2 + $0x48] sm:$0xff]
    %v771 = vld [vmem:[#allocation2 + $0x50] sm:$0xff]
    %v772 = vld [vmem:[#allocation2 + $0x58] sm:$0xff]
    %v773 = vld [vmem:[#allocation2 + $0x60] sm:$0xff]
    %v774 = vld [vmem:[#allocation2 + $0x68] sm:$0xff]
    %v775 = vld [vmem:[#allocation2 + $0x70] sm:$0xff]
    %v776 = vld [vmem:[#allocation2 + $0x78] sm:$0xff]
    %v777 = vld [vmem:[#allocation2 + $0x80] sm:$0xff]
    %v778 = vld [vmem:[#allocation2 + $0x88] sm:$0xff]
    %v779 = vld [vmem:[#allocation2 + $0x90] sm:$0xff]
    %v780 = vld [vmem:[#allocation2 + $0x98] sm:$0xff]
    %v781 = vld [vmem:[#allocation2 + $0xa0] sm:$0xff]
    %v782 = vld [vmem:[#allocation2 + $0xa8] sm:$0xff]
    %v783 = vld [vmem:[#allocation2 + $0xb0] sm:$0xff]
    %v784 = vld [vmem:[#allocation2 + $0xb8] sm:$0xff]
    %v785 = vld [vmem:[#allocation2 + $0xc0] sm:$0xff]
    %v786 = vld [vmem:[#allocation2 + $0xc8] sm:$0xff]
    %v787 = vld [vmem:[#allocation2 + $0xd0] sm:$0xff]
    %v788 = vld [vmem:[#allocation2 + $0xd8] sm:$0xff]
    %v789 = vld [vmem:[#allocation2 + $0xe0] sm:$0xff]
    %v790 = vld [vmem:[#allocation2 + $0xe8] sm:$0xff]
    %v791 = vld [vmem:[#allocation2 + $0xf0] sm:$0xff]
    %v792 = vld [vmem:[#allocation2 + $0xf8] sm:$0xff]
    %v793 = vld [vmem:[#allocation2 + $0x100] sm:$0xff]
    %v794 = vld [vmem:[#allocation2 + $0x108] sm:$0xff]
    %v795 = vld [vmem:[#allocation2 + $0x110] sm:$0xff]
    %v796 = vld [vmem:[#allocation2 + $0x118] sm:$0xff]
    %v797 = vld [vmem:[#allocation2 + $0x120] sm:$0xff]
    %v798 = vld [vmem:[#allocation2 + $0x128] sm:$0xff]
    %v799 = vld [vmem:[#allocation2 + $0x130] sm:$0xff]
    %v800 = vld [vmem:[#allocation2 + $0x138] sm:$0xff]
    %v801 = vld [vmem:[#allocation2 + $0x140] sm:$0xff]
    %v802 = vld [vmem:[#allocation2 + $0x148] sm:$0xff]
    %v803 = vld [vmem:[#allocation2 + $0x150] sm:$0xff]
    %v804 = vld [vmem:[#allocation2 + $0x158] sm:$0xff]
    %v805 = vld [vmem:[#allocation2 + $0x160] sm:$0xff]
    %v806 = vld [vmem:[#allocation2 + $0x168] sm:$0xff]
    %v807 = vld [vmem:[#allocation2 + $0x170] sm:$0xff]
    %v808 = vld [vmem:[#allocation2 + $0x178] sm:$0xff]
    %v809 = vld [vmem:[#allocation2 + $0x180] sm:$0xff]
    %v810 = vld [vmem:[#allocation2 + $0x188] sm:$0xff]
    %v811 = vld [vmem:[#allocation2 + $0x190] sm:$0xff]
    %v812 = vld [vmem:[#allocation2 + $0x198] sm:$0xff]
    %v813 = vld [vmem:[#allocation2 + $0x1a0] sm:$0xff]
    %v814 = vld [vmem:[#allocation2 + $0x1a8] sm:$0xff]
    %v815 = vld [vmem:[#allocation2 + $0x1b0] sm:$0xff]
    %v816 = vld [vmem:[#allocation2 + $0x1b8] sm:$0xff]
    %v817 = vld [vmem:[#allocation2 + $0x1c0] sm:$0xff]
    %v818 = vld [vmem:[#allocation2 + $0x1c8] sm:$0xff]
    %v819 = vld [vmem:[#allocation2 + $0x1d0] sm:$0xff]
    %v820 = vld [vmem:[#allocation2 + $0x1d8] sm:$0xff]
    %v821 = vld [vmem:[#allocation2 + $0x1e0] sm:$0xff]
    %v822 = vld [vmem:[#allocation2 + $0x1e8] sm:$0xff]
    %v823 = vld [vmem:[#allocation2 + $0x1f0] sm:$0xff]
    %v824 = vld [vmem:[#allocation2 + $0x1f8] sm:$0xff]
    %v825 = vsel %vm301, %v761, 0.0
    %v826 = vsel %vm301, %v762, 0.0
    %v827 = vadd.f32 %v825, %v826
    %v828 = vsel %vm301, %v763, 0.0
    %v829 = vadd.f32 %v827, %v828
    %v830 = vsel %vm301, %v764, 0.0
    %v831 = vadd.f32 %v829, %v830
    %v832 = vsel %vm301, %v765, 0.0
    %v833 = vadd.f32 %v831, %v832
    %v834 = vsel %vm301, %v766, 0.0
    %v835 = vadd.f32 %v833, %v834
    %v836 = vsel %vm301, %v767, 0.0
    %v837 = vadd.f32 %v835, %v836
    %v838 = vsel %vm301, %v768, 0.0
    %v839 = vadd.f32 %v837, %v838
    %v840 = vsel %vm301, %v769, 0.0
    %v841 = vadd.f32 %v839, %v840
    %v842 = vsel %vm301, %v770, 0.0
    %v843 = vadd.f32 %v841, %v842
    %v844 = vsel %vm301, %v771, 0.0
    %v845 = vadd.f32 %v843, %v844
    %v846 = vsel %vm301, %v772, 0.0
    %v847 = vadd.f32 %v845, %v846
    %v848 = vsel %vm301, %v773, 0.0
    %v849 = vadd.f32 %v847, %v848
    %v850 = vsel %vm301, %v774, 0.0
    %v851 = vadd.f32 %v849, %v850
    %v852 = vsel %vm301, %v775, 0.0
    %v853 = vadd.f32 %v851, %v852
    %v854 = vsel %vm301, %v776, 0.0
    %v855 = vadd.f32 %v853, %v854
    %v856 = vsel %vm301, %v777, 0.0
    %v857 = vadd.f32 %v855, %v856
    %v858 = vsel %vm301, %v778, 0.0
    %v859 = vadd.f32 %v857, %v858
    %v860 = vsel %vm301, %v779, 0.0
    %v861 = vadd.f32 %v859, %v860
    %v862 = vsel %vm301, %v780, 0.0
    %v863 = vadd.f32 %v861, %v862
    %v864 = vsel %vm301, %v781, 0.0
    %v865 = vadd.f32 %v863, %v864
    %v866 = vsel %vm301, %v782, 0.0
    %v867 = vadd.f32 %v865, %v866
    %v868 = vsel %vm301, %v783, 0.0
    %v869 = vadd.f32 %v867, %v868
    %v870 = vsel %vm301, %v784, 0.0
    %v871 = vadd.f32 %v869, %v870
    %v872 = vsel %vm301, %v785, 0.0
    %v873 = vadd.f32 %v871, %v872
    %v874 = vsel %vm301, %v786, 0.0
    %v875 = vadd.f32 %v873, %v874
    %v876 = vsel %vm301, %v787, 0.0
    %v877 = vadd.f32 %v875, %v876
    %v878 = vsel %vm301, %v788, 0.0
    %v879 = vadd.f32 %v877, %v878
    %v880 = vsel %vm301, %v789, 0.0
    %v881 = vadd.f32 %v879, %v880
    %v882 = vsel %vm301, %v790, 0.0
    %v883 = vadd.f32 %v881, %v882
    %v884 = vsel %vm301, %v791, 0.0
    %v885 = vadd.f32 %v883, %v884
    %v886 = vsel %vm301, %v792, 0.0
    %v887 = vadd.f32 %v885, %v886
    %v888 = vsel %vm301, %v793, 0.0
    %v889 = vadd.f32 %v887, %v888
    %v890 = vsel %vm301, %v794, 0.0
    %v891 = vadd.f32 %v889, %v890
    %v892 = vsel %vm301, %v795, 0.0
    %v893 = vadd.f32 %v891, %v892
    %v894 = vsel %vm301, %v796, 0.0
    %v895 = vadd.f32 %v893, %v894
    %v896 = vsel %vm301, %v797, 0.0
    %v897 = vadd.f32 %v895, %v896
    %v898 = vsel %vm301, %v798, 0.0
    %v899 = vadd.f32 %v897, %v898
    %v900 = vsel %vm301, %v799, 0.0
    %v901 = vadd.f32 %v899, %v900
    %v902 = vsel %vm301, %v800, 0.0
    %v903 = vadd.f32 %v901, %v902
    %v904 = vsel %vm301, %v801, 0.0
    %v905 = vadd.f32 %v903, %v904
    %v906 = vsel %vm301, %v802, 0.0
    %v907 = vadd.f32 %v905, %v906
    %v908 = vsel %vm301, %v803, 0.0
    %v909 = vadd.f32 %v907, %v908
    %v910 = vsel %vm301, %v804, 0.0
    %v911 = vadd.f32 %v909, %v910
    %v912 = vsel %vm301, %v805, 0.0
    %v913 = vadd.f32 %v911, %v912
    %v914 = vsel %vm301, %v806, 0.0
    %v915 = vadd.f32 %v913, %v914
    %v916 = vsel %vm301, %v807, 0.0
    %v917 = vadd.f32 %v915, %v916
    %v918 = vsel %vm301, %v808, 0.0
    %v919 = vadd.f32 %v917, %v918
    %v920 = vsel %vm301, %v809, 0.0
    %v921 = vadd.f32 %v919, %v920
    %v922 = vsel %vm301, %v810, 0.0
    %v923 = vadd.f32 %v921, %v922
    %v924 = vsel %vm301, %v811, 0.0
    %v925 = vadd.f32 %v923, %v924
    %v926 = vsel %vm301, %v812, 0.0
    %v927 = vadd.f32 %v925, %v926
    %v928 = vsel %vm301, %v813, 0.0
    %v929 = vadd.f32 %v927, %v928
    %v930 = vsel %vm301, %v814, 0.0
    %v931 = vadd.f32 %v929, %v930
    %v932 = vsel %vm301, %v815, 0.0
    %v933 = vadd.f32 %v931, %v932
    %v934 = vsel %vm301, %v816, 0.0
    %v935 = vadd.f32 %v933, %v934
    %v936 = vsel %vm301, %v817, 0.0
    %v937 = vadd.f32 %v935, %v936
    %v938 = vsel %vm301, %v818, 0.0
    %v939 = vadd.f32 %v937, %v938
    %v940 = vsel %vm301, %v819, 0.0
    %v941 = vadd.f32 %v939, %v940
    %v942 = vsel %vm301, %v820, 0.0
    %v943 = vadd.f32 %v941, %v942
    %v944 = vsel %vm301, %v821, 0.0
    %v945 = vadd.f32 %v943, %v944
    %v946 = vsel %vm301, %v822, 0.0
    %v947 = vadd.f32 %v945, %v946
    %v948 = vsel %vm301, %v823, 0.0
    %v949 = vadd.f32 %v947, %v948
    %v950 = vsel %vm301, %v824, 0.0
    %v951 = vadd.f32 %v949, %v950
    %v952 = vrot.slane %v951, 4
    %v953 = vadd.f32 %v951, %v952
    %v954 = vrot.slane %v953, 2
    %v955 = vadd.f32 %v953, %v954
    %v956 = vrot.slane %v955, 1
    %v957 = vadd.f32 %v955, %v956
    %v958 = vrcp.pop 512.0
    %v959 = vmul.f32 %v957, %v958
    %v960 = vsub.f32 %v761, %v959
    %v961 = vsub.f32 %v762, %v959
    %v962 = vsub.f32 %v763, %v959
    %v963 = vsub.f32 %v764, %v959
    %v964 = vsub.f32 %v765, %v959
    %v965 = vsub.f32 %v766, %v959
    %v966 = vsub.f32 %v767, %v959
    %v967 = vsub.f32 %v768, %v959
    %v968 = vsub.f32 %v769, %v959
    %v969 = vsub.f32 %v770, %v959
    %v970 = vsub.f32 %v771, %v959
    %v971 = vsub.f32 %v772, %v959
    %v972 = vsub.f32 %v773, %v959
    %v973 = vsub.f32 %v774, %v959
    %v974 = vsub.f32 %v775, %v959
    %v975 = vsub.f32 %v776, %v959
    %v976 = vsub.f32 %v777, %v959
    %v977 = vsub.f32 %v778, %v959
    %v978 = vsub.f32 %v779, %v959
    %v979 = vsub.f32 %v780, %v959
    %v980 = vsub.f32 %v781, %v959
    %v981 = vsub.f32 %v782, %v959
    %v982 = vsub.f32 %v783, %v959
    %v983 = vsub.f32 %v784, %v959
    %v984 = vsub.f32 %v785, %v959
    %v985 = vsub.f32 %v786, %v959
    %v986 = vsub.f32 %v787, %v959
    %v987 = vsub.f32 %v788, %v959
    %v988 = vsub.f32 %v789, %v959
    %v989 = vsub.f32 %v790, %v959
    %v990 = vsub.f32 %v791, %v959
    %v991 = vsub.f32 %v792, %v959
    %v992 = vsub.f32 %v793, %v959
    %v993 = vsub.f32 %v794, %v959
    %v994 = vsub.f32 %v795, %v959
    %v995 = vsub.f32 %v796, %v959
    %v996 = vsub.f32 %v797, %v959
    %v997 = vsub.f32 %v798, %v959
    %v998 = vsub.f32 %v799, %v959
    %v999 = vsub.f32 %v800, %v959
    %v1000 = vsub.f32 %v801, %v959
    %v1001 = vsub.f32 %v802, %v959
    %v1002 = vsub.f32 %v803, %v959
    %v1003 = vsub.f32 %v804, %v959
    %v1004 = vsub.f32 %v805, %v959
    %v1005 = vsub.f32 %v806, %v959
    %v1006 = vsub.f32 %v807, %v959
    %v1007 = vsub.f32 %v808, %v959
    %v1008 = vsub.f32 %v809, %v959
    %v1009 = vsub.f32 %v810, %v959
    %v1010 = vsub.f32 %v811, %v959
    %v1011 = vsub.f32 %v812, %v959
    %v1012 = vsub.f32 %v813, %v959
    %v1013 = vsub.f32 %v814, %v959
    %v1014 = vsub.f32 %v815, %v959
    %v1015 = vsub.f32 %v816, %v959
    %v1016 = vsub.f32 %v817, %v959
    %v1017 = vsub.f32 %v818, %v959
    %v1018 = vsub.f32 %v819, %v959
    %v1019 = vsub.f32 %v820, %v959
    %v1020 = vsub.f32 %v821, %v959
    %v1021 = vsub.f32 %v822, %v959
    %v1022 = vsub.f32 %v823, %v959
    %v1023 = vsub.f32 %v824, %v959
    %v1024 = vmul.f32 %v960, %v960
    %v1025 = vmul.f32 %v961, %v961
    %v1026 = vmul.f32 %v962, %v962
    %v1027 = vmul.f32 %v963, %v963
    %v1028 = vmul.f32 %v964, %v964
    %v1029 = vmul.f32 %v965, %v965
    %v1030 = vmul.f32 %v966, %v966
    %v1031 = vmul.f32 %v967, %v967
    %v1032 = vmul.f32 %v968, %v968
    %v1033 = vmul.f32 %v969, %v969
    %v1034 = vmul.f32 %v970, %v970
    %v1035 = vmul.f32 %v971, %v971
    %v1036 = vmul.f32 %v972, %v972
    %v1037 = vmul.f32 %v973, %v973
    %v1038 = vmul.f32 %v974, %v974
    %v1039 = vmul.f32 %v975, %v975
    %v1040 = vmul.f32 %v976, %v976
    %v1041 = vmul.f32 %v977, %v977
    %v1042 = vmul.f32 %v978, %v978
    %v1043 = vmul.f32 %v979, %v979
    %v1044 = vmul.f32 %v980, %v980
    %v1045 = vmul.f32 %v981, %v981
    %v1046 = vmul.f32 %v982, %v982
    %v1047 = vmul.f32 %v983, %v983
    %v1048 = vmul.f32 %v984, %v984
    %v1049 = vmul.f32 %v985, %v985
    %v1050 = vmul.f32 %v986, %v986
    %v1051 = vmul.f32 %v987, %v987
    %v1052 = vmul.f32 %v988, %v988
    %v1053 = vmul.f32 %v989, %v989
    %v1054 = vmul.f32 %v990, %v990
    %v1055 = vmul.f32 %v991, %v991
    %v1056 = vmul.f32 %v992, %v992
    %v1057 = vmul.f32 %v993, %v993
    %v1058 = vmul.f32 %v994, %v994
    %v1059 = vmul.f32 %v995, %v995
    %v1060 = vmul.f32 %v996, %v996
    %v1061 = vmul.f32 %v997, %v997
    %v1062 = vmul.f32 %v998, %v998
    %v1063 = vmul.f32 %v999, %v999
    %v1064 = vmul.f32 %v1000, %v1000
    %v1065 = vmul.f32 %v1001, %v1001
    %v1066 = vmul.f32 %v1002, %v1002
    %v1067 = vmul.f32 %v1003, %v1003
    %v1068 = vmul.f32 %v1004, %v1004
    %v1069 = vmul.f32 %v1005, %v1005
    %v1070 = vmul.f32 %v1006, %v1006
    %v1071 = vmul.f32 %v1007, %v1007
    %v1072 = vmul.f32 %v1008, %v1008
    %v1073 = vmul.f32 %v1009, %v1009
    %v1074 = vmul.f32 %v1010, %v1010
    %v1075 = vmul.f32 %v1011, %v1011
    %v1076 = vmul.f32 %v1012, %v1012
    %v1077 = vmul.f32 %v1013, %v1013
    %v1078 = vmul.f32 %v1014, %v1014
    %v1079 = vmul.f32 %v1015, %v1015
    %v1080 = vmul.f32 %v1016, %v1016
    %v1081 = vmul.f32 %v1017, %v1017
    %v1082 = vmul.f32 %v1018, %v1018
    %v1083 = vmul.f32 %v1019, %v1019
    %v1084 = vmul.f32 %v1020, %v1020
    %v1085 = vmul.f32 %v1021, %v1021
    %v1086 = vmul.f32 %v1022, %v1022
    %v1087 = vmul.f32 %v1023, %v1023
    %v1088 = vsel %vm301, %v1024, 0.0
    %v1089 = vsel %vm301, %v1025, 0.0
    %v1090 = vadd.f32 %v1088, %v1089
    %v1091 = vsel %vm301, %v1026, 0.0
    %v1092 = vadd.f32 %v1090, %v1091
    %v1093 = vsel %vm301, %v1027, 0.0
    %v1094 = vadd.f32 %v1092, %v1093
    %v1095 = vsel %vm301, %v1028, 0.0
    %v1096 = vadd.f32 %v1094, %v1095
    %v1097 = vsel %vm301, %v1029, 0.0
    %v1098 = vadd.f32 %v1096, %v1097
    %v1099 = vsel %vm301, %v1030, 0.0
    %v1100 = vadd.f32 %v1098, %v1099
    %v1101 = vsel %vm301, %v1031, 0.0
    %v1102 = vadd.f32 %v1100, %v1101
    %v1103 = vsel %vm301, %v1032, 0.0
    %v1104 = vadd.f32 %v1102, %v1103
    %v1105 = vsel %vm301, %v1033, 0.0
    %v1106 = vadd.f32 %v1104, %v1105
    %v1107 = vsel %vm301, %v1034, 0.0
    %v1108 = vadd.f32 %v1106, %v1107
    %v1109 = vsel %vm301, %v1035, 0.0
    %v1110 = vadd.f32 %v1108, %v1109
    %v1111 = vsel %vm301, %v1036, 0.0
    %v1112 = vadd.f32 %v1110, %v1111
    %v1113 = vsel %vm301, %v1037, 0.0
    %v1114 = vadd.f32 %v1112, %v1113
    %v1115 = vsel %vm301, %v1038, 0.0
    %v1116 = vadd.f32 %v1114, %v1115
    %v1117 = vsel %vm301, %v1039, 0.0
    %v1118 = vadd.f32 %v1116, %v1117
    %v1119 = vsel %vm301, %v1040, 0.0
    %v1120 = vadd.f32 %v1118, %v1119
    %v1121 = vsel %vm301, %v1041, 0.0
    %v1122 = vadd.f32 %v1120, %v1121
    %v1123 = vsel %vm301, %v1042, 0.0
    %v1124 = vadd.f32 %v1122, %v1123
    %v1125 = vsel %vm301, %v1043, 0.0
    %v1126 = vadd.f32 %v1124, %v1125
    %v1127 = vsel %vm301, %v1044, 0.0
    %v1128 = vadd.f32 %v1126, %v1127
    %v1129 = vsel %vm301, %v1045, 0.0
    %v1130 = vadd.f32 %v1128, %v1129
    %v1131 = vsel %vm301, %v1046, 0.0
    %v1132 = vadd.f32 %v1130, %v1131
    %v1133 = vsel %vm301, %v1047, 0.0
    %v1134 = vadd.f32 %v1132, %v1133
    %v1135 = vsel %vm301, %v1048, 0.0
    %v1136 = vadd.f32 %v1134, %v1135
    %v1137 = vsel %vm301, %v1049, 0.0
    %v1138 = vadd.f32 %v1136, %v1137
    %v1139 = vsel %vm301, %v1050, 0.0
    %v1140 = vadd.f32 %v1138, %v1139
    %v1141 = vsel %vm301, %v1051, 0.0
    %v1142 = vadd.f32 %v1140, %v1141
    %v1143 = vsel %vm301, %v1052, 0.0
    %v1144 = vadd.f32 %v1142, %v1143
    %v1145 = vsel %vm301, %v1053, 0.0
    %v1146 = vadd.f32 %v1144, %v1145
    %v1147 = vsel %vm301, %v1054, 0.0
    %v1148 = vadd.f32 %v1146, %v1147
    %v1149 = vsel %vm301, %v1055, 0.0
    %v1150 = vadd.f32 %v1148, %v1149
    %v1151 = vsel %vm301, %v1056, 0.0
    %v1152 = vadd.f32 %v1150, %v1151
    %v1153 = vsel %vm301, %v1057, 0.0
    %v1154 = vadd.f32 %v1152, %v1153
    %v1155 = vsel %vm301, %v1058, 0.0
    %v1156 = vadd.f32 %v1154, %v1155
    %v1157 = vsel %vm301, %v1059, 0.0
    %v1158 = vadd.f32 %v1156, %v1157
    %v1159 = vsel %vm301, %v1060, 0.0
    %v1160 = vadd.f32 %v1158, %v1159
    %v1161 = vsel %vm301, %v1061, 0.0
    %v1162 = vadd.f32 %v1160, %v1161
    %v1163 = vsel %vm301, %v1062, 0.0
    %v1164 = vadd.f32 %v1162, %v1163
    %v1165 = vsel %vm301, %v1063, 0.0
    %v1166 = vadd.f32 %v1164, %v1165
    %v1167 = vsel %vm301, %v1064, 0.0
    %v1168 = vadd.f32 %v1166, %v1167
    %v1169 = vsel %vm301, %v1065, 0.0
    %v1170 = vadd.f32 %v1168, %v1169
    %v1171 = vsel %vm301, %v1066, 0.0
    %v1172 = vadd.f32 %v1170, %v1171
    %v1173 = vsel %vm301, %v1067, 0.0
    %v1174 = vadd.f32 %v1172, %v1173
    %v1175 = vsel %vm301, %v1068, 0.0
    %v1176 = vadd.f32 %v1174, %v1175
    %v1177 = vsel %vm301, %v1069, 0.0
    %v1178 = vadd.f32 %v1176, %v1177
    %v1179 = vsel %vm301, %v1070, 0.0
    %v1180 = vadd.f32 %v1178, %v1179
    %v1181 = vsel %vm301, %v1071, 0.0
    %v1182 = vadd.f32 %v1180, %v1181
    %v1183 = vsel %vm301, %v1072, 0.0
    %v1184 = vadd.f32 %v1182, %v1183
    %v1185 = vsel %vm301, %v1073, 0.0
    %v1186 = vadd.f32 %v1184, %v1185
    %v1187 = vsel %vm301, %v1074, 0.0
    %v1188 = vadd.f32 %v1186, %v1187
    %v1189 = vsel %vm301, %v1075, 0.0
    %v1190 = vadd.f32 %v1188, %v1189
    %v1191 = vsel %vm301, %v1076, 0.0
    %v1192 = vadd.f32 %v1190, %v1191
    %v1193 = vsel %vm301, %v1077, 0.0
    %v1194 = vadd.f32 %v1192, %v1193
    %v1195 = vsel %vm301, %v1078, 0.0
    %v1196 = vadd.f32 %v1194, %v1195
    %v1197 = vsel %vm301, %v1079, 0.0
    %v1198 = vadd.f32 %v1196, %v1197
    %v1199 = vsel %vm301, %v1080, 0.0
    %v1200 = vadd.f32 %v1198, %v1199
    %v1201 = vsel %vm301, %v1081, 0.0
    %v1202 = vadd.f32 %v1200, %v1201
    %v1203 = vsel %vm301, %v1082, 0.0
    %v1204 = vadd.f32 %v1202, %v1203
    %v1205 = vsel %vm301, %v1083, 0.0
    %v1206 = vadd.f32 %v1204, %v1205
    %v1207 = vsel %vm301, %v1084, 0.0
    %v1208 = vadd.f32 %v1206, %v1207
    %v1209 = vsel %vm301, %v1085, 0.0
    %v1210 = vadd.f32 %v1208, %v1209
    %v1211 = vsel %vm301, %v1086, 0.0
    %v1212 = vadd.f32 %v1210, %v1211
    %v1213 = vsel %vm301, %v1087, 0.0
    %v1214 = vadd.f32 %v1212, %v1213
    %v1215 = vrot.slane %v1214, 4
    %v1216 = vadd.f32 %v1214, %v1215
    %v1217 = vrot.slane %v1216, 2
    %v1218 = vadd.f32 %v1216, %v1217
    %v1219 = vrot.slane %v1218, 1
    %v1220 = vadd.f32 %v1218, %v1219
    %v1221 = vmul.f32 %v1220, %v958
    %v1222 = vadd.f32 %v1221, 1e-05
    %v1223 = vrsqrt.pop %v1222
    %v1224 = vmul.f32 %v960, %v1223
    %v1225 = vmul.f32 %v961, %v1223
    %v1226 = vmul.f32 %v962, %v1223
    %v1227 = vmul.f32 %v963, %v1223
    %v1228 = vmul.f32 %v964, %v1223
    %v1229 = vmul.f32 %v965, %v1223
    %v1230 = vmul.f32 %v966, %v1223
    %v1231 = vmul.f32 %v967, %v1223
    %v1232 = vmul.f32 %v968, %v1223
    %v1233 = vmul.f32 %v969, %v1223
    %v1234 = vmul.f32 %v970, %v1223
    %v1235 = vmul.f32 %v971, %v1223
    %v1236 = vmul.f32 %v972, %v1223
    %v1237 = vmul.f32 %v973, %v1223
    %v1238 = vmul.f32 %v974, %v1223
    %v1239 = vmul.f32 %v975, %v1223
    %v1240 = vmul.f32 %v976, %v1223
    %v1241 = vmul.f32 %v977, %v1223
    %v1242 = vmul.f32 %v978, %v1223
    %v1243 = vmul.f32 %v979, %v1223
    %v1244 = vmul.f32 %v980, %v1223
    %v1245 = vmul.f32 %v981, %v1223
    %v1246 = vmul.f32 %v982, %v1223
    %v1247 = vmul.f32 %v983, %v1223
    %v1248 = vmul.f32 %v984, %v1223
    %v1249 = vmul.f32 %v985, %v1223
    %v1250 = vmul.f32 %v986, %v1223
    %v1251 = vmul.f32 %v987, %v1223
    %v1252 = vmul.f32 %v988, %v1223
    %v1253 = vmul.f32 %v989, %v1223
    %v1254 = vmul.f32 %v990, %v1223
    %v1255 = vmul.f32 %v991, %v1223
    %v1256 = vmul.f32 %v992, %v1223
    %v1257 = vmul.f32 %v993, %v1223
    %v1258 = vmul.f32 %v994, %v1223
    %v1259 = vmul.f32 %v995, %v1223
    %v1260 = vmul.f32 %v996, %v1223
    %v1261 = vmul.f32 %v997, %v1223
    %v1262 = vmul.f32 %v998, %v1223
    %v1263 = vmul.f32 %v999, %v1223
    %v1264 = vmul.f32 %v1000, %v1223
    %v1265 = vmul.f32 %v1001, %v1223
    %v1266 = vmul.f32 %v1002, %v1223
    %v1267 = vmul.f32 %v1003, %v1223
    %v1268 = vmul.f32 %v1004, %v1223
    %v1269 = vmul.f32 %v1005, %v1223
    %v1270 = vmul.f32 %v1006, %v1223
    %v1271 = vmul.f32 %v1007, %v1223
    %v1272 = vmul.f32 %v1008, %v1223
    %v1273 = vmul.f32 %v1009, %v1223
    %v1274 = vmul.f32 %v1010, %v1223
    %v1275 = vmul.f32 %v1011, %v1223
    %v1276 = vmul.f32 %v1012, %v1223
    %v1277 = vmul.f32 %v1013, %v1223
    %v1278 = vmul.f32 %v1014, %v1223
    %v1279 = vmul.f32 %v1015, %v1223
    %v1280 = vmul.f32 %v1016, %v1223
    %v1281 = vmul.f32 %v1017, %v1223
    %v1282 = vmul.f32 %v1018, %v1223
    %v1283 = vmul.f32 %v1019, %v1223
    %v1284 = vmul.f32 %v1020, %v1223
    %v1285 = vmul.f32 %v1021, %v1223
    %v1286 = vmul.f32 %v1022, %v1223
    %v1287 = vmul.f32 %v1023, %v1223
    %v1288 = vpack.c.bf16 %v1225, %v1224
    %v1289 = vpack.c.bf16 %v1227, %v1226
    %v1290 = vpack.c.bf16 %v1229, %v1228
    %v1291 = vpack.c.bf16 %v1231, %v1230
    %v1292 = vpack.c.bf16 %v1233, %v1232
    %v1293 = vpack.c.bf16 %v1235, %v1234
    %v1294 = vpack.c.bf16 %v1237, %v1236
    %v1295 = vpack.c.bf16 %v1239, %v1238
    %v1296 = vpack.c.bf16 %v1241, %v1240
    %v1297 = vpack.c.bf16 %v1243, %v1242
    %v1298 = vpack.c.bf16 %v1245, %v1244
    %v1299 = vpack.c.bf16 %v1247, %v1246
    %v1300 = vpack.c.bf16 %v1249, %v1248
    %v1301 = vpack.c.bf16 %v1251, %v1250
    %v1302 = vpack.c.bf16 %v1253, %v1252
    %v1303 = vpack.c.bf16 %v1255, %v1254
    %v1304 = vpack.c.bf16 %v1257, %v1256
    %v1305 = vpack.c.bf16 %v1259, %v1258
    %v1306 = vpack.c.bf16 %v1261, %v1260
    %v1307 = vpack.c.bf16 %v1263, %v1262
    %v1308 = vpack.c.bf16 %v1265, %v1264
    %v1309 = vpack.c.bf16 %v1267, %v1266
    %v1310 = vpack.c.bf16 %v1269, %v1268
    %v1311 = vpack.c.bf16 %v1271, %v1270
    %v1312 = vpack.c.bf16 %v1273, %v1272
    %v1313 = vpack.c.bf16 %v1275, %v1274
    %v1314 = vpack.c.bf16 %v1277, %v1276
    %v1315 = vpack.c.bf16 %v1279, %v1278
    %v1316 = vpack.c.bf16 %v1281, %v1280
    %v1317 = vpack.c.bf16 %v1283, %v1282
    %v1318 = vpack.c.bf16 %v1285, %v1284
    %v1319 = vpack.c.bf16 %v1287, %v1286
    %v1352 = vunpack.c.l.b16 %v1288
    %v1353 = vunpack.c.h.b16 %v1288
    %v1354 = vunpack.c.l.b16 %v1289
    %v1355 = vunpack.c.h.b16 %v1289
    %v1356 = vunpack.c.l.b16 %v1290
    %v1357 = vunpack.c.h.b16 %v1290
    %v1358 = vunpack.c.l.b16 %v1291
    %v1359 = vunpack.c.h.b16 %v1291
    %v1360 = vunpack.c.l.b16 %v1292
    %v1361 = vunpack.c.h.b16 %v1292
    %v1362 = vunpack.c.l.b16 %v1293
    %v1363 = vunpack.c.h.b16 %v1293
    %v1364 = vunpack.c.l.b16 %v1294
    %v1365 = vunpack.c.h.b16 %v1294
    %v1366 = vunpack.c.l.b16 %v1295
    %v1367 = vunpack.c.h.b16 %v1295
    %v1368 = vunpack.c.l.b16 %v1296
    %v1369 = vunpack.c.h.b16 %v1296
    %v1370 = vunpack.c.l.b16 %v1297
    %v1371 = vunpack.c.h.b16 %v1297
    %v1372 = vunpack.c.l.b16 %v1298
    %v1373 = vunpack.c.h.b16 %v1298
    %v1374 = vunpack.c.l.b16 %v1299
    %v1375 = vunpack.c.h.b16 %v1299
    %v1376 = vunpack.c.l.b16 %v1300
    %v1377 = vunpack.c.h.b16 %v1300
    %v1378 = vunpack.c.l.b16 %v1301
    %v1379 = vunpack.c.h.b16 %v1301
    %v1380 = vunpack.c.l.b16 %v1302
    %v1381 = vunpack.c.h.b16 %v1302
    %v1382 = vunpack.c.l.b16 %v1303
    %v1383 = vunpack.c.h.b16 %v1303
    %v1384 = vunpack.c.l.b16 %v1304
    %v1385 = vunpack.c.h.b16 %v1304
    %v1386 = vunpack.c.l.b16 %v1305
    %v1387 = vunpack.c.h.b16 %v1305
    %v1388 = vunpack.c.l.b16 %v1306
    %v1389 = vunpack.c.h.b16 %v1306
    %v1390 = vunpack.c.l.b16 %v1307
    %v1391 = vunpack.c.h.b16 %v1307
    %v1392 = vunpack.c.l.b16 %v1308
    %v1393 = vunpack.c.h.b16 %v1308
    %v1394 = vunpack.c.l.b16 %v1309
    %v1395 = vunpack.c.h.b16 %v1309
    %v1396 = vunpack.c.l.b16 %v1310
    %v1397 = vunpack.c.h.b16 %v1310
    %v1398 = vunpack.c.l.b16 %v1311
    %v1399 = vunpack.c.h.b16 %v1311
    %v1400 = vunpack.c.l.b16 %v1312
    %v1401 = vunpack.c.h.b16 %v1312
    %v1402 = vunpack.c.l.b16 %v1313
    %v1403 = vunpack.c.h.b16 %v1313
    %v1404 = vunpack.c.l.b16 %v1314
    %v1405 = vunpack.c.h.b16 %v1314
    %v1406 = vunpack.c.l.b16 %v1315
    %v1407 = vunpack.c.h.b16 %v1315
    %v1408 = vunpack.c.l.b16 %v1316
    %v1409 = vunpack.c.h.b16 %v1316
    %v1410 = vunpack.c.l.b16 %v1317
    %v1411 = vunpack.c.h.b16 %v1317
    %v1412 = vunpack.c.l.b16 %v1318
    %v1413 = vunpack.c.h.b16 %v1318
    %v1414 = vunpack.c.l.b16 %v1319
    %v1415 = vunpack.c.h.b16 %v1319
    %v1416 = vpack.c.b16 %v1352, %v1352
    %v1417 = vpack.c.b16 %v1353, %v1353
    %v1418 = vpack.c.b16 %v1354, %v1354
    %v1419 = vpack.c.b16 %v1355, %v1355
    %v1420 = vpack.c.b16 %v1356, %v1356
    %v1421 = vpack.c.b16 %v1357, %v1357
    %v1422 = vpack.c.b16 %v1358, %v1358
    %v1423 = vpack.c.b16 %v1359, %v1359
    %v1424 = vpack.c.b16 %v1360, %v1360
    %v1425 = vpack.c.b16 %v1361, %v1361
    %v1426 = vpack.c.b16 %v1362, %v1362
    %v1427 = vpack.c.b16 %v1363, %v1363
    %v1428 = vpack.c.b16 %v1364, %v1364
    %v1429 = vpack.c.b16 %v1365, %v1365
    %v1430 = vpack.c.b16 %v1366, %v1366
    %v1431 = vpack.c.b16 %v1367, %v1367
    %v1432 = vpack.c.b16 %v1368, %v1368
    %v1433 = vpack.c.b16 %v1369, %v1369
    %v1434 = vpack.c.b16 %v1370, %v1370
    %v1435 = vpack.c.b16 %v1371, %v1371
    %v1436 = vpack.c.b16 %v1372, %v1372
    %v1437 = vpack.c.b16 %v1373, %v1373
    %v1438 = vpack.c.b16 %v1374, %v1374
    %v1439 = vpack.c.b16 %v1375, %v1375
    %v1440 = vpack.c.b16 %v1376, %v1376
    %v1441 = vpack.c.b16 %v1377, %v1377
    %v1442 = vpack.c.b16 %v1378, %v1378
    %v1443 = vpack.c.b16 %v1379, %v1379
    %v1444 = vpack.c.b16 %v1380, %v1380
    %v1445 = vpack.c.b16 %v1381, %v1381
    %v1446 = vpack.c.b16 %v1382, %v1382
    %v1447 = vpack.c.b16 %v1383, %v1383
    %v1448 = vpack.c.b16 %v1384, %v1384
    %v1449 = vpack.c.b16 %v1385, %v1385
    %v1450 = vpack.c.b16 %v1386, %v1386
    %v1451 = vpack.c.b16 %v1387, %v1387
    %v1452 = vpack.c.b16 %v1388, %v1388
    %v1453 = vpack.c.b16 %v1389, %v1389
    %v1454 = vpack.c.b16 %v1390, %v1390
    %v1455 = vpack.c.b16 %v1391, %v1391
    %v1456 = vpack.c.b16 %v1392, %v1392
    %v1457 = vpack.c.b16 %v1393, %v1393
    %v1458 = vpack.c.b16 %v1394, %v1394
    %v1459 = vpack.c.b16 %v1395, %v1395
    %v1460 = vpack.c.b16 %v1396, %v1396
    %v1461 = vpack.c.b16 %v1397, %v1397
    %v1462 = vpack.c.b16 %v1398, %v1398
    %v1463 = vpack.c.b16 %v1399, %v1399
    %v1464 = vpack.c.b16 %v1400, %v1400
    %v1465 = vpack.c.b16 %v1401, %v1401
    %v1466 = vpack.c.b16 %v1402, %v1402
    %v1467 = vpack.c.b16 %v1403, %v1403
    %v1468 = vpack.c.b16 %v1404, %v1404
    %v1469 = vpack.c.b16 %v1405, %v1405
    %v1470 = vpack.c.b16 %v1406, %v1406
    %v1471 = vpack.c.b16 %v1407, %v1407
    %v1472 = vpack.c.b16 %v1408, %v1408
    %v1473 = vpack.c.b16 %v1409, %v1409
    %v1474 = vpack.c.b16 %v1410, %v1410
    %v1475 = vpack.c.b16 %v1411, %v1411
    %v1476 = vpack.c.b16 %v1412, %v1412
    %v1477 = vpack.c.b16 %v1413, %v1413
    %v1478 = vpack.c.b16 %v1414, %v1414
    %v1479 = vpack.c.b16 %v1415, %v1415
    %vm1544 = vcmask 60416
    %1545 = vst.msk [vmem:[%s2] sm:$0xf] %vm1544, %v1416
    %1546 = vst.msk [vmem:[%s2 + $0x4] sm:$0xf] %vm1544, %v1417
    %1547 = vst.msk [vmem:[%s2 + $0x8] sm:$0xf] %vm1544, %v1418
    %1548 = vst.msk [vmem:[%s2 + $0xc] sm:$0xf] %vm1544, %v1419
    %1549 = vst.msk [vmem:[%s2 + $0x10] sm:$0xf] %vm1544, %v1420
    %1550 = vst.msk [vmem:[%s2 + $0x14] sm:$0xf] %vm1544, %v1421
    %1551 = vst.msk [vmem:[%s2 + $0x18] sm:$0xf] %vm1544, %v1422
    %1552 = vst.msk [vmem:[%s2 + $0x1c] sm:$0xf] %vm1544, %v1423
    %1553 = vst.msk [vmem:[%s2 + $0x20] sm:$0xf] %vm1544, %v1424
    %1554 = vst.msk [vmem:[%s2 + $0x24] sm:$0xf] %vm1544, %v1425
    %1555 = vst.msk [vmem:[%s2 + $0x28] sm:$0xf] %vm1544, %v1426
    %1556 = vst.msk [vmem:[%s2 + $0x2c] sm:$0xf] %vm1544, %v1427
    %1557 = vst.msk [vmem:[%s2 + $0x30] sm:$0xf] %vm1544, %v1428
    %1558 = vst.msk [vmem:[%s2 + $0x34] sm:$0xf] %vm1544, %v1429
    %1559 = vst.msk [vmem:[%s2 + $0x38] sm:$0xf] %vm1544, %v1430
    %1560 = vst.msk [vmem:[%s2 + $0x3c] sm:$0xf] %vm1544, %v1431
    %1561 = vst.msk [vmem:[%s2 + $0x40] sm:$0xf] %vm1544, %v1432
    %1562 = vst.msk [vmem:[%s2 + $0x44] sm:$0xf] %vm1544, %v1433
    %1563 = vst.msk [vmem:[%s2 + $0x48] sm:$0xf] %vm1544, %v1434
    %1564 = vst.msk [vmem:[%s2 + $0x4c] sm:$0xf] %vm1544, %v1435
    %1565 = vst.msk [vmem:[%s2 + $0x50] sm:$0xf] %vm1544, %v1436
    %1566 = vst.msk [vmem:[%s2 + $0x54] sm:$0xf] %vm1544, %v1437
    %1567 = vst.msk [vmem:[%s2 + $0x58] sm:$0xf] %vm1544, %v1438
    %1568 = vst.msk [vmem:[%s2 + $0x5c] sm:$0xf] %vm1544, %v1439
    %1569 = vst.msk [vmem:[%s2 + $0x60] sm:$0xf] %vm1544, %v1440
    %1570 = vst.msk [vmem:[%s2 + $0x64] sm:$0xf] %vm1544, %v1441
    %1571 = vst.msk [vmem:[%s2 + $0x68] sm:$0xf] %vm1544, %v1442
    %1572 = vst.msk [vmem:[%s2 + $0x6c] sm:$0xf] %vm1544, %v1443
    %1573 = vst.msk [vmem:[%s2 + $0x70] sm:$0xf] %vm1544, %v1444
    %1574 = vst.msk [vmem:[%s2 + $0x74] sm:$0xf] %vm1544, %v1445
    %1575 = vst.msk [vmem:[%s2 + $0x78] sm:$0xf] %vm1544, %v1446
    %1576 = vst.msk [vmem:[%s2 + $0x7c] sm:$0xf] %vm1544, %v1447
    %1577 = vst.msk [vmem:[%s2 + $0x80] sm:$0xf] %vm1544, %v1448
    %1578 = vst.msk [vmem:[%s2 + $0x84] sm:$0xf] %vm1544, %v1449
    %1579 = vst.msk [vmem:[%s2 + $0x88] sm:$0xf] %vm1544, %v1450
    %1580 = vst.msk [vmem:[%s2 + $0x8c] sm:$0xf] %vm1544, %v1451
    %1581 = vst.msk [vmem:[%s2 + $0x90] sm:$0xf] %vm1544, %v1452
    %1582 = vst.msk [vmem:[%s2 + $0x94] sm:$0xf] %vm1544, %v1453
    %1583 = vst.msk [vmem:[%s2 + $0x98] sm:$0xf] %vm1544, %v1454
    %1584 = vst.msk [vmem:[%s2 + $0x9c] sm:$0xf] %vm1544, %v1455
    %1585 = vst.msk [vmem:[%s2 + $0xa0] sm:$0xf] %vm1544, %v1456
    %1586 = vst.msk [vmem:[%s2 + $0xa4] sm:$0xf] %vm1544, %v1457
    %1587 = vst.msk [vmem:[%s2 + $0xa8] sm:$0xf] %vm1544, %v1458
    %1588 = vst.msk [vmem:[%s2 + $0xac] sm:$0xf] %vm1544, %v1459
    %1589 = vst.msk [vmem:[%s2 + $0xb0] sm:$0xf] %vm1544, %v1460
    %1590 = vst.msk [vmem:[%s2 + $0xb4] sm:$0xf] %vm1544, %v1461
    %1591 = vst.msk [vmem:[%s2 + $0xb8] sm:$0xf] %vm1544, %v1462
    %1592 = vst.msk [vmem:[%s2 + $0xbc] sm:$0xf] %vm1544, %v1463
    %1593 = vst.msk [vmem:[%s2 + $0xc0] sm:$0xf] %vm1544, %v1464
    %1594 = vst.msk [vmem:[%s2 + $0xc4] sm:$0xf] %vm1544, %v1465
    %1595 = vst.msk [vmem:[%s2 + $0xc8] sm:$0xf] %vm1544, %v1466
    %1596 = vst.msk [vmem:[%s2 + $0xcc] sm:$0xf] %vm1544, %v1467
    %1597 = vst.msk [vmem:[%s2 + $0xd0] sm:$0xf] %vm1544, %v1468
    %1598 = vst.msk [vmem:[%s2 + $0xd4] sm:$0xf] %vm1544, %v1469
    %1599 = vst.msk [vmem:[%s2 + $0xd8] sm:$0xf] %vm1544, %v1470
    %1600 = vst.msk [vmem:[%s2 + $0xdc] sm:$0xf] %vm1544, %v1471
    %1601 = vst.msk [vmem:[%s2 + $0xe0] sm:$0xf] %vm1544, %v1472
    %1602 = vst.msk [vmem:[%s2 + $0xe4] sm:$0xf] %vm1544, %v1473
    %1603 = vst.msk [vmem:[%s2 + $0xe8] sm:$0xf] %vm1544, %v1474
    %1604 = vst.msk [vmem:[%s2 + $0xec] sm:$0xf] %vm1544, %v1475
    %1605 = vst.msk [vmem:[%s2 + $0xf0] sm:$0xf] %vm1544, %v1476
    %1606 = vst.msk [vmem:[%s2 + $0xf4] sm:$0xf] %vm1544, %v1477
    %1607 = vst.msk [vmem:[%s2 + $0xf8] sm:$0xf] %vm1544, %v1478
    %1608 = vst.msk [vmem:[%s2 + $0xfc] sm:$0xf] %vm1544, %v1479
  $region13: #{_lambda_.14} parent=0 // pred_fallthru
    _
  // Predicated region
  $region14: #{_lambda_.14} parent=0 // pred_check
    _
  $region15: #{_lambda_.14} parent=0 // pred_check_branch
    %1610 = sbr.rel (0) target = $region17
  $region16: #{_lambda_.14} parent=0 // pred_region
    _
  $region17: #{_lambda_.14} parent=0 // pred_fallthru
    _
  // Predicated region
  $region18: #{_lambda_.14} parent=0 // pred_check
    _
  $region19: #{_lambda_.14} parent=0 // pred_check_branch
    %1612 = sbr.rel (0) target = $region21
  $region20: #{_lambda_.14} parent=0 // pred_region
    _
  $region21: #{_lambda_.14} parent=0 // pred_fallthru
    _

// kernel: _lambda_.13
$region0: #{_lambda_.13}
  #allocation0 [shape = 'u32[]', space=smem, size = 0x4, offset = 0x4, fixed_abs, tag = 'smem constant byte address 0x4 - core index']
  #allocation1 [shape = 'u32[144,128]{1,0:T(1,128)}', space=vmem, size = 0x12000, scoped, tag = 'internal scratch']
  #allocation2 [shape = 'f32[512,8]{1,0:T(8,128)}', space=vmem, size = 0x40000, scoped, tag = 'scratch operand']
  %s0 = inlined_call_operand.vmem [shape: bf16[512,12], index: 0, kind: input, shape index: {}]
  %s1 = inlined_call_operand.vmem [shape: bf16[12,8], index: 1, kind: input, shape index: {}]
  %s2 = inlined_call_operand.vmem [shape: bf16[512,8], index: 2, kind: output, shape index: {}]
  %s3 = sld [smem:[#allocation0]]
  $region22: #{_lambda_.13} parent=0
    _
  %s5 = ssub.s32 1, %s3
  %s6 = scalar_select 0, %s5, %s3
  // Predicated region
  $region2: #{_lambda_.13} parent=0 // pred_check
    _
  $region3: #{_lambda_.13} parent=0 // pred_check_branch
    %8 = sbr.rel (0) target = $region5
  $region4: #{_lambda_.13} parent=0 // pred_region
    _
  $region5: #{_lambda_.13} parent=0 // pred_fallthru
    _
  // Predicated region
  $region6: #{_lambda_.13} parent=0 // pred_check
    _
  $region7: #{_lambda_.13} parent=0 // pred_check_branch
    %10 = sbr.rel (0) target = $region9
  $region8: #{_lambda_.13} parent=0 // pred_region
    _
  $region9: #{_lambda_.13} parent=0 // pred_fallthru
    _
  %v12 = vld [vmem:[%s0] sm:$0xf]
  %v13 = vld [vmem:[%s0 + $0x4] sm:$0xf]
  %v14 = vld [vmem:[%s0 + $0x8] sm:$0xf]
  %v15 = vld [vmem:[%s0 + $0xc] sm:$0xf]
  %v16 = vld [vmem:[%s0 + $0x10] sm:$0xf]
  %v17 = vld [vmem:[%s0 + $0x14] sm:$0xf]
  %v18 = vld [vmem:[%s0 + $0x18] sm:$0xf]
  %v19 = vld [vmem:[%s0 + $0x1c] sm:$0xf]
  %v20 = vld [vmem:[%s0 + $0x20] sm:$0xf]
  %v21 = vld [vmem:[%s0 + $0x24] sm:$0xf]
  %v22 = vld [vmem:[%s0 + $0x28] sm:$0xf]
  %v23 = vld [vmem:[%s0 + $0x2c] sm:$0xf]
  %v24 = vld [vmem:[%s0 + $0x30] sm:$0xf]
  %v25 = vld [vmem:[%s0 + $0x34] sm:$0xf]
  %v26 = vld [vmem:[%s0 + $0x38] sm:$0xf]
  %v27 = vld [vmem:[%s0 + $0x3c] sm:$0xf]
  %v28 = vld [vmem:[%s0 + $0x40] sm:$0xf]
  %v29 = vld [vmem:[%s0 + $0x44] sm:$0xf]
  %v30 = vld [vmem:[%s0 + $0x48] sm:$0xf]
  %v31 = vld [vmem:[%s0 + $0x4c] sm:$0xf]
  %v32 = vld [vmem:[%s0 + $0x50] sm:$0xf]
  %v33 = vld [vmem:[%s0 + $0x54] sm:$0xf]
  %v34 = vld [vmem:[%s0 + $0x58] sm:$0xf]
  %v35 = vld [vmem:[%s0 + $0x5c] sm:$0xf]
  %v36 = vld [vmem:[%s0 + $0x60] sm:$0xf]
  %v37 = vld [vmem:[%s0 + $0x64] sm:$0xf]
  %v38 = vld [vmem:[%s0 + $0x68] sm:$0xf]
  %v39 = vld [vmem:[%s0 + $0x6c] sm:$0xf]
  %v40 = vld [vmem:[%s0 + $0x70] sm:$0xf]
  %v41 = vld [vmem:[%s0 + $0x74] sm:$0xf]
  %v42 = vld [vmem:[%s0 + $0x78] sm:$0xf]
  %v43 = vld [vmem:[%s0 + $0x7c] sm:$0xf]
  %v44 = vld [vmem:[%s0 + $0x80] sm:$0xf]
  %v45 = vld [vmem:[%s0 + $0x84] sm:$0xf]
  %v46 = vld [vmem:[%s0 + $0x88] sm:$0xf]
  %v47 = vld [vmem:[%s0 + $0x8c] sm:$0xf]
  %v48 = vld [vmem:[%s0 + $0x90] sm:$0xf]
  %v49 = vld [vmem:[%s0 + $0x94] sm:$0xf]
  %v50 = vld [vmem:[%s0 + $0x98] sm:$0xf]
  %v51 = vld [vmem:[%s0 + $0x9c] sm:$0xf]
  %v52 = vld [vmem:[%s0 + $0xa0] sm:$0xf]
  %v53 = vld [vmem:[%s0 + $0xa4] sm:$0xf]
  %v54 = vld [vmem:[%s0 + $0xa8] sm:$0xf]
  %v55 = vld [vmem:[%s0 + $0xac] sm:$0xf]
  %v56 = vld [vmem:[%s0 + $0xb0] sm:$0xf]
  %v57 = vld [vmem:[%s0 + $0xb4] sm:$0xf]
  %v58 = vld [vmem:[%s0 + $0xb8] sm:$0xf]
  %v59 = vld [vmem:[%s0 + $0xbc] sm:$0xf]
  %v60 = vld [vmem:[%s0 + $0xc0] sm:$0xf]
  %v61 = vld [vmem:[%s0 + $0xc4] sm:$0xf]
  %v62 = vld [vmem:[%s0 + $0xc8] sm:$0xf]
  %v63 = vld [vmem:[%s0 + $0xcc] sm:$0xf]
  %v64 = vld [vmem:[%s0 + $0xd0] sm:$0xf]
  %v65 = vld [vmem:[%s0 + $0xd4] sm:$0xf]
  %v66 = vld [vmem:[%s0 + $0xd8] sm:$0xf]
  %v67 = vld [vmem:[%s0 + $0xdc] sm:$0xf]
  %v68 = vld [vmem:[%s0 + $0xe0] sm:$0xf]
  %v69 = vld [vmem:[%s0 + $0xe4] sm:$0xf]
  %v70 = vld [vmem:[%s0 + $0xe8] sm:$0xf]
  %v71 = vld [vmem:[%s0 + $0xec] sm:$0xf]
  %v72 = vld [vmem:[%s0 + $0xf0] sm:$0xf]
  %v73 = vld [vmem:[%s0 + $0xf4] sm:$0xf]
  %v74 = vld [vmem:[%s0 + $0xf8] sm:$0xf]
  %v75 = vld [vmem:[%s0 + $0xfc] sm:$0xf]
  %v76 = vmax.bf16 %v12, 0
  %v77 = vmax.bf16 %v13, 0
  %v78 = vmax.bf16 %v14, 0
  %v79 = vmax.bf16 %v15, 0
  %v80 = vmax.bf16 %v16, 0
  %v81 = vmax.bf16 %v17, 0
  %v82 = vmax.bf16 %v18, 0
  %v83 = vmax.bf16 %v19, 0
  %v84 = vmax.bf16 %v20, 0
  %v85 = vmax.bf16 %v21, 0
  %v86 = vmax.bf16 %v22, 0
  %v87 = vmax.bf16 %v23, 0
  %v88 = vmax.bf16 %v24, 0
  %v89 = vmax.bf16 %v25, 0
  %v90 = vmax.bf16 %v26, 0
  %v91 = vmax.bf16 %v27, 0
  %v92 = vmax.bf16 %v28, 0
  %v93 = vmax.bf16 %v29, 0
  %v94 = vmax.bf16 %v30, 0
  %v95 = vmax.bf16 %v31, 0
  %v96 = vmax.bf16 %v32, 0
  %v97 = vmax.bf16 %v33, 0
  %v98 = vmax.bf16 %v34, 0
  %v99 = vmax.bf16 %v35, 0
  %v100 = vmax.bf16 %v36, 0
  %v101 = vmax.bf16 %v37, 0
  %v102 = vmax.bf16 %v38, 0
  %v103 = vmax.bf16 %v39, 0
  %v104 = vmax.bf16 %v40, 0
  %v105 = vmax.bf16 %v41, 0
  %v106 = vmax.bf16 %v42, 0
  %v107 = vmax.bf16 %v43, 0
  %v108 = vmax.bf16 %v44, 0
  %v109 = vmax.bf16 %v45, 0
  %v110 = vmax.bf16 %v46, 0
  %v111 = vmax.bf16 %v47, 0
  %v112 = vmax.bf16 %v48, 0
  %v113 = vmax.bf16 %v49, 0
  %v114 = vmax.bf16 %v50, 0
  %v115 = vmax.bf16 %v51, 0
  %v116 = vmax.bf16 %v52, 0
  %v117 = vmax.bf16 %v53, 0
  %v118 = vmax.bf16 %v54, 0
  %v119 = vmax.bf16 %v55, 0
  %v120 = vmax.bf16 %v56, 0
  %v121 = vmax.bf16 %v57, 0
  %v122 = vmax.bf16 %v58, 0
  %v123 = vmax.bf16 %v59, 0
  %v124 = vmax.bf16 %v60, 0
  %v125 = vmax.bf16 %v61, 0
  %v126 = vmax.bf16 %v62, 0
  %v127 = vmax.bf16 %v63, 0
  %v128 = vmax.bf16 %v64, 0
  %v129 = vmax.bf16 %v65, 0
  %v130 = vmax.bf16 %v66, 0
  %v131 = vmax.bf16 %v67, 0
  %v132 = vmax.bf16 %v68, 0
  %v133 = vmax.bf16 %v69, 0
  %v134 = vmax.bf16 %v70, 0
  %v135 = vmax.bf16 %v71, 0
  %v136 = vmax.bf16 %v72, 0
  %v137 = vmax.bf16 %v73, 0
  %v138 = vmax.bf16 %v74, 0
  %v139 = vmax.bf16 %v75, 0
  %v140 = vld [vmem:[%s1] sm:$0xf]
  %v141 = vld [vmem:[%s1 + $0x4] sm:$0x3]
  %v206 = vunpack.c.l.b16 %v76
  %v207 = vunpack.c.l.b16 %v77
  %v208 = vunpack.c.l.b16 %v78
  %v209 = vunpack.c.l.b16 %v79
  %v210 = vunpack.c.l.b16 %v80
  %v211 = vunpack.c.l.b16 %v81
  %v212 = vunpack.c.l.b16 %v82
  %v213 = vunpack.c.l.b16 %v83
  %v214 = vunpack.c.l.b16 %v84
  %v215 = vunpack.c.l.b16 %v85
  %v216 = vunpack.c.l.b16 %v86
  %v217 = vunpack.c.l.b16 %v87
  %v218 = vunpack.c.l.b16 %v88
  %v219 = vunpack.c.l.b16 %v89
  %v220 = vunpack.c.l.b16 %v90
  %v221 = vunpack.c.l.b16 %v91
  %v222 = vunpack.c.l.b16 %v92
  %v223 = vunpack.c.l.b16 %v93
  %v224 = vunpack.c.l.b16 %v94
  %v225 = vunpack.c.l.b16 %v95
  %v226 = vunpack.c.l.b16 %v96
  %v227 = vunpack.c.l.b16 %v97
  %v228 = vunpack.c.l.b16 %v98
  %v229 = vunpack.c.l.b16 %v99
  %v230 = vunpack.c.l.b16 %v100
  %v231 = vunpack.c.l.b16 %v101
  %v232 = vunpack.c.l.b16 %v102
  %v233 = vunpack.c.l.b16 %v103
  %v234 = vunpack.c.l.b16 %v104
  %v235 = vunpack.c.l.b16 %v105
  %v236 = vunpack.c.l.b16 %v106
  %v237 = vunpack.c.l.b16 %v107
  %v238 = vunpack.c.l.b16 %v108
  %v239 = vunpack.c.l.b16 %v109
  %v240 = vunpack.c.l.b16 %v110
  %v241 = vunpack.c.l.b16 %v111
  %v242 = vunpack.c.l.b16 %v112
  %v243 = vunpack.c.l.b16 %v113
  %v244 = vunpack.c.l.b16 %v114
  %v245 = vunpack.c.l.b16 %v115
  %v246 = vunpack.c.l.b16 %v116
  %v247 = vunpack.c.l.b16 %v117
  %v248 = vunpack.c.l.b16 %v118
  %v249 = vunpack.c.l.b16 %v119
  %v250 = vunpack.c.l.b16 %v120
  %v251 = vunpack.c.l.b16 %v121
  %v252 = vunpack.c.l.b16 %v122
  %v253 = vunpack.c.l.b16 %v123
  %v254 = vunpack.c.l.b16 %v124
  %v255 = vunpack.c.l.b16 %v125
  %v256 = vunpack.c.l.b16 %v126
  %v257 = vunpack.c.l.b16 %v127
  %v258 = vunpack.c.l.b16 %v128
  %v259 = vunpack.c.l.b16 %v129
  %v260 = vunpack.c.l.b16 %v130
  %v261 = vunpack.c.l.b16 %v131
  %v262 = vunpack.c.l.b16 %v132
  %v263 = vunpack.c.l.b16 %v133
  %v264 = vunpack.c.l.b16 %v134
  %v265 = vunpack.c.l.b16 %v135
  %v266 = vunpack.c.l.b16 %v136
  %v267 = vunpack.c.l.b16 %v137
  %v268 = vunpack.c.l.b16 %v138
  %v269 = vunpack.c.l.b16 %v139
  %v270 = vpack.c.b16 %v207, %v206
  %v271 = vpack.c.b16 %v209, %v208
  %v272 = vpack.c.b16 %v211, %v210
  %v273 = vpack.c.b16 %v213, %v212
  %v274 = vpack.c.b16 %v215, %v214
  %v275 = vpack.c.b16 %v217, %v216
  %v276 = vpack.c.b16 %v219, %v218
  %v277 = vpack.c.b16 %v221, %v220
  %v278 = vpack.c.b16 %v223, %v222
  %v279 = vpack.c.b16 %v225, %v224
  %v280 = vpack.c.b16 %v227, %v226
  %v281 = vpack.c.b16 %v229, %v228
  %v282 = vpack.c.b16 %v231, %v230
  %v283 = vpack.c.b16 %v233, %v232
  %v284 = vpack.c.b16 %v235, %v234
  %v285 = vpack.c.b16 %v237, %v236
  %v286 = vpack.c.b16 %v239, %v238
  %v287 = vpack.c.b16 %v241, %v240
  %v288 = vpack.c.b16 %v243, %v242
  %v289 = vpack.c.b16 %v245, %v244
  %v290 = vpack.c.b16 %v247, %v246
  %v291 = vpack.c.b16 %v249, %v248
  %v292 = vpack.c.b16 %v251, %v250
  %v293 = vpack.c.b16 %v253, %v252
  %v294 = vpack.c.b16 %v255, %v254
  %v295 = vpack.c.b16 %v257, %v256
  %v296 = vpack.c.b16 %v259, %v258
  %v297 = vpack.c.b16 %v261, %v260
  %v298 = vpack.c.b16 %v263, %v262
  %v299 = vpack.c.b16 %v265, %v264
  %v300 = vpack.c.b16 %v267, %v266
  %v301 = vpack.c.b16 %v269, %v268
  %v304 = vunpack.c.l.b16 %v140
  %v305 = vunpack.c.l.b16 %v141
  %v306 = vpack.c.b16 %v305, %v304
  %vm307 = vcmask 97280
  %v309 = vsel %vm307, %v270, 0
  %v312 = vsel %vm307, %v271, 0
  %v315 = vsel %vm307, %v272, 0
  %v318 = vsel %vm307, %v273, 0
  %v321 = vsel %vm307, %v274, 0
  %v324 = vsel %vm307, %v275, 0
  %v327 = vsel %vm307, %v276, 0
  %v330 = vsel %vm307, %v277, 0
  %v333 = vsel %vm307, %v278, 0
  %v336 = vsel %vm307, %v279, 0
  %v339 = vsel %vm307, %v280, 0
  %v342 = vsel %vm307, %v281, 0
  %v345 = vsel %vm307, %v282, 0
  %v348 = vsel %vm307, %v283, 0
  %v351 = vsel %vm307, %v284, 0
  %v354 = vsel %vm307, %v285, 0
  %v357 = vsel %vm307, %v286, 0
  %v360 = vsel %vm307, %v287, 0
  %v363 = vsel %vm307, %v288, 0
  %v366 = vsel %vm307, %v289, 0
  %v369 = vsel %vm307, %v290, 0
  %v372 = vsel %vm307, %v291, 0
  %v375 = vsel %vm307, %v292, 0
  %v378 = vsel %vm307, %v293, 0
  %v381 = vsel %vm307, %v294, 0
  %v384 = vsel %vm307, %v295, 0
  %v387 = vsel %vm307, %v296, 0
  %v390 = vsel %vm307, %v297, 0
  %v393 = vsel %vm307, %v298, 0
  %v396 = vsel %vm307, %v299, 0
  %v399 = vsel %vm307, %v300, 0
  %v402 = vsel %vm307, %v301, 0
  %vm404 = vcmask 1045504
  %v406 = vsel %vm404, %v306, 0
  %408 = vmatprep.subr.bf16.mxu0 0
  %409 = vmatpush1.bf16.msra.mxu0 %v406
  %410 = vmatprep.subr.bf16.mxu0 0
  %411 = vmatpush1.bf16.msra.mxu0 0
  %412 = vmatprep.subr.bf16.mxu0 0
  %413 = vmatpush1.bf16.msra.mxu0 0
  %414 = vmatprep.subr.bf16.mxu0 0
  %415 = vmatpush1.bf16.msra.mxu0 0
  %416 = vmatprep.subr.bf16.mxu0 0
  %417 = vmatpush1.bf16.msra.mxu0 0
  %418 = vmatprep.subr.bf16.mxu0 0
  %419 = vmatpush1.bf16.msra.mxu0 0
  %420 = vmatprep.subr.bf16.mxu0 0
  %421 = vmatpush1.bf16.msra.mxu0 0
  %422 = vmatprep.subr.bf16.mxu0 0
  %423 = vmatpush1.bf16.msra.mxu0 0
  %424 = vmatprep.subr.bf16.mxu0 0
  %425 = vmatpush1.bf16.msra.mxu0 0
  %426 = vmatprep.subr.bf16.mxu0 0
  %427 = vmatpush1.bf16.msra.mxu0 0
  %428 = vmatprep.subr.bf16.mxu0 0
  %429 = vmatpush1.bf16.msra.mxu0 0
  %430 = vmatprep.subr.bf16.mxu0 0
  %431 = vmatpush1.bf16.msra.mxu0 0
  %432 = vmatprep.subr.bf16.mxu0 0
  %433 = vmatpush1.bf16.msra.mxu0 0
  %434 = vmatprep.subr.bf16.mxu0 0
  %435 = vmatpush1.bf16.msra.mxu0 0
  %436 = vmatprep.subr.bf16.mxu0 0
  %437 = vmatpush1.bf16.msra.mxu0 0
  %438 = vmatprep.subr.bf16.mxu0 0
  %439 = vmatpush1.bf16.msra.mxu0 0
  %440 = vmatprep.mubr.bf16.mxu0 0
  %441 = vmatmul.mubr.bf16.gmra.mrb[0].mxu0 %v309
  %v442 = vpop.f32.mrb[0].mxu0
  %v443 = vadd.f32 0.0, %v442
  %v444 = vpop.f32.mrb[0].mxu0
  %v445 = vpop.f32.mrb[0].mxu0
  %v446 = vadd.f32 0.0, %v445
  %v447 = vpop.f32.mrb[0].mxu0
  %448 = vmatprep.mubr.bf16.mxu0 0
  %449 = vmatmul.mubr.bf16.gmra.mrb[0].mxu0 %v312
  %v450 = vpop.f32.mrb[0].mxu0
  %v451 = vadd.f32 0.0, %v450
  %v452 = vpop.f32.mrb[0].mxu0
  %v453 = vpop.f32.mrb[0].mxu0
  %v454 = vadd.f32 0.0, %v453
  %v455 = vpop.f32.mrb[0].mxu0
  %456 = vmatprep.mubr.bf16.mxu0 0
  %457 = vmatmul.mubr.bf16.gmra.mrb[0].mxu0 %v315
  %v458 = vpop.f32.mrb[0].mxu0
  %v459 = vadd.f32 0.0, %v458
  %v460 = vpop.f32.mrb[0].mxu0
  %v461 = vpop.f32.mrb[0].mxu0
  %v462 = vadd.f32 0.0, %v461
  %v463 = vpop.f32.mrb[0].mxu0
  %464 = vmatprep.mubr.bf16.mxu0 0
  %465 = vmatmul.mubr.bf16.gmra.mrb[0].mxu0 %v318
  %v466 = vpop.f32.mrb[0].mxu0
  %v467 = vadd.f32 0.0, %v466
  %v468 = vpop.f32.mrb[0].mxu0
  %v469 = vpop.f32.mrb[0].mxu0
  %v470 = vadd.f32 0.0, %v469
  %v471 = vpop.f32.mrb[0].mxu0
  %472 = vmatprep.mubr.bf16.mxu0 0
  %473 = vmatmul.mubr.bf16.gmra.mrb[0].mxu0 %v321
  %v474 = vpop.f32.mrb[0].mxu0
  %v475 = vadd.f32 0.0, %v474
  %v476 = vpop.f32.mrb[0].mxu0
  %v477 = vpop.f32.mrb[0].mxu0
  %v478 = vadd.f32 0.0, %v477
  %v479 = vpop.f32.mrb[0].mxu0
  %480 = vmatprep.mubr.bf16.mxu0 0
  %481 = vmatmul.mubr.bf16.gmra.mrb[0].mxu0 %v324
  %v482 = vpop.f32.mrb[0].mxu0
  %v483 = vadd.f32 0.0, %v482
  %v484 = vpop.f32.mrb[0].mxu0
  %v485 = vpop.f32.mrb[0].mxu0
  %v486 = vadd.f32 0.0, %v485
  %v487 = vpop.f32.mrb[0].mxu0
  %488 = vmatprep.mubr.bf16.mxu0 0
  %489 = vmatmul.mubr.bf16.gmra.mrb[0].mxu0 %v327
  %v490 = vpop.f32.mrb[0].mxu0
  %v491 = vadd.f32 0.0, %v490
  %v492 = vpop.f32.mrb[0].mxu0
  %v493 = vpop.f32.mrb[0].mxu0
  %v494 = vadd.f32 0.0, %v493
  %v495 = vpop.f32.mrb[0].mxu0
  %496 = vmatprep.mubr.bf16.mxu0 0
  %497 = vmatmul.mubr.bf16.gmra.mrb[0].mxu0 %v330
  %v498 = vpop.f32.mrb[0].mxu0
  %v499 = vadd.f32 0.0, %v498
  %v500 = vpop.f32.mrb[0].mxu0
  %v501 = vpop.f32.mrb[0].mxu0
  %v502 = vadd.f32 0.0, %v501
  %v503 = vpop.f32.mrb[0].mxu0
  %504 = vmatprep.mubr.bf16.mxu0 0
  %505 = vmatmul.mubr.bf16.gmra.mrb[0].mxu0 %v333
  %v506 = vpop.f32.mrb[0].mxu0
  %v507 = vadd.f32 0.0, %v506
  %v508 = vpop.f32.mrb[0].mxu0
  %v509 = vpop.f32.mrb[0].mxu0
  %v510 = vadd.f32 0.0, %v509
  %v511 = vpop.f32.mrb[0].mxu0
  %512 = vmatprep.mubr.bf16.mxu0 0
  %513 = vmatmul.mubr.bf16.gmra.mrb[0].mxu0 %v336
  %v514 = vpop.f32.mrb[0].mxu0
  %v515 = vadd.f32 0.0, %v514
  %v516 = vpop.f32.mrb[0].mxu0
  %v517 = vpop.f32.mrb[0].mxu0
  %v518 = vadd.f32 0.0, %v517
  %v519 = vpop.f32.mrb[0].mxu0
  %520 = vmatprep.mubr.bf16.mxu0 0
  %521 = vmatmul.mubr.bf16.gmra.mrb[0].mxu0 %v339
  %v522 = vpop.f32.mrb[0].mxu0
  %v523 = vadd.f32 0.0, %v522
  %v524 = vpop.f32.mrb[0].mxu0
  %v525 = vpop.f32.mrb[0].mxu0
  %v526 = vadd.f32 0.0, %v525
  %v527 = vpop.f32.mrb[0].mxu0
  %528 = vmatprep.mubr.bf16.mxu0 0
  %529 = vmatmul.mubr.bf16.gmra.mrb[0].mxu0 %v342
  %v530 = vpop.f32.mrb[0].mxu0
  %v531 = vadd.f32 0.0, %v530
  %v532 = vpop.f32.mrb[0].mxu0
  %v533 = vpop.f32.mrb[0].mxu0
  %v534 = vadd.f32 0.0, %v533
  %v535 = vpop.f32.mrb[0].mxu0
  %536 = vmatprep.mubr.bf16.mxu0 0
  %537 = vmatmul.mubr.bf16.gmra.mrb[0].mxu0 %v345
  %v538 = vpop.f32.mrb[0].mxu0
  %v539 = vadd.f32 0.0, %v538
  %v540 = vpop.f32.mrb[0].mxu0
  %v541 = vpop.f32.mrb[0].mxu0
  %v542 = vadd.f32 0.0, %v541
  %v543 = vpop.f32.mrb[0].mxu0
  %544 = vmatprep.mubr.bf16.mxu0 0
  %545 = vmatmul.mubr.bf16.gmra.mrb[0].mxu0 %v348
  %v546 = vpop.f32.mrb[0].mxu0
  %v547 = vadd.f32 0.0, %v546
  %v548 = vpop.f32.mrb[0].mxu0
  %v549 = vpop.f32.mrb[0].mxu0
  %v550 = vadd.f32 0.0, %v549
  %v551 = vpop.f32.mrb[0].mxu0
  %552 = vmatprep.mubr.bf16.mxu0 0
  %553 = vmatmul.mubr.bf16.gmra.mrb[0].mxu0 %v351
  %v554 = vpop.f32.mrb[0].mxu0
  %v555 = vadd.f32 0.0, %v554
  %v556 = vpop.f32.mrb[0].mxu0
  %v557 = vpop.f32.mrb[0].mxu0
  %v558 = vadd.f32 0.0, %v557
  %v559 = vpop.f32.mrb[0].mxu0
  %560 = vmatprep.mubr.bf16.mxu0 0
  %561 = vmatmul.mubr.bf16.gmra.mrb[0].mxu0 %v354
  %v562 = vpop.f32.mrb[0].mxu0
  %v563 = vadd.f32 0.0, %v562
  %v564 = vpop.f32.mrb[0].mxu0
  %v565 = vpop.f32.mrb[0].mxu0
  %v566 = vadd.f32 0.0, %v565
  %v567 = vpop.f32.mrb[0].mxu0
  %568 = vmatprep.mubr.bf16.mxu0 0
  %569 = vmatmul.mubr.bf16.gmra.mrb[0].mxu0 %v357
  %v570 = vpop.f32.mrb[0].mxu0
  %v571 = vadd.f32 0.0, %v570
  %v572 = vpop.f32.mrb[0].mxu0
  %v573 = vpop.f32.mrb[0].mxu0
  %v574 = vadd.f32 0.0, %v573
  %v575 = vpop.f32.mrb[0].mxu0
  %576 = vmatprep.mubr.bf16.mxu0 0
  %577 = vmatmul.mubr.bf16.gmra.mrb[0].mxu0 %v360
  %v578 = vpop.f32.mrb[0].mxu0
  %v579 = vadd.f32 0.0, %v578
  %v580 = vpop.f32.mrb[0].mxu0
  %v581 = vpop.f32.mrb[0].mxu0
  %v582 = vadd.f32 0.0, %v581
  %v583 = vpop.f32.mrb[0].mxu0
  %584 = vmatprep.mubr.bf16.mxu0 0
  %585 = vmatmul.mubr.bf16.gmra.mrb[0].mxu0 %v363
  %v586 = vpop.f32.mrb[0].mxu0
  %v587 = vadd.f32 0.0, %v586
  %v588 = vpop.f32.mrb[0].mxu0
  %v589 = vpop.f32.mrb[0].mxu0
  %v590 = vadd.f32 0.0, %v589
  %v591 = vpop.f32.mrb[0].mxu0
  %592 = vmatprep.mubr.bf16.mxu0 0
  %593 = vmatmul.mubr.bf16.gmra.mrb[0].mxu0 %v366
  %v594 = vpop.f32.mrb[0].mxu0
  %v595 = vadd.f32 0.0, %v594
  %v596 = vpop.f32.mrb[0].mxu0
  %v597 = vpop.f32.mrb[0].mxu0
  %v598 = vadd.f32 0.0, %v597
  %v599 = vpop.f32.mrb[0].mxu0
  %600 = vmatprep.mubr.bf16.mxu0 0
  %601 = vmatmul.mubr.bf16.gmra.mrb[0].mxu0 %v369
  %v602 = vpop.f32.mrb[0].mxu0
  %v603 = vadd.f32 0.0, %v602
  %v604 = vpop.f32.mrb[0].mxu0
  %v605 = vpop.f32.mrb[0].mxu0
  %v606 = vadd.f32 0.0, %v605
  %v607 = vpop.f32.mrb[0].mxu0
  %608 = vmatprep.mubr.bf16.mxu0 0
  %609 = vmatmul.mubr.bf16.gmra.mrb[0].mxu0 %v372
  %v610 = vpop.f32.mrb[0].mxu0
  %v611 = vadd.f32 0.0, %v610
  %v612 = vpop.f32.mrb[0].mxu0
  %v613 = vpop.f32.mrb[0].mxu0
  %v614 = vadd.f32 0.0, %v613
  %v615 = vpop.f32.mrb[0].mxu0
  %616 = vmatprep.mubr.bf16.mxu0 0
  %617 = vmatmul.mubr.bf16.gmra.mrb[0].mxu0 %v375
  %v618 = vpop.f32.mrb[0].mxu0
  %v619 = vadd.f32 0.0, %v618
  %v620 = vpop.f32.mrb[0].mxu0
  %v621 = vpop.f32.mrb[0].mxu0
  %v622 = vadd.f32 0.0, %v621
  %v623 = vpop.f32.mrb[0].mxu0
  %624 = vmatprep.mubr.bf16.mxu0 0
  %625 = vmatmul.mubr.bf16.gmra.mrb[0].mxu0 %v378
  %v626 = vpop.f32.mrb[0].mxu0
  %v627 = vadd.f32 0.0, %v626
  %v628 = vpop.f32.mrb[0].mxu0
  %v629 = vpop.f32.mrb[0].mxu0
  %v630 = vadd.f32 0.0, %v629
  %v631 = vpop.f32.mrb[0].mxu0
  %632 = vmatprep.mubr.bf16.mxu0 0
  %633 = vmatmul.mubr.bf16.gmra.mrb[0].mxu0 %v381
  %v634 = vpop.f32.mrb[0].mxu0
  %v635 = vadd.f32 0.0, %v634
  %v636 = vpop.f32.mrb[0].mxu0
  %v637 = vpop.f32.mrb[0].mxu0
  %v638 = vadd.f32 0.0, %v637
  %v639 = vpop.f32.mrb[0].mxu0
  %640 = vmatprep.mubr.bf16.mxu0 0
  %641 = vmatmul.mubr.bf16.gmra.mrb[0].mxu0 %v384
  %v642 = vpop.f32.mrb[0].mxu0
  %v643 = vadd.f32 0.0, %v642
  %v644 = vpop.f32.mrb[0].mxu0
  %v645 = vpop.f32.mrb[0].mxu0
  %v646 = vadd.f32 0.0, %v645
  %v647 = vpop.f32.mrb[0].mxu0
  %648 = vmatprep.mubr.bf16.mxu0 0
  %649 = vmatmul.mubr.bf16.gmra.mrb[0].mxu0 %v387
  %v650 = vpop.f32.mrb[0].mxu0
  %v651 = vadd.f32 0.0, %v650
  %v652 = vpop.f32.mrb[0].mxu0
  %v653 = vpop.f32.mrb[0].mxu0
  %v654 = vadd.f32 0.0, %v653
  %v655 = vpop.f32.mrb[0].mxu0
  %656 = vmatprep.mubr.bf16.mxu0 0
  %657 = vmatmul.mubr.bf16.gmra.mrb[0].mxu0 %v390
  %v658 = vpop.f32.mrb[0].mxu0
  %v659 = vadd.f32 0.0, %v658
  %v660 = vpop.f32.mrb[0].mxu0
  %v661 = vpop.f32.mrb[0].mxu0
  %v662 = vadd.f32 0.0, %v661
  %v663 = vpop.f32.mrb[0].mxu0
  %664 = vmatprep.mubr.bf16.mxu0 0
  %665 = vmatmul.mubr.bf16.gmra.mrb[0].mxu0 %v393
  %v666 = vpop.f32.mrb[0].mxu0
  %v667 = vadd.f32 0.0, %v666
  %v668 = vpop.f32.mrb[0].mxu0
  %v669 = vpop.f32.mrb[0].mxu0
  %v670 = vadd.f32 0.0, %v669
  %v671 = vpop.f32.mrb[0].mxu0
  %672 = vmatprep.mubr.bf16.mxu0 0
  %673 = vmatmul.mubr.bf16.gmra.mrb[0].mxu0 %v396
  %v674 = vpop.f32.mrb[0].mxu0
  %v675 = vadd.f32 0.0, %v674
  %v676 = vpop.f32.mrb[0].mxu0
  %v677 = vpop.f32.mrb[0].mxu0
  %v678 = vadd.f32 0.0, %v677
  %v679 = vpop.f32.mrb[0].mxu0
  %680 = vmatprep.mubr.bf16.mxu0 0
  %681 = vmatmul.mubr.bf16.gmra.mrb[0].mxu0 %v399
  %v682 = vpop.f32.mrb[0].mxu0
  %v683 = vadd.f32 0.0, %v682
  %v684 = vpop.f32.mrb[0].mxu0
  %v685 = vpop.f32.mrb[0].mxu0
  %v686 = vadd.f32 0.0, %v685
  %v687 = vpop.f32.mrb[0].mxu0
  %688 = vmatprep.mubr.bf16.mxu0 0
  %689 = vmatmul.mubr.bf16.gmra.mrb[0].mxu0 %v402
  %v690 = vpop.f32.mrb[0].mxu0
  %v691 = vadd.f32 0.0, %v690
  %v692 = vpop.f32.mrb[0].mxu0
  %v693 = vpop.f32.mrb[0].mxu0
  %v694 = vadd.f32 0.0, %v693
  %v695 = vpop.f32.mrb[0].mxu0
  %696 = vdwg.mxu0
  %s697 = smul.u32 0, 512
  %s698 = scalar_lea.vmem [#allocation2], %s697
  %vm699 = vcmask 64512
  %700 = vst.msk [vmem:[%s698] sm:$0xff] %vm699, %v443
  %701 = vst.msk [vmem:[%s698 + $0x8] sm:$0xff] %vm699, %v446
  %702 = vst.msk [vmem:[%s698 + $0x10] sm:$0xff] %vm699, %v451
  %703 = vst.msk [vmem:[%s698 + $0x18] sm:$0xff] %vm699, %v454
  %704 = vst.msk [vmem:[%s698 + $0x20] sm:$0xff] %vm699, %v459
  %705 = vst.msk [vmem:[%s698 + $0x28] sm:$0xff] %vm699, %v462
  %706 = vst.msk [vmem:[%s698 + $0x30] sm:$0xff] %vm699, %v467
  %707 = vst.msk [vmem:[%s698 + $0x38] sm:$0xff] %vm699, %v470
  %708 = vst.msk [vmem:[%s698 + $0x40] sm:$0xff] %vm699, %v475
  %709 = vst.msk [vmem:[%s698 + $0x48] sm:$0xff] %vm699, %v478
  %710 = vst.msk [vmem:[%s698 + $0x50] sm:$0xff] %vm699, %v483
  %711 = vst.msk [vmem:[%s698 + $0x58] sm:$0xff] %vm699, %v486
  %712 = vst.msk [vmem:[%s698 + $0x60] sm:$0xff] %vm699, %v491
  %713 = vst.msk [vmem:[%s698 + $0x68] sm:$0xff] %vm699, %v494
  %714 = vst.msk [vmem:[%s698 + $0x70] sm:$0xff] %vm699, %v499
  %715 = vst.msk [vmem:[%s698 + $0x78] sm:$0xff] %vm699, %v502
  %716 = vst.msk [vmem:[%s698 + $0x80] sm:$0xff] %vm699, %v507
  %717 = vst.msk [vmem:[%s698 + $0x88] sm:$0xff] %vm699, %v510
  %718 = vst.msk [vmem:[%s698 + $0x90] sm:$0xff] %vm699, %v515
  %719 = vst.msk [vmem:[%s698 + $0x98] sm:$0xff] %vm699, %v518
  %720 = vst.msk [vmem:[%s698 + $0xa0] sm:$0xff] %vm699, %v523
  %721 = vst.msk [vmem:[%s698 + $0xa8] sm:$0xff] %vm699, %v526
  %722 = vst.msk [vmem:[%s698 + $0xb0] sm:$0xff] %vm699, %v531
  %723 = vst.msk [vmem:[%s698 + $0xb8] sm:$0xff] %vm699, %v534
  %724 = vst.msk [vmem:[%s698 + $0xc0] sm:$0xff] %vm699, %v539
  %725 = vst.msk [vmem:[%s698 + $0xc8] sm:$0xff] %vm699, %v542
  %726 = vst.msk [vmem:[%s698 + $0xd0] sm:$0xff] %vm699, %v547
  %727 = vst.msk [vmem:[%s698 + $0xd8] sm:$0xff] %vm699, %v550
  %728 = vst.msk [vmem:[%s698 + $0xe0] sm:$0xff] %vm699, %v555
  %729 = vst.msk [vmem:[%s698 + $0xe8] sm:$0xff] %vm699, %v558
  %730 = vst.msk [vmem:[%s698 + $0xf0] sm:$0xff] %vm699, %v563
  %731 = vst.msk [vmem:[%s698 + $0xf8] sm:$0xff] %vm699, %v566
  %732 = vst.msk [vmem:[%s698 + $0x100] sm:$0xff] %vm699, %v571
  %733 = vst.msk [vmem:[%s698 + $0x108] sm:$0xff] %vm699, %v574
  %734 = vst.msk [vmem:[%s698 + $0x110] sm:$0xff] %vm699, %v579
  %735 = vst.msk [vmem:[%s698 + $0x118] sm:$0xff] %vm699, %v582
  %736 = vst.msk [vmem:[%s698 + $0x120] sm:$0xff] %vm699, %v587
  %737 = vst.msk [vmem:[%s698 + $0x128] sm:$0xff] %vm699, %v590
  %738 = vst.msk [vmem:[%s698 + $0x130] sm:$0xff] %vm699, %v595
  %739 = vst.msk [vmem:[%s698 + $0x138] sm:$0xff] %vm699, %v598
  %740 = vst.msk [vmem:[%s698 + $0x140] sm:$0xff] %vm699, %v603
  %741 = vst.msk [vmem:[%s698 + $0x148] sm:$0xff] %vm699, %v606
  %742 = vst.msk [vmem:[%s698 + $0x150] sm:$0xff] %vm699, %v611
  %743 = vst.msk [vmem:[%s698 + $0x158] sm:$0xff] %vm699, %v614
  %744 = vst.msk [vmem:[%s698 + $0x160] sm:$0xff] %vm699, %v619
  %745 = vst.msk [vmem:[%s698 + $0x168] sm:$0xff] %vm699, %v622
  %746 = vst.msk [vmem:[%s698 + $0x170] sm:$0xff] %vm699, %v627
  %747 = vst.msk [vmem:[%s698 + $0x178] sm:$0xff] %vm699, %v630
  %748 = vst.msk [vmem:[%s698 + $0x180] sm:$0xff] %vm699, %v635
  %749 = vst.msk [vmem:[%s698 + $0x188] sm:$0xff] %vm699, %v638
  %750 = vst.msk [vmem:[%s698 + $0x190] sm:$0xff] %vm699, %v643
  %751 = vst.msk [vmem:[%s698 + $0x198] sm:$0xff] %vm699, %v646
  %752 = vst.msk [vmem:[%s698 + $0x1a0] sm:$0xff] %vm699, %v651
  %753 = vst.msk [vmem:[%s698 + $0x1a8] sm:$0xff] %vm699, %v654
  %754 = vst.msk [vmem:[%s698 + $0x1b0] sm:$0xff] %vm699, %v659
  %755 = vst.msk [vmem:[%s698 + $0x1b8] sm:$0xff] %vm699, %v662
  %756 = vst.msk [vmem:[%s698 + $0x1c0] sm:$0xff] %vm699, %v667
  %757 = vst.msk [vmem:[%s698 + $0x1c8] sm:$0xff] %vm699, %v670
  %758 = vst.msk [vmem:[%s698 + $0x1d0] sm:$0xff] %vm699, %v675
  %759 = vst.msk [vmem:[%s698 + $0x1d8] sm:$0xff] %vm699, %v678
  %760 = vst.msk [vmem:[%s698 + $0x1e0] sm:$0xff] %vm699, %v683
  %761 = vst.msk [vmem:[%s698 + $0x1e8] sm:$0xff] %vm699, %v686
  %762 = vst.msk [vmem:[%s698 + $0x1f0] sm:$0xff] %vm699, %v691
  %763 = vst.msk [vmem:[%s698 + $0x1f8] sm:$0xff] %vm699, %v694
  %p764 = scmp.eq.s32.totalorder 0, 0
  // Predicated region
  $region10: #{_lambda_.13} parent=0 // pred_check
    %p765 = pneg %p764
  $region11: #{_lambda_.13} parent=0 // pred_check_branch
    %767 = sbr.rel (%p765) target = $region13
  $region12: #{_lambda_.13} parent=0 // pred_region
    %v768 = vld [vmem:[#allocation2] sm:$0xff]
    %v769 = vld [vmem:[#allocation2 + $0x8] sm:$0xff]
    %v770 = vld [vmem:[#allocation2 + $0x10] sm:$0xff]
    %v771 = vld [vmem:[#allocation2 + $0x18] sm:$0xff]
    %v772 = vld [vmem:[#allocation2 + $0x20] sm:$0xff]
    %v773 = vld [vmem:[#allocation2 + $0x28] sm:$0xff]
    %v774 = vld [vmem:[#allocation2 + $0x30] sm:$0xff]
    %v775 = vld [vmem:[#allocation2 + $0x38] sm:$0xff]
    %v776 = vld [vmem:[#allocation2 + $0x40] sm:$0xff]
    %v777 = vld [vmem:[#allocation2 + $0x48] sm:$0xff]
    %v778 = vld [vmem:[#allocation2 + $0x50] sm:$0xff]
    %v779 = vld [vmem:[#allocation2 + $0x58] sm:$0xff]
    %v780 = vld [vmem:[#allocation2 + $0x60] sm:$0xff]
    %v781 = vld [vmem:[#allocation2 + $0x68] sm:$0xff]
    %v782 = vld [vmem:[#allocation2 + $0x70] sm:$0xff]
    %v783 = vld [vmem:[#allocation2 + $0x78] sm:$0xff]
    %v784 = vld [vmem:[#allocation2 + $0x80] sm:$0xff]
    %v785 = vld [vmem:[#allocation2 + $0x88] sm:$0xff]
    %v786 = vld [vmem:[#allocation2 + $0x90] sm:$0xff]
    %v787 = vld [vmem:[#allocation2 + $0x98] sm:$0xff]
    %v788 = vld [vmem:[#allocation2 + $0xa0] sm:$0xff]
    %v789 = vld [vmem:[#allocation2 + $0xa8] sm:$0xff]
    %v790 = vld [vmem:[#allocation2 + $0xb0] sm:$0xff]
    %v791 = vld [vmem:[#allocation2 + $0xb8] sm:$0xff]
    %v792 = vld [vmem:[#allocation2 + $0xc0] sm:$0xff]
    %v793 = vld [vmem:[#allocation2 + $0xc8] sm:$0xff]
    %v794 = vld [vmem:[#allocation2 + $0xd0] sm:$0xff]
    %v795 = vld [vmem:[#allocation2 + $0xd8] sm:$0xff]
    %v796 = vld [vmem:[#allocation2 + $0xe0] sm:$0xff]
    %v797 = vld [vmem:[#allocation2 + $0xe8] sm:$0xff]
    %v798 = vld [vmem:[#allocation2 + $0xf0] sm:$0xff]
    %v799 = vld [vmem:[#allocation2 + $0xf8] sm:$0xff]
    %v800 = vld [vmem:[#allocation2 + $0x100] sm:$0xff]
    %v801 = vld [vmem:[#allocation2 + $0x108] sm:$0xff]
    %v802 = vld [vmem:[#allocation2 + $0x110] sm:$0xff]
    %v803 = vld [vmem:[#allocation2 + $0x118] sm:$0xff]
    %v804 = vld [vmem:[#allocation2 + $0x120] sm:$0xff]
    %v805 = vld [vmem:[#allocation2 + $0x128] sm:$0xff]
    %v806 = vld [vmem:[#allocation2 + $0x130] sm:$0xff]
    %v807 = vld [vmem:[#allocation2 + $0x138] sm:$0xff]
    %v808 = vld [vmem:[#allocation2 + $0x140] sm:$0xff]
    %v809 = vld [vmem:[#allocation2 + $0x148] sm:$0xff]
    %v810 = vld [vmem:[#allocation2 + $0x150] sm:$0xff]
    %v811 = vld [vmem:[#allocation2 + $0x158] sm:$0xff]
    %v812 = vld [vmem:[#allocation2 + $0x160] sm:$0xff]
    %v813 = vld [vmem:[#allocation2 + $0x168] sm:$0xff]
    %v814 = vld [vmem:[#allocation2 + $0x170] sm:$0xff]
    %v815 = vld [vmem:[#allocation2 + $0x178] sm:$0xff]
    %v816 = vld [vmem:[#allocation2 + $0x180] sm:$0xff]
    %v817 = vld [vmem:[#allocation2 + $0x188] sm:$0xff]
    %v818 = vld [vmem:[#allocation2 + $0x190] sm:$0xff]
    %v819 = vld [vmem:[#allocation2 + $0x198] sm:$0xff]
    %v820 = vld [vmem:[#allocation2 + $0x1a0] sm:$0xff]
    %v821 = vld [vmem:[#allocation2 + $0x1a8] sm:$0xff]
    %v822 = vld [vmem:[#allocation2 + $0x1b0] sm:$0xff]
    %v823 = vld [vmem:[#allocation2 + $0x1b8] sm:$0xff]
    %v824 = vld [vmem:[#allocation2 + $0x1c0] sm:$0xff]
    %v825 = vld [vmem:[#allocation2 + $0x1c8] sm:$0xff]
    %v826 = vld [vmem:[#allocation2 + $0x1d0] sm:$0xff]
    %v827 = vld [vmem:[#allocation2 + $0x1d8] sm:$0xff]
    %v828 = vld [vmem:[#allocation2 + $0x1e0] sm:$0xff]
    %v829 = vld [vmem:[#allocation2 + $0x1e8] sm:$0xff]
    %v830 = vld [vmem:[#allocation2 + $0x1f0] sm:$0xff]
    %v831 = vld [vmem:[#allocation2 + $0x1f8] sm:$0xff]
    %v832 = vsel %vm699, %v768, 0.0
    %v833 = vsel %vm699, %v769, 0.0
    %v834 = vadd.f32 %v832, %v833
    %v835 = vsel %vm699, %v770, 0.0
    %v836 = vadd.f32 %v834, %v835
    %v837 = vsel %vm699, %v771, 0.0
    %v838 = vadd.f32 %v836, %v837
    %v839 = vsel %vm699, %v772, 0.0
    %v840 = vadd.f32 %v838, %v839
    %v841 = vsel %vm699, %v773, 0.0
    %v842 = vadd.f32 %v840, %v841
    %v843 = vsel %vm699, %v774, 0.0
    %v844 = vadd.f32 %v842, %v843
    %v845 = vsel %vm699, %v775, 0.0
    %v846 = vadd.f32 %v844, %v845
    %v847 = vsel %vm699, %v776, 0.0
    %v848 = vadd.f32 %v846, %v847
    %v849 = vsel %vm699, %v777, 0.0
    %v850 = vadd.f32 %v848, %v849
    %v851 = vsel %vm699, %v778, 0.0
    %v852 = vadd.f32 %v850, %v851
    %v853 = vsel %vm699, %v779, 0.0
    %v854 = vadd.f32 %v852, %v853
    %v855 = vsel %vm699, %v780, 0.0
    %v856 = vadd.f32 %v854, %v855
    %v857 = vsel %vm699, %v781, 0.0
    %v858 = vadd.f32 %v856, %v857
    %v859 = vsel %vm699, %v782, 0.0
    %v860 = vadd.f32 %v858, %v859
    %v861 = vsel %vm699, %v783, 0.0
    %v862 = vadd.f32 %v860, %v861
    %v863 = vsel %vm699, %v784, 0.0
    %v864 = vadd.f32 %v862, %v863
    %v865 = vsel %vm699, %v785, 0.0
    %v866 = vadd.f32 %v864, %v865
    %v867 = vsel %vm699, %v786, 0.0
    %v868 = vadd.f32 %v866, %v867
    %v869 = vsel %vm699, %v787, 0.0
    %v870 = vadd.f32 %v868, %v869
    %v871 = vsel %vm699, %v788, 0.0
    %v872 = vadd.f32 %v870, %v871
    %v873 = vsel %vm699, %v789, 0.0
    %v874 = vadd.f32 %v872, %v873
    %v875 = vsel %vm699, %v790, 0.0
    %v876 = vadd.f32 %v874, %v875
    %v877 = vsel %vm699, %v791, 0.0
    %v878 = vadd.f32 %v876, %v877
    %v879 = vsel %vm699, %v792, 0.0
    %v880 = vadd.f32 %v878, %v879
    %v881 = vsel %vm699, %v793, 0.0
    %v882 = vadd.f32 %v880, %v881
    %v883 = vsel %vm699, %v794, 0.0
    %v884 = vadd.f32 %v882, %v883
    %v885 = vsel %vm699, %v795, 0.0
    %v886 = vadd.f32 %v884, %v885
    %v887 = vsel %vm699, %v796, 0.0
    %v888 = vadd.f32 %v886, %v887
    %v889 = vsel %vm699, %v797, 0.0
    %v890 = vadd.f32 %v888, %v889
    %v891 = vsel %vm699, %v798, 0.0
    %v892 = vadd.f32 %v890, %v891
    %v893 = vsel %vm699, %v799, 0.0
    %v894 = vadd.f32 %v892, %v893
    %v895 = vsel %vm699, %v800, 0.0
    %v896 = vadd.f32 %v894, %v895
    %v897 = vsel %vm699, %v801, 0.0
    %v898 = vadd.f32 %v896, %v897
    %v899 = vsel %vm699, %v802, 0.0
    %v900 = vadd.f32 %v898, %v899
    %v901 = vsel %vm699, %v803, 0.0
    %v902 = vadd.f32 %v900, %v901
    %v903 = vsel %vm699, %v804, 0.0
    %v904 = vadd.f32 %v902, %v903
    %v905 = vsel %vm699, %v805, 0.0
    %v906 = vadd.f32 %v904, %v905
    %v907 = vsel %vm699, %v806, 0.0
    %v908 = vadd.f32 %v906, %v907
    %v909 = vsel %vm699, %v807, 0.0
    %v910 = vadd.f32 %v908, %v909
    %v911 = vsel %vm699, %v808, 0.0
    %v912 = vadd.f32 %v910, %v911
    %v913 = vsel %vm699, %v809, 0.0
    %v914 = vadd.f32 %v912, %v913
    %v915 = vsel %vm699, %v810, 0.0
    %v916 = vadd.f32 %v914, %v915
    %v917 = vsel %vm699, %v811, 0.0
    %v918 = vadd.f32 %v916, %v917
    %v919 = vsel %vm699, %v812, 0.0
    %v920 = vadd.f32 %v918, %v919
    %v921 = vsel %vm699, %v813, 0.0
    %v922 = vadd.f32 %v920, %v921
    %v923 = vsel %vm699, %v814, 0.0
    %v924 = vadd.f32 %v922, %v923
    %v925 = vsel %vm699, %v815, 0.0
    %v926 = vadd.f32 %v924, %v925
    %v927 = vsel %vm699, %v816, 0.0
    %v928 = vadd.f32 %v926, %v927
    %v929 = vsel %vm699, %v817, 0.0
    %v930 = vadd.f32 %v928, %v929
    %v931 = vsel %vm699, %v818, 0.0
    %v932 = vadd.f32 %v930, %v931
    %v933 = vsel %vm699, %v819, 0.0
    %v934 = vadd.f32 %v932, %v933
    %v935 = vsel %vm699, %v820, 0.0
    %v936 = vadd.f32 %v934, %v935
    %v937 = vsel %vm699, %v821, 0.0
    %v938 = vadd.f32 %v936, %v937
    %v939 = vsel %vm699, %v822, 0.0
    %v940 = vadd.f32 %v938, %v939
    %v941 = vsel %vm699, %v823, 0.0
    %v942 = vadd.f32 %v940, %v941
    %v943 = vsel %vm699, %v824, 0.0
    %v944 = vadd.f32 %v942, %v943
    %v945 = vsel %vm699, %v825, 0.0
    %v946 = vadd.f32 %v944, %v945
    %v947 = vsel %vm699, %v826, 0.0
    %v948 = vadd.f32 %v946, %v947
    %v949 = vsel %vm699, %v827, 0.0
    %v950 = vadd.f32 %v948, %v949
    %v951 = vsel %vm699, %v828, 0.0
    %v952 = vadd.f32 %v950, %v951
    %v953 = vsel %vm699, %v829, 0.0
    %v954 = vadd.f32 %v952, %v953
    %v955 = vsel %vm699, %v830, 0.0
    %v956 = vadd.f32 %v954, %v955
    %v957 = vsel %vm699, %v831, 0.0
    %v958 = vadd.f32 %v956, %v957
    %v959 = vrot.slane %v958, 4
    %v960 = vadd.f32 %v958, %v959
    %v961 = vrot.slane %v960, 2
    %v962 = vadd.f32 %v960, %v961
    %v963 = vrot.slane %v962, 1
    %v964 = vadd.f32 %v962, %v963
    %v965 = vrcp.pop 512.0
    %v966 = vmul.f32 %v964, %v965
    %v967 = vsub.f32 %v768, %v966
    %v968 = vsub.f32 %v769, %v966
    %v969 = vsub.f32 %v770, %v966
    %v970 = vsub.f32 %v771, %v966
    %v971 = vsub.f32 %v772, %v966
    %v972 = vsub.f32 %v773, %v966
    %v973 = vsub.f32 %v774, %v966
    %v974 = vsub.f32 %v775, %v966
    %v975 = vsub.f32 %v776, %v966
    %v976 = vsub.f32 %v777, %v966
    %v977 = vsub.f32 %v778, %v966
    %v978 = vsub.f32 %v779, %v966
    %v979 = vsub.f32 %v780, %v966
    %v980 = vsub.f32 %v781, %v966
    %v981 = vsub.f32 %v782, %v966
    %v982 = vsub.f32 %v783, %v966
    %v983 = vsub.f32 %v784, %v966
    %v984 = vsub.f32 %v785, %v966
    %v985 = vsub.f32 %v786, %v966
    %v986 = vsub.f32 %v787, %v966
    %v987 = vsub.f32 %v788, %v966
    %v988 = vsub.f32 %v789, %v966
    %v989 = vsub.f32 %v790, %v966
    %v990 = vsub.f32 %v791, %v966
    %v991 = vsub.f32 %v792, %v966
    %v992 = vsub.f32 %v793, %v966
    %v993 = vsub.f32 %v794, %v966
    %v994 = vsub.f32 %v795, %v966
    %v995 = vsub.f32 %v796, %v966
    %v996 = vsub.f32 %v797, %v966
    %v997 = vsub.f32 %v798, %v966
    %v998 = vsub.f32 %v799, %v966
    %v999 = vsub.f32 %v800, %v966
    %v1000 = vsub.f32 %v801, %v966
    %v1001 = vsub.f32 %v802, %v966
    %v1002 = vsub.f32 %v803, %v966
    %v1003 = vsub.f32 %v804, %v966
    %v1004 = vsub.f32 %v805, %v966
    %v1005 = vsub.f32 %v806, %v966
    %v1006 = vsub.f32 %v807, %v966
    %v1007 = vsub.f32 %v808, %v966
    %v1008 = vsub.f32 %v809, %v966
    %v1009 = vsub.f32 %v810, %v966
    %v1010 = vsub.f32 %v811, %v966
    %v1011 = vsub.f32 %v812, %v966
    %v1012 = vsub.f32 %v813, %v966
    %v1013 = vsub.f32 %v814, %v966
    %v1014 = vsub.f32 %v815, %v966
    %v1015 = vsub.f32 %v816, %v966
    %v1016 = vsub.f32 %v817, %v966
    %v1017 = vsub.f32 %v818, %v966
    %v1018 = vsub.f32 %v819, %v966
    %v1019 = vsub.f32 %v820, %v966
    %v1020 = vsub.f32 %v821, %v966
    %v1021 = vsub.f32 %v822, %v966
    %v1022 = vsub.f32 %v823, %v966
    %v1023 = vsub.f32 %v824, %v966
    %v1024 = vsub.f32 %v825, %v966
    %v1025 = vsub.f32 %v826, %v966
    %v1026 = vsub.f32 %v827, %v966
    %v1027 = vsub.f32 %v828, %v966
    %v1028 = vsub.f32 %v829, %v966
    %v1029 = vsub.f32 %v830, %v966
    %v1030 = vsub.f32 %v831, %v966
    %v1031 = vmul.f32 %v967, %v967
    %v1032 = vmul.f32 %v968, %v968
    %v1033 = vmul.f32 %v969, %v969
    %v1034 = vmul.f32 %v970, %v970
    %v1035 = vmul.f32 %v971, %v971
    %v1036 = vmul.f32 %v972, %v972
    %v1037 = vmul.f32 %v973, %v973
    %v1038 = vmul.f32 %v974, %v974
    %v1039 = vmul.f32 %v975, %v975
    %v1040 = vmul.f32 %v976, %v976
    %v1041 = vmul.f32 %v977, %v977
    %v1042 = vmul.f32 %v978, %v978
    %v1043 = vmul.f32 %v979, %v979
    %v1044 = vmul.f32 %v980, %v980
    %v1045 = vmul.f32 %v981, %v981
    %v1046 = vmul.f32 %v982, %v982
    %v1047 = vmul.f32 %v983, %v983
    %v1048 = vmul.f32 %v984, %v984
    %v1049 = vmul.f32 %v985, %v985
    %v1050 = vmul.f32 %v986, %v986
    %v1051 = vmul.f32 %v987, %v987
    %v1052 = vmul.f32 %v988, %v988
    %v1053 = vmul.f32 %v989, %v989
    %v1054 = vmul.f32 %v990, %v990
    %v1055 = vmul.f32 %v991, %v991
    %v1056 = vmul.f32 %v992, %v992
    %v1057 = vmul.f32 %v993, %v993
    %v1058 = vmul.f32 %v994, %v994
    %v1059 = vmul.f32 %v995, %v995
    %v1060 = vmul.f32 %v996, %v996
    %v1061 = vmul.f32 %v997, %v997
    %v1062 = vmul.f32 %v998, %v998
    %v1063 = vmul.f32 %v999, %v999
    %v1064 = vmul.f32 %v1000, %v1000
    %v1065 = vmul.f32 %v1001, %v1001
    %v1066 = vmul.f32 %v1002, %v1002
    %v1067 = vmul.f32 %v1003, %v1003
    %v1068 = vmul.f32 %v1004, %v1004
    %v1069 = vmul.f32 %v1005, %v1005
    %v1070 = vmul.f32 %v1006, %v1006
    %v1071 = vmul.f32 %v1007, %v1007
    %v1072 = vmul.f32 %v1008, %v1008
    %v1073 = vmul.f32 %v1009, %v1009
    %v1074 = vmul.f32 %v1010, %v1010
    %v1075 = vmul.f32 %v1011, %v1011
    %v1076 = vmul.f32 %v1012, %v1012
    %v1077 = vmul.f32 %v1013, %v1013
    %v1078 = vmul.f32 %v1014, %v1014
    %v1079 = vmul.f32 %v1015, %v1015
    %v1080 = vmul.f32 %v1016, %v1016
    %v1081 = vmul.f32 %v1017, %v1017
    %v1082 = vmul.f32 %v1018, %v1018
    %v1083 = vmul.f32 %v1019, %v1019
    %v1084 = vmul.f32 %v1020, %v1020
    %v1085 = vmul.f32 %v1021, %v1021
    %v1086 = vmul.f32 %v1022, %v1022
    %v1087 = vmul.f32 %v1023, %v1023
    %v1088 = vmul.f32 %v1024, %v1024
    %v1089 = vmul.f32 %v1025, %v1025
    %v1090 = vmul.f32 %v1026, %v1026
    %v1091 = vmul.f32 %v1027, %v1027
    %v1092 = vmul.f32 %v1028, %v1028
    %v1093 = vmul.f32 %v1029, %v1029
    %v1094 = vmul.f32 %v1030, %v1030
    %v1095 = vsel %vm699, %v1031, 0.0
    %v1096 = vsel %vm699, %v1032, 0.0
    %v1097 = vadd.f32 %v1095, %v1096
    %v1098 = vsel %vm699, %v1033, 0.0
    %v1099 = vadd.f32 %v1097, %v1098
    %v1100 = vsel %vm699, %v1034, 0.0
    %v1101 = vadd.f32 %v1099, %v1100
    %v1102 = vsel %vm699, %v1035, 0.0
    %v1103 = vadd.f32 %v1101, %v1102
    %v1104 = vsel %vm699, %v1036, 0.0
    %v1105 = vadd.f32 %v1103, %v1104
    %v1106 = vsel %vm699, %v1037, 0.0
    %v1107 = vadd.f32 %v1105, %v1106
    %v1108 = vsel %vm699, %v1038, 0.0
    %v1109 = vadd.f32 %v1107, %v1108
    %v1110 = vsel %vm699, %v1039, 0.0
    %v1111 = vadd.f32 %v1109, %v1110
    %v1112 = vsel %vm699, %v1040, 0.0
    %v1113 = vadd.f32 %v1111, %v1112
    %v1114 = vsel %vm699, %v1041, 0.0
    %v1115 = vadd.f32 %v1113, %v1114
    %v1116 = vsel %vm699, %v1042, 0.0
    %v1117 = vadd.f32 %v1115, %v1116
    %v1118 = vsel %vm699, %v1043, 0.0
    %v1119 = vadd.f32 %v1117, %v1118
    %v1120 = vsel %vm699, %v1044, 0.0
    %v1121 = vadd.f32 %v1119, %v1120
    %v1122 = vsel %vm699, %v1045, 0.0
    %v1123 = vadd.f32 %v1121, %v1122
    %v1124 = vsel %vm699, %v1046, 0.0
    %v1125 = vadd.f32 %v1123, %v1124
    %v1126 = vsel %vm699, %v1047, 0.0
    %v1127 = vadd.f32 %v1125, %v1126
    %v1128 = vsel %vm699, %v1048, 0.0
    %v1129 = vadd.f32 %v1127, %v1128
    %v1130 = vsel %vm699, %v1049, 0.0
    %v1131 = vadd.f32 %v1129, %v1130
    %v1132 = vsel %vm699, %v1050, 0.0
    %v1133 = vadd.f32 %v1131, %v1132
    %v1134 = vsel %vm699, %v1051, 0.0
    %v1135 = vadd.f32 %v1133, %v1134
    %v1136 = vsel %vm699, %v1052, 0.0
    %v1137 = vadd.f32 %v1135, %v1136
    %v1138 = vsel %vm699, %v1053, 0.0
    %v1139 = vadd.f32 %v1137, %v1138
    %v1140 = vsel %vm699, %v1054, 0.0
    %v1141 = vadd.f32 %v1139, %v1140
    %v1142 = vsel %vm699, %v1055, 0.0
    %v1143 = vadd.f32 %v1141, %v1142
    %v1144 = vsel %vm699, %v1056, 0.0
    %v1145 = vadd.f32 %v1143, %v1144
    %v1146 = vsel %vm699, %v1057, 0.0
    %v1147 = vadd.f32 %v1145, %v1146
    %v1148 = vsel %vm699, %v1058, 0.0
    %v1149 = vadd.f32 %v1147, %v1148
    %v1150 = vsel %vm699, %v1059, 0.0
    %v1151 = vadd.f32 %v1149, %v1150
    %v1152 = vsel %vm699, %v1060, 0.0
    %v1153 = vadd.f32 %v1151, %v1152
    %v1154 = vsel %vm699, %v1061, 0.0
    %v1155 = vadd.f32 %v1153, %v1154
    %v1156 = vsel %vm699, %v1062, 0.0
    %v1157 = vadd.f32 %v1155, %v1156
    %v1158 = vsel %vm699, %v1063, 0.0
    %v1159 = vadd.f32 %v1157, %v1158
    %v1160 = vsel %vm699, %v1064, 0.0
    %v1161 = vadd.f32 %v1159, %v1160
    %v1162 = vsel %vm699, %v1065, 0.0
    %v1163 = vadd.f32 %v1161, %v1162
    %v1164 = vsel %vm699, %v1066, 0.0
    %v1165 = vadd.f32 %v1163, %v1164
    %v1166 = vsel %vm699, %v1067, 0.0
    %v1167 = vadd.f32 %v1165, %v1166
    %v1168 = vsel %vm699, %v1068, 0.0
    %v1169 = vadd.f32 %v1167, %v1168
    %v1170 = vsel %vm699, %v1069, 0.0
    %v1171 = vadd.f32 %v1169, %v1170
    %v1172 = vsel %vm699, %v1070, 0.0
    %v1173 = vadd.f32 %v1171, %v1172
    %v1174 = vsel %vm699, %v1071, 0.0
    %v1175 = vadd.f32 %v1173, %v1174
    %v1176 = vsel %vm699, %v1072, 0.0
    %v1177 = vadd.f32 %v1175, %v1176
    %v1178 = vsel %vm699, %v1073, 0.0
    %v1179 = vadd.f32 %v1177, %v1178
    %v1180 = vsel %vm699, %v1074, 0.0
    %v1181 = vadd.f32 %v1179, %v1180
    %v1182 = vsel %vm699, %v1075, 0.0
    %v1183 = vadd.f32 %v1181, %v1182
    %v1184 = vsel %vm699, %v1076, 0.0
    %v1185 = vadd.f32 %v1183, %v1184
    %v1186 = vsel %vm699, %v1077, 0.0
    %v1187 = vadd.f32 %v1185, %v1186
    %v1188 = vsel %vm699, %v1078, 0.0
    %v1189 = vadd.f32 %v1187, %v1188
    %v1190 = vsel %vm699, %v1079, 0.0
    %v1191 = vadd.f32 %v1189, %v1190
    %v1192 = vsel %vm699, %v1080, 0.0
    %v1193 = vadd.f32 %v1191, %v1192
    %v1194 = vsel %vm699, %v1081, 0.0
    %v1195 = vadd.f32 %v1193, %v1194
    %v1196 = vsel %vm699, %v1082, 0.0
    %v1197 = vadd.f32 %v1195, %v1196
    %v1198 = vsel %vm699, %v1083, 0.0
    %v1199 = vadd.f32 %v1197, %v1198
    %v1200 = vsel %vm699, %v1084, 0.0
    %v1201 = vadd.f32 %v1199, %v1200
    %v1202 = vsel %vm699, %v1085, 0.0
    %v1203 = vadd.f32 %v1201, %v1202
    %v1204 = vsel %vm699, %v1086, 0.0
    %v1205 = vadd.f32 %v1203, %v1204
    %v1206 = vsel %vm699, %v1087, 0.0
    %v1207 = vadd.f32 %v1205, %v1206
    %v1208 = vsel %vm699, %v1088, 0.0
    %v1209 = vadd.f32 %v1207, %v1208
    %v1210 = vsel %vm699, %v1089, 0.0
    %v1211 = vadd.f32 %v1209, %v1210
    %v1212 = vsel %vm699, %v1090, 0.0
    %v1213 = vadd.f32 %v1211, %v1212
    %v1214 = vsel %vm699, %v1091, 0.0
    %v1215 = vadd.f32 %v1213, %v1214
    %v1216 = vsel %vm699, %v1092, 0.0
    %v1217 = vadd.f32 %v1215, %v1216
    %v1218 = vsel %vm699, %v1093, 0.0
    %v1219 = vadd.f32 %v1217, %v1218
    %v1220 = vsel %vm699, %v1094, 0.0
    %v1221 = vadd.f32 %v1219, %v1220
    %v1222 = vrot.slane %v1221, 4
    %v1223 = vadd.f32 %v1221, %v1222
    %v1224 = vrot.slane %v1223, 2
    %v1225 = vadd.f32 %v1223, %v1224
    %v1226 = vrot.slane %v1225, 1
    %v1227 = vadd.f32 %v1225, %v1226
    %v1228 = vmul.f32 %v1227, %v965
    %v1229 = vadd.f32 %v1228, 1e-05
    %v1230 = vrsqrt.pop %v1229
    %v1231 = vmul.f32 %v967, %v1230
    %v1232 = vmul.f32 %v968, %v1230
    %v1233 = vmul.f32 %v969, %v1230
    %v1234 = vmul.f32 %v970, %v1230
    %v1235 = vmul.f32 %v971, %v1230
    %v1236 = vmul.f32 %v972, %v1230
    %v1237 = vmul.f32 %v973, %v1230
    %v1238 = vmul.f32 %v974, %v1230
    %v1239 = vmul.f32 %v975, %v1230
    %v1240 = vmul.f32 %v976, %v1230
    %v1241 = vmul.f32 %v977, %v1230
    %v1242 = vmul.f32 %v978, %v1230
    %v1243 = vmul.f32 %v979, %v1230
    %v1244 = vmul.f32 %v980, %v1230
    %v1245 = vmul.f32 %v981, %v1230
    %v1246 = vmul.f32 %v982, %v1230
    %v1247 = vmul.f32 %v983, %v1230
    %v1248 = vmul.f32 %v984, %v1230
    %v1249 = vmul.f32 %v985, %v1230
    %v1250 = vmul.f32 %v986, %v1230
    %v1251 = vmul.f32 %v987, %v1230
    %v1252 = vmul.f32 %v988, %v1230
    %v1253 = vmul.f32 %v989, %v1230
    %v1254 = vmul.f32 %v990, %v1230
    %v1255 = vmul.f32 %v991, %v1230
    %v1256 = vmul.f32 %v992, %v1230
    %v1257 = vmul.f32 %v993, %v1230
    %v1258 = vmul.f32 %v994, %v1230
    %v1259 = vmul.f32 %v995, %v1230
    %v1260 = vmul.f32 %v996, %v1230
    %v1261 = vmul.f32 %v997, %v1230
    %v1262 = vmul.f32 %v998, %v1230
    %v1263 = vmul.f32 %v999, %v1230
    %v1264 = vmul.f32 %v1000, %v1230
    %v1265 = vmul.f32 %v1001, %v1230
    %v1266 = vmul.f32 %v1002, %v1230
    %v1267 = vmul.f32 %v1003, %v1230
    %v1268 = vmul.f32 %v1004, %v1230
    %v1269 = vmul.f32 %v1005, %v1230
    %v1270 = vmul.f32 %v1006, %v1230
    %v1271 = vmul.f32 %v1007, %v1230
    %v1272 = vmul.f32 %v1008, %v1230
    %v1273 = vmul.f32 %v1009, %v1230
    %v1274 = vmul.f32 %v1010, %v1230
    %v1275 = vmul.f32 %v1011, %v1230
    %v1276 = vmul.f32 %v1012, %v1230
    %v1277 = vmul.f32 %v1013, %v1230
    %v1278 = vmul.f32 %v1014, %v1230
    %v1279 = vmul.f32 %v1015, %v1230
    %v1280 = vmul.f32 %v1016, %v1230
    %v1281 = vmul.f32 %v1017, %v1230
    %v1282 = vmul.f32 %v1018, %v1230
    %v1283 = vmul.f32 %v1019, %v1230
    %v1284 = vmul.f32 %v1020, %v1230
    %v1285 = vmul.f32 %v1021, %v1230
    %v1286 = vmul.f32 %v1022, %v1230
    %v1287 = vmul.f32 %v1023, %v1230
    %v1288 = vmul.f32 %v1024, %v1230
    %v1289 = vmul.f32 %v1025, %v1230
    %v1290 = vmul.f32 %v1026, %v1230
    %v1291 = vmul.f32 %v1027, %v1230
    %v1292 = vmul.f32 %v1028, %v1230
    %v1293 = vmul.f32 %v1029, %v1230
    %v1294 = vmul.f32 %v1030, %v1230
    %v1295 = vpack.c.bf16 %v1232, %v1231
    %v1296 = vpack.c.bf16 %v1234, %v1233
    %v1297 = vpack.c.bf16 %v1236, %v1235
    %v1298 = vpack.c.bf16 %v1238, %v1237
    %v1299 = vpack.c.bf16 %v1240, %v1239
    %v1300 = vpack.c.bf16 %v1242, %v1241
    %v1301 = vpack.c.bf16 %v1244, %v1243
    %v1302 = vpack.c.bf16 %v1246, %v1245
    %v1303 = vpack.c.bf16 %v1248, %v1247
    %v1304 = vpack.c.bf16 %v1250, %v1249
    %v1305 = vpack.c.bf16 %v1252, %v1251
    %v1306 = vpack.c.bf16 %v1254, %v1253
    %v1307 = vpack.c.bf16 %v1256, %v1255
    %v1308 = vpack.c.bf16 %v1258, %v1257
    %v1309 = vpack.c.bf16 %v1260, %v1259
    %v1310 = vpack.c.bf16 %v1262, %v1261
    %v1311 = vpack.c.bf16 %v1264, %v1263
    %v1312 = vpack.c.bf16 %v1266, %v1265
    %v1313 = vpack.c.bf16 %v1268, %v1267
    %v1314 = vpack.c.bf16 %v1270, %v1269
    %v1315 = vpack.c.bf16 %v1272, %v1271
    %v1316 = vpack.c.bf16 %v1274, %v1273
    %v1317 = vpack.c.bf16 %v1276, %v1275
    %v1318 = vpack.c.bf16 %v1278, %v1277
    %v1319 = vpack.c.bf16 %v1280, %v1279
    %v1320 = vpack.c.bf16 %v1282, %v1281
    %v1321 = vpack.c.bf16 %v1284, %v1283
    %v1322 = vpack.c.bf16 %v1286, %v1285
    %v1323 = vpack.c.bf16 %v1288, %v1287
    %v1324 = vpack.c.bf16 %v1290, %v1289
    %v1325 = vpack.c.bf16 %v1292, %v1291
    %v1326 = vpack.c.bf16 %v1294, %v1293
    %v1359 = vunpack.c.l.b16 %v1295
    %v1360 = vunpack.c.h.b16 %v1295
    %v1361 = vunpack.c.l.b16 %v1296
    %v1362 = vunpack.c.h.b16 %v1296
    %v1363 = vunpack.c.l.b16 %v1297
    %v1364 = vunpack.c.h.b16 %v1297
    %v1365 = vunpack.c.l.b16 %v1298
    %v1366 = vunpack.c.h.b16 %v1298
    %v1367 = vunpack.c.l.b16 %v1299
    %v1368 = vunpack.c.h.b16 %v1299
    %v1369 = vunpack.c.l.b16 %v1300
    %v1370 = vunpack.c.h.b16 %v1300
    %v1371 = vunpack.c.l.b16 %v1301
    %v1372 = vunpack.c.h.b16 %v1301
    %v1373 = vunpack.c.l.b16 %v1302
    %v1374 = vunpack.c.h.b16 %v1302
    %v1375 = vunpack.c.l.b16 %v1303
    %v1376 = vunpack.c.h.b16 %v1303
    %v1377 = vunpack.c.l.b16 %v1304
    %v1378 = vunpack.c.h.b16 %v1304
    %v1379 = vunpack.c.l.b16 %v1305
    %v1380 = vunpack.c.h.b16 %v1305
    %v1381 = vunpack.c.l.b16 %v1306
    %v1382 = vunpack.c.h.b16 %v1306
    %v1383 = vunpack.c.l.b16 %v1307
    %v1384 = vunpack.c.h.b16 %v1307
    %v1385 = vunpack.c.l.b16 %v1308
    %v1386 = vunpack.c.h.b16 %v1308
    %v1387 = vunpack.c.l.b16 %v1309
    %v1388 = vunpack.c.h.b16 %v1309
    %v1389 = vunpack.c.l.b16 %v1310
    %v1390 = vunpack.c.h.b16 %v1310
    %v1391 = vunpack.c.l.b16 %v1311
    %v1392 = vunpack.c.h.b16 %v1311
    %v1393 = vunpack.c.l.b16 %v1312
    %v1394 = vunpack.c.h.b16 %v1312
    %v1395 = vunpack.c.l.b16 %v1313
    %v1396 = vunpack.c.h.b16 %v1313
    %v1397 = vunpack.c.l.b16 %v1314
    %v1398 = vunpack.c.h.b16 %v1314
    %v1399 = vunpack.c.l.b16 %v1315
    %v1400 = vunpack.c.h.b16 %v1315
    %v1401 = vunpack.c.l.b16 %v1316
    %v1402 = vunpack.c.h.b16 %v1316
    %v1403 = vunpack.c.l.b16 %v1317
    %v1404 = vunpack.c.h.b16 %v1317
    %v1405 = vunpack.c.l.b16 %v1318
    %v1406 = vunpack.c.h.b16 %v1318
    %v1407 = vunpack.c.l.b16 %v1319
    %v1408 = vunpack.c.h.b16 %v1319
    %v1409 = vunpack.c.l.b16 %v1320
    %v1410 = vunpack.c.h.b16 %v1320
    %v1411 = vunpack.c.l.b16 %v1321
    %v1412 = vunpack.c.h.b16 %v1321
    %v1413 = vunpack.c.l.b16 %v1322
    %v1414 = vunpack.c.h.b16 %v1322
    %v1415 = vunpack.c.l.b16 %v1323
    %v1416 = vunpack.c.h.b16 %v1323
    %v1417 = vunpack.c.l.b16 %v1324
    %v1418 = vunpack.c.h.b16 %v1324
    %v1419 = vunpack.c.l.b16 %v1325
    %v1420 = vunpack.c.h.b16 %v1325
    %v1421 = vunpack.c.l.b16 %v1326
    %v1422 = vunpack.c.h.b16 %v1326
    %v1423 = vpack.c.b16 %v1359, %v1359
    %v1424 = vpack.c.b16 %v1360, %v1360
    %v1425 = vpack.c.b16 %v1361, %v1361
    %v1426 = vpack.c.b16 %v1362, %v1362
    %v1427 = vpack.c.b16 %v1363, %v1363
    %v1428 = vpack.c.b16 %v1364, %v1364
    %v1429 = vpack.c.b16 %v1365, %v1365
    %v1430 = vpack.c.b16 %v1366, %v1366
    %v1431 = vpack.c.b16 %v1367, %v1367
    %v1432 = vpack.c.b16 %v1368, %v1368
    %v1433 = vpack.c.b16 %v1369, %v1369
    %v1434 = vpack.c.b16 %v1370, %v1370
    %v1435 = vpack.c.b16 %v1371, %v1371
    %v1436 = vpack.c.b16 %v1372, %v1372
    %v1437 = vpack.c.b16 %v1373, %v1373
    %v1438 = vpack.c.b16 %v1374, %v1374
    %v1439 = vpack.c.b16 %v1375, %v1375
    %v1440 = vpack.c.b16 %v1376, %v1376
    %v1441 = vpack.c.b16 %v1377, %v1377
    %v1442 = vpack.c.b16 %v1378, %v1378
    %v1443 = vpack.c.b16 %v1379, %v1379
    %v1444 = vpack.c.b16 %v1380, %v1380
    %v1445 = vpack.c.b16 %v1381, %v1381
    %v1446 = vpack.c.b16 %v1382, %v1382
    %v1447 = vpack.c.b16 %v1383, %v1383
    %v1448 = vpack.c.b16 %v1384, %v1384
    %v1449 = vpack.c.b16 %v1385, %v1385
    %v1450 = vpack.c.b16 %v1386, %v1386
    %v1451 = vpack.c.b16 %v1387, %v1387
    %v1452 = vpack.c.b16 %v1388, %v1388
    %v1453 = vpack.c.b16 %v1389, %v1389
    %v1454 = vpack.c.b16 %v1390, %v1390
    %v1455 = vpack.c.b16 %v1391, %v1391
    %v1456 = vpack.c.b16 %v1392, %v1392
    %v1457 = vpack.c.b16 %v1393, %v1393
    %v1458 = vpack.c.b16 %v1394, %v1394
    %v1459 = vpack.c.b16 %v1395, %v1395
    %v1460 = vpack.c.b16 %v1396, %v1396
    %v1461 = vpack.c.b16 %v1397, %v1397
    %v1462 = vpack.c.b16 %v1398, %v1398
    %v1463 = vpack.c.b16 %v1399, %v1399
    %v1464 = vpack.c.b16 %v1400, %v1400
    %v1465 = vpack.c.b16 %v1401, %v1401
    %v1466 = vpack.c.b16 %v1402, %v1402
    %v1467 = vpack.c.b16 %v1403, %v1403
    %v1468 = vpack.c.b16 %v1404, %v1404
    %v1469 = vpack.c.b16 %v1405, %v1405
    %v1470 = vpack.c.b16 %v1406, %v1406
    %v1471 = vpack.c.b16 %v1407, %v1407
    %v1472 = vpack.c.b16 %v1408, %v1408
    %v1473 = vpack.c.b16 %v1409, %v1409
    %v1474 = vpack.c.b16 %v1410, %v1410
    %v1475 = vpack.c.b16 %v1411, %v1411
    %v1476 = vpack.c.b16 %v1412, %v1412
    %v1477 = vpack.c.b16 %v1413, %v1413
    %v1478 = vpack.c.b16 %v1414, %v1414
    %v1479 = vpack.c.b16 %v1415, %v1415
    %v1480 = vpack.c.b16 %v1416, %v1416
    %v1481 = vpack.c.b16 %v1417, %v1417
    %v1482 = vpack.c.b16 %v1418, %v1418
    %v1483 = vpack.c.b16 %v1419, %v1419
    %v1484 = vpack.c.b16 %v1420, %v1420
    %v1485 = vpack.c.b16 %v1421, %v1421
    %v1486 = vpack.c.b16 %v1422, %v1422
    %vm1551 = vcmask 60416
    %1552 = vst.msk [vmem:[%s2] sm:$0xf] %vm1551, %v1423
    %1553 = vst.msk [vmem:[%s2 + $0x4] sm:$0xf] %vm1551, %v1424
    %1554 = vst.msk [vmem:[%s2 + $0x8] sm:$0xf] %vm1551, %v1425
    %1555 = vst.msk [vmem:[%s2 + $0xc] sm:$0xf] %vm1551, %v1426
    %1556 = vst.msk [vmem:[%s2 + $0x10] sm:$0xf] %vm1551, %v1427
    %1557 = vst.msk [vmem:[%s2 + $0x14] sm:$0xf] %vm1551, %v1428
    %1558 = vst.msk [vmem:[%s2 + $0x18] sm:$0xf] %vm1551, %v1429
    %1559 = vst.msk [vmem:[%s2 + $0x1c] sm:$0xf] %vm1551, %v1430
    %1560 = vst.msk [vmem:[%s2 + $0x20] sm:$0xf] %vm1551, %v1431
    %1561 = vst.msk [vmem:[%s2 + $0x24] sm:$0xf] %vm1551, %v1432
    %1562 = vst.msk [vmem:[%s2 + $0x28] sm:$0xf] %vm1551, %v1433
    %1563 = vst.msk [vmem:[%s2 + $0x2c] sm:$0xf] %vm1551, %v1434
    %1564 = vst.msk [vmem:[%s2 + $0x30] sm:$0xf] %vm1551, %v1435
    %1565 = vst.msk [vmem:[%s2 + $0x34] sm:$0xf] %vm1551, %v1436
    %1566 = vst.msk [vmem:[%s2 + $0x38] sm:$0xf] %vm1551, %v1437
    %1567 = vst.msk [vmem:[%s2 + $0x3c] sm:$0xf] %vm1551, %v1438
    %1568 = vst.msk [vmem:[%s2 + $0x40] sm:$0xf] %vm1551, %v1439
    %1569 = vst.msk [vmem:[%s2 + $0x44] sm:$0xf] %vm1551, %v1440
    %1570 = vst.msk [vmem:[%s2 + $0x48] sm:$0xf] %vm1551, %v1441
    %1571 = vst.msk [vmem:[%s2 + $0x4c] sm:$0xf] %vm1551, %v1442
    %1572 = vst.msk [vmem:[%s2 + $0x50] sm:$0xf] %vm1551, %v1443
    %1573 = vst.msk [vmem:[%s2 + $0x54] sm:$0xf] %vm1551, %v1444
    %1574 = vst.msk [vmem:[%s2 + $0x58] sm:$0xf] %vm1551, %v1445
    %1575 = vst.msk [vmem:[%s2 + $0x5c] sm:$0xf] %vm1551, %v1446
    %1576 = vst.msk [vmem:[%s2 + $0x60] sm:$0xf] %vm1551, %v1447
    %1577 = vst.msk [vmem:[%s2 + $0x64] sm:$0xf] %vm1551, %v1448
    %1578 = vst.msk [vmem:[%s2 + $0x68] sm:$0xf] %vm1551, %v1449
    %1579 = vst.msk [vmem:[%s2 + $0x6c] sm:$0xf] %vm1551, %v1450
    %1580 = vst.msk [vmem:[%s2 + $0x70] sm:$0xf] %vm1551, %v1451
    %1581 = vst.msk [vmem:[%s2 + $0x74] sm:$0xf] %vm1551, %v1452
    %1582 = vst.msk [vmem:[%s2 + $0x78] sm:$0xf] %vm1551, %v1453
    %1583 = vst.msk [vmem:[%s2 + $0x7c] sm:$0xf] %vm1551, %v1454
    %1584 = vst.msk [vmem:[%s2 + $0x80] sm:$0xf] %vm1551, %v1455
    %1585 = vst.msk [vmem:[%s2 + $0x84] sm:$0xf] %vm1551, %v1456
    %1586 = vst.msk [vmem:[%s2 + $0x88] sm:$0xf] %vm1551, %v1457
    %1587 = vst.msk [vmem:[%s2 + $0x8c] sm:$0xf] %vm1551, %v1458
    %1588 = vst.msk [vmem:[%s2 + $0x90] sm:$0xf] %vm1551, %v1459
    %1589 = vst.msk [vmem:[%s2 + $0x94] sm:$0xf] %vm1551, %v1460
    %1590 = vst.msk [vmem:[%s2 + $0x98] sm:$0xf] %vm1551, %v1461
    %1591 = vst.msk [vmem:[%s2 + $0x9c] sm:$0xf] %vm1551, %v1462
    %1592 = vst.msk [vmem:[%s2 + $0xa0] sm:$0xf] %vm1551, %v1463
    %1593 = vst.msk [vmem:[%s2 + $0xa4] sm:$0xf] %vm1551, %v1464
    %1594 = vst.msk [vmem:[%s2 + $0xa8] sm:$0xf] %vm1551, %v1465
    %1595 = vst.msk [vmem:[%s2 + $0xac] sm:$0xf] %vm1551, %v1466
    %1596 = vst.msk [vmem:[%s2 + $0xb0] sm:$0xf] %vm1551, %v1467
    %1597 = vst.msk [vmem:[%s2 + $0xb4] sm:$0xf] %vm1551, %v1468
    %1598 = vst.msk [vmem:[%s2 + $0xb8] sm:$0xf] %vm1551, %v1469
    %1599 = vst.msk [vmem:[%s2 + $0xbc] sm:$0xf] %vm1551, %v1470
    %1600 = vst.msk [vmem:[%s2 + $0xc0] sm:$0xf] %vm1551, %v1471
    %1601 = vst.msk [vmem:[%s2 + $0xc4] sm:$0xf] %vm1551, %v1472
    %1602 = vst.msk [vmem:[%s2 + $0xc8] sm:$0xf] %vm1551, %v1473
    %1603 = vst.msk [vmem:[%s2 + $0xcc] sm:$0xf] %vm1551, %v1474
    %1604 = vst.msk [vmem:[%s2 + $0xd0] sm:$0xf] %vm1551, %v1475
    %1605 = vst.msk [vmem:[%s2 + $0xd4] sm:$0xf] %vm1551, %v1476
    %1606 = vst.msk [vmem:[%s2 + $0xd8] sm:$0xf] %vm1551, %v1477
    %1607 = vst.msk [vmem:[%s2 + $0xdc] sm:$0xf] %vm1551, %v1478
    %1608 = vst.msk [vmem:[%s2 + $0xe0] sm:$0xf] %vm1551, %v1479
    %1609 = vst.msk [vmem:[%s2 + $0xe4] sm:$0xf] %vm1551, %v1480
    %1610 = vst.msk [vmem:[%s2 + $0xe8] sm:$0xf] %vm1551, %v1481
    %1611 = vst.msk [vmem:[%s2 + $0xec] sm:$0xf] %vm1551, %v1482
    %1612 = vst.msk [vmem:[%s2 + $0xf0] sm:$0xf] %vm1551, %v1483
    %1613 = vst.msk [vmem:[%s2 + $0xf4] sm:$0xf] %vm1551, %v1484
    %1614 = vst.msk [vmem:[%s2 + $0xf8] sm:$0xf] %vm1551, %v1485
    %1615 = vst.msk [vmem:[%s2 + $0xfc] sm:$0xf] %vm1551, %v1486
  $region13: #{_lambda_.13} parent=0 // pred_fallthru
    _
  // Predicated region
  $region14: #{_lambda_.13} parent=0 // pred_check
    _
  $region15: #{_lambda_.13} parent=0 // pred_check_branch
    %1617 = sbr.rel (0) target = $region17
  $region16: #{_lambda_.13} parent=0 // pred_region
    _
  $region17: #{_lambda_.13} parent=0 // pred_fallthru
    _
  // Predicated region
  $region18: #{_lambda_.13} parent=0 // pred_check
    _
  $region19: #{_lambda_.13} parent=0 // pred_check_branch
    %1619 = sbr.rel (0) target = $region21
  $region20: #{_lambda_.13} parent=0 // pred_region
    _
  $region21: #{_lambda_.13} parent=0 // pred_fallthru
    _

// kernel: _lambda_.15
$region0: #{_lambda_.15}
  #allocation0 [shape = 'u32[]', space=smem, size = 0x4, offset = 0x4, fixed_abs, tag = 'smem constant byte address 0x4 - core index']
  #allocation1 [shape = 'u32[144,128]{1,0:T(1,128)}', space=vmem, size = 0x12000, scoped, tag = 'internal scratch']
  %s0 = inlined_call_operand.vmem [shape: bf16[4,128,16], index: 0, kind: input, shape index: {}]
  %s1 = inlined_call_operand.vmem [shape: bf16[4,16,8], index: 1, kind: input, shape index: {}]
  %s2 = inlined_call_operand.vmem [shape: bf16[4,128,8], index: 2, kind: output, shape index: {}]
  %s3 = sld [smem:[#allocation0]]
  $region41: #{_lambda_.15} parent=0
    _
  %s5 = ssub.s32 1, %s3
  %s6 = scalar_select 0, %s5, %s3
  loop: start=0, step=1, limit=6
  $region2: #{_lambda_.15} parent=0 // loop_pre_header
    _
  $region3: #{_lambda_.15} parent=0 // loop_header
    %s8 = sphi 0, %s12
    %p9 = scmp.ge.s32.totalorder %s8, 6
    %s18 = sphi 0, %s20
    %s21 = sphi 0, %s18
    %s22 = sphi 0, %s21
    %s38 = sphi 0, %s22
    %s44 = sphi 0, %s46
    %s47 = sphi 0, %s44
    %s48 = sphi 0, %s47
    %s64 = sphi 0, %s48
    %s70 = sphi 0, %s72
    %s73 = sphi 0, %s70
    %s74 = sphi 0, %s73
    %s90 = sphi 0, %s74
  $region4: #{_lambda_.15} parent=0 // loop_header_branch
    %11 = sbr.rel (%p9) target = $region8
  $region5: #{_lambda_.15} parent=0 // loop_body
    %s13 = ssub.s32 %s8, 1
    %s14 = ssub.s32 %s8, 2
    %s15 = sadd.s32 %s8, 1
    %s16 = ssub.s32 %s8, %s15
    %p17 = scmp.eq.s32.totalorder %s16, 0
    %s19 = sadd.s32 %s18, 1
    %s20 = scalar_select %p17, %s18, %s19
    %p23 = pneg %p17
    %p24 = scmp.eq.s32.totalorder %s8, 3
    %p25 = por %p23, %p24
    %p26 = scmp.ne.s32.totalorder %s18, %s21
    %p27 = scmp.eq.s32.totalorder %s8, 0
    %p28 = por %p26, %p27
    %p29 = scmp.ne.s32.totalorder %s18, %s21
    %p30 = scmp.eq.s32.totalorder %s13, 3
    %p31 = por %p29, %p30
    %p32 = scmp.ne.s32.totalorder %s21, %s22
    %p33 = scmp.eq.s32.totalorder %s13, 0
    %p34 = por %p32, %p33
    %p35 = scmp.ne.s32.totalorder %s21, %s22
    %p36 = scmp.eq.s32.totalorder %s14, 3
    %p37 = por %p35, %p36
    %p39 = scmp.ne.s32.totalorder %s22, %s38
    %p40 = scmp.eq.s32.totalorder %s14, 0
    %p41 = por %p39, %p40
    %s42 = ssub.s32 %s8, %s15
    %p43 = scmp.eq.s32.totalorder %s42, 0
    %s45 = sadd.s32 %s44, 1
    %s46 = scalar_select %p43, %s44, %s45
    %p49 = pneg %p43
    %p50 = scmp.eq.s32.totalorder %s8, 3
    %p51 = por %p49, %p50
    %p52 = scmp.ne.s32.totalorder %s44, %s47
    %p53 = scmp.eq.s32.totalorder %s8, 0
    %p54 = por %p52, %p53
    %p55 = scmp.ne.s32.totalorder %s44, %s47
    %p56 = scmp.eq.s32.totalorder %s13, 3
    %p57 = por %p55, %p56
    %p58 = scmp.ne.s32.totalorder %s47, %s48
    %p59 = scmp.eq.s32.totalorder %s13, 0
    %p60 = por %p58, %p59
    %p61 = scmp.ne.s32.totalorder %s47, %s48
    %p62 = scmp.eq.s32.totalorder %s14, 3
    %p63 = por %p61, %p62
    %p65 = scmp.ne.s32.totalorder %s48, %s64
    %p66 = scmp.eq.s32.totalorder %s14, 0
    %p67 = por %p65, %p66
    %s68 = ssub.s32 %s8, %s15
    %p69 = scmp.eq.s32.totalorder %s68, 0
    %s71 = sadd.s32 %s70, 1
    %s72 = scalar_select %p69, %s70, %s71
    %p75 = pneg %p69
    %p76 = scmp.eq.s32.totalorder %s8, 3
    %p77 = por %p75, %p76
    %p78 = scmp.ne.s32.totalorder %s70, %s73
    %p79 = scmp.eq.s32.totalorder %s8, 0
    %p80 = por %p78, %p79
    %p81 = scmp.ne.s32.totalorder %s70, %s73
    %p82 = scmp.eq.s32.totalorder %s13, 3
    %p83 = por %p81, %p82
    %p84 = scmp.ne.s32.totalorder %s73, %s74
    %p85 = scmp.eq.s32.totalorder %s13, 0
    %p86 = por %p84, %p85
    %p87 = scmp.ne.s32.totalorder %s73, %s74
    %p88 = scmp.eq.s32.totalorder %s14, 3
    %p89 = por %p87, %p88
    %p91 = scmp.ne.s32.totalorder %s74, %s90
    %p92 = scmp.eq.s32.totalorder %s14, 0
    %p93 = por %p91, %p92
    %p94 = scmp.le.s32.totalorder 1, %s8
    %p95 = scmp.lt.s32.totalorder %s8, 5
    %p96 = pnand %p94, %p95
    %p97 = pneg %p96
    // Predicated region
    $region9: #{_lambda_.15} parent=5 // pred_check
      _
    $region10: #{_lambda_.15} parent=5 // pred_check_branch
      %99 = sbr.rel (%p96) target = $region12
    $region11: #{_lambda_.15} parent=5 // pred_region
      %s100 = ssub.s32 %s8, 1
    $region12: #{_lambda_.15} parent=5 // pred_fallthru
      _
    %p101 = scmp.lt.s32.totalorder %s8, 4
    // Predicated region
    $region13: #{_lambda_.15} parent=5 // pred_check
      %p102 = pneg %p101
    $region14: #{_lambda_.15} parent=5 // pred_check_branch
      %104 = sbr.rel (%p102) target = $region16
    $region15: #{_lambda_.15} parent=5 // pred_region
      // Predicated region
      $region17: #{_lambda_.15} parent=15 // pred_check
        %p105 = pneg %p28
      $region18: #{_lambda_.15} parent=15 // pred_check_branch
        %107 = sbr.rel (%p105) target = $region20
      $region19: #{_lambda_.15} parent=15 // pred_region
        %p108 = scmp.lt.s32.totalorder %s8, 3
        %s109 = scalar_select %p108, %s8, 3
        %s110 = smul.addr %s109, 16
        %s111 = smul.addr %s110, 4
        %s112 = scalar_lea.vmem %s0, %s111
      $region20: #{_lambda_.15} parent=15 // pred_fallthru
        _
      // Predicated region
      $region21: #{_lambda_.15} parent=15 // pred_check
        %p113 = pneg %p54
      $region22: #{_lambda_.15} parent=15 // pred_check_branch
        %115 = sbr.rel (%p113) target = $region24
      $region23: #{_lambda_.15} parent=15 // pred_region
        %p116 = scmp.lt.s32.totalorder %s8, 3
        %s117 = scalar_select %p116, %s8, 3
        %s118 = smul.addr %s117, 2
        %s119 = smul.addr %s118, 4
        %s120 = scalar_lea.vmem %s1, %s119
      $region24: #{_lambda_.15} parent=15 // pred_fallthru
        _
    $region16: #{_lambda_.15} parent=5 // pred_fallthru
      _
    %p121 = scmp.le.s32.totalorder 1, %s8
    %p122 = scmp.lt.s32.totalorder %s8, 5
    %p123 = pnand %p121, %p122
    %p124 = pneg %p123
    // Predicated region
    $region25: #{_lambda_.15} parent=5 // pred_check
      _
    $region26: #{_lambda_.15} parent=5 // pred_check_branch
      %126 = sbr.rel (%p123) target = $region28
    $region27: #{_lambda_.15} parent=5 // pred_region
      %s127 = ssub.s32 %s8, 1
      %p128 = scmp.lt.s32.totalorder %s13, 3
      %s129 = scalar_select %p128, %s13, 3
      %s130 = smul.addr %s129, 16
      %s131 = smul.addr %s130, 4
      %s132 = scalar_lea.vmem %s0, %s131
      %p133 = pneg %p34
      %p134 = pneg %p31
      %p135 = scmp.lt.s32.totalorder %s13, 3
      %s136 = scalar_select %p135, %s13, 3
      %s137 = smul.addr %s136, 2
      %s138 = smul.addr %s137, 4
      %s139 = scalar_lea.vmem %s1, %s138
      %p140 = pneg %p60
      %p141 = pneg %p57
      %p142 = pneg %p86
      %p143 = pneg %p83
      %p144 = scmp.lt.s32.totalorder %s13, 3
      %s145 = scalar_select %p144, %s13, 3
      %s146 = smul.addr %s145, 16
      %s147 = smul.addr %s146, 4
      %s148 = scalar_lea.vmem %s2, %s147
      %p149 = scmp.lt.s32.totalorder %s13, 3
      %s150 = scalar_select %p149, %s13, 3
      %s151 = smul.addr %s150, 16
      %s152 = smul.addr %s151, 4
      %s153 = scalar_lea.vmem %s0, %s152
      %p154 = scmp.lt.s32.totalorder %s13, 3
      %s155 = scalar_select %p154, %s13, 3
      %s156 = smul.addr %s155, 2
      %s157 = smul.addr %s156, 4
      %s158 = scalar_lea.vmem %s1, %s157
      %p159 = scmp.lt.s32.totalorder %s13, 3
      %s160 = scalar_select %p159, %s13, 3
      %s161 = smul.addr %s160, 16
      %s162 = smul.addr %s161, 4
      %s163 = scalar_lea.vmem %s2, %s162
      %v165 = vld [vmem:[%s153] sm:$0xf]
      %v166 = vld [vmem:[%s153 + $0x4] sm:$0xf]
      %v167 = vld [vmem:[%s153 + $0x8] sm:$0xf]
      %v168 = vld [vmem:[%s153 + $0xc] sm:$0xf]
      %v169 = vld [vmem:[%s153 + $0x10] sm:$0xf]
      %v170 = vld [vmem:[%s153 + $0x14] sm:$0xf]
      %v171 = vld [vmem:[%s153 + $0x18] sm:$0xf]
      %v172 = vld [vmem:[%s153 + $0x1c] sm:$0xf]
      %v173 = vld [vmem:[%s153 + $0x20] sm:$0xf]
      %v174 = vld [vmem:[%s153 + $0x24] sm:$0xf]
      %v175 = vld [vmem:[%s153 + $0x28] sm:$0xf]
      %v176 = vld [vmem:[%s153 + $0x2c] sm:$0xf]
      %v177 = vld [vmem:[%s153 + $0x30] sm:$0xf]
      %v178 = vld [vmem:[%s153 + $0x34] sm:$0xf]
      %v179 = vld [vmem:[%s153 + $0x38] sm:$0xf]
      %v180 = vld [vmem:[%s153 + $0x3c] sm:$0xf]
      %v181 = vmax.bf16 %v165, 0
      %v182 = vmax.bf16 %v166, 0
      %v183 = vmax.bf16 %v167, 0
      %v184 = vmax.bf16 %v168, 0
      %v185 = vmax.bf16 %v169, 0
      %v186 = vmax.bf16 %v170, 0
      %v187 = vmax.bf16 %v171, 0
      %v188 = vmax.bf16 %v172, 0
      %v189 = vmax.bf16 %v173, 0
      %v190 = vmax.bf16 %v174, 0
      %v191 = vmax.bf16 %v175, 0
      %v192 = vmax.bf16 %v176, 0
      %v193 = vmax.bf16 %v177, 0
      %v194 = vmax.bf16 %v178, 0
      %v195 = vmax.bf16 %v179, 0
      %v196 = vmax.bf16 %v180, 0
      %v197 = vld [vmem:[%s158] sm:$0xf]
      %v198 = vld [vmem:[%s158 + $0x4] sm:$0xf]
      %v215 = vunpack.c.l.b16 %v181
      %v216 = vunpack.c.l.b16 %v182
      %v217 = vunpack.c.l.b16 %v183
      %v218 = vunpack.c.l.b16 %v184
      %v219 = vunpack.c.l.b16 %v185
      %v220 = vunpack.c.l.b16 %v186
      %v221 = vunpack.c.l.b16 %v187
      %v222 = vunpack.c.l.b16 %v188
      %v223 = vunpack.c.l.b16 %v189
      %v224 = vunpack.c.l.b16 %v190
      %v225 = vunpack.c.l.b16 %v191
      %v226 = vunpack.c.l.b16 %v192
      %v227 = vunpack.c.l.b16 %v193
      %v228 = vunpack.c.l.b16 %v194
      %v229 = vunpack.c.l.b16 %v195
      %v230 = vunpack.c.l.b16 %v196
      %v231 = vpack.c.b16 %v216, %v215
      %v232 = vpack.c.b16 %v218, %v217
      %v233 = vpack.c.b16 %v220, %v219
      %v234 = vpack.c.b16 %v222, %v221
      %v235 = vpack.c.b16 %v224, %v223
      %v236 = vpack.c.b16 %v226, %v225
      %v237 = vpack.c.b16 %v228, %v227
      %v238 = vpack.c.b16 %v230, %v229
      %v241 = vunpack.c.l.b16 %v197
      %v242 = vunpack.c.l.b16 %v198
      %v243 = vpack.c.b16 %v242, %v241
      %vm245 = vcmask 130048
      %v247 = vsel %vm245, %v231, 0
      %v250 = vsel %vm245, %v232, 0
      %v253 = vsel %vm245, %v233, 0
      %v256 = vsel %vm245, %v234, 0
      %v259 = vsel %vm245, %v235, 0
      %v262 = vsel %vm245, %v236, 0
      %v265 = vsel %vm245, %v237, 0
      %v268 = vsel %vm245, %v238, 0
      %270 = vmatprep.subr.bf16.mxu0 0
      %271 = vmatpush1.bf16.msra.mxu0 %v243
      %272 = vmatprep.subr.bf16.mxu0 0
      %273 = vmatpush1.bf16.msra.mxu0 0
      %274 = vmatprep.subr.bf16.mxu0 0
      %275 = vmatpush1.bf16.msra.mxu0 0
      %276 = vmatprep.subr.bf16.mxu0 0
      %277 = vmatpush1.bf16.msra.mxu0 0
      %278 = vmatprep.subr.bf16.mxu0 0
      %279 = vmatpush1.bf16.msra.mxu0 0
      %280 = vmatprep.subr.bf16.mxu0 0
      %281 = vmatpush1.bf16.msra.mxu0 0
      %282 = vmatprep.subr.bf16.mxu0 0
      %283 = vmatpush1.bf16.msra.mxu0 0
      %284 = vmatprep.subr.bf16.mxu0 0
      %285 = vmatpush1.bf16.msra.mxu0 0
      %286 = vmatprep.subr.bf16.mxu0 0
      %287 = vmatpush1.bf16.msra.mxu0 0
      %288 = vmatprep.subr.bf16.mxu0 0
      %289 = vmatpush1.bf16.msra.mxu0 0
      %290 = vmatprep.subr.bf16.mxu0 0
      %291 = vmatpush1.bf16.msra.mxu0 0
      %292 = vmatprep.subr.bf16.mxu0 0
      %293 = vmatpush1.bf16.msra.mxu0 0
      %294 = vmatprep.subr.bf16.mxu0 0
      %295 = vmatpush1.bf16.msra.mxu0 0
      %296 = vmatprep.subr.bf16.mxu0 0
      %297 = vmatpush1.bf16.msra.mxu0 0
      %298 = vmatprep.subr.bf16.mxu0 0
      %299 = vmatpush1.bf16.msra.mxu0 0
      %300 = vmatprep.subr.bf16.mxu0 0
      %301 = vmatpush1.bf16.msra.mxu0 0
      %302 = vmatprep.mubr.bf16.mxu0 0
      %303 = vmatmul.mubr.bf16.gmra.mrb[0].mxu0 %v247
      %v304 = vpop.f32.mrb[0].mxu0
      %v305 = vadd.f32 0.0, %v304
      %v306 = vpop.f32.mrb[0].mxu0
      %v307 = vpop.f32.mrb[0].mxu0
      %v308 = vadd.f32 0.0, %v307
      %v309 = vpop.f32.mrb[0].mxu0
      %310 = vmatprep.mubr.bf16.mxu0 0
      %311 = vmatmul.mubr.bf16.gmra.mrb[0].mxu0 %v250
      %v312 = vpop.f32.mrb[0].mxu0
      %v313 = vadd.f32 0.0, %v312
      %v314 = vpop.f32.mrb[0].mxu0
      %v315 = vpop.f32.mrb[0].mxu0
      %v316 = vadd.f32 0.0, %v315
      %v317 = vpop.f32.mrb[0].mxu0
      %318 = vmatprep.mubr.bf16.mxu0 0
      %319 = vmatmul.mubr.bf16.gmra.mrb[0].mxu0 %v253
      %v320 = vpop.f32.mrb[0].mxu0
      %v321 = vadd.f32 0.0, %v320
      %v322 = vpop.f32.mrb[0].mxu0
      %v323 = vpop.f32.mrb[0].mxu0
      %v324 = vadd.f32 0.0, %v323
      %v325 = vpop.f32.mrb[0].mxu0
      %326 = vmatprep.mubr.bf16.mxu0 0
      %327 = vmatmul.mubr.bf16.gmra.mrb[0].mxu0 %v256
      %v328 = vpop.f32.mrb[0].mxu0
      %v329 = vadd.f32 0.0, %v328
      %v330 = vpop.f32.mrb[0].mxu0
      %v331 = vpop.f32.mrb[0].mxu0
      %v332 = vadd.f32 0.0, %v331
      %v333 = vpop.f32.mrb[0].mxu0
      %334 = vmatprep.mubr.bf16.mxu0 0
      %335 = vmatmul.mubr.bf16.gmra.mrb[0].mxu0 %v259
      %v336 = vpop.f32.mrb[0].mxu0
      %v337 = vadd.f32 0.0, %v336
      %v338 = vpop.f32.mrb[0].mxu0
      %v339 = vpop.f32.mrb[0].mxu0
      %v340 = vadd.f32 0.0, %v339
      %v341 = vpop.f32.mrb[0].mxu0
      %342 = vmatprep.mubr.bf16.mxu0 0
      %343 = vmatmul.mubr.bf16.gmra.mrb[0].mxu0 %v262
      %v344 = vpop.f32.mrb[0].mxu0
      %v345 = vadd.f32 0.0, %v344
      %v346 = vpop.f32.mrb[0].mxu0
      %v347 = vpop.f32.mrb[0].mxu0
      %v348 = vadd.f32 0.0, %v347
      %v349 = vpop.f32.mrb[0].mxu0
      %350 = vmatprep.mubr.bf16.mxu0 0
      %351 = vmatmul.mubr.bf16.gmra.mrb[0].mxu0 %v265
      %v352 = vpop.f32.mrb[0].mxu0
      %v353 = vadd.f32 0.0, %v352
      %v354 = vpop.f32.mrb[0].mxu0
      %v355 = vpop.f32.mrb[0].mxu0
      %v356 = vadd.f32 0.0, %v355
      %v357 = vpop.f32.mrb[0].mxu0
      %358 = vmatprep.mubr.bf16.mxu0 0
      %359 = vmatmul.mubr.bf16.gmra.mrb[0].mxu0 %v268
      %v360 = vpop.f32.mrb[0].mxu0
      %v361 = vadd.f32 0.0, %v360
      %v362 = vpop.f32.mrb[0].mxu0
      %v363 = vpop.f32.mrb[0].mxu0
      %v364 = vadd.f32 0.0, %v363
      %v365 = vpop.f32.mrb[0].mxu0
      %366 = vdwg.mxu0
      %vm367 = vcmask 64512
      %v368 = vsel %vm367, %v305, 0.0
      %v369 = vsel %vm367, %v308, 0.0
      %v370 = vadd.f32 %v368, %v369
      %v371 = vsel %vm367, %v313, 0.0
      %v372 = vadd.f32 %v370, %v371
      %v373 = vsel %vm367, %v316, 0.0
      %v374 = vadd.f32 %v372, %v373
      %v375 = vsel %vm367, %v321, 0.0
      %v376 = vadd.f32 %v374, %v375
      %v377 = vsel %vm367, %v324, 0.0
      %v378 = vadd.f32 %v376, %v377
      %v379 = vsel %vm367, %v329, 0.0
      %v380 = vadd.f32 %v378, %v379
      %v381 = vsel %vm367, %v332, 0.0
      %v382 = vadd.f32 %v380, %v381
      %v383 = vsel %vm367, %v337, 0.0
      %v384 = vadd.f32 %v382, %v383
      %v385 = vsel %vm367, %v340, 0.0
      %v386 = vadd.f32 %v384, %v385
      %v387 = vsel %vm367, %v345, 0.0
      %v388 = vadd.f32 %v386, %v387
      %v389 = vsel %vm367, %v348, 0.0
      %v390 = vadd.f32 %v388, %v389
      %v391 = vsel %vm367, %v353, 0.0
      %v392 = vadd.f32 %v390, %v391
      %v393 = vsel %vm367, %v356, 0.0
      %v394 = vadd.f32 %v392, %v393
      %v395 = vsel %vm367, %v361, 0.0
      %v396 = vadd.f32 %v394, %v395
      %v397 = vsel %vm367, %v364, 0.0
      %v398 = vadd.f32 %v396, %v397
      %v399 = vrot.slane %v398, 4
      %v400 = vadd.f32 %v398, %v399
      %v401 = vrot.slane %v400, 2
      %v402 = vadd.f32 %v400, %v401
      %v403 = vrot.slane %v402, 1
      %v404 = vadd.f32 %v402, %v403
      %v405 = vrcp.pop 128.0
      %v406 = vmul.f32 %v404, %v405
      %v407 = vsub.f32 %v305, %v406
      %v408 = vsub.f32 %v308, %v406
      %v409 = vsub.f32 %v313, %v406
      %v410 = vsub.f32 %v316, %v406
      %v411 = vsub.f32 %v321, %v406
      %v412 = vsub.f32 %v324, %v406
      %v413 = vsub.f32 %v329, %v406
      %v414 = vsub.f32 %v332, %v406
      %v415 = vsub.f32 %v337, %v406
      %v416 = vsub.f32 %v340, %v406
      %v417 = vsub.f32 %v345, %v406
      %v418 = vsub.f32 %v348, %v406
      %v419 = vsub.f32 %v353, %v406
      %v420 = vsub.f32 %v356, %v406
      %v421 = vsub.f32 %v361, %v406
      %v422 = vsub.f32 %v364, %v406
      %v423 = vmul.f32 %v407, %v407
      %v424 = vmul.f32 %v408, %v408
      %v425 = vmul.f32 %v409, %v409
      %v426 = vmul.f32 %v410, %v410
      %v427 = vmul.f32 %v411, %v411
      %v428 = vmul.f32 %v412, %v412
      %v429 = vmul.f32 %v413, %v413
      %v430 = vmul.f32 %v414, %v414
      %v431 = vmul.f32 %v415, %v415
      %v432 = vmul.f32 %v416, %v416
      %v433 = vmul.f32 %v417, %v417
      %v434 = vmul.f32 %v418, %v418
      %v435 = vmul.f32 %v419, %v419
      %v436 = vmul.f32 %v420, %v420
      %v437 = vmul.f32 %v421, %v421
      %v438 = vmul.f32 %v422, %v422
      %v439 = vsel %vm367, %v423, 0.0
      %v440 = vsel %vm367, %v424, 0.0
      %v441 = vadd.f32 %v439, %v440
      %v442 = vsel %vm367, %v425, 0.0
      %v443 = vadd.f32 %v441, %v442
      %v444 = vsel %vm367, %v426, 0.0
      %v445 = vadd.f32 %v443, %v444
      %v446 = vsel %vm367, %v427, 0.0
      %v447 = vadd.f32 %v445, %v446
      %v448 = vsel %vm367, %v428, 0.0
      %v449 = vadd.f32 %v447, %v448
      %v450 = vsel %vm367, %v429, 0.0
      %v451 = vadd.f32 %v449, %v450
      %v452 = vsel %vm367, %v430, 0.0
      %v453 = vadd.f32 %v451, %v452
      %v454 = vsel %vm367, %v431, 0.0
      %v455 = vadd.f32 %v453, %v454
      %v456 = vsel %vm367, %v432, 0.0
      %v457 = vadd.f32 %v455, %v456
      %v458 = vsel %vm367, %v433, 0.0
      %v459 = vadd.f32 %v457, %v458
      %v460 = vsel %vm367, %v434, 0.0
      %v461 = vadd.f32 %v459, %v460
      %v462 = vsel %vm367, %v435, 0.0
      %v463 = vadd.f32 %v461, %v462
      %v464 = vsel %vm367, %v436, 0.0
      %v465 = vadd.f32 %v463, %v464
      %v466 = vsel %vm367, %v437, 0.0
      %v467 = vadd.f32 %v465, %v466
      %v468 = vsel %vm367, %v438, 0.0
      %v469 = vadd.f32 %v467, %v468
      %v470 = vrot.slane %v469, 4
      %v471 = vadd.f32 %v469, %v470
      %v472 = vrot.slane %v471, 2
      %v473 = vadd.f32 %v471, %v472
      %v474 = vrot.slane %v473, 1
      %v475 = vadd.f32 %v473, %v474
      %v476 = vmul.f32 %v475, %v405
      %v477 = vadd.f32 %v476, 1e-05
      %v478 = vrsqrt.pop %v477
      %v479 = vmul.f32 %v407, %v478
      %v480 = vmul.f32 %v408, %v478
      %v481 = vmul.f32 %v409, %v478
      %v482 = vmul.f32 %v410, %v478
      %v483 = vmul.f32 %v411, %v478
      %v484 = vmul.f32 %v412, %v478
      %v485 = vmul.f32 %v413, %v478
      %v486 = vmul.f32 %v414, %v478
      %v487 = vmul.f32 %v415, %v478
      %v488 = vmul.f32 %v416, %v478
      %v489 = vmul.f32 %v417, %v478
      %v490 = vmul.f32 %v418, %v478
      %v491 = vmul.f32 %v419, %v478
      %v492 = vmul.f32 %v420, %v478
      %v493 = vmul.f32 %v421, %v478
      %v494 = vmul.f32 %v422, %v478
      %v495 = vpack.c.bf16 %v480, %v479
      %v496 = vpack.c.bf16 %v482, %v481
      %v497 = vpack.c.bf16 %v484, %v483
      %v498 = vpack.c.bf16 %v486, %v485
      %v499 = vpack.c.bf16 %v488, %v487
      %v500 = vpack.c.bf16 %v490, %v489
      %v501 = vpack.c.bf16 %v492, %v491
      %v502 = vpack.c.bf16 %v494, %v493
      %v511 = vunpack.c.l.b16 %v495
      %v512 = vunpack.c.h.b16 %v495
      %v513 = vunpack.c.l.b16 %v496
      %v514 = vunpack.c.h.b16 %v496
      %v515 = vunpack.c.l.b16 %v497
      %v516 = vunpack.c.h.b16 %v497
      %v517 = vunpack.c.l.b16 %v498
      %v518 = vunpack.c.h.b16 %v498
      %v519 = vunpack.c.l.b16 %v499
      %v520 = vunpack.c.h.b16 %v499
      %v521 = vunpack.c.l.b16 %v500
      %v522 = vunpack.c.h.b16 %v500
      %v523 = vunpack.c.l.b16 %v501
      %v524 = vunpack.c.h.b16 %v501
      %v525 = vunpack.c.l.b16 %v502
      %v526 = vunpack.c.h.b16 %v502
      %v527 = vpack.c.b16 %v511, %v511
      %v528 = vpack.c.b16 %v512, %v512
      %v529 = vpack.c.b16 %v513, %v513
      %v530 = vpack.c.b16 %v514, %v514
      %v531 = vpack.c.b16 %v515, %v515
      %v532 = vpack.c.b16 %v516, %v516
      %v533 = vpack.c.b16 %v517, %v517
      %v534 = vpack.c.b16 %v518, %v518
      %v535 = vpack.c.b16 %v519, %v519
      %v536 = vpack.c.b16 %v520, %v520
      %v537 = vpack.c.b16 %v521, %v521
      %v538 = vpack.c.b16 %v522, %v522
      %v539 = vpack.c.b16 %v523, %v523
      %v540 = vpack.c.b16 %v524, %v524
      %v541 = vpack.c.b16 %v525, %v525
      %v542 = vpack.c.b16 %v526, %v526
      %vm559 = vcmask 60416
      %560 = vst.msk [vmem:[%s163] sm:$0xf] %vm559, %v527
      %561 = vst.msk [vmem:[%s163 + $0x4] sm:$0xf] %vm559, %v528
      %562 = vst.msk [vmem:[%s163 + $0x8] sm:$0xf] %vm559, %v529
      %563 = vst.msk [vmem:[%s163 + $0xc] sm:$0xf] %vm559, %v530
      %564 = vst.msk [vmem:[%s163 + $0x10] sm:$0xf] %vm559, %v531
      %565 = vst.msk [vmem:[%s163 + $0x14] sm:$0xf] %vm559, %v532
      %566 = vst.msk [vmem:[%s163 + $0x18] sm:$0xf] %vm559, %v533
      %567 = vst.msk [vmem:[%s163 + $0x1c] sm:$0xf] %vm559, %v534
      %568 = vst.msk [vmem:[%s163 + $0x20] sm:$0xf] %vm559, %v535
      %569 = vst.msk [vmem:[%s163 + $0x24] sm:$0xf] %vm559, %v536
      %570 = vst.msk [vmem:[%s163 + $0x28] sm:$0xf] %vm559, %v537
      %571 = vst.msk [vmem:[%s163 + $0x2c] sm:$0xf] %vm559, %v538
      %572 = vst.msk [vmem:[%s163 + $0x30] sm:$0xf] %vm559, %v539
      %573 = vst.msk [vmem:[%s163 + $0x34] sm:$0xf] %vm559, %v540
      %574 = vst.msk [vmem:[%s163 + $0x38] sm:$0xf] %vm559, %v541
      %575 = vst.msk [vmem:[%s163 + $0x3c] sm:$0xf] %vm559, %v542
      %p576 = scmp.lt.s32.totalorder %s13, 3
      %s577 = scalar_select %p576, %s13, 3
      %s578 = smul.addr %s577, 16
      %s579 = smul.addr %s578, 4
      %s580 = scalar_lea.vmem %s2, %s579
      // Predicated region
      $region29: #{_lambda_.15} parent=27 // pred_check
        %p581 = pneg %p83
      $region30: #{_lambda_.15} parent=27 // pred_check_branch
        %583 = sbr.rel (%p581) target = $region32
      $region31: #{_lambda_.15} parent=27 // pred_region
        _
      $region32: #{_lambda_.15} parent=27 // pred_fallthru
        _
    $region28: #{_lambda_.15} parent=5 // pred_fallthru
      _
    %p584 = scmp.le.s32.totalorder 2, %s8
    // Predicated region
    $region33: #{_lambda_.15} parent=5 // pred_check
      %p585 = pneg %p584
    $region34: #{_lambda_.15} parent=5 // pred_check_branch
      %587 = sbr.rel (%p585) target = $region36
    $region35: #{_lambda_.15} parent=5 // pred_region
      %s588 = ssub.s32 %s8, 2
      // Predicated region
      $region37: #{_lambda_.15} parent=35 // pred_check
        %p589 = pneg %p89
      $region38: #{_lambda_.15} parent=35 // pred_check_branch
        %591 = sbr.rel (%p589) target = $region40
      $region39: #{_lambda_.15} parent=35 // pred_region
        %p592 = scmp.lt.s32.totalorder %s14, 3
        %s593 = scalar_select %p592, %s14, 3
        %s594 = smul.addr %s593, 16
        %s595 = smul.addr %s594, 4
        %s596 = scalar_lea.vmem %s2, %s595
      $region40: #{_lambda_.15} parent=35 // pred_fallthru
        _
    $region36: #{_lambda_.15} parent=5 // pred_fallthru
      _
  $region6: #{_lambda_.15} parent=0 // loop_footer
    %s12 = sadd.s32 1, %s8
  $region7: #{_lambda_.15} parent=0 // loop_footer_branch
    %7 = sbr.rel target = $region3
  $region8: #{_lambda_.15} parent=0 // loop_exit
    _

// kernel: _lambda_.17
$region0: #{_lambda_.17}
  #allocation0 [shape = 'u32[]', space=smem, size = 0x4, offset = 0x4, fixed_abs, tag = 'smem constant byte address 0x4 - core index']
  #allocation1 [shape = 'u32[144,128]{1,0:T(1,128)}', space=vmem, size = 0x12000, scoped, tag = 'internal scratch']
  #allocation2 [shape = 'f32[128,16]{1,0:T(8,128)}', space=vmem, size = 0x10000, scoped, tag = 'scratch operand']
  %s0 = inlined_call_operand.vmem [shape: bf16[128,16], index: 0, kind: input, shape index: {}]
  %s1 = inlined_call_operand.vmem [shape: bf16[16,16], index: 1, kind: input, shape index: {}]
  %s2 = inlined_call_operand.vmem [shape: bf16[128,16], index: 2, kind: output, shape index: {}]
  %s3 = sld [smem:[#allocation0]]
  $region22: #{_lambda_.17} parent=0
    _
  %s5 = ssub.s32 1, %s3
  %s6 = scalar_select 0, %s5, %s3
  // Predicated region
  $region2: #{_lambda_.17} parent=0 // pred_check
    _
  $region3: #{_lambda_.17} parent=0 // pred_check_branch
    %8 = sbr.rel (0) target = $region5
  $region4: #{_lambda_.17} parent=0 // pred_region
    _
  $region5: #{_lambda_.17} parent=0 // pred_fallthru
    _
  // Predicated region
  $region6: #{_lambda_.17} parent=0 // pred_check
    _
  $region7: #{_lambda_.17} parent=0 // pred_check_branch
    %10 = sbr.rel (0) target = $region9
  $region8: #{_lambda_.17} parent=0 // pred_region
    _
  $region9: #{_lambda_.17} parent=0 // pred_fallthru
    _
  %v12 = vld [vmem:[%s0] sm:$0xf]
  %v13 = vld [vmem:[%s0 + $0x4] sm:$0xf]
  %v14 = vld [vmem:[%s0 + $0x8] sm:$0xf]
  %v15 = vld [vmem:[%s0 + $0xc] sm:$0xf]
  %v16 = vld [vmem:[%s0 + $0x10] sm:$0xf]
  %v17 = vld [vmem:[%s0 + $0x14] sm:$0xf]
  %v18 = vld [vmem:[%s0 + $0x18] sm:$0xf]
  %v19 = vld [vmem:[%s0 + $0x1c] sm:$0xf]
  %v20 = vld [vmem:[%s0 + $0x20] sm:$0xf]
  %v21 = vld [vmem:[%s0 + $0x24] sm:$0xf]
  %v22 = vld [vmem:[%s0 + $0x28] sm:$0xf]
  %v23 = vld [vmem:[%s0 + $0x2c] sm:$0xf]
  %v24 = vld [vmem:[%s0 + $0x30] sm:$0xf]
  %v25 = vld [vmem:[%s0 + $0x34] sm:$0xf]
  %v26 = vld [vmem:[%s0 + $0x38] sm:$0xf]
  %v27 = vld [vmem:[%s0 + $0x3c] sm:$0xf]
  %v28 = vmax.bf16 %v12, 0
  %v29 = vmax.bf16 %v13, 0
  %v30 = vmax.bf16 %v14, 0
  %v31 = vmax.bf16 %v15, 0
  %v32 = vmax.bf16 %v16, 0
  %v33 = vmax.bf16 %v17, 0
  %v34 = vmax.bf16 %v18, 0
  %v35 = vmax.bf16 %v19, 0
  %v36 = vmax.bf16 %v20, 0
  %v37 = vmax.bf16 %v21, 0
  %v38 = vmax.bf16 %v22, 0
  %v39 = vmax.bf16 %v23, 0
  %v40 = vmax.bf16 %v24, 0
  %v41 = vmax.bf16 %v25, 0
  %v42 = vmax.bf16 %v26, 0
  %v43 = vmax.bf16 %v27, 0
  %v44 = vld [vmem:[%s1] sm:$0xf]
  %v45 = vld [vmem:[%s1 + $0x4] sm:$0xf]
  %v62 = vunpack.c.l.b16 %v28
  %v63 = vunpack.c.l.b16 %v29
  %v64 = vunpack.c.l.b16 %v30
  %v65 = vunpack.c.l.b16 %v31
  %v66 = vunpack.c.l.b16 %v32
  %v67 = vunpack.c.l.b16 %v33
  %v68 = vunpack.c.l.b16 %v34
  %v69 = vunpack.c.l.b16 %v35
  %v70 = vunpack.c.l.b16 %v36
  %v71 = vunpack.c.l.b16 %v37
  %v72 = vunpack.c.l.b16 %v38
  %v73 = vunpack.c.l.b16 %v39
  %v74 = vunpack.c.l.b16 %v40
  %v75 = vunpack.c.l.b16 %v41
  %v76 = vunpack.c.l.b16 %v42
  %v77 = vunpack.c.l.b16 %v43
  %v78 = vpack.c.b16 %v63, %v62
  %v79 = vpack.c.b16 %v65, %v64
  %v80 = vpack.c.b16 %v67, %v66
  %v81 = vpack.c.b16 %v69, %v68
  %v82 = vpack.c.b16 %v71, %v70
  %v83 = vpack.c.b16 %v73, %v72
  %v84 = vpack.c.b16 %v75, %v74
  %v85 = vpack.c.b16 %v77, %v76
  %v88 = vunpack.c.l.b16 %v44
  %v89 = vunpack.c.l.b16 %v45
  %v90 = vpack.c.b16 %v89, %v88
  %vm92 = vcmask 130048
  %v94 = vsel %vm92, %v78, 0
  %v97 = vsel %vm92, %v79, 0
  %v100 = vsel %vm92, %v80, 0
  %v103 = vsel %vm92, %v81, 0
  %v106 = vsel %vm92, %v82, 0
  %v109 = vsel %vm92, %v83, 0
  %v112 = vsel %vm92, %v84, 0
  %v115 = vsel %vm92, %v85, 0
  %117 = vmatprep.subr.bf16.mxu0 0
  %118 = vmatpush1.bf16.msra.mxu0 %v90
  %119 = vmatprep.subr.bf16.mxu0 0
  %120 = vmatpush1.bf16.msra.mxu0 0
  %121 = vmatprep.subr.bf16.mxu0 0
  %122 = vmatpush1.bf16.msra.mxu0 0
  %123 = vmatprep.subr.bf16.mxu0 0
  %124 = vmatpush1.bf16.msra.mxu0 0
  %125 = vmatprep.subr.bf16.mxu0 0
  %126 = vmatpush1.bf16.msra.mxu0 0
  %127 = vmatprep.subr.bf16.mxu0 0
  %128 = vmatpush1.bf16.msra.mxu0 0
  %129 = vmatprep.subr.bf16.mxu0 0
  %130 = vmatpush1.bf16.msra.mxu0 0
  %131 = vmatprep.subr.bf16.mxu0 0
  %132 = vmatpush1.bf16.msra.mxu0 0
  %133 = vmatprep.subr.bf16.mxu0 0
  %134 = vmatpush1.bf16.msra.mxu0 0
  %135 = vmatprep.subr.bf16.mxu0 0
  %136 = vmatpush1.bf16.msra.mxu0 0
  %137 = vmatprep.subr.bf16.mxu0 0
  %138 = vmatpush1.bf16.msra.mxu0 0
  %139 = vmatprep.subr.bf16.mxu0 0
  %140 = vmatpush1.bf16.msra.mxu0 0
  %141 = vmatprep.subr.bf16.mxu0 0
  %142 = vmatpush1.bf16.msra.mxu0 0
  %143 = vmatprep.subr.bf16.mxu0 0
  %144 = vmatpush1.bf16.msra.mxu0 0
  %145 = vmatprep.subr.bf16.mxu0 0
  %146 = vmatpush1.bf16.msra.mxu0 0
  %147 = vmatprep.subr.bf16.mxu0 0
  %148 = vmatpush1.bf16.msra.mxu0 0
  %149 = vmatprep.mubr.bf16.mxu0 0
  %150 = vmatmul.mubr.bf16.gmra.mrb[0].mxu0 %v94
  %v151 = vpop.f32.mrb[0].mxu0
  %v152 = vadd.f32 0.0, %v151
  %v153 = vpop.f32.mrb[0].mxu0
  %v154 = vpop.f32.mrb[0].mxu0
  %v155 = vadd.f32 0.0, %v154
  %v156 = vpop.f32.mrb[0].mxu0
  %157 = vmatprep.mubr.bf16.mxu0 0
  %158 = vmatmul.mubr.bf16.gmra.mrb[0].mxu0 %v97
  %v159 = vpop.f32.mrb[0].mxu0
  %v160 = vadd.f32 0.0, %v159
  %v161 = vpop.f32.mrb[0].mxu0
  %v162 = vpop.f32.mrb[0].mxu0
  %v163 = vadd.f32 0.0, %v162
  %v164 = vpop.f32.mrb[0].mxu0
  %165 = vmatprep.mubr.bf16.mxu0 0
  %166 = vmatmul.mubr.bf16.gmra.mrb[0].mxu0 %v100
  %v167 = vpop.f32.mrb[0].mxu0
  %v168 = vadd.f32 0.0, %v167
  %v169 = vpop.f32.mrb[0].mxu0
  %v170 = vpop.f32.mrb[0].mxu0
  %v171 = vadd.f32 0.0, %v170
  %v172 = vpop.f32.mrb[0].mxu0
  %173 = vmatprep.mubr.bf16.mxu0 0
  %174 = vmatmul.mubr.bf16.gmra.mrb[0].mxu0 %v103
  %v175 = vpop.f32.mrb[0].mxu0
  %v176 = vadd.f32 0.0, %v175
  %v177 = vpop.f32.mrb[0].mxu0
  %v178 = vpop.f32.mrb[0].mxu0
  %v179 = vadd.f32 0.0, %v178
  %v180 = vpop.f32.mrb[0].mxu0
  %181 = vmatprep.mubr.bf16.mxu0 0
  %182 = vmatmul.mubr.bf16.gmra.mrb[0].mxu0 %v106
  %v183 = vpop.f32.mrb[0].mxu0
  %v184 = vadd.f32 0.0, %v183
  %v185 = vpop.f32.mrb[0].mxu0
  %v186 = vpop.f32.mrb[0].mxu0
  %v187 = vadd.f32 0.0, %v186
  %v188 = vpop.f32.mrb[0].mxu0
  %189 = vmatprep.mubr.bf16.mxu0 0
  %190 = vmatmul.mubr.bf16.gmra.mrb[0].mxu0 %v109
  %v191 = vpop.f32.mrb[0].mxu0
  %v192 = vadd.f32 0.0, %v191
  %v193 = vpop.f32.mrb[0].mxu0
  %v194 = vpop.f32.mrb[0].mxu0
  %v195 = vadd.f32 0.0, %v194
  %v196 = vpop.f32.mrb[0].mxu0
  %197 = vmatprep.mubr.bf16.mxu0 0
  %198 = vmatmul.mubr.bf16.gmra.mrb[0].mxu0 %v112
  %v199 = vpop.f32.mrb[0].mxu0
  %v200 = vadd.f32 0.0, %v199
  %v201 = vpop.f32.mrb[0].mxu0
  %v202 = vpop.f32.mrb[0].mxu0
  %v203 = vadd.f32 0.0, %v202
  %v204 = vpop.f32.mrb[0].mxu0
  %205 = vmatprep.mubr.bf16.mxu0 0
  %206 = vmatmul.mubr.bf16.gmra.mrb[0].mxu0 %v115
  %v207 = vpop.f32.mrb[0].mxu0
  %v208 = vadd.f32 0.0, %v207
  %v209 = vpop.f32.mrb[0].mxu0
  %v210 = vpop.f32.mrb[0].mxu0
  %v211 = vadd.f32 0.0, %v210
  %v212 = vpop.f32.mrb[0].mxu0
  %213 = vdwg.mxu0
  %s214 = smul.u32 0, 128
  %s215 = scalar_lea.vmem [#allocation2], %s214
  %216 = vst.msk [vmem:[%s215] sm:$0xff] %vm92, %v152
  %217 = vst.msk [vmem:[%s215 + $0x8] sm:$0xff] %vm92, %v155
  %218 = vst.msk [vmem:[%s215 + $0x10] sm:$0xff] %vm92, %v160
  %219 = vst.msk [vmem:[%s215 + $0x18] sm:$0xff] %vm92, %v163
  %220 = vst.msk [vmem:[%s215 + $0x20] sm:$0xff] %vm92, %v168
  %221 = vst.msk [vmem:[%s215 + $0x28] sm:$0xff] %vm92, %v171
  %222 = vst.msk [vmem:[%s215 + $0x30] sm:$0xff] %vm92, %v176
  %223 = vst.msk [vmem:[%s215 + $0x38] sm:$0xff] %vm92, %v179
  %224 = vst.msk [vmem:[%s215 + $0x40] sm:$0xff] %vm92, %v184
  %225 = vst.msk [vmem:[%s215 + $0x48] sm:$0xff] %vm92, %v187
  %226 = vst.msk [vmem:[%s215 + $0x50] sm:$0xff] %vm92, %v192
  %227 = vst.msk [vmem:[%s215 + $0x58] sm:$0xff] %vm92, %v195
  %228 = vst.msk [vmem:[%s215 + $0x60] sm:$0xff] %vm92, %v200
  %229 = vst.msk [vmem:[%s215 + $0x68] sm:$0xff] %vm92, %v203
  %230 = vst.msk [vmem:[%s215 + $0x70] sm:$0xff] %vm92, %v208
  %231 = vst.msk [vmem:[%s215 + $0x78] sm:$0xff] %vm92, %v211
  %p232 = scmp.eq.s32.totalorder 0, 0
  // Predicated region
  $region10: #{_lambda_.17} parent=0 // pred_check
    %p233 = pneg %p232
  $region11: #{_lambda_.17} parent=0 // pred_check_branch
    %235 = sbr.rel (%p233) target = $region13
  $region12: #{_lambda_.17} parent=0 // pred_region
    %v236 = vld [vmem:[#allocation2] sm:$0xff]
    %v237 = vld [vmem:[#allocation2 + $0x8] sm:$0xff]
    %v238 = vld [vmem:[#allocation2 + $0x10] sm:$0xff]
    %v239 = vld [vmem:[#allocation2 + $0x18] sm:$0xff]
    %v240 = vld [vmem:[#allocation2 + $0x20] sm:$0xff]
    %v241 = vld [vmem:[#allocation2 + $0x28] sm:$0xff]
    %v242 = vld [vmem:[#allocation2 + $0x30] sm:$0xff]
    %v243 = vld [vmem:[#allocation2 + $0x38] sm:$0xff]
    %v244 = vld [vmem:[#allocation2 + $0x40] sm:$0xff]
    %v245 = vld [vmem:[#allocation2 + $0x48] sm:$0xff]
    %v246 = vld [vmem:[#allocation2 + $0x50] sm:$0xff]
    %v247 = vld [vmem:[#allocation2 + $0x58] sm:$0xff]
    %v248 = vld [vmem:[#allocation2 + $0x60] sm:$0xff]
    %v249 = vld [vmem:[#allocation2 + $0x68] sm:$0xff]
    %v250 = vld [vmem:[#allocation2 + $0x70] sm:$0xff]
    %v251 = vld [vmem:[#allocation2 + $0x78] sm:$0xff]
    %v252 = vsel %vm92, %v236, 0.0
    %v253 = vsel %vm92, %v237, 0.0
    %v254 = vadd.f32 %v252, %v253
    %v255 = vsel %vm92, %v238, 0.0
    %v256 = vadd.f32 %v254, %v255
    %v257 = vsel %vm92, %v239, 0.0
    %v258 = vadd.f32 %v256, %v257
    %v259 = vsel %vm92, %v240, 0.0
    %v260 = vadd.f32 %v258, %v259
    %v261 = vsel %vm92, %v241, 0.0
    %v262 = vadd.f32 %v260, %v261
    %v263 = vsel %vm92, %v242, 0.0
    %v264 = vadd.f32 %v262, %v263
    %v265 = vsel %vm92, %v243, 0.0
    %v266 = vadd.f32 %v264, %v265
    %v267 = vsel %vm92, %v244, 0.0
    %v268 = vadd.f32 %v266, %v267
    %v269 = vsel %vm92, %v245, 0.0
    %v270 = vadd.f32 %v268, %v269
    %v271 = vsel %vm92, %v246, 0.0
    %v272 = vadd.f32 %v270, %v271
    %v273 = vsel %vm92, %v247, 0.0
    %v274 = vadd.f32 %v272, %v273
    %v275 = vsel %vm92, %v248, 0.0
    %v276 = vadd.f32 %v274, %v275
    %v277 = vsel %vm92, %v249, 0.0
    %v278 = vadd.f32 %v276, %v277
    %v279 = vsel %vm92, %v250, 0.0
    %v280 = vadd.f32 %v278, %v279
    %v281 = vsel %vm92, %v251, 0.0
    %v282 = vadd.f32 %v280, %v281
    %v283 = vrot.slane %v282, 4
    %v284 = vadd.f32 %v282, %v283
    %v285 = vrot.slane %v284, 2
    %v286 = vadd.f32 %v284, %v285
    %v287 = vrot.slane %v286, 1
    %v288 = vadd.f32 %v286, %v287
    %v289 = vrcp.pop 128.0
    %v290 = vmul.f32 %v288, %v289
    %v291 = vsub.f32 %v236, %v290
    %v292 = vsub.f32 %v237, %v290
    %v293 = vsub.f32 %v238, %v290
    %v294 = vsub.f32 %v239, %v290
    %v295 = vsub.f32 %v240, %v290
    %v296 = vsub.f32 %v241, %v290
    %v297 = vsub.f32 %v242, %v290
    %v298 = vsub.f32 %v243, %v290
    %v299 = vsub.f32 %v244, %v290
    %v300 = vsub.f32 %v245, %v290
    %v301 = vsub.f32 %v246, %v290
    %v302 = vsub.f32 %v247, %v290
    %v303 = vsub.f32 %v248, %v290
    %v304 = vsub.f32 %v249, %v290
    %v305 = vsub.f32 %v250, %v290
    %v306 = vsub.f32 %v251, %v290
    %v307 = vmul.f32 %v291, %v291
    %v308 = vmul.f32 %v292, %v292
    %v309 = vmul.f32 %v293, %v293
    %v310 = vmul.f32 %v294, %v294
    %v311 = vmul.f32 %v295, %v295
    %v312 = vmul.f32 %v296, %v296
    %v313 = vmul.f32 %v297, %v297
    %v314 = vmul.f32 %v298, %v298
    %v315 = vmul.f32 %v299, %v299
    %v316 = vmul.f32 %v300, %v300
    %v317 = vmul.f32 %v301, %v301
    %v318 = vmul.f32 %v302, %v302
    %v319 = vmul.f32 %v303, %v303
    %v320 = vmul.f32 %v304, %v304
    %v321 = vmul.f32 %v305, %v305
    %v322 = vmul.f32 %v306, %v306
    %v323 = vsel %vm92, %v307, 0.0
    %v324 = vsel %vm92, %v308, 0.0
    %v325 = vadd.f32 %v323, %v324
    %v326 = vsel %vm92, %v309, 0.0
    %v327 = vadd.f32 %v325, %v326
    %v328 = vsel %vm92, %v310, 0.0
    %v329 = vadd.f32 %v327, %v328
    %v330 = vsel %vm92, %v311, 0.0
    %v331 = vadd.f32 %v329, %v330
    %v332 = vsel %vm92, %v312, 0.0
    %v333 = vadd.f32 %v331, %v332
    %v334 = vsel %vm92, %v313, 0.0
    %v335 = vadd.f32 %v333, %v334
    %v336 = vsel %vm92, %v314, 0.0
    %v337 = vadd.f32 %v335, %v336
    %v338 = vsel %vm92, %v315, 0.0
    %v339 = vadd.f32 %v337, %v338
    %v340 = vsel %vm92, %v316, 0.0
    %v341 = vadd.f32 %v339, %v340
    %v342 = vsel %vm92, %v317, 0.0
    %v343 = vadd.f32 %v341, %v342
    %v344 = vsel %vm92, %v318, 0.0
    %v345 = vadd.f32 %v343, %v344
    %v346 = vsel %vm92, %v319, 0.0
    %v347 = vadd.f32 %v345, %v346
    %v348 = vsel %vm92, %v320, 0.0
    %v349 = vadd.f32 %v347, %v348
    %v350 = vsel %vm92, %v321, 0.0
    %v351 = vadd.f32 %v349, %v350
    %v352 = vsel %vm92, %v322, 0.0
    %v353 = vadd.f32 %v351, %v352
    %v354 = vrot.slane %v353, 4
    %v355 = vadd.f32 %v353, %v354
    %v356 = vrot.slane %v355, 2
    %v357 = vadd.f32 %v355, %v356
    %v358 = vrot.slane %v357, 1
    %v359 = vadd.f32 %v357, %v358
    %v360 = vmul.f32 %v359, %v289
    %v361 = vadd.f32 %v360, 1e-05
    %v362 = vrsqrt.pop %v361
    %v363 = vmul.f32 %v291, %v362
    %v364 = vmul.f32 %v292, %v362
    %v365 = vmul.f32 %v293, %v362
    %v366 = vmul.f32 %v294, %v362
    %v367 = vmul.f32 %v295, %v362
    %v368 = vmul.f32 %v296, %v362
    %v369 = vmul.f32 %v297, %v362
    %v370 = vmul.f32 %v298, %v362
    %v371 = vmul.f32 %v299, %v362
    %v372 = vmul.f32 %v300, %v362
    %v373 = vmul.f32 %v301, %v362
    %v374 = vmul.f32 %v302, %v362
    %v375 = vmul.f32 %v303, %v362
    %v376 = vmul.f32 %v304, %v362
    %v377 = vmul.f32 %v305, %v362
    %v378 = vmul.f32 %v306, %v362
    %v379 = vpack.c.bf16 %v364, %v363
    %v380 = vpack.c.bf16 %v366, %v365
    %v381 = vpack.c.bf16 %v368, %v367
    %v382 = vpack.c.bf16 %v370, %v369
    %v383 = vpack.c.bf16 %v372, %v371
    %v384 = vpack.c.bf16 %v374, %v373
    %v385 = vpack.c.bf16 %v376, %v375
    %v386 = vpack.c.bf16 %v378, %v377
    %v395 = vunpack.c.l.b16 %v379
    %v396 = vunpack.c.h.b16 %v379
    %v397 = vunpack.c.l.b16 %v380
    %v398 = vunpack.c.h.b16 %v380
    %v399 = vunpack.c.l.b16 %v381
    %v400 = vunpack.c.h.b16 %v381
    %v401 = vunpack.c.l.b16 %v382
    %v402 = vunpack.c.h.b16 %v382
    %v403 = vunpack.c.l.b16 %v383
    %v404 = vunpack.c.h.b16 %v383
    %v405 = vunpack.c.l.b16 %v384
    %v406 = vunpack.c.h.b16 %v384
    %v407 = vunpack.c.l.b16 %v385
    %v408 = vunpack.c.h.b16 %v385
    %v409 = vunpack.c.l.b16 %v386
    %v410 = vunpack.c.h.b16 %v386
    %v411 = vpack.c.b16 %v395, %v395
    %v412 = vpack.c.b16 %v396, %v396
    %v413 = vpack.c.b16 %v397, %v397
    %v414 = vpack.c.b16 %v398, %v398
    %v415 = vpack.c.b16 %v399, %v399
    %v416 = vpack.c.b16 %v400, %v400
    %v417 = vpack.c.b16 %v401, %v401
    %v418 = vpack.c.b16 %v402, %v402
    %v419 = vpack.c.b16 %v403, %v403
    %v420 = vpack.c.b16 %v404, %v404
    %v421 = vpack.c.b16 %v405, %v405
    %v422 = vpack.c.b16 %v406, %v406
    %v423 = vpack.c.b16 %v407, %v407
    %v424 = vpack.c.b16 %v408, %v408
    %v425 = vpack.c.b16 %v409, %v409
    %v426 = vpack.c.b16 %v410, %v410
    %vm443 = vcmask 125952
    %444 = vst.msk [vmem:[%s2] sm:$0xf] %vm443, %v411
    %445 = vst.msk [vmem:[%s2 + $0x4] sm:$0xf] %vm443, %v412
    %446 = vst.msk [vmem:[%s2 + $0x8] sm:$0xf] %vm443, %v413
    %447 = vst.msk [vmem:[%s2 + $0xc] sm:$0xf] %vm443, %v414
    %448 = vst.msk [vmem:[%s2 + $0x10] sm:$0xf] %vm443, %v415
    %449 = vst.msk [vmem:[%s2 + $0x14] sm:$0xf] %vm443, %v416
    %450 = vst.msk [vmem:[%s2 + $0x18] sm:$0xf] %vm443, %v417
    %451 = vst.msk [vmem:[%s2 + $0x1c] sm:$0xf] %vm443, %v418
    %452 = vst.msk [vmem:[%s2 + $0x20] sm:$0xf] %vm443, %v419
    %453 = vst.msk [vmem:[%s2 + $0x24] sm:$0xf] %vm443, %v420
    %454 = vst.msk [vmem:[%s2 + $0x28] sm:$0xf] %vm443, %v421
    %455 = vst.msk [vmem:[%s2 + $0x2c] sm:$0xf] %vm443, %v422
    %456 = vst.msk [vmem:[%s2 + $0x30] sm:$0xf] %vm443, %v423
    %457 = vst.msk [vmem:[%s2 + $0x34] sm:$0xf] %vm443, %v424
    %458 = vst.msk [vmem:[%s2 + $0x38] sm:$0xf] %vm443, %v425
    %459 = vst.msk [vmem:[%s2 + $0x3c] sm:$0xf] %vm443, %v426
  $region13: #{_lambda_.17} parent=0 // pred_fallthru
    _
  // Predicated region
  $region14: #{_lambda_.17} parent=0 // pred_check
    _
  $region15: #{_lambda_.17} parent=0 // pred_check_branch
    %461 = sbr.rel (0) target = $region17
  $region16: #{_lambda_.17} parent=0 // pred_region
    _
  $region17: #{_lambda_.17} parent=0 // pred_fallthru
    _
  // Predicated region
  $region18: #{_lambda_.17} parent=0 // pred_check
    _
  $region19: #{_lambda_.17} parent=0 // pred_check_branch
    %463 = sbr.rel (0) target = $region21
  $region20: #{_lambda_.17} parent=0 // pred_region
    _
  $region21: #{_lambda_.17} parent=0 // pred_fallthru
    _

// kernel: _lambda_.18
$region0: #{_lambda_.18}
  #allocation0 [shape = 'u32[]', space=smem, size = 0x4, offset = 0x4, fixed_abs, tag = 'smem constant byte address 0x4 - core index']
  #allocation1 [shape = 'u32[144,128]{1,0:T(1,128)}', space=vmem, size = 0x12000, scoped, tag = 'internal scratch']
  %s0 = inlined_call_operand.vmem [shape: bf16[4,32,32], index: 0, kind: input, shape index: {}]
  %s1 = inlined_call_operand.vmem [shape: bf16[4,32,16], index: 1, kind: input, shape index: {}]
  %s2 = inlined_call_operand.vmem [shape: bf16[4,32,16], index: 2, kind: output, shape index: {}]
  %s3 = sld [smem:[#allocation0]]
  $region41: #{_lambda_.18} parent=0
    _
  %s5 = ssub.s32 1, %s3
  %s6 = scalar_select 0, %s5, %s3
  loop: start=0, step=1, limit=6
  $region2: #{_lambda_.18} parent=0 // loop_pre_header
    _
  $region3: #{_lambda_.18} parent=0 // loop_header
    %s8 = sphi 0, %s12
    %p9 = scmp.ge.s32.totalorder %s8, 6
    %s18 = sphi 0, %s20
    %s21 = sphi 0, %s18
    %s22 = sphi 0, %s21
    %s38 = sphi 0, %s22
    %s44 = sphi 0, %s46
    %s47 = sphi 0, %s44
    %s48 = sphi 0, %s47
    %s64 = sphi 0, %s48
    %s70 = sphi 0, %s72
    %s73 = sphi 0, %s70
    %s74 = sphi 0, %s73
    %s90 = sphi 0, %s74
  $region4: #{_lambda_.18} parent=0 // loop_header_branch
    %11 = sbr.rel (%p9) target = $region8
  $region5: #{_lambda_.18} parent=0 // loop_body
    %s13 = ssub.s32 %s8, 1
    %s14 = ssub.s32 %s8, 2
    %s15 = sadd.s32 %s8, 1
    %s16 = ssub.s32 %s8, %s15
    %p17 = scmp.eq.s32.totalorder %s16, 0
    %s19 = sadd.s32 %s18, 1
    %s20 = scalar_select %p17, %s18, %s19
    %p23 = pneg %p17
    %p24 = scmp.eq.s32.totalorder %s8, 3
    %p25 = por %p23, %p24
    %p26 = scmp.ne.s32.totalorder %s18, %s21
    %p27 = scmp.eq.s32.totalorder %s8, 0
    %p28 = por %p26, %p27
    %p29 = scmp.ne.s32.totalorder %s18, %s21
    %p30 = scmp.eq.s32.totalorder %s13, 3
    %p31 = por %p29, %p30
    %p32 = scmp.ne.s32.totalorder %s21, %s22
    %p33 = scmp.eq.s32.totalorder %s13, 0
    %p34 = por %p32, %p33
    %p35 = scmp.ne.s32.totalorder %s21, %s22
    %p36 = scmp.eq.s32.totalorder %s14, 3
    %p37 = por %p35, %p36
    %p39 = scmp.ne.s32.totalorder %s22, %s38
    %p40 = scmp.eq.s32.totalorder %s14, 0
    %p41 = por %p39, %p40
    %s42 = ssub.s32 %s8, %s15
    %p43 = scmp.eq.s32.totalorder %s42, 0
    %s45 = sadd.s32 %s44, 1
    %s46 = scalar_select %p43, %s44, %s45
    %p49 = pneg %p43
    %p50 = scmp.eq.s32.totalorder %s8, 3
    %p51 = por %p49, %p50
    %p52 = scmp.ne.s32.totalorder %s44, %s47
    %p53 = scmp.eq.s32.totalorder %s8, 0
    %p54 = por %p52, %p53
    %p55 = scmp.ne.s32.totalorder %s44, %s47
    %p56 = scmp.eq.s32.totalorder %s13, 3
    %p57 = por %p55, %p56
    %p58 = scmp.ne.s32.totalorder %s47, %s48
    %p59 = scmp.eq.s32.totalorder %s13, 0
    %p60 = por %p58, %p59
    %p61 = scmp.ne.s32.totalorder %s47, %s48
    %p62 = scmp.eq.s32.totalorder %s14, 3
    %p63 = por %p61, %p62
    %p65 = scmp.ne.s32.totalorder %s48, %s64
    %p66 = scmp.eq.s32.totalorder %s14, 0
    %p67 = por %p65, %p66
    %s68 = ssub.s32 %s8, %s15
    %p69 = scmp.eq.s32.totalorder %s68, 0
    %s71 = sadd.s32 %s70, 1
    %s72 = scalar_select %p69, %s70, %s71
    %p75 = pneg %p69
    %p76 = scmp.eq.s32.totalorder %s8, 3
    %p77 = por %p75, %p76
    %p78 = scmp.ne.s32.totalorder %s70, %s73
    %p79 = scmp.eq.s32.totalorder %s8, 0
    %p80 = por %p78, %p79
    %p81 = scmp.ne.s32.totalorder %s70, %s73
    %p82 = scmp.eq.s32.totalorder %s13, 3
    %p83 = por %p81, %p82
    %p84 = scmp.ne.s32.totalorder %s73, %s74
    %p85 = scmp.eq.s32.totalorder %s13, 0
    %p86 = por %p84, %p85
    %p87 = scmp.ne.s32.totalorder %s73, %s74
    %p88 = scmp.eq.s32.totalorder %s14, 3
    %p89 = por %p87, %p88
    %p91 = scmp.ne.s32.totalorder %s74, %s90
    %p92 = scmp.eq.s32.totalorder %s14, 0
    %p93 = por %p91, %p92
    %p94 = scmp.le.s32.totalorder 1, %s8
    %p95 = scmp.lt.s32.totalorder %s8, 5
    %p96 = pnand %p94, %p95
    %p97 = pneg %p96
    // Predicated region
    $region9: #{_lambda_.18} parent=5 // pred_check
      _
    $region10: #{_lambda_.18} parent=5 // pred_check_branch
      %99 = sbr.rel (%p96) target = $region12
    $region11: #{_lambda_.18} parent=5 // pred_region
      %s100 = ssub.s32 %s8, 1
    $region12: #{_lambda_.18} parent=5 // pred_fallthru
      _
    %p101 = scmp.lt.s32.totalorder %s8, 4
    // Predicated region
    $region13: #{_lambda_.18} parent=5 // pred_check
      %p102 = pneg %p101
    $region14: #{_lambda_.18} parent=5 // pred_check_branch
      %104 = sbr.rel (%p102) target = $region16
    $region15: #{_lambda_.18} parent=5 // pred_region
      // Predicated region
      $region17: #{_lambda_.18} parent=15 // pred_check
        %p105 = pneg %p28
      $region18: #{_lambda_.18} parent=15 // pred_check_branch
        %107 = sbr.rel (%p105) target = $region20
      $region19: #{_lambda_.18} parent=15 // pred_region
        %p108 = scmp.lt.s32.totalorder %s8, 3
        %s109 = scalar_select %p108, %s8, 3
        %s110 = smul.addr %s109, 4
        %s111 = smul.addr %s110, 4
        %s112 = scalar_lea.vmem %s0, %s111
      $region20: #{_lambda_.18} parent=15 // pred_fallthru
        _
      // Predicated region
      $region21: #{_lambda_.18} parent=15 // pred_check
        %p113 = pneg %p54
      $region22: #{_lambda_.18} parent=15 // pred_check_branch
        %115 = sbr.rel (%p113) target = $region24
      $region23: #{_lambda_.18} parent=15 // pred_region
        %p116 = scmp.lt.s32.totalorder %s8, 3
        %s117 = scalar_select %p116, %s8, 3
        %s118 = smul.addr %s117, 4
        %s119 = smul.addr %s118, 4
        %s120 = scalar_lea.vmem %s1, %s119
      $region24: #{_lambda_.18} parent=15 // pred_fallthru
        _
    $region16: #{_lambda_.18} parent=5 // pred_fallthru
      _
    %p121 = scmp.le.s32.totalorder 1, %s8
    %p122 = scmp.lt.s32.totalorder %s8, 5
    %p123 = pnand %p121, %p122
    %p124 = pneg %p123
    // Predicated region
    $region25: #{_lambda_.18} parent=5 // pred_check
      _
    $region26: #{_lambda_.18} parent=5 // pred_check_branch
      %126 = sbr.rel (%p123) target = $region28
    $region27: #{_lambda_.18} parent=5 // pred_region
      %s127 = ssub.s32 %s8, 1
      %p128 = scmp.lt.s32.totalorder %s13, 3
      %s129 = scalar_select %p128, %s13, 3
      %s130 = smul.addr %s129, 4
      %s131 = smul.addr %s130, 4
      %s132 = scalar_lea.vmem %s0, %s131
      %p133 = pneg %p34
      %p134 = pneg %p31
      %p135 = scmp.lt.s32.totalorder %s13, 3
      %s136 = scalar_select %p135, %s13, 3
      %s137 = smul.addr %s136, 4
      %s138 = smul.addr %s137, 4
      %s139 = scalar_lea.vmem %s1, %s138
      %p140 = pneg %p60
      %p141 = pneg %p57
      %p142 = pneg %p86
      %p143 = pneg %p83
      %p144 = scmp.lt.s32.totalorder %s13, 3
      %s145 = scalar_select %p144, %s13, 3
      %s146 = smul.addr %s145, 4
      %s147 = smul.addr %s146, 4
      %s148 = scalar_lea.vmem %s2, %s147
      %p149 = scmp.lt.s32.totalorder %s13, 3
      %s150 = scalar_select %p149, %s13, 3
      %s151 = smul.addr %s150, 4
      %s152 = smul.addr %s151, 4
      %s153 = scalar_lea.vmem %s0, %s152
      %p154 = scmp.lt.s32.totalorder %s13, 3
      %s155 = scalar_select %p154, %s13, 3
      %s156 = smul.addr %s155, 4
      %s157 = smul.addr %s156, 4
      %s158 = scalar_lea.vmem %s1, %s157
      %p159 = scmp.lt.s32.totalorder %s13, 3
      %s160 = scalar_select %p159, %s13, 3
      %s161 = smul.addr %s160, 4
      %s162 = smul.addr %s161, 4
      %s163 = scalar_lea.vmem %s2, %s162
      %v165 = vld [vmem:[%s153] sm:$0xf]
      %v166 = vld [vmem:[%s153 + $0x4] sm:$0xf]
      %v167 = vld [vmem:[%s153 + $0x8] sm:$0xf]
      %v168 = vld [vmem:[%s153 + $0xc] sm:$0xf]
      %v169 = vmax.bf16 %v165, 0
      %v170 = vmax.bf16 %v166, 0
      %v171 = vmax.bf16 %v167, 0
      %v172 = vmax.bf16 %v168, 0
      %v173 = vld [vmem:[%s158] sm:$0xf]
      %v174 = vld [vmem:[%s158 + $0x4] sm:$0xf]
      %v175 = vld [vmem:[%s158 + $0x8] sm:$0xf]
      %v176 = vld [vmem:[%s158 + $0xc] sm:$0xf]
      %v181 = vunpack.c.l.b16 %v169
      %v182 = vunpack.c.l.b16 %v170
      %v183 = vunpack.c.l.b16 %v171
      %v184 = vunpack.c.l.b16 %v172
      %v185 = vpack.c.b16 %v182, %v181
      %v186 = vpack.c.b16 %v184, %v183
      %v191 = vunpack.c.l.b16 %v173
      %v192 = vunpack.c.l.b16 %v174
      %v193 = vunpack.c.l.b16 %v175
      %v194 = vunpack.c.l.b16 %v176
      %v195 = vpack.c.b16 %v192, %v191
      %v196 = vpack.c.b16 %v194, %v193
      %vm199 = vcmask 261120
      %v201 = vsel %vm199, %v185, 0
      %v204 = vsel %vm199, %v186, 0
      %206 = vmatprep.subr.bf16.mxu0 0
      %207 = vmatpush1.bf16.msra.mxu0 %v195
      %208 = vmatprep.subr.bf16.mxu0 0
      %209 = vmatpush1.bf16.msra.mxu0 %v196
      %210 = vmatprep.subr.bf16.mxu0 0
      %211 = vmatpush1.bf16.msra.mxu0 0
      %212 = vmatprep.subr.bf16.mxu0 0
      %213 = vmatpush1.bf16.msra.mxu0 0
      %214 = vmatprep.subr.bf16.mxu0 0
      %215 = vmatpush1.bf16.msra.mxu0 0
      %216 = vmatprep.subr.bf16.mxu0 0
      %217 = vmatpush1.bf16.msra.mxu0 0
      %218 = vmatprep.subr.bf16.mxu0 0
      %219 = vmatpush1.bf16.msra.mxu0 0
      %220 = vmatprep.subr.bf16.mxu0 0
      %221 = vmatpush1.bf16.msra.mxu0 0
      %222 = vmatprep.subr.bf16.mxu0 0
      %223 = vmatpush1.bf16.msra.mxu0 0
      %224 = vmatprep.subr.bf16.mxu0 0
      %225 = vmatpush1.bf16.msra.mxu0 0
      %226 = vmatprep.subr.bf16.mxu0 0
      %227 = vmatpush1.bf16.msra.mxu0 0
      %228 = vmatprep.subr.bf16.mxu0 0
      %229 = vmatpush1.bf16.msra.mxu0 0
      %230 = vmatprep.subr.bf16.mxu0 0
      %231 = vmatpush1.bf16.msra.mxu0 0
      %232 = vmatprep.subr.bf16.mxu0 0
      %233 = vmatpush1.bf16.msra.mxu0 0
      %234 = vmatprep.subr.bf16.mxu0 0
      %235 = vmatpush1.bf16.msra.mxu0 0
      %236 = vmatprep.subr.bf16.mxu0 0
      %237 = vmatpush1.bf16.msra.mxu0 0
      %238 = vmatprep.mubr.bf16.mxu0 0
      %239 = vmatmul.mubr.bf16.gmra.mrb[0].mxu0 %v201
      %v240 = vpop.f32.mrb[0].mxu0
      %v241 = vadd.f32 0.0, %v240
      %v242 = vpop.f32.mrb[0].mxu0
      %v243 = vpop.f32.mrb[0].mxu0
      %v244 = vadd.f32 0.0, %v243
      %v245 = vpop.f32.mrb[0].mxu0
      %246 = vmatprep.mubr.bf16.mxu0 0
      %247 = vmatmul.mubr.bf16.gmra.mrb[0].mxu0 %v204
      %v248 = vpop.f32.mrb[0].mxu0
      %v249 = vadd.f32 0.0, %v248
      %v250 = vpop.f32.mrb[0].mxu0
      %v251 = vpop.f32.mrb[0].mxu0
      %v252 = vadd.f32 0.0, %v251
      %v253 = vpop.f32.mrb[0].mxu0
      %254 = vdwg.mxu0
      %vm255 = vcmask 130048
      %v256 = vsel %vm255, %v241, 0.0
      %v257 = vsel %vm255, %v244, 0.0
      %v258 = vadd.f32 %v256, %v257
      %v259 = vsel %vm255, %v249, 0.0
      %v260 = vadd.f32 %v258, %v259
      %v261 = vsel %vm255, %v252, 0.0
      %v262 = vadd.f32 %v260, %v261
      %v263 = vrot.slane %v262, 4
      %v264 = vadd.f32 %v262, %v263
      %v265 = vrot.slane %v264, 2
      %v266 = vadd.f32 %v264, %v265
      %v267 = vrot.slane %v266, 1
      %v268 = vadd.f32 %v266, %v267
      %v269 = vrcp.pop 32.0
      %v270 = vmul.f32 %v268, %v269
      %v271 = vsub.f32 %v241, %v270
      %v272 = vsub.f32 %v244, %v270
      %v273 = vsub.f32 %v249, %v270
      %v274 = vsub.f32 %v252, %v270
      %v275 = vmul.f32 %v271, %v271
      %v276 = vmul.f32 %v272, %v272
      %v277 = vmul.f32 %v273, %v273
      %v278 = vmul.f32 %v274, %v274
      %v279 = vsel %vm255, %v275, 0.0
      %v280 = vsel %vm255, %v276, 0.0
      %v281 = vadd.f32 %v279, %v280
      %v282 = vsel %vm255, %v277, 0.0
      %v283 = vadd.f32 %v281, %v282
      %v284 = vsel %vm255, %v278, 0.0
      %v285 = vadd.f32 %v283, %v284
      %v286 = vrot.slane %v285, 4
      %v287 = vadd.f32 %v285, %v286
      %v288 = vrot.slane %v287, 2
      %v289 = vadd.f32 %v287, %v288
      %v290 = vrot.slane %v289, 1
      %v291 = vadd.f32 %v289, %v290
      %v292 = vmul.f32 %v291, %v269
      %v293 = vadd.f32 %v292, 1e-05
      %v294 = vrsqrt.pop %v293
      %v295 = vmul.f32 %v271, %v294
      %v296 = vmul.f32 %v272, %v294
      %v297 = vmul.f32 %v273, %v294
      %v298 = vmul.f32 %v274, %v294
      %v299 = vpack.c.bf16 %v296, %v295
      %v300 = vpack.c.bf16 %v298, %v297
      %v303 = vunpack.c.l.b16 %v299
      %v304 = vunpack.c.h.b16 %v299
      %v305 = vunpack.c.l.b16 %v300
      %v306 = vunpack.c.h.b16 %v300
      %v307 = vpack.c.b16 %v303, %v303
      %v308 = vpack.c.b16 %v304, %v304
      %v309 = vpack.c.b16 %v305, %v305
      %v310 = vpack.c.b16 %v306, %v306
      %vm315 = vcmask 125952
      %316 = vst.msk [vmem:[%s163] sm:$0xf] %vm315, %v307
      %317 = vst.msk [vmem:[%s163 + $0x4] sm:$0xf] %vm315, %v308
      %318 = vst.msk [vmem:[%s163 + $0x8] sm:$0xf] %vm315, %v309
      %319 = vst.msk [vmem:[%s163 + $0xc] sm:$0xf] %vm315, %v310
      %p320 = scmp.lt.s32.totalorder %s13, 3
      %s321 = scalar_select %p320, %s13, 3
      %s322 = smul.addr %s321, 4
      %s323 = smul.addr %s322, 4
      %s324 = scalar_lea.vmem %s2, %s323
      // Predicated region
      $region29: #{_lambda_.18} parent=27 // pred_check
        %p325 = pneg %p83
      $region30: #{_lambda_.18} parent=27 // pred_check_branch
        %327 = sbr.rel (%p325) target = $region32
      $region31: #{_lambda_.18} parent=27 // pred_region
        _
      $region32: #{_lambda_.18} parent=27 // pred_fallthru
        _
    $region28: #{_lambda_.18} parent=5 // pred_fallthru
      _
    %p328 = scmp.le.s32.totalorder 2, %s8
    // Predicated region
    $region33: #{_lambda_.18} parent=5 // pred_check
      %p329 = pneg %p328
    $region34: #{_lambda_.18} parent=5 // pred_check_branch
      %331 = sbr.rel (%p329) target = $region36
    $region35: #{_lambda_.18} parent=5 // pred_region
      %s332 = ssub.s32 %s8, 2
      // Predicated region
      $region37: #{_lambda_.18} parent=35 // pred_check
        %p333 = pneg %p89
      $region38: #{_lambda_.18} parent=35 // pred_check_branch
        %335 = sbr.rel (%p333) target = $region40
      $region39: #{_lambda_.18} parent=35 // pred_region
        %p336 = scmp.lt.s32.totalorder %s14, 3
        %s337 = scalar_select %p336, %s14, 3
        %s338 = smul.addr %s337, 4
        %s339 = smul.addr %s338, 4
        %s340 = scalar_lea.vmem %s2, %s339
      $region40: #{_lambda_.18} parent=35 // pred_fallthru
        _
    $region36: #{_lambda_.18} parent=5 // pred_fallthru
      _
  $region6: #{_lambda_.18} parent=0 // loop_footer
    %s12 = sadd.s32 1, %s8
  $region7: #{_lambda_.18} parent=0 // loop_footer_branch
    %7 = sbr.rel target = $region3
  $region8: #{_lambda_.18} parent=0 // loop_exit
    _

// kernel: _lambda_.16
$region0: #{_lambda_.16}
  #allocation0 [shape = 'u32[]', space=smem, size = 0x4, offset = 0x4, fixed_abs, tag = 'smem constant byte address 0x4 - core index']
  #allocation1 [shape = 'u32[144,128]{1,0:T(1,128)}', space=vmem, size = 0x12000, scoped, tag = 'internal scratch']
  %s0 = inlined_call_operand.vmem [shape: bf16[1,128,16], index: 0, kind: input, shape index: {}]
  %s1 = inlined_call_operand.vmem [shape: bf16[1,16,16], index: 1, kind: input, shape index: {}]
  %s2 = inlined_call_operand.vmem [shape: bf16[1,128,16], index: 2, kind: output, shape index: {}]
  %s3 = sld [smem:[#allocation0]]
  $region18: #{_lambda_.16} parent=0
    _
  %s5 = ssub.s32 1, %s3
  %s6 = scalar_select 0, %s5, %s3
  // Predicated region
  $region2: #{_lambda_.16} parent=0 // pred_check
    _
  $region3: #{_lambda_.16} parent=0 // pred_check_branch
    %8 = sbr.rel (0) target = $region5
  $region4: #{_lambda_.16} parent=0 // pred_region
    _
  $region5: #{_lambda_.16} parent=0 // pred_fallthru
    _
  // Predicated region
  $region6: #{_lambda_.16} parent=0 // pred_check
    _
  $region7: #{_lambda_.16} parent=0 // pred_check_branch
    %10 = sbr.rel (0) target = $region9
  $region8: #{_lambda_.16} parent=0 // pred_region
    _
  $region9: #{_lambda_.16} parent=0 // pred_fallthru
    _
  %v12 = vld [vmem:[%s0] sm:$0xf]
  %v13 = vld [vmem:[%s0 + $0x4] sm:$0xf]
  %v14 = vld [vmem:[%s0 + $0x8] sm:$0xf]
  %v15 = vld [vmem:[%s0 + $0xc] sm:$0xf]
  %v16 = vld [vmem:[%s0 + $0x10] sm:$0xf]
  %v17 = vld [vmem:[%s0 + $0x14] sm:$0xf]
  %v18 = vld [vmem:[%s0 + $0x18] sm:$0xf]
  %v19 = vld [vmem:[%s0 + $0x1c] sm:$0xf]
  %v20 = vld [vmem:[%s0 + $0x20] sm:$0xf]
  %v21 = vld [vmem:[%s0 + $0x24] sm:$0xf]
  %v22 = vld [vmem:[%s0 + $0x28] sm:$0xf]
  %v23 = vld [vmem:[%s0 + $0x2c] sm:$0xf]
  %v24 = vld [vmem:[%s0 + $0x30] sm:$0xf]
  %v25 = vld [vmem:[%s0 + $0x34] sm:$0xf]
  %v26 = vld [vmem:[%s0 + $0x38] sm:$0xf]
  %v27 = vld [vmem:[%s0 + $0x3c] sm:$0xf]
  %v28 = vmax.bf16 %v12, 0
  %v29 = vmax.bf16 %v13, 0
  %v30 = vmax.bf16 %v14, 0
  %v31 = vmax.bf16 %v15, 0
  %v32 = vmax.bf16 %v16, 0
  %v33 = vmax.bf16 %v17, 0
  %v34 = vmax.bf16 %v18, 0
  %v35 = vmax.bf16 %v19, 0
  %v36 = vmax.bf16 %v20, 0
  %v37 = vmax.bf16 %v21, 0
  %v38 = vmax.bf16 %v22, 0
  %v39 = vmax.bf16 %v23, 0
  %v40 = vmax.bf16 %v24, 0
  %v41 = vmax.bf16 %v25, 0
  %v42 = vmax.bf16 %v26, 0
  %v43 = vmax.bf16 %v27, 0
  %v44 = vld [vmem:[%s1] sm:$0xf]
  %v45 = vld [vmem:[%s1 + $0x4] sm:$0xf]
  %v62 = vunpack.c.l.b16 %v28
  %v63 = vunpack.c.l.b16 %v29
  %v64 = vunpack.c.l.b16 %v30
  %v65 = vunpack.c.l.b16 %v31
  %v66 = vunpack.c.l.b16 %v32
  %v67 = vunpack.c.l.b16 %v33
  %v68 = vunpack.c.l.b16 %v34
  %v69 = vunpack.c.l.b16 %v35
  %v70 = vunpack.c.l.b16 %v36
  %v71 = vunpack.c.l.b16 %v37
  %v72 = vunpack.c.l.b16 %v38
  %v73 = vunpack.c.l.b16 %v39
  %v74 = vunpack.c.l.b16 %v40
  %v75 = vunpack.c.l.b16 %v41
  %v76 = vunpack.c.l.b16 %v42
  %v77 = vunpack.c.l.b16 %v43
  %v78 = vpack.c.b16 %v63, %v62
  %v79 = vpack.c.b16 %v65, %v64
  %v80 = vpack.c.b16 %v67, %v66
  %v81 = vpack.c.b16 %v69, %v68
  %v82 = vpack.c.b16 %v71, %v70
  %v83 = vpack.c.b16 %v73, %v72
  %v84 = vpack.c.b16 %v75, %v74
  %v85 = vpack.c.b16 %v77, %v76
  %v88 = vunpack.c.l.b16 %v44
  %v89 = vunpack.c.l.b16 %v45
  %v90 = vpack.c.b16 %v89, %v88
  %vm92 = vcmask 130048
  %v94 = vsel %vm92, %v78, 0
  %v97 = vsel %vm92, %v79, 0
  %v100 = vsel %vm92, %v80, 0
  %v103 = vsel %vm92, %v81, 0
  %v106 = vsel %vm92, %v82, 0
  %v109 = vsel %vm92, %v83, 0
  %v112 = vsel %vm92, %v84, 0
  %v115 = vsel %vm92, %v85, 0
  %117 = vmatprep.subr.bf16.mxu0 0
  %118 = vmatpush1.bf16.msra.mxu0 %v90
  %119 = vmatprep.subr.bf16.mxu0 0
  %120 = vmatpush1.bf16.msra.mxu0 0
  %121 = vmatprep.subr.bf16.mxu0 0
  %122 = vmatpush1.bf16.msra.mxu0 0
  %123 = vmatprep.subr.bf16.mxu0 0
  %124 = vmatpush1.bf16.msra.mxu0 0
  %125 = vmatprep.subr.bf16.mxu0 0
  %126 = vmatpush1.bf16.msra.mxu0 0
  %127 = vmatprep.subr.bf16.mxu0 0
  %128 = vmatpush1.bf16.msra.mxu0 0
  %129 = vmatprep.subr.bf16.mxu0 0
  %130 = vmatpush1.bf16.msra.mxu0 0
  %131 = vmatprep.subr.bf16.mxu0 0
  %132 = vmatpush1.bf16.msra.mxu0 0
  %133 = vmatprep.subr.bf16.mxu0 0
  %134 = vmatpush1.bf16.msra.mxu0 0
  %135 = vmatprep.subr.bf16.mxu0 0
  %136 = vmatpush1.bf16.msra.mxu0 0
  %137 = vmatprep.subr.bf16.mxu0 0
  %138 = vmatpush1.bf16.msra.mxu0 0
  %139 = vmatprep.subr.bf16.mxu0 0
  %140 = vmatpush1.bf16.msra.mxu0 0
  %141 = vmatprep.subr.bf16.mxu0 0
  %142 = vmatpush1.bf16.msra.mxu0 0
  %143 = vmatprep.subr.bf16.mxu0 0
  %144 = vmatpush1.bf16.msra.mxu0 0
  %145 = vmatprep.subr.bf16.mxu0 0
  %146 = vmatpush1.bf16.msra.mxu0 0
  %147 = vmatprep.subr.bf16.mxu0 0
  %148 = vmatpush1.bf16.msra.mxu0 0
  %149 = vmatprep.mubr.bf16.mxu0 0
  %150 = vmatmul.mubr.bf16.gmra.mrb[0].mxu0 %v94
  %v151 = vpop.f32.mrb[0].mxu0
  %v152 = vadd.f32 0.0, %v151
  %v153 = vpop.f32.mrb[0].mxu0
  %v154 = vpop.f32.mrb[0].mxu0
  %v155 = vadd.f32 0.0, %v154
  %v156 = vpop.f32.mrb[0].mxu0
  %157 = vmatprep.mubr.bf16.mxu0 0
  %158 = vmatmul.mubr.bf16.gmra.mrb[0].mxu0 %v97
  %v159 = vpop.f32.mrb[0].mxu0
  %v160 = vadd.f32 0.0, %v159
  %v161 = vpop.f32.mrb[0].mxu0
  %v162 = vpop.f32.mrb[0].mxu0
  %v163 = vadd.f32 0.0, %v162
  %v164 = vpop.f32.mrb[0].mxu0
  %165 = vmatprep.mubr.bf16.mxu0 0
  %166 = vmatmul.mubr.bf16.gmra.mrb[0].mxu0 %v100
  %v167 = vpop.f32.mrb[0].mxu0
  %v168 = vadd.f32 0.0, %v167
  %v169 = vpop.f32.mrb[0].mxu0
  %v170 = vpop.f32.mrb[0].mxu0
  %v171 = vadd.f32 0.0, %v170
  %v172 = vpop.f32.mrb[0].mxu0
  %173 = vmatprep.mubr.bf16.mxu0 0
  %174 = vmatmul.mubr.bf16.gmra.mrb[0].mxu0 %v103
  %v175 = vpop.f32.mrb[0].mxu0
  %v176 = vadd.f32 0.0, %v175
  %v177 = vpop.f32.mrb[0].mxu0
  %v178 = vpop.f32.mrb[0].mxu0
  %v179 = vadd.f32 0.0, %v178
  %v180 = vpop.f32.mrb[0].mxu0
  %181 = vmatprep.mubr.bf16.mxu0 0
  %182 = vmatmul.mubr.bf16.gmra.mrb[0].mxu0 %v106
  %v183 = vpop.f32.mrb[0].mxu0
  %v184 = vadd.f32 0.0, %v183
  %v185 = vpop.f32.mrb[0].mxu0
  %v186 = vpop.f32.mrb[0].mxu0
  %v187 = vadd.f32 0.0, %v186
  %v188 = vpop.f32.mrb[0].mxu0
  %189 = vmatprep.mubr.bf16.mxu0 0
  %190 = vmatmul.mubr.bf16.gmra.mrb[0].mxu0 %v109
  %v191 = vpop.f32.mrb[0].mxu0
  %v192 = vadd.f32 0.0, %v191
  %v193 = vpop.f32.mrb[0].mxu0
  %v194 = vpop.f32.mrb[0].mxu0
  %v195 = vadd.f32 0.0, %v194
  %v196 = vpop.f32.mrb[0].mxu0
  %197 = vmatprep.mubr.bf16.mxu0 0
  %198 = vmatmul.mubr.bf16.gmra.mrb[0].mxu0 %v112
  %v199 = vpop.f32.mrb[0].mxu0
  %v200 = vadd.f32 0.0, %v199
  %v201 = vpop.f32.mrb[0].mxu0
  %v202 = vpop.f32.mrb[0].mxu0
  %v203 = vadd.f32 0.0, %v202
  %v204 = vpop.f32.mrb[0].mxu0
  %205 = vmatprep.mubr.bf16.mxu0 0
  %206 = vmatmul.mubr.bf16.gmra.mrb[0].mxu0 %v115
  %v207 = vpop.f32.mrb[0].mxu0
  %v208 = vadd.f32 0.0, %v207
  %v209 = vpop.f32.mrb[0].mxu0
  %v210 = vpop.f32.mrb[0].mxu0
  %v211 = vadd.f32 0.0, %v210
  %v212 = vpop.f32.mrb[0].mxu0
  %213 = vdwg.mxu0
  %v214 = vsel %vm92, %v152, 0.0
  %v215 = vsel %vm92, %v155, 0.0
  %v216 = vadd.f32 %v214, %v215
  %v217 = vsel %vm92, %v160, 0.0
  %v218 = vadd.f32 %v216, %v217
  %v219 = vsel %vm92, %v163, 0.0
  %v220 = vadd.f32 %v218, %v219
  %v221 = vsel %vm92, %v168, 0.0
  %v222 = vadd.f32 %v220, %v221
  %v223 = vsel %vm92, %v171, 0.0
  %v224 = vadd.f32 %v222, %v223
  %v225 = vsel %vm92, %v176, 0.0
  %v226 = vadd.f32 %v224, %v225
  %v227 = vsel %vm92, %v179, 0.0
  %v228 = vadd.f32 %v226, %v227
  %v229 = vsel %vm92, %v184, 0.0
  %v230 = vadd.f32 %v228, %v229
  %v231 = vsel %vm92, %v187, 0.0
  %v232 = vadd.f32 %v230, %v231
  %v233 = vsel %vm92, %v192, 0.0
  %v234 = vadd.f32 %v232, %v233
  %v235 = vsel %vm92, %v195, 0.0
  %v236 = vadd.f32 %v234, %v235
  %v237 = vsel %vm92, %v200, 0.0
  %v238 = vadd.f32 %v236, %v237
  %v239 = vsel %vm92, %v203, 0.0
  %v240 = vadd.f32 %v238, %v239
  %v241 = vsel %vm92, %v208, 0.0
  %v242 = vadd.f32 %v240, %v241
  %v243 = vsel %vm92, %v211, 0.0
  %v244 = vadd.f32 %v242, %v243
  %v245 = vrot.slane %v244, 4
  %v246 = vadd.f32 %v244, %v245
  %v247 = vrot.slane %v246, 2
  %v248 = vadd.f32 %v246, %v247
  %v249 = vrot.slane %v248, 1
  %v250 = vadd.f32 %v248, %v249
  %v251 = vrcp.pop 128.0
  %v252 = vmul.f32 %v250, %v251
  %v253 = vsub.f32 %v152, %v252
  %v254 = vsub.f32 %v155, %v252
  %v255 = vsub.f32 %v160, %v252
  %v256 = vsub.f32 %v163, %v252
  %v257 = vsub.f32 %v168, %v252
  %v258 = vsub.f32 %v171, %v252
  %v259 = vsub.f32 %v176, %v252
  %v260 = vsub.f32 %v179, %v252
  %v261 = vsub.f32 %v184, %v252
  %v262 = vsub.f32 %v187, %v252
  %v263 = vsub.f32 %v192, %v252
  %v264 = vsub.f32 %v195, %v252
  %v265 = vsub.f32 %v200, %v252
  %v266 = vsub.f32 %v203, %v252
  %v267 = vsub.f32 %v208, %v252
  %v268 = vsub.f32 %v211, %v252
  %v269 = vmul.f32 %v253, %v253
  %v270 = vmul.f32 %v254, %v254
  %v271 = vmul.f32 %v255, %v255
  %v272 = vmul.f32 %v256, %v256
  %v273 = vmul.f32 %v257, %v257
  %v274 = vmul.f32 %v258, %v258
  %v275 = vmul.f32 %v259, %v259
  %v276 = vmul.f32 %v260, %v260
  %v277 = vmul.f32 %v261, %v261
  %v278 = vmul.f32 %v262, %v262
  %v279 = vmul.f32 %v263, %v263
  %v280 = vmul.f32 %v264, %v264
  %v281 = vmul.f32 %v265, %v265
  %v282 = vmul.f32 %v266, %v266
  %v283 = vmul.f32 %v267, %v267
  %v284 = vmul.f32 %v268, %v268
  %v285 = vsel %vm92, %v269, 0.0
  %v286 = vsel %vm92, %v270, 0.0
  %v287 = vadd.f32 %v285, %v286
  %v288 = vsel %vm92, %v271, 0.0
  %v289 = vadd.f32 %v287, %v288
  %v290 = vsel %vm92, %v272, 0.0
  %v291 = vadd.f32 %v289, %v290
  %v292 = vsel %vm92, %v273, 0.0
  %v293 = vadd.f32 %v291, %v292
  %v294 = vsel %vm92, %v274, 0.0
  %v295 = vadd.f32 %v293, %v294
  %v296 = vsel %vm92, %v275, 0.0
  %v297 = vadd.f32 %v295, %v296
  %v298 = vsel %vm92, %v276, 0.0
  %v299 = vadd.f32 %v297, %v298
  %v300 = vsel %vm92, %v277, 0.0
  %v301 = vadd.f32 %v299, %v300
  %v302 = vsel %vm92, %v278, 0.0
  %v303 = vadd.f32 %v301, %v302
  %v304 = vsel %vm92, %v279, 0.0
  %v305 = vadd.f32 %v303, %v304
  %v306 = vsel %vm92, %v280, 0.0
  %v307 = vadd.f32 %v305, %v306
  %v308 = vsel %vm92, %v281, 0.0
  %v309 = vadd.f32 %v307, %v308
  %v310 = vsel %vm92, %v282, 0.0
  %v311 = vadd.f32 %v309, %v310
  %v312 = vsel %vm92, %v283, 0.0
  %v313 = vadd.f32 %v311, %v312
  %v314 = vsel %vm92, %v284, 0.0
  %v315 = vadd.f32 %v313, %v314
  %v316 = vrot.slane %v315, 4
  %v317 = vadd.f32 %v315, %v316
  %v318 = vrot.slane %v317, 2
  %v319 = vadd.f32 %v317, %v318
  %v320 = vrot.slane %v319, 1
  %v321 = vadd.f32 %v319, %v320
  %v322 = vmul.f32 %v321, %v251
  %v323 = vadd.f32 %v322, 1e-05
  %v324 = vrsqrt.pop %v323
  %v325 = vmul.f32 %v253, %v324
  %v326 = vmul.f32 %v254, %v324
  %v327 = vmul.f32 %v255, %v324
  %v328 = vmul.f32 %v256, %v324
  %v329 = vmul.f32 %v257, %v324
  %v330 = vmul.f32 %v258, %v324
  %v331 = vmul.f32 %v259, %v324
  %v332 = vmul.f32 %v260, %v324
  %v333 = vmul.f32 %v261, %v324
  %v334 = vmul.f32 %v262, %v324
  %v335 = vmul.f32 %v263, %v324
  %v336 = vmul.f32 %v264, %v324
  %v337 = vmul.f32 %v265, %v324
  %v338 = vmul.f32 %v266, %v324
  %v339 = vmul.f32 %v267, %v324
  %v340 = vmul.f32 %v268, %v324
  %v341 = vpack.c.bf16 %v326, %v325
  %v342 = vpack.c.bf16 %v328, %v327
  %v343 = vpack.c.bf16 %v330, %v329
  %v344 = vpack.c.bf16 %v332, %v331
  %v345 = vpack.c.bf16 %v334, %v333
  %v346 = vpack.c.bf16 %v336, %v335
  %v347 = vpack.c.bf16 %v338, %v337
  %v348 = vpack.c.bf16 %v340, %v339
  %v357 = vunpack.c.l.b16 %v341
  %v358 = vunpack.c.h.b16 %v341
  %v359 = vunpack.c.l.b16 %v342
  %v360 = vunpack.c.h.b16 %v342
  %v361 = vunpack.c.l.b16 %v343
  %v362 = vunpack.c.h.b16 %v343
  %v363 = vunpack.c.l.b16 %v344
  %v364 = vunpack.c.h.b16 %v344
  %v365 = vunpack.c.l.b16 %v345
  %v366 = vunpack.c.h.b16 %v345
  %v367 = vunpack.c.l.b16 %v346
  %v368 = vunpack.c.h.b16 %v346
  %v369 = vunpack.c.l.b16 %v347
  %v370 = vunpack.c.h.b16 %v347
  %v371 = vunpack.c.l.b16 %v348
  %v372 = vunpack.c.h.b16 %v348
  %v373 = vpack.c.b16 %v357, %v357
  %v374 = vpack.c.b16 %v358, %v358
  %v375 = vpack.c.b16 %v359, %v359
  %v376 = vpack.c.b16 %v360, %v360
  %v377 = vpack.c.b16 %v361, %v361
  %v378 = vpack.c.b16 %v362, %v362
  %v379 = vpack.c.b16 %v363, %v363
  %v380 = vpack.c.b16 %v364, %v364
  %v381 = vpack.c.b16 %v365, %v365
  %v382 = vpack.c.b16 %v366, %v366
  %v383 = vpack.c.b16 %v367, %v367
  %v384 = vpack.c.b16 %v368, %v368
  %v385 = vpack.c.b16 %v369, %v369
  %v386 = vpack.c.b16 %v370, %v370
  %v387 = vpack.c.b16 %v371, %v371
  %v388 = vpack.c.b16 %v372, %v372
  %vm405 = vcmask 125952
  %406 = vst.msk [vmem:[%s2] sm:$0xf] %vm405, %v373
  %407 = vst.msk [vmem:[%s2 + $0x4] sm:$0xf] %vm405, %v374
  %408 = vst.msk [vmem:[%s2 + $0x8] sm:$0xf] %vm405, %v375
  %409 = vst.msk [vmem:[%s2 + $0xc] sm:$0xf] %vm405, %v376
  %410 = vst.msk [vmem:[%s2 + $0x10] sm:$0xf] %vm405, %v377
  %411 = vst.msk [vmem:[%s2 + $0x14] sm:$0xf] %vm405, %v378
  %412 = vst.msk [vmem:[%s2 + $0x18] sm:$0xf] %vm405, %v379
  %413 = vst.msk [vmem:[%s2 + $0x1c] sm:$0xf] %vm405, %v380
  %414 = vst.msk [vmem:[%s2 + $0x20] sm:$0xf] %vm405, %v381
  %415 = vst.msk [vmem:[%s2 + $0x24] sm:$0xf] %vm405, %v382
  %416 = vst.msk [vmem:[%s2 + $0x28] sm:$0xf] %vm405, %v383
  %417 = vst.msk [vmem:[%s2 + $0x2c] sm:$0xf] %vm405, %v384
  %418 = vst.msk [vmem:[%s2 + $0x30] sm:$0xf] %vm405, %v385
  %419 = vst.msk [vmem:[%s2 + $0x34] sm:$0xf] %vm405, %v386
  %420 = vst.msk [vmem:[%s2 + $0x38] sm:$0xf] %vm405, %v387
  %421 = vst.msk [vmem:[%s2 + $0x3c] sm:$0xf] %vm405, %v388
  // Predicated region
  $region10: #{_lambda_.16} parent=0 // pred_check
    _
  $region11: #{_lambda_.16} parent=0 // pred_check_branch
    %423 = sbr.rel (0) target = $region13
  $region12: #{_lambda_.16} parent=0 // pred_region
    _
  $region13: #{_lambda_.16} parent=0 // pred_fallthru
    _
  // Predicated region
  $region14: #{_lambda_.16} parent=0 // pred_check
    _
  $region15: #{_lambda_.16} parent=0 // pred_check_branch
    %425 = sbr.rel (0) target = $region17
  $region16: #{_lambda_.16} parent=0 // pred_region
    _
  $region17: #{_lambda_.16} parent=0 // pred_fallthru
    _

// kernel: _lambda_.19
$region0: #{_lambda_.19}
  #allocation0 [shape = 'u32[]', space=smem, size = 0x4, offset = 0x4, fixed_abs, tag = 'smem constant byte address 0x4 - core index']
  #allocation1 [shape = 'u32[144,128]{1,0:T(1,128)}', space=vmem, size = 0x12000, scoped, tag = 'internal scratch']
  %s0 = inlined_call_operand.vmem [shape: bf16[2,16,32], index: 0, kind: input, shape index: {}]
  %s1 = inlined_call_operand.vmem [shape: f32[32,10], index: 1, kind: input, shape index: {}]
  %s2 = inlined_call_operand.vmem [shape: f32[1,10], index: 2, kind: input, shape index: {}]
  %s3 = inlined_call_operand.hbm [shape: f32[2,10], index: 3, kind: output, shape index: {}]
  %s4 = sld [smem:[#allocation0]]
  $region22: #{_lambda_.19} parent=0
    _
  %s6 = ssub.s32 1, %s4
  %s7 = scalar_select 0, %s6, %s4
  $region1: #{_lambda_.19} parent=0
    #allocation2 [shape = 'u8[1024]{0}', space=vmem, size = 0x400, scoped, tag = 'output window, operand 0, single buffered']
    #allocation3 [shape = 's32[1]{0}', space=sflag, size = 0x4, scoped, tag = 'scoped memory for _lambda_.19']
    %8 = vsyncpa [#allocation3], 0
    // Predicated region
    $region2: #{_lambda_.19} parent=1 // pred_check
      _
    $region3: #{_lambda_.19} parent=1 // pred_check_branch
      %10 = sbr.rel (0) target = $region5
    $region4: #{_lambda_.19} parent=1 // pred_region
      _
    $region5: #{_lambda_.19} parent=1 // pred_fallthru
      _
    // Predicated region
    $region6: #{_lambda_.19} parent=1 // pred_check
      _
    $region7: #{_lambda_.19} parent=1 // pred_check_branch
      %12 = sbr.rel (0) target = $region9
    $region8: #{_lambda_.19} parent=1 // pred_region
      _
    $region9: #{_lambda_.19} parent=1 // pred_fallthru
      _
    // Predicated region
    $region10: #{_lambda_.19} parent=1 // pred_check
      _
    $region11: #{_lambda_.19} parent=1 // pred_check_branch
      %14 = sbr.rel (0) target = $region13
    $region12: #{_lambda_.19} parent=1 // pred_region
      _
    $region13: #{_lambda_.19} parent=1 // pred_fallthru
      _
    %v15 = vld [vmem:[%s0] sm:$0xf]
    %v16 = vld [vmem:[%s0 + $0x4] sm:$0xf]
    %v17 = vld [vmem:[%s0 + $0x8] sm:$0xf]
    %v18 = vld [vmem:[%s0 + $0xc] sm:$0xf]
    %v19 = vunpack.c.l.bf16 %v15
    %v20 = vunpack.c.l.bf16 %v16
    %v21 = vunpack.c.l.bf16 %v17
    %v22 = vunpack.c.l.bf16 %v18
    %vm23 = vcmask 261120
    %v24 = vsel %vm23, %v19, 0.0
    %v25 = vsel %vm23, %v20, 0.0
    %v26 = vadd.f32 %v24, %v25
    %v27 = vrot.slane %v26, 4
    %v28 = vadd.f32 %v26, %v27
    %v29 = vrot.slane %v28, 2
    %v30 = vadd.f32 %v28, %v29
    %v31 = vrot.slane %v30, 1
    %v32 = vadd.f32 %v30, %v31
    %v33 = vsel %vm23, %v21, 0.0
    %v34 = vsel %vm23, %v22, 0.0
    %v35 = vadd.f32 %v33, %v34
    %v36 = vrot.slane %v35, 4
    %v37 = vadd.f32 %v35, %v36
    %v38 = vrot.slane %v37, 2
    %v39 = vadd.f32 %v37, %v38
    %v40 = vrot.slane %v39, 1
    %v41 = vadd.f32 %v39, %v40
    %v42 = vrcp.pop 16.0
    %v43 = vmul.f32 %v32, %v42
    %v44 = vmul.f32 %v41, %v42
    %v45 = vld [vmem:[%s1] sm:$0xff]
    %v46 = vld [vmem:[%s1 + $0x8] sm:$0xff]
    %v47 = vld [vmem:[%s1 + $0x10] sm:$0xff]
    %v48 = vld [vmem:[%s1 + $0x18] sm:$0xff]
    %v49 = vld [vmem:[%s2] sm:$0x1]
    %v51 = vlaneseq
    %v52 = vshrl.u32 %v51, 7
    %v53 = vsub.s32 0, %v52
    %v54 = vrot.slane %v49, %v53
    %vm58 = vcmask 1041409
    %v59 = vsel %vm58, %v44, %v43
    %v60 = vsel %vm23, %v59, 0
    %62 = vmatprep.subr.mxu0 0.0
    %63 = vmatpush1.msra.mxu0 %v45
    %64 = vmatprep.subr.mxu0 0.0
    %65 = vmatpush1.msra.mxu0 %v46
    %66 = vmatprep.subr.mxu0 0.0
    %67 = vmatpush1.msra.mxu0 %v47
    %68 = vmatprep.subr.mxu0 0.0
    %69 = vmatpush1.msra.mxu0 %v48
    %70 = vmatprep.subr.mxu0 0.0
    %71 = vmatpush1.msra.mxu0 0.0
    %72 = vmatprep.subr.mxu0 0.0
    %73 = vmatpush1.msra.mxu0 0.0
    %74 = vmatprep.subr.mxu0 0.0
    %75 = vmatpush1.msra.mxu0 0.0
    %76 = vmatprep.subr.mxu0 0.0
    %77 = vmatpush1.msra.mxu0 0.0
    %78 = vmatprep.subr.mxu0 0.0
    %79 = vmatpush1.msra.mxu0 0.0
    %80 = vmatprep.subr.mxu0 0.0
    %81 = vmatpush1.msra.mxu0 0.0
    %82 = vmatprep.subr.mxu0 0.0
    %83 = vmatpush1.msra.mxu0 0.0
    %84 = vmatprep.subr.mxu0 0.0
    %85 = vmatpush1.msra.mxu0 0.0
    %86 = vmatprep.subr.mxu0 0.0
    %87 = vmatpush1.msra.mxu0 0.0
    %88 = vmatprep.subr.mxu0 0.0
    %89 = vmatpush1.msra.mxu0 0.0
    %90 = vmatprep.subr.mxu0 0.0
    %91 = vmatpush1.msra.mxu0 0.0
    %92 = vmatprep.subr.mxu0 0.0
    %93 = vmatpush1.msra.mxu0 0.0
    %94 = vmatprep.subr.mxu0 0.0
    %95 = vmatpush1.msra.mxu0 0.0
    %96 = vmatprep.subr.mxu0 0.0
    %97 = vmatpush1.msra.mxu0 0.0
    %98 = vmatprep.subr.mxu0 0.0
    %99 = vmatpush1.msra.mxu0 0.0
    %100 = vmatprep.subr.mxu0 0.0
    %101 = vmatpush1.msra.mxu0 0.0
    %102 = vmatprep.subr.mxu0 0.0
    %103 = vmatpush1.msra.mxu0 0.0
    %104 = vmatprep.subr.mxu0 0.0
    %105 = vmatpush1.msra.mxu0 0.0
    %106 = vmatprep.subr.mxu0 0.0
    %107 = vmatpush1.msra.mxu0 0.0
    %108 = vmatprep.subr.mxu0 0.0
    %109 = vmatpush1.msra.mxu0 0.0
    %110 = vmatprep.subr.mxu0 0.0
    %111 = vmatpush1.msra.mxu0 0.0
    %112 = vmatprep.subr.mxu0 0.0
    %113 = vmatpush1.msra.mxu0 0.0
    %114 = vmatprep.subr.mxu0 0.0
    %115 = vmatpush1.msra.mxu0 0.0
    %116 = vmatprep.subr.mxu0 0.0
    %117 = vmatpush1.msra.mxu0 0.0
    %118 = vmatprep.subr.mxu0 0.0
    %119 = vmatpush1.msra.mxu0 0.0
    %120 = vmatprep.subr.mxu0 0.0
    %121 = vmatpush1.msra.mxu0 0.0
    %122 = vmatprep.subr.mxu0 0.0
    %123 = vmatpush1.msra.mxu0 0.0
    %124 = vmatprep.subr.mxu0 0.0
    %125 = vmatpush1.msra.mxu0 0.0
    %126 = vmatprep.mubr.f32.mxu0 0.0
    %127 = vmatmul.mubr.f32.gmra.mrb[0].mxu0 %v60
    %v128 = vpop.f32.mrb[0].mxu0
    %v129 = vadd.f32 %v54, %v128
    %v130 = vpop.f32.mrb[0].mxu0
    %131 = vdwg.mxu0
    %vm132 = vcmask 74752
    %133 = vst.msk [vmem:[#allocation2] sm:$0x3] %vm132, %v129
    // Predicated region
    $region14: #{_lambda_.19} parent=1 // pred_check
      _
    $region15: #{_lambda_.19} parent=1 // pred_check_branch
      %135 = sbr.rel (0) target = $region17
    $region16: #{_lambda_.19} parent=1 // pred_region
      %s137 = ssub.s32 32, 32
      %138 = vsyncadd [#allocation3], %s137
      %s140 = sshll.u32 [#allocation2], 4
      %s141 = int_to_ptr.vmem [resolvable:$true] %s140
      %143 = dma.vmem_to_hbm [thread:$0]  %s141, 32, %s3, [#allocation3]
    $region17: #{_lambda_.19} parent=1 // pred_fallthru
      _
    // Predicated region
    $region18: #{_lambda_.19} parent=1 // pred_check
      _
    $region19: #{_lambda_.19} parent=1 // pred_check_branch
      %145 = sbr.rel (0) target = $region21
    $region20: #{_lambda_.19} parent=1 // pred_region
      %146 = dma.done [#allocation3], 32
    $region21: #{_lambda_.19} parent=1 // pred_fallthru
      _
    %147 = vsyncpa [#allocation3], 1

</llo_original>
